<compile_context>
chip_gen: v7x
topology: tpu7x:2x2x1
jax: 0.10.0
libtpu: 0.0.40
codegen_flags: <defaults>
</compile_context>

<pallas_src>
import functools
import math

import jax
import jax.numpy as jnp
import numpy as np
from jax.experimental import pallas as pl
from jax.experimental.pallas import tpu as pltpu

LANE = 128          # TPU lane width; every feature dim is zero-padded to this
NEG_BIG = -1e9      # additive "invalid neighbour" marker carried in the input


def _round_up(x, m):
    return (x + m - 1) // m * m


# ----------------------------------------------------------------------------
# Pallas kernel: neighbourhood-encoder + fc1..fc3 + masked max pool +
#                fc1_global..fc3_global + fused output concat
# ----------------------------------------------------------------------------
def _middle_encoder_kernel(packed_ref, w01_ref, wsq_ref, b_ref, out_ref,
                           *, tm, k):
    # packed_ref: [tm*k, CH] bf16, CH = 3 (rel) + C (feat) + 1 (mask channel).
    # w01_ref:    [CH, 2*LANE] bf16 — encoder columns [0:128] and fc1's
    #             rel/feat columns [128:256]; the mask-channel row is 1.0
    #             across the encoder half (pre-ReLU kill of invalid rows) and
    #             1.0 only in column 255 (mask transport lane).
    # wsq_ref:    [LANE, 6*LANE] bf16 — [w1_enc | W2 | W3 | Wg1 | Wg2 | Wg3].
    # b_ref:      [8, LANE] f32 — rows bn, b1, b2, b3, bg1, bg2, bg3, 0.
    f32 = jnp.float32
    bf16 = jnp.bfloat16

    def wsq(i):                      # static lane slice of the stacked weights
        return wsq_ref[:, i * LANE:(i + 1) * LANE]

    # One bf16 MXU pass over the packed stream covers BOTH the neighbourhood
    # encoder and the rel/feat half of fc1 (column-concatenated weights).
    h01 = jnp.dot(packed_ref[...], w01_ref[...],
                  preferred_element_type=f32)                 # [tm*k, 2*LANE]

    # Additive mask (0 valid / NEG_BIG invalid) transported in lane 255.
    addmask = h01[:, 2 * LANE - 1:2 * LANE]                   # [tm*k, 1]

    # --- neighbourhood encoder: Linear + ReLU + per-cluster max -------------
    # Invalid rows have a <= NEG_BIG pre-activation (mask row of w01), so ReLU
    # zeroes them; every cluster contains its own centre (>= 1 valid
    # neighbour), so the plain max over K equals the reference's masked max
    # (the stand-in encoder ends in ReLU — see correctness note in the JSON).
    hn = jnp.maximum(h01[:, :LANE] + b_ref[0:1, :], 0.0)
    rel_enc = jnp.max(hn.reshape(tm, k, LANE), axis=1)        # [tm, LANE] f32

    # --- fc1 / fc2 / fc3 on every neighbour ----------------------------------
    h_enc = jnp.dot(rel_enc.astype(bf16), wsq(0), preferred_element_type=f32)
    h1 = h01[:, LANE:].reshape(tm, k, LANE) + h_enc[:, None, :] + b_ref[1:2, :]
    h1 = jnp.maximum(h1, 0.0).reshape(tm * k, LANE)
    h2 = jnp.maximum(
        jnp.dot(h1.astype(bf16), wsq(1), preferred_element_type=f32)
        + b_ref[2:3, :], 0.0)
    h3 = jnp.maximum(
        jnp.dot(h2.astype(bf16), wsq(2), preferred_element_type=f32)
        + b_ref[3:4, :], 0.0)

    # --- masked global max pool over each cluster ----------------------------
    mx = jnp.max((h3 + addmask).reshape(tm, k, LANE), axis=1)  # [tm, LANE]

    # --- fc1_global / fc2_global / fc3_global --------------------------------
    g1 = jnp.maximum(
        jnp.dot(mx.astype(bf16), wsq(3), preferred_element_type=f32)
        + b_ref[4:5, :], 0.0)
    g2 = jnp.maximum(
        jnp.dot(g1.astype(bf16), wsq(4), preferred_element_type=f32)
        + b_ref[5:6, :], 0.0)
    # Wg3 columns are pre-shifted to lanes [E:E+G3]; rel_enc occupies [0:E];
    # the fused cat([rel_enc, fc3_global]) is one lane-dense add and one full
    # 128-lane store (no masked vst).
    g3 = jnp.maximum(
        jnp.dot(g2.astype(bf16), wsq(5), preferred_element_type=f32)
        + b_ref[6:7, :], 0.0)
    out_ref[...] = rel_enc + g3


def middle_encoder_pallas(packed, w01, wsq, biases, *, tm, k):
    """packed: [m_pad*k, CH] bf16; returns [m_pad, LANE] f32."""
    mk, ch = packed.shape
    m_pad = mk // k
    assert m_pad * k == mk and m_pad % tm == 0
    assert k % 8 == 0 and tm % 8 == 0
    # Review guidance (v7x): keep tm <= 256 so the per-step working set (f32
    # intermediates ~ tm*k*(256+3*128)*4 B plus the lane-padded [tm*k, CH]
    # packed buffer ~ tm*k*128*2 B, double-buffered) stays well inside v7x's
    # 64 MiB physical VMEM; v5e/v6e (128 MiB) could go larger with a raised
    # vmem_limit_bytes.
    assert tm <= 256
    kernel = functools.partial(_middle_encoder_kernel, tm=tm, k=k)
    return pl.pallas_call(
        kernel,
        out_shape=jax.ShapeDtypeStruct((m_pad, LANE), jnp.float32),
        grid=(m_pad // tm,),
        in_specs=[
            pl.BlockSpec((tm * k, ch), lambda i: (i, 0)),
            pl.BlockSpec(w01.shape, lambda i: (0, 0)),
            pl.BlockSpec(wsq.shape, lambda i: (0, 0)),
            pl.BlockSpec(biases.shape, lambda i: (0, 0)),
        ],
        out_specs=pl.BlockSpec((tm, LANE), lambda i: (i, 0)),
        compiler_params=pltpu.CompilerParams(
            dimension_semantics=("parallel",),
            # <= physical VMEM on every generation (v7x: 64 MiB).
            vmem_limit_bytes=32 * 1024 * 1024),
    )(packed, w01, wsq, biases)


# ----------------------------------------------------------------------------
# Wrapper-side weight packing: 14 params -> 3 consolidated, lane-dense arrays
# ----------------------------------------------------------------------------
def _pack_params(params, *, P, C, E):
    (Wn, bn, W1, b1, W2, b2, W3, b3,
     Wg1, bg1, Wg2, bg2, Wg3, bg3) = params
    G3 = Wg3.shape[1]
    CH = P + C + 1                         # [rel | feat | mask]
    assert W1.shape[0] == P + E + C
    assert E + G3 <= LANE and E <= LANE
    assert W1.shape[1] < LANE              # lane 127 of the fc1 half reserved
    for w in (Wn, W1, W2, W3, Wg1, Wg2, Wg3):
        assert max(w.shape) <= LANE

    def pad2(w, rows, cols, row_off=0, col_off=0):
        out = jnp.zeros((rows, cols), jnp.float32)
        return out.at[row_off:row_off + w.shape[0],
                      col_off:col_off + w.shape[1]].set(w.astype(jnp.float32))

    mask_row = P + C
    # Encoder half; its mask-channel row forwards NEG_BIG into every lane so
    # invalid rows hit ReLU with a huge negative pre-activation.
    wn_p = pad2(Wn, CH, LANE).at[mask_row, :].set(1.0)
    # fc1 rel/feat half, rows ordered to match the packed stream [rel | feat]
    # (original W1 row order is [rel, enc, feat]); lane 127 transports the
    # additive mask through the matmul into h01[:, 255].
    w1_rel, w1_enc, w1_feat = W1[:P], W1[P:P + E], W1[P + E:P + E + C]
    w1_pf = pad2(jnp.concatenate([w1_rel, w1_feat], axis=0), CH, LANE)
    w1_pf = w1_pf.at[mask_row, LANE - 1].set(1.0)
    w01 = jnp.concatenate([wn_p, w1_pf], axis=1).astype(jnp.bfloat16)

    wsq = jnp.concatenate([
        pad2(w1_enc, LANE, LANE), pad2(W2, LANE, LANE), pad2(W3, LANE, LANE),
        pad2(Wg1, LANE, LANE), pad2(Wg2, LANE, LANE),
        pad2(Wg3, LANE, LANE, col_off=E),   # shift fc3_global to lanes [E:E+G3]
    ], axis=1).astype(jnp.bfloat16)          # [LANE, 6*LANE]

    biases = jnp.zeros((8, LANE), jnp.float32)
    for row, (b, off) in enumerate(((bn, 0), (b1, 0), (b2, 0), (b3, 0),
                                    (bg1, 0), (bg2, 0), (bg3, E))):
        bb = jnp.asarray(b, jnp.float32).reshape(-1)
        biases = biases.at[row, off:off + bb.shape[0]].set(bb)
    return w01, wsq, biases


# ----------------------------------------------------------------------------
# Plain-JAX glue: deterministic FPS + dense radius query (graph construction)
# ----------------------------------------------------------------------------
def fps_one_segment(pts, n_samples):
    """Farthest point sampling on one batch segment (deterministic start @ 0)."""
    N = pts.shape[0]

    def body(i, state):
        min_d2, idxs = state
        last = idxs[i - 1]
        d2 = jnp.sum((pts - pts[last]) ** 2, axis=-1)
        min_d2 = jnp.minimum(min_d2, d2)
        idxs = idxs.at[i].set(jnp.argmax(min_d2).astype(jnp.int32))
        return min_d2, idxs

    min_d2 = jnp.full((N,), jnp.inf, dtype=pts.dtype)
    idxs = jnp.zeros((n_samples,), dtype=jnp.int32)
    _, idxs = jax.lax.fori_loop(1, n_samples, body, (min_d2, idxs))
    return idxs


def build_dense_neighborhoods(points, features, batch, fps_points, fps_batch,
                              r, K):
    """Dense radius query: first K in-radius, same-batch points per centre."""
    N = points.shape[0]
    d2 = jnp.sum((fps_points[:, None, :] - points[None, :, :]) ** 2, axis=-1)
    valid = (d2 <= r * r) & (fps_batch[:, None] == batch[None, :])
    idx_row = jnp.broadcast_to(jnp.arange(N)[None, :], valid.shape)
    key = jnp.where(valid, idx_row, idx_row + N)
    order = jnp.argsort(key, axis=1)[:, :K]                   # [M, K]
    neigh_valid = jnp.take_along_axis(valid, order, axis=1)   # [M, K]
    rel = (points[order] - fps_points[:, None, :]) / r        # [M, K, 3]
    rel = jnp.where(neigh_valid[..., None], rel, 0.0)
    nfeat = jnp.where(neigh_valid[..., None], features[order], 0.0)
    return rel, nfeat, neigh_valid


def _pick_tm(m, cap=128):
    """>= 4 grid steps (v7x: 2 TensorCores x >= 2 pipelined steps each),
    capped so the per-step VMEM working set stays small on 64 MiB parts."""
    return max(8, min(cap, (m // 4) // 8 * 8))


def old_middle_encoder_forward(params, points, features, batch, *,
                               nb_neighbors, radius_r, max_neighbors,
                               num_batches, tm=None, input_dtype=jnp.bfloat16):
    # TODO(synk): gnn.fps / gnn.radius have no Pallas equivalent; the dense
    # O(M*N) radius query below is plain-JAX glue and will dominate for big N.
    Wn = params[0]
    P = points.shape[-1]
    C = features.shape[-1]
    E = Wn.shape[-1]
    G3 = params[-2].shape[-1]
    N = points.shape[0]
    n_per = N // num_batches
    n_samples = max(1, math.ceil(n_per / nb_neighbors))   # ratio = 1/nb_neighbors

    fps_idx = []
    for b in range(num_batches):
        seg = points[b * n_per:(b + 1) * n_per]
        fps_idx.append(fps_one_segment(seg, n_samples) + b * n_per)
    fps_indices = jnp.concatenate(fps_idx)                 # [M]
    fps_points = points[fps_indices]                       # [M, 3]
    fps_batch = batch[fps_indices]                         # [M]

    K = _round_up(max_neighbors, 8)                        # keep K 8-aligned
    rel, nfeat, valid = build_dense_neighborhoods(
        points, features, batch, fps_points, fps_batch, radius_r, K)

    M = fps_points.shape[0]
    if tm is None:
        tm = _pick_tm(M)
    m_pad = _round_up(M, tm)

    # Pack [rel | feat | additive mask] into ONE [M*K, P+C+1] bf16 stream (one
    # input DMA per tile, consumed by a single bf16 MXU pass in the kernel;
    # all in-kernel accumulation is f32).
    addmask = jnp.where(valid, 0.0, NEG_BIG).astype(jnp.float32)[..., None]
    packed = jnp.concatenate(
        [rel.astype(jnp.float32), nfeat.astype(jnp.float32), addmask], axis=-1)
    # Padded clusters (rows M..m_pad) compute finite garbage and are sliced off.
    packed = jnp.pad(packed, ((0, m_pad - M), (0, 0), (0, 0)))
    packed = packed.reshape(m_pad * K, P + C + 1).astype(input_dtype)

    w01, wsq, biases = _pack_params(params, P=P, C=C, E=E)
    out_full = middle_encoder_pallas(packed, w01, wsq, biases, tm=tm, k=K)
    output_features = out_full[:M, :E + G3]     # [rel_enc | fc3_global]
    return fps_points, output_features, fps_batch


# ----------------------------------------------------------------------------
# Pure-jnp reference of the densified hot path (for the sanity check)
# ----------------------------------------------------------------------------
def ref_dense(rel, feats, valid, params):
    (Wn, bn, W1, b1, W2, b2, W3, b3,
     Wg1, bg1, Wg2, bg2, Wg3, bg3) = params
    neg = jnp.float32(-1e30)
    M, K, _ = rel.shape
    E = Wn.shape[-1]
    mask = valid[..., None]
    hn = jnp.maximum(rel @ Wn + bn, 0.0)
    rel_enc = jnp.max(jnp.where(mask, hn, neg), axis=1)
    fc_in = jnp.concatenate(
        [rel, jnp.broadcast_to(rel_enc[:, None, :], (M, K, E)), feats], axis=-1)
    h1 = jnp.maximum(fc_in @ W1 + b1, 0.0)
    h2 = jnp.maximum(h1 @ W2 + b2, 0.0)
    h3 = jnp.maximum(h2 @ W3 + b3, 0.0)
    mx = jnp.max(jnp.where(mask, h3, neg), axis=1)
    g1 = jnp.maximum(mx @ Wg1 + bg1, 0.0)
    g2 = jnp.maximum(g1 @ Wg2 + bg2, 0.0)
    g3 = jnp.maximum(g2 @ Wg3 + bg3, 0.0)
    return jnp.concatenate([rel_enc, g3], axis=-1)


def init_linear(key, fan_in, fan_out):
    k1, k2 = jax.random.split(key)
    bound = 1.0 / np.sqrt(fan_in)
    W = jax.random.uniform(k1, (fan_in, fan_out), jnp.float32, -bound, bound)
    b = jax.random.uniform(k2, (1, fan_out), jnp.float32, -bound, bound)
    return W, b


if __name__ == "__main__":
    NUM_BATCHES = 2
    N_PER_BATCH = 1024
    N = NUM_BATCHES * N_PER_BATCH
    C_IN = 4                          # per-point feature dim
    ENC_DIM = 8                       # neighbourhood-encoder output dim
    FEATURES = (32, 64, 32)           # fc1 / fc2 / fc3
    FEATURES_GLOBAL = (64, 32, 16)    # fc1_global / fc2_global / fc3_global
    NB_NEIGHBORS = 8                  # ratio = 1/8 -> 128 fps points per batch
    RADIUS = 0.12
    MAX_NEIGHBORS = 16                # K (cf. torch_geometric radius cap)
    INPUT_SIZE = 3 + ENC_DIM + C_IN   # fc1 input = cat([rel, rel_enc, feats])

    key = jax.random.PRNGKey(0)
    keys = jax.random.split(key, 9)
    points = jax.random.uniform(keys[0], (N, 3), jnp.float32)
    features = jax.random.normal(keys[1], (N, C_IN), jnp.float32)
    batch = jnp.repeat(jnp.arange(NUM_BATCHES, dtype=jnp.int32), N_PER_BATCH)

    Wn, bn = init_linear(keys[2], 3, ENC_DIM)        # neighbourhood enc (stand-in)
    W1, b1 = init_linear(keys[3], INPUT_SIZE, FEATURES[0])
    W2, b2 = init_linear(keys[4], FEATURES[0], FEATURES[1])
    W3, b3 = init_linear(keys[5], FEATURES[1], FEATURES[2])
    Wg1, bg1 = init_linear(keys[6], FEATURES[2], FEATURES_GLOBAL[0])
    Wg2, bg2 = init_linear(keys[7], FEATURES_GLOBAL[0], FEATURES_GLOBAL[1])
    Wg3, bg3 = init_linear(keys[8], FEATURES_GLOBAL[1], FEATURES_GLOBAL[2])
    params = (Wn, bn, W1, b1, W2, b2, W3, b3, Wg1, bg1, Wg2, bg2, Wg3, bg3)

    fps_points, output_features, fps_batch = old_middle_encoder_forward(
        params, points, features, batch,
        nb_neighbors=NB_NEIGHBORS, radius_r=RADIUS,
        max_neighbors=MAX_NEIGHBORS, num_batches=NUM_BATCHES)
    jax.block_until_ready(output_features)

    M = NUM_BATCHES * (N_PER_BATCH // NB_NEIGHBORS)   # 256 -> tm=64, grid=4
    assert fps_points.shape == (M, 3)
    assert fps_batch.shape == (M,)
    assert output_features.shape == (M, ENC_DIM + FEATURES_GLOBAL[2])

    # Check the fused Pallas hot path against a pure-jnp dense reference fed
    # the SAME bf16-rounded rel/feat values and bf16-rounded weight matrices
    # the kernel consumes (biases and accumulation stay f32 in both).
    K = _round_up(MAX_NEIGHBORS, 8)
    rel, nfeat, valid = build_dense_neighborhoods(
        points, features, batch, fps_points, fps_batch, RADIUS, K)
    q = lambda x: x.astype(jnp.bfloat16).astype(jnp.float32)
    params_q = (q(Wn), bn, q(W1), b1, q(W2), b2, q(W3), b3,
                q(Wg1), bg1, q(Wg2), bg2, q(Wg3), bg3)
    ref_out = ref_dense(q(rel), q(nfeat), valid, params_q)

    np.testing.assert_allclose(np.asarray(output_features), np.asarray(ref_out),
                               rtol=5e-2, atol=5e-2)
    print("KERNEL_OK")
</pallas_src>

<mosaic_0001>
module attributes {stable_mosaic.version = 11 : i64} {
  func.func @_middle_encoder_kernel(%arg0: i32, %arg1: memref<1024x8xbf16, #tpu.memory_space<vmem>>, %arg2: memref<8x256xbf16, #tpu.memory_space<vmem>>, %arg3: memref<128x768xbf16, #tpu.memory_space<vmem>>, %arg4: memref<8x128xf32, #tpu.memory_space<vmem>>, %arg5: memref<64x128xf32, #tpu.memory_space<vmem>>) attributes {dimension_semantics = [#tpu.dimension_semantics<parallel>], iteration_bounds = array<i64: 4>, scalar_prefetch = 0 : i64, scratch_operands = 0 : i64, tpu.core_type = #tpu.core_type<tc>, window_params = [{transform_indices = @transform_0, window_bounds = array<i64: 1024, 8>}, {pipeline_mode = #tpu.pipeline_mode<synchronous>, transform_indices = @transform_1, window_bounds = array<i64: 8, 256>}, {pipeline_mode = #tpu.pipeline_mode<synchronous>, transform_indices = @transform_2, window_bounds = array<i64: 128, 768>}, {pipeline_mode = #tpu.pipeline_mode<synchronous>, transform_indices = @transform_3, window_bounds = array<i64: 8, 128>}, {transform_indices = @transform_4, window_bounds = array<i64: 64, 128>}]} {
    %c0 = arith.constant 0 : index
    %c0_0 = arith.constant 0 : index
    %0 = vector.load %arg1[%c0, %c0_0] : memref<1024x8xbf16, #tpu.memory_space<vmem>>, vector<1024x8xbf16>
    %c0_1 = arith.constant 0 : index
    %c0_2 = arith.constant 0 : index
    %1 = vector.load %arg2[%c0_1, %c0_2] : memref<8x256xbf16, #tpu.memory_space<vmem>>, vector<8x256xbf16>
    %cst = arith.constant dense<0.000000e+00> : vector<1024x256xf32>
    %2 = tpu.matmul %0, %1, %cst {dimension_numbers = #tpu.dot_dimension_numbers<[1], [0], [0], [1], [0, 0, 1, 1], [], []>} : vector<1024x8xbf16>, vector<8x256xbf16>, vector<1024x256xf32> -> vector<1024x256xf32>
    %3 = vector.extract_strided_slice %2 {offsets = [0, 255], sizes = [1024, 1], strides = [1, 1]} : vector<1024x256xf32> to vector<1024x1xf32>
    %4 = vector.extract_strided_slice %2 {offsets = [0, 0], sizes = [1024, 128], strides = [1, 1]} : vector<1024x256xf32> to vector<1024x128xf32>
    %c0_3 = arith.constant 0 : index
    %c0_4 = arith.constant 0 : index
    %5 = vector.load %arg4[%c0_3, %c0_4] : memref<8x128xf32, #tpu.memory_space<vmem>>, vector<1x128xf32>
    %6 = vector.broadcast %5 : vector<1x128xf32> to vector<1024x128xf32>
    %7 = arith.addf %4, %6 : vector<1024x128xf32>
    %cst_5 = arith.constant 0.000000e+00 : f32
    %8 = vector.broadcast %cst_5 : f32 to vector<1024x128xf32>
    %9 = arith.maximumf %7, %8 : vector<1024x128xf32>
    %10 = vector.shape_cast %9 : vector<1024x128xf32> to vector<64x16x128xf32>
    %cst_6 = arith.constant dense<0xFF800000> : vector<64x128xf32>
    %11 = vector.multi_reduction <maximumf>, %10, %cst_6 [1] : vector<64x16x128xf32> to vector<64x128xf32>
    %12 = arith.truncf %11 : vector<64x128xf32> to vector<64x128xbf16>
    %c0_7 = arith.constant 0 : index
    %c0_8 = arith.constant 0 : index
    %13 = vector.load %arg3[%c0_7, %c0_8] : memref<128x768xbf16, #tpu.memory_space<vmem>>, vector<128x128xbf16>
    %cst_9 = arith.constant dense<0.000000e+00> : vector<64x128xf32>
    %14 = tpu.matmul %12, %13, %cst_9 {dimension_numbers = #tpu.dot_dimension_numbers<[1], [0], [0], [1], [0, 0, 1, 1], [], []>} : vector<64x128xbf16>, vector<128x128xbf16>, vector<64x128xf32> -> vector<64x128xf32>
    %15 = vector.extract_strided_slice %2 {offsets = [0, 128], sizes = [1024, 128], strides = [1, 1]} : vector<1024x256xf32> to vector<1024x128xf32>
    %16 = vector.shape_cast %15 : vector<1024x128xf32> to vector<64x16x128xf32>
    %17 = vector.shape_cast %14 : vector<64x128xf32> to vector<64x1x128xf32>
    %18 = vector.broadcast %17 : vector<64x1x128xf32> to vector<64x16x128xf32>
    %19 = arith.addf %16, %18 : vector<64x16x128xf32>
    %c1 = arith.constant 1 : index
    %c0_10 = arith.constant 0 : index
    %20 = vector.load %arg4[%c1, %c0_10] : memref<8x128xf32, #tpu.memory_space<vmem>>, vector<1x128xf32>
    %21 = vector.shape_cast %20 : vector<1x128xf32> to vector<1x1x128xf32>
    %22 = vector.broadcast %21 : vector<1x1x128xf32> to vector<64x16x128xf32>
    %23 = arith.addf %19, %22 : vector<64x16x128xf32>
    %cst_11 = arith.constant 0.000000e+00 : f32
    %24 = vector.broadcast %cst_11 : f32 to vector<64x16x128xf32>
    %25 = arith.maximumf %23, %24 : vector<64x16x128xf32>
    %26 = vector.shape_cast %25 : vector<64x16x128xf32> to vector<1024x128xf32>
    %27 = arith.truncf %26 : vector<1024x128xf32> to vector<1024x128xbf16>
    %c0_12 = arith.constant 0 : index
    %c128 = arith.constant 128 : index
    %28 = vector.load %arg3[%c0_12, %c128] : memref<128x768xbf16, #tpu.memory_space<vmem>>, vector<128x128xbf16>
    %cst_13 = arith.constant dense<0.000000e+00> : vector<1024x128xf32>
    %29 = tpu.matmul %27, %28, %cst_13 {dimension_numbers = #tpu.dot_dimension_numbers<[1], [0], [0], [1], [0, 0, 1, 1], [], []>} : vector<1024x128xbf16>, vector<128x128xbf16>, vector<1024x128xf32> -> vector<1024x128xf32>
    %c2 = arith.constant 2 : index
    %c0_14 = arith.constant 0 : index
    %30 = vector.load %arg4[%c2, %c0_14] : memref<8x128xf32, #tpu.memory_space<vmem>>, vector<1x128xf32>
    %31 = vector.broadcast %30 : vector<1x128xf32> to vector<1024x128xf32>
    %32 = arith.addf %29, %31 : vector<1024x128xf32>
    %cst_15 = arith.constant 0.000000e+00 : f32
    %33 = vector.broadcast %cst_15 : f32 to vector<1024x128xf32>
    %34 = arith.maximumf %32, %33 : vector<1024x128xf32>
    %35 = arith.truncf %34 : vector<1024x128xf32> to vector<1024x128xbf16>
    %c0_16 = arith.constant 0 : index
    %c256 = arith.constant 256 : index
    %36 = vector.load %arg3[%c0_16, %c256] : memref<128x768xbf16, #tpu.memory_space<vmem>>, vector<128x128xbf16>
    %cst_17 = arith.constant dense<0.000000e+00> : vector<1024x128xf32>
    %37 = tpu.matmul %35, %36, %cst_17 {dimension_numbers = #tpu.dot_dimension_numbers<[1], [0], [0], [1], [0, 0, 1, 1], [], []>} : vector<1024x128xbf16>, vector<128x128xbf16>, vector<1024x128xf32> -> vector<1024x128xf32>
    %c3 = arith.constant 3 : index
    %c0_18 = arith.constant 0 : index
    %38 = vector.load %arg4[%c3, %c0_18] : memref<8x128xf32, #tpu.memory_space<vmem>>, vector<1x128xf32>
    %39 = vector.broadcast %38 : vector<1x128xf32> to vector<1024x128xf32>
    %40 = arith.addf %37, %39 : vector<1024x128xf32>
    %cst_19 = arith.constant 0.000000e+00 : f32
    %41 = vector.broadcast %cst_19 : f32 to vector<1024x128xf32>
    %42 = arith.maximumf %40, %41 : vector<1024x128xf32>
    %43 = vector.broadcast %3 : vector<1024x1xf32> to vector<1024x128xf32>
    %44 = arith.addf %42, %43 : vector<1024x128xf32>
    %45 = vector.shape_cast %44 : vector<1024x128xf32> to vector<64x16x128xf32>
    %cst_20 = arith.constant dense<0xFF800000> : vector<64x128xf32>
    %46 = vector.multi_reduction <maximumf>, %45, %cst_20 [1] : vector<64x16x128xf32> to vector<64x128xf32>
    %47 = arith.truncf %46 : vector<64x128xf32> to vector<64x128xbf16>
    %c0_21 = arith.constant 0 : index
    %c384 = arith.constant 384 : index
    %48 = vector.load %arg3[%c0_21, %c384] : memref<128x768xbf16, #tpu.memory_space<vmem>>, vector<128x128xbf16>
    %cst_22 = arith.constant dense<0.000000e+00> : vector<64x128xf32>
    %49 = tpu.matmul %47, %48, %cst_22 {dimension_numbers = #tpu.dot_dimension_numbers<[1], [0], [0], [1], [0, 0, 1, 1], [], []>} : vector<64x128xbf16>, vector<128x128xbf16>, vector<64x128xf32> -> vector<64x128xf32>
    %c4 = arith.constant 4 : index
    %c0_23 = arith.constant 0 : index
    %50 = vector.load %arg4[%c4, %c0_23] : memref<8x128xf32, #tpu.memory_space<vmem>>, vector<1x128xf32>
    %51 = vector.broadcast %50 : vector<1x128xf32> to vector<64x128xf32>
    %52 = arith.addf %49, %51 : vector<64x128xf32>
    %cst_24 = arith.constant 0.000000e+00 : f32
    %53 = vector.broadcast %cst_24 : f32 to vector<64x128xf32>
    %54 = arith.maximumf %52, %53 : vector<64x128xf32>
    %55 = arith.truncf %54 : vector<64x128xf32> to vector<64x128xbf16>
    %c0_25 = arith.constant 0 : index
    %c512 = arith.constant 512 : index
    %56 = vector.load %arg3[%c0_25, %c512] : memref<128x768xbf16, #tpu.memory_space<vmem>>, vector<128x128xbf16>
    %cst_26 = arith.constant dense<0.000000e+00> : vector<64x128xf32>
    %57 = tpu.matmul %55, %56, %cst_26 {dimension_numbers = #tpu.dot_dimension_numbers<[1], [0], [0], [1], [0, 0, 1, 1], [], []>} : vector<64x128xbf16>, vector<128x128xbf16>, vector<64x128xf32> -> vector<64x128xf32>
    %c5 = arith.constant 5 : index
    %c0_27 = arith.constant 0 : index
    %58 = vector.load %arg4[%c5, %c0_27] : memref<8x128xf32, #tpu.memory_space<vmem>>, vector<1x128xf32>
    %59 = vector.broadcast %58 : vector<1x128xf32> to vector<64x128xf32>
    %60 = arith.addf %57, %59 : vector<64x128xf32>
    %cst_28 = arith.constant 0.000000e+00 : f32
    %61 = vector.broadcast %cst_28 : f32 to vector<64x128xf32>
    %62 = arith.maximumf %60, %61 : vector<64x128xf32>
    %63 = arith.truncf %62 : vector<64x128xf32> to vector<64x128xbf16>
    %c0_29 = arith.constant 0 : index
    %c640 = arith.constant 640 : index
    %64 = vector.load %arg3[%c0_29, %c640] : memref<128x768xbf16, #tpu.memory_space<vmem>>, vector<128x128xbf16>
    %cst_30 = arith.constant dense<0.000000e+00> : vector<64x128xf32>
    %65 = tpu.matmul %63, %64, %cst_30 {dimension_numbers = #tpu.dot_dimension_numbers<[1], [0], [0], [1], [0, 0, 1, 1], [], []>} : vector<64x128xbf16>, vector<128x128xbf16>, vector<64x128xf32> -> vector<64x128xf32>
    %c6 = arith.constant 6 : index
    %c0_31 = arith.constant 0 : index
    %66 = vector.load %arg4[%c6, %c0_31] : memref<8x128xf32, #tpu.memory_space<vmem>>, vector<1x128xf32>
    %67 = vector.broadcast %66 : vector<1x128xf32> to vector<64x128xf32>
    %68 = arith.addf %65, %67 : vector<64x128xf32>
    %cst_32 = arith.constant 0.000000e+00 : f32
    %69 = vector.broadcast %cst_32 : f32 to vector<64x128xf32>
    %70 = arith.maximumf %68, %69 : vector<64x128xf32>
    %71 = arith.addf %11, %70 : vector<64x128xf32>
    %c0_33 = arith.constant 0 : index
    %c0_34 = arith.constant 0 : index
    %72 = vector.load %arg5[%c0_33, %c0_34] : memref<64x128xf32, #tpu.memory_space<vmem>>, vector<64x128xf32>
    tpu.vector_store %arg5[%c0_33, %c0_34], %71 {strides = array<i32>} : memref<64x128xf32, #tpu.memory_space<vmem>>, vector<64x128xf32>,
    return
  }
  func.func @transform_0(%arg0: i32) -> (i32, i32) {
    %c0_i32 = arith.constant 0 : i32
    %c0_i32_0 = arith.constant 0 : i32
    return %arg0, %c0_i32 : i32, i32
  }
  func.func @transform_1(%arg0: i32) -> (i32, i32) {
    %c0_i32 = arith.constant 0 : i32
    %c0_i32_0 = arith.constant 0 : i32
    %c0_i32_1 = arith.constant 0 : i32
    return %c0_i32, %c0_i32_0 : i32, i32
  }
  func.func @transform_2(%arg0: i32) -> (i32, i32) {
    %c0_i32 = arith.constant 0 : i32
    %c0_i32_0 = arith.constant 0 : i32
    %c0_i32_1 = arith.constant 0 : i32
    return %c0_i32, %c0_i32_0 : i32, i32
  }
  func.func @transform_3(%arg0: i32) -> (i32, i32) {
    %c0_i32 = arith.constant 0 : i32
    %c0_i32_0 = arith.constant 0 : i32
    %c0_i32_1 = arith.constant 0 : i32
    return %c0_i32, %c0_i32_0 : i32, i32
  }
  func.func @transform_4(%arg0: i32) -> (i32, i32) {
    %c0_i32 = arith.constant 0 : i32
    %c0_i32_0 = arith.constant 0 : i32
    return %arg0, %c0_i32 : i32, i32
  }
}

</mosaic_0001>

<llo_original>
// kernel: tpu_custom_call.1
$region0: #{tpu_custom_call.1}
  #allocation0 [shape = 'u32[]', space=smem, size = 0x4, offset = 0x4, fixed_abs, tag = 'smem constant byte address 0x4 - core index']
  #allocation1 [shape = 'u32[144,128]{1,0:T(1,128)}', space=vmem, size = 0x12000, scoped, tag = 'internal scratch']
  %s0 = inlined_call_operand.vmem [shape: bf16[4096,8], index: 0, kind: input, shape index: {}]
  %s1 = inlined_call_operand.vmem [shape: bf16[8,256], index: 1, kind: input, shape index: {}]
  %s2 = inlined_call_operand.vmem [shape: bf16[128,768], index: 2, kind: input, shape index: {}]
  %s3 = inlined_call_operand.vmem [shape: f32[8,128], index: 3, kind: input, shape index: {}]
  %s4 = inlined_call_operand.hbm [shape: f32[256,128], index: 4, kind: output, shape index: {}]
  %s5 = sld [smem:[#allocation0]]
  $region49: #{tpu_custom_call.1} parent=0
    _
  %s7 = ssub.s32 1, %s5
  %s8 = scalar_select 0, %s7, %s5
  $region1: #{tpu_custom_call.1} parent=0
    #allocation2 [shape = 'u8[65536]{0}', space=vmem, size = 0x10000, scoped, tag = 'output window, operand 0']
    #allocation3 [shape = 's32[2]{0}', space=sflag, size = 0x8, scoped, tag = 'scoped memory for tpu_custom_call.1']
    %9 = vsyncpa [#allocation3], 0
    %s10 = scalar_lea.sflag [#allocation3], 1
    %11 = vsyncpa %s10, 0
    loop: start=0, step=1, limit=6
    $region2: #{tpu_custom_call.1} parent=1 // loop_pre_header
      _
    $region3: #{tpu_custom_call.1} parent=1 // loop_header
      %s13 = sphi 0, %s17
      %p14 = scmp.ge.s32.totalorder %s13, 6
      %s23 = sphi 0, %s25
      %s26 = sphi 0, %s23
      %s27 = sphi 0, %s26
      %s43 = sphi 0, %s27
      %s47 = sphi 0, %s47
      %s49 = sphi 0, %s47
      %s50 = sphi 0, %s49
      %s64 = sphi 0, %s50
      %s68 = sphi 0, %s68
      %s70 = sphi 0, %s68
      %s71 = sphi 0, %s70
      %s85 = sphi 0, %s71
      %s89 = sphi 0, %s89
      %s91 = sphi 0, %s89
      %s92 = sphi 0, %s91
      %s106 = sphi 0, %s92
      %s112 = sphi 0, %s114
      %s115 = sphi 0, %s112
      %s116 = sphi 0, %s115
      %s132 = sphi 0, %s116
    $region4: #{tpu_custom_call.1} parent=1 // loop_header_branch
      %16 = sbr.rel (%p14) target = $region8
    $region5: #{tpu_custom_call.1} parent=1 // loop_body
      %s18 = ssub.s32 %s13, 1
      %s19 = ssub.s32 %s13, 2
      %s20 = sadd.s32 %s13, 1
      %s21 = ssub.s32 %s13, %s20
      %p22 = scmp.eq.s32.totalorder %s21, 0
      %s24 = sadd.s32 %s23, 1
      %s25 = scalar_select %p22, %s23, %s24
      %p28 = pneg %p22
      %p29 = scmp.eq.s32.totalorder %s13, 3
      %p30 = por %p28, %p29
      %p31 = scmp.ne.s32.totalorder %s23, %s26
      %p32 = scmp.eq.s32.totalorder %s13, 0
      %p33 = por %p31, %p32
      %p34 = scmp.ne.s32.totalorder %s23, %s26
      %p35 = scmp.eq.s32.totalorder %s18, 3
      %p36 = por %p34, %p35
      %p37 = scmp.ne.s32.totalorder %s26, %s27
      %p38 = scmp.eq.s32.totalorder %s18, 0
      %p39 = por %p37, %p38
      %p40 = scmp.ne.s32.totalorder %s26, %s27
      %p41 = scmp.eq.s32.totalorder %s19, 3
      %p42 = por %p40, %p41
      %p44 = scmp.ne.s32.totalorder %s27, %s43
      %p45 = scmp.eq.s32.totalorder %s19, 0
      %p46 = por %p44, %p45
      %s48 = sadd.s32 %s47, 1
      %p51 = scmp.eq.s32.totalorder %s13, 3
      %p52 = scmp.ne.s32.totalorder %s47, %s49
      %p53 = scmp.eq.s32.totalorder %s13, 0
      %p54 = por %p52, %p53
      %p55 = scmp.ne.s32.totalorder %s47, %s49
      %p56 = scmp.eq.s32.totalorder %s18, 3
      %p57 = por %p55, %p56
      %p58 = scmp.ne.s32.totalorder %s49, %s50
      %p59 = scmp.eq.s32.totalorder %s18, 0
      %p60 = por %p58, %p59
      %p61 = scmp.ne.s32.totalorder %s49, %s50
      %p62 = scmp.eq.s32.totalorder %s19, 3
      %p63 = por %p61, %p62
      %p65 = scmp.ne.s32.totalorder %s50, %s64
      %p66 = scmp.eq.s32.totalorder %s19, 0
      %p67 = por %p65, %p66
      %s69 = sadd.s32 %s68, 1
      %p72 = scmp.eq.s32.totalorder %s13, 3
      %p73 = scmp.ne.s32.totalorder %s68, %s70
      %p74 = scmp.eq.s32.totalorder %s13, 0
      %p75 = por %p73, %p74
      %p76 = scmp.ne.s32.totalorder %s68, %s70
      %p77 = scmp.eq.s32.totalorder %s18, 3
      %p78 = por %p76, %p77
      %p79 = scmp.ne.s32.totalorder %s70, %s71
      %p80 = scmp.eq.s32.totalorder %s18, 0
      %p81 = por %p79, %p80
      %p82 = scmp.ne.s32.totalorder %s70, %s71
      %p83 = scmp.eq.s32.totalorder %s19, 3
      %p84 = por %p82, %p83
      %p86 = scmp.ne.s32.totalorder %s71, %s85
      %p87 = scmp.eq.s32.totalorder %s19, 0
      %p88 = por %p86, %p87
      %s90 = sadd.s32 %s89, 1
      %p93 = scmp.eq.s32.totalorder %s13, 3
      %p94 = scmp.ne.s32.totalorder %s89, %s91
      %p95 = scmp.eq.s32.totalorder %s13, 0
      %p96 = por %p94, %p95
      %p97 = scmp.ne.s32.totalorder %s89, %s91
      %p98 = scmp.eq.s32.totalorder %s18, 3
      %p99 = por %p97, %p98
      %p100 = scmp.ne.s32.totalorder %s91, %s92
      %p101 = scmp.eq.s32.totalorder %s18, 0
      %p102 = por %p100, %p101
      %p103 = scmp.ne.s32.totalorder %s91, %s92
      %p104 = scmp.eq.s32.totalorder %s19, 3
      %p105 = por %p103, %p104
      %p107 = scmp.ne.s32.totalorder %s92, %s106
      %p108 = scmp.eq.s32.totalorder %s19, 0
      %p109 = por %p107, %p108
      %s110 = ssub.s32 %s13, %s20
      %p111 = scmp.eq.s32.totalorder %s110, 0
      %s113 = sadd.s32 %s112, 1
      %s114 = scalar_select %p111, %s112, %s113
      %p117 = pneg %p111
      %p118 = scmp.eq.s32.totalorder %s13, 3
      %p119 = por %p117, %p118
      %p120 = scmp.ne.s32.totalorder %s112, %s115
      %p121 = scmp.eq.s32.totalorder %s13, 0
      %p122 = por %p120, %p121
      %p123 = scmp.ne.s32.totalorder %s112, %s115
      %p124 = scmp.eq.s32.totalorder %s18, 3
      %p125 = por %p123, %p124
      %p126 = scmp.ne.s32.totalorder %s115, %s116
      %p127 = scmp.eq.s32.totalorder %s18, 0
      %p128 = por %p126, %p127
      %p129 = scmp.ne.s32.totalorder %s115, %s116
      %p130 = scmp.eq.s32.totalorder %s19, 3
      %p131 = por %p129, %p130
      %p133 = scmp.ne.s32.totalorder %s116, %s132
      %p134 = scmp.eq.s32.totalorder %s19, 0
      %p135 = por %p133, %p134
      %p136 = scmp.le.s32.totalorder 1, %s13
      %p137 = scmp.lt.s32.totalorder %s13, 5
      %p138 = pnand %p136, %p137
      %p139 = pneg %p138
      // Predicated region
      $region9: #{tpu_custom_call.1} parent=5 // pred_check
        _
      $region10: #{tpu_custom_call.1} parent=5 // pred_check_branch
        %141 = sbr.rel (%p138) target = $region12
      $region11: #{tpu_custom_call.1} parent=5 // pred_region
        %s142 = ssub.s32 %s13, 1
        // Predicated region
        $region13: #{tpu_custom_call.1} parent=11 // pred_check
          %p143 = pneg %p60
        $region14: #{tpu_custom_call.1} parent=11 // pred_check_branch
          %145 = sbr.rel (%p143) target = $region16
        $region15: #{tpu_custom_call.1} parent=11 // pred_region
          _
        $region16: #{tpu_custom_call.1} parent=11 // pred_fallthru
          _
        // Predicated region
        $region17: #{tpu_custom_call.1} parent=11 // pred_check
          %p146 = pneg %p81
        $region18: #{tpu_custom_call.1} parent=11 // pred_check_branch
          %148 = sbr.rel (%p146) target = $region20
        $region19: #{tpu_custom_call.1} parent=11 // pred_region
          _
        $region20: #{tpu_custom_call.1} parent=11 // pred_fallthru
          _
        // Predicated region
        $region21: #{tpu_custom_call.1} parent=11 // pred_check
          %p149 = pneg %p102
        $region22: #{tpu_custom_call.1} parent=11 // pred_check_branch
          %151 = sbr.rel (%p149) target = $region24
        $region23: #{tpu_custom_call.1} parent=11 // pred_region
          _
        $region24: #{tpu_custom_call.1} parent=11 // pred_fallthru
          _
      $region12: #{tpu_custom_call.1} parent=5 // pred_fallthru
        _
      %p152 = scmp.lt.s32.totalorder %s13, 4
      // Predicated region
      $region25: #{tpu_custom_call.1} parent=5 // pred_check
        %p153 = pneg %p152
      $region26: #{tpu_custom_call.1} parent=5 // pred_check_branch
        %155 = sbr.rel (%p153) target = $region28
      $region27: #{tpu_custom_call.1} parent=5 // pred_region
        // Predicated region
        $region29: #{tpu_custom_call.1} parent=27 // pred_check
          %p156 = pneg %p33
        $region30: #{tpu_custom_call.1} parent=27 // pred_check_branch
          %158 = sbr.rel (%p156) target = $region32
        $region31: #{tpu_custom_call.1} parent=27 // pred_region
          %s159 = smul.u32 128, %s13
          %p160 = scmp.lt.s32.totalorder %s159, 511
          %s161 = scalar_select %p160, %s159, 511
          %s162 = smul.addr %s161, 4
          %s163 = scalar_lea.vmem %s0, %s162
          %s164 = smul.u32 128, %s13
        $region32: #{tpu_custom_call.1} parent=27 // pred_fallthru
          _
      $region28: #{tpu_custom_call.1} parent=5 // pred_fallthru
        _
      %p165 = scmp.le.s32.totalorder 1, %s13
      %p166 = scmp.lt.s32.totalorder %s13, 5
      %p167 = pnand %p165, %p166
      %p168 = pneg %p167
      // Predicated region
      $region33: #{tpu_custom_call.1} parent=5 // pred_check
        _
      $region34: #{tpu_custom_call.1} parent=5 // pred_check_branch
        %170 = sbr.rel (%p167) target = $region36
      $region35: #{tpu_custom_call.1} parent=5 // pred_region
        %s171 = ssub.s32 %s13, 1
        %s172 = smul.u32 128, %s18
        %p173 = scmp.lt.s32.totalorder %s172, 511
        %s174 = scalar_select %p173, %s172, 511
        %s175 = smul.addr %s174, 4
        %s176 = scalar_lea.vmem %s0, %s175
        %p177 = pneg %p39
        %p178 = pneg %p36
        %p179 = pneg %p60
        %p180 = pneg %p57
        %p181 = pneg %p81
        %p182 = pneg %p78
        %p183 = pneg %p102
        %p184 = pneg %p99
        %p185 = pneg %p128
        %p186 = pneg %p125
        %s187 = sand.u32 %s115, 1
        %s188 = scalar_lea.sflag [#allocation3], %s187
        %s189 = sand.u32 %s115, 1
        %s190 = smul.addr %s189, 64
        %s191 = scalar_lea.vmem [#allocation2], %s190
        %s192 = smul.u32 128, %s18
        %p193 = scmp.lt.s32.totalorder %s192, 511
        %s194 = scalar_select %p193, %s192, 511
        %s195 = smul.addr %s194, 4
        %s196 = scalar_lea.vmem %s0, %s195
        %s197 = smul.u32 128, %s18
        %s198 = smul.u32 8, %s18
        %v200 = vld [vmem:[%s196] sm:$0xf]
        %v201 = vld [vmem:[%s196 + $0x4] sm:$0xf]
        %v202 = vld [vmem:[%s196 + $0x8] sm:$0xf]
        %v203 = vld [vmem:[%s196 + $0xc] sm:$0xf]
        %v204 = vld [vmem:[%s196 + $0x10] sm:$0xf]
        %v205 = vld [vmem:[%s196 + $0x14] sm:$0xf]
        %v206 = vld [vmem:[%s196 + $0x18] sm:$0xf]
        %v207 = vld [vmem:[%s196 + $0x1c] sm:$0xf]
        %v208 = vld [vmem:[%s196 + $0x20] sm:$0xf]
        %v209 = vld [vmem:[%s196 + $0x24] sm:$0xf]
        %v210 = vld [vmem:[%s196 + $0x28] sm:$0xf]
        %v211 = vld [vmem:[%s196 + $0x2c] sm:$0xf]
        %v212 = vld [vmem:[%s196 + $0x30] sm:$0xf]
        %v213 = vld [vmem:[%s196 + $0x34] sm:$0xf]
        %v214 = vld [vmem:[%s196 + $0x38] sm:$0xf]
        %v215 = vld [vmem:[%s196 + $0x3c] sm:$0xf]
        %v216 = vld [vmem:[%s196 + $0x40] sm:$0xf]
        %v217 = vld [vmem:[%s196 + $0x44] sm:$0xf]
        %v218 = vld [vmem:[%s196 + $0x48] sm:$0xf]
        %v219 = vld [vmem:[%s196 + $0x4c] sm:$0xf]
        %v220 = vld [vmem:[%s196 + $0x50] sm:$0xf]
        %v221 = vld [vmem:[%s196 + $0x54] sm:$0xf]
        %v222 = vld [vmem:[%s196 + $0x58] sm:$0xf]
        %v223 = vld [vmem:[%s196 + $0x5c] sm:$0xf]
        %v224 = vld [vmem:[%s196 + $0x60] sm:$0xf]
        %v225 = vld [vmem:[%s196 + $0x64] sm:$0xf]
        %v226 = vld [vmem:[%s196 + $0x68] sm:$0xf]
        %v227 = vld [vmem:[%s196 + $0x6c] sm:$0xf]
        %v228 = vld [vmem:[%s196 + $0x70] sm:$0xf]
        %v229 = vld [vmem:[%s196 + $0x74] sm:$0xf]
        %v230 = vld [vmem:[%s196 + $0x78] sm:$0xf]
        %v231 = vld [vmem:[%s196 + $0x7c] sm:$0xf]
        %v232 = vld [vmem:[%s196 + $0x80] sm:$0xf]
        %v233 = vld [vmem:[%s196 + $0x84] sm:$0xf]
        %v234 = vld [vmem:[%s196 + $0x88] sm:$0xf]
        %v235 = vld [vmem:[%s196 + $0x8c] sm:$0xf]
        %v236 = vld [vmem:[%s196 + $0x90] sm:$0xf]
        %v237 = vld [vmem:[%s196 + $0x94] sm:$0xf]
        %v238 = vld [vmem:[%s196 + $0x98] sm:$0xf]
        %v239 = vld [vmem:[%s196 + $0x9c] sm:$0xf]
        %v240 = vld [vmem:[%s196 + $0xa0] sm:$0xf]
        %v241 = vld [vmem:[%s196 + $0xa4] sm:$0xf]
        %v242 = vld [vmem:[%s196 + $0xa8] sm:$0xf]
        %v243 = vld [vmem:[%s196 + $0xac] sm:$0xf]
        %v244 = vld [vmem:[%s196 + $0xb0] sm:$0xf]
        %v245 = vld [vmem:[%s196 + $0xb4] sm:$0xf]
        %v246 = vld [vmem:[%s196 + $0xb8] sm:$0xf]
        %v247 = vld [vmem:[%s196 + $0xbc] sm:$0xf]
        %v248 = vld [vmem:[%s196 + $0xc0] sm:$0xf]
        %v249 = vld [vmem:[%s196 + $0xc4] sm:$0xf]
        %v250 = vld [vmem:[%s196 + $0xc8] sm:$0xf]
        %v251 = vld [vmem:[%s196 + $0xcc] sm:$0xf]
        %v252 = vld [vmem:[%s196 + $0xd0] sm:$0xf]
        %v253 = vld [vmem:[%s196 + $0xd4] sm:$0xf]
        %v254 = vld [vmem:[%s196 + $0xd8] sm:$0xf]
        %v255 = vld [vmem:[%s196 + $0xdc] sm:$0xf]
        %v256 = vld [vmem:[%s196 + $0xe0] sm:$0xf]
        %v257 = vld [vmem:[%s196 + $0xe4] sm:$0xf]
        %v258 = vld [vmem:[%s196 + $0xe8] sm:$0xf]
        %v259 = vld [vmem:[%s196 + $0xec] sm:$0xf]
        %v260 = vld [vmem:[%s196 + $0xf0] sm:$0xf]
        %v261 = vld [vmem:[%s196 + $0xf4] sm:$0xf]
        %v262 = vld [vmem:[%s196 + $0xf8] sm:$0xf]
        %v263 = vld [vmem:[%s196 + $0xfc] sm:$0xf]
        %v264 = vld [vmem:[%s196 + $0x100] sm:$0xf]
        %v265 = vld [vmem:[%s196 + $0x104] sm:$0xf]
        %v266 = vld [vmem:[%s196 + $0x108] sm:$0xf]
        %v267 = vld [vmem:[%s196 + $0x10c] sm:$0xf]
        %v268 = vld [vmem:[%s196 + $0x110] sm:$0xf]
        %v269 = vld [vmem:[%s196 + $0x114] sm:$0xf]
        %v270 = vld [vmem:[%s196 + $0x118] sm:$0xf]
        %v271 = vld [vmem:[%s196 + $0x11c] sm:$0xf]
        %v272 = vld [vmem:[%s196 + $0x120] sm:$0xf]
        %v273 = vld [vmem:[%s196 + $0x124] sm:$0xf]
        %v274 = vld [vmem:[%s196 + $0x128] sm:$0xf]
        %v275 = vld [vmem:[%s196 + $0x12c] sm:$0xf]
        %v276 = vld [vmem:[%s196 + $0x130] sm:$0xf]
        %v277 = vld [vmem:[%s196 + $0x134] sm:$0xf]
        %v278 = vld [vmem:[%s196 + $0x138] sm:$0xf]
        %v279 = vld [vmem:[%s196 + $0x13c] sm:$0xf]
        %v280 = vld [vmem:[%s196 + $0x140] sm:$0xf]
        %v281 = vld [vmem:[%s196 + $0x144] sm:$0xf]
        %v282 = vld [vmem:[%s196 + $0x148] sm:$0xf]
        %v283 = vld [vmem:[%s196 + $0x14c] sm:$0xf]
        %v284 = vld [vmem:[%s196 + $0x150] sm:$0xf]
        %v285 = vld [vmem:[%s196 + $0x154] sm:$0xf]
        %v286 = vld [vmem:[%s196 + $0x158] sm:$0xf]
        %v287 = vld [vmem:[%s196 + $0x15c] sm:$0xf]
        %v288 = vld [vmem:[%s196 + $0x160] sm:$0xf]
        %v289 = vld [vmem:[%s196 + $0x164] sm:$0xf]
        %v290 = vld [vmem:[%s196 + $0x168] sm:$0xf]
        %v291 = vld [vmem:[%s196 + $0x16c] sm:$0xf]
        %v292 = vld [vmem:[%s196 + $0x170] sm:$0xf]
        %v293 = vld [vmem:[%s196 + $0x174] sm:$0xf]
        %v294 = vld [vmem:[%s196 + $0x178] sm:$0xf]
        %v295 = vld [vmem:[%s196 + $0x17c] sm:$0xf]
        %v296 = vld [vmem:[%s196 + $0x180] sm:$0xf]
        %v297 = vld [vmem:[%s196 + $0x184] sm:$0xf]
        %v298 = vld [vmem:[%s196 + $0x188] sm:$0xf]
        %v299 = vld [vmem:[%s196 + $0x18c] sm:$0xf]
        %v300 = vld [vmem:[%s196 + $0x190] sm:$0xf]
        %v301 = vld [vmem:[%s196 + $0x194] sm:$0xf]
        %v302 = vld [vmem:[%s196 + $0x198] sm:$0xf]
        %v303 = vld [vmem:[%s196 + $0x19c] sm:$0xf]
        %v304 = vld [vmem:[%s196 + $0x1a0] sm:$0xf]
        %v305 = vld [vmem:[%s196 + $0x1a4] sm:$0xf]
        %v306 = vld [vmem:[%s196 + $0x1a8] sm:$0xf]
        %v307 = vld [vmem:[%s196 + $0x1ac] sm:$0xf]
        %v308 = vld [vmem:[%s196 + $0x1b0] sm:$0xf]
        %v309 = vld [vmem:[%s196 + $0x1b4] sm:$0xf]
        %v310 = vld [vmem:[%s196 + $0x1b8] sm:$0xf]
        %v311 = vld [vmem:[%s196 + $0x1bc] sm:$0xf]
        %v312 = vld [vmem:[%s196 + $0x1c0] sm:$0xf]
        %v313 = vld [vmem:[%s196 + $0x1c4] sm:$0xf]
        %v314 = vld [vmem:[%s196 + $0x1c8] sm:$0xf]
        %v315 = vld [vmem:[%s196 + $0x1cc] sm:$0xf]
        %v316 = vld [vmem:[%s196 + $0x1d0] sm:$0xf]
        %v317 = vld [vmem:[%s196 + $0x1d4] sm:$0xf]
        %v318 = vld [vmem:[%s196 + $0x1d8] sm:$0xf]
        %v319 = vld [vmem:[%s196 + $0x1dc] sm:$0xf]
        %v320 = vld [vmem:[%s196 + $0x1e0] sm:$0xf]
        %v321 = vld [vmem:[%s196 + $0x1e4] sm:$0xf]
        %v322 = vld [vmem:[%s196 + $0x1e8] sm:$0xf]
        %v323 = vld [vmem:[%s196 + $0x1ec] sm:$0xf]
        %v324 = vld [vmem:[%s196 + $0x1f0] sm:$0xf]
        %v325 = vld [vmem:[%s196 + $0x1f4] sm:$0xf]
        %v326 = vld [vmem:[%s196 + $0x1f8] sm:$0xf]
        %v327 = vld [vmem:[%s196 + $0x1fc] sm:$0xf]
        %v328 = vld [vmem:[%s1] sm:$0xff]
        %v457 = vunpack.c.l.b16 %v200
        %v458 = vunpack.c.l.b16 %v201
        %v459 = vunpack.c.l.b16 %v202
        %v460 = vunpack.c.l.b16 %v203
        %v461 = vunpack.c.l.b16 %v204
        %v462 = vunpack.c.l.b16 %v205
        %v463 = vunpack.c.l.b16 %v206
        %v464 = vunpack.c.l.b16 %v207
        %v465 = vunpack.c.l.b16 %v208
        %v466 = vunpack.c.l.b16 %v209
        %v467 = vunpack.c.l.b16 %v210
        %v468 = vunpack.c.l.b16 %v211
        %v469 = vunpack.c.l.b16 %v212
        %v470 = vunpack.c.l.b16 %v213
        %v471 = vunpack.c.l.b16 %v214
        %v472 = vunpack.c.l.b16 %v215
        %v473 = vunpack.c.l.b16 %v216
        %v474 = vunpack.c.l.b16 %v217
        %v475 = vunpack.c.l.b16 %v218
        %v476 = vunpack.c.l.b16 %v219
        %v477 = vunpack.c.l.b16 %v220
        %v478 = vunpack.c.l.b16 %v221
        %v479 = vunpack.c.l.b16 %v222
        %v480 = vunpack.c.l.b16 %v223
        %v481 = vunpack.c.l.b16 %v224
        %v482 = vunpack.c.l.b16 %v225
        %v483 = vunpack.c.l.b16 %v226
        %v484 = vunpack.c.l.b16 %v227
        %v485 = vunpack.c.l.b16 %v228
        %v486 = vunpack.c.l.b16 %v229
        %v487 = vunpack.c.l.b16 %v230
        %v488 = vunpack.c.l.b16 %v231
        %v489 = vunpack.c.l.b16 %v232
        %v490 = vunpack.c.l.b16 %v233
        %v491 = vunpack.c.l.b16 %v234
        %v492 = vunpack.c.l.b16 %v235
        %v493 = vunpack.c.l.b16 %v236
        %v494 = vunpack.c.l.b16 %v237
        %v495 = vunpack.c.l.b16 %v238
        %v496 = vunpack.c.l.b16 %v239
        %v497 = vunpack.c.l.b16 %v240
        %v498 = vunpack.c.l.b16 %v241
        %v499 = vunpack.c.l.b16 %v242
        %v500 = vunpack.c.l.b16 %v243
        %v501 = vunpack.c.l.b16 %v244
        %v502 = vunpack.c.l.b16 %v245
        %v503 = vunpack.c.l.b16 %v246
        %v504 = vunpack.c.l.b16 %v247
        %v505 = vunpack.c.l.b16 %v248
        %v506 = vunpack.c.l.b16 %v249
        %v507 = vunpack.c.l.b16 %v250
        %v508 = vunpack.c.l.b16 %v251
        %v509 = vunpack.c.l.b16 %v252
        %v510 = vunpack.c.l.b16 %v253
        %v511 = vunpack.c.l.b16 %v254
        %v512 = vunpack.c.l.b16 %v255
        %v513 = vunpack.c.l.b16 %v256
        %v514 = vunpack.c.l.b16 %v257
        %v515 = vunpack.c.l.b16 %v258
        %v516 = vunpack.c.l.b16 %v259
        %v517 = vunpack.c.l.b16 %v260
        %v518 = vunpack.c.l.b16 %v261
        %v519 = vunpack.c.l.b16 %v262
        %v520 = vunpack.c.l.b16 %v263
        %v521 = vunpack.c.l.b16 %v264
        %v522 = vunpack.c.l.b16 %v265
        %v523 = vunpack.c.l.b16 %v266
        %v524 = vunpack.c.l.b16 %v267
        %v525 = vunpack.c.l.b16 %v268
        %v526 = vunpack.c.l.b16 %v269
        %v527 = vunpack.c.l.b16 %v270
        %v528 = vunpack.c.l.b16 %v271
        %v529 = vunpack.c.l.b16 %v272
        %v530 = vunpack.c.l.b16 %v273
        %v531 = vunpack.c.l.b16 %v274
        %v532 = vunpack.c.l.b16 %v275
        %v533 = vunpack.c.l.b16 %v276
        %v534 = vunpack.c.l.b16 %v277
        %v535 = vunpack.c.l.b16 %v278
        %v536 = vunpack.c.l.b16 %v279
        %v537 = vunpack.c.l.b16 %v280
        %v538 = vunpack.c.l.b16 %v281
        %v539 = vunpack.c.l.b16 %v282
        %v540 = vunpack.c.l.b16 %v283
        %v541 = vunpack.c.l.b16 %v284
        %v542 = vunpack.c.l.b16 %v285
        %v543 = vunpack.c.l.b16 %v286
        %v544 = vunpack.c.l.b16 %v287
        %v545 = vunpack.c.l.b16 %v288
        %v546 = vunpack.c.l.b16 %v289
        %v547 = vunpack.c.l.b16 %v290
        %v548 = vunpack.c.l.b16 %v291
        %v549 = vunpack.c.l.b16 %v292
        %v550 = vunpack.c.l.b16 %v293
        %v551 = vunpack.c.l.b16 %v294
        %v552 = vunpack.c.l.b16 %v295
        %v553 = vunpack.c.l.b16 %v296
        %v554 = vunpack.c.l.b16 %v297
        %v555 = vunpack.c.l.b16 %v298
        %v556 = vunpack.c.l.b16 %v299
        %v557 = vunpack.c.l.b16 %v300
        %v558 = vunpack.c.l.b16 %v301
        %v559 = vunpack.c.l.b16 %v302
        %v560 = vunpack.c.l.b16 %v303
        %v561 = vunpack.c.l.b16 %v304
        %v562 = vunpack.c.l.b16 %v305
        %v563 = vunpack.c.l.b16 %v306
        %v564 = vunpack.c.l.b16 %v307
        %v565 = vunpack.c.l.b16 %v308
        %v566 = vunpack.c.l.b16 %v309
        %v567 = vunpack.c.l.b16 %v310
        %v568 = vunpack.c.l.b16 %v311
        %v569 = vunpack.c.l.b16 %v312
        %v570 = vunpack.c.l.b16 %v313
        %v571 = vunpack.c.l.b16 %v314
        %v572 = vunpack.c.l.b16 %v315
        %v573 = vunpack.c.l.b16 %v316
        %v574 = vunpack.c.l.b16 %v317
        %v575 = vunpack.c.l.b16 %v318
        %v576 = vunpack.c.l.b16 %v319
        %v577 = vunpack.c.l.b16 %v320
        %v578 = vunpack.c.l.b16 %v321
        %v579 = vunpack.c.l.b16 %v322
        %v580 = vunpack.c.l.b16 %v323
        %v581 = vunpack.c.l.b16 %v324
        %v582 = vunpack.c.l.b16 %v325
        %v583 = vunpack.c.l.b16 %v326
        %v584 = vunpack.c.l.b16 %v327
        %v585 = vpack.c.b16 %v458, %v457
        %v586 = vpack.c.b16 %v460, %v459
        %v587 = vpack.c.b16 %v462, %v461
        %v588 = vpack.c.b16 %v464, %v463
        %v589 = vpack.c.b16 %v466, %v465
        %v590 = vpack.c.b16 %v468, %v467
        %v591 = vpack.c.b16 %v470, %v469
        %v592 = vpack.c.b16 %v472, %v471
        %v593 = vpack.c.b16 %v474, %v473
        %v594 = vpack.c.b16 %v476, %v475
        %v595 = vpack.c.b16 %v478, %v477
        %v596 = vpack.c.b16 %v480, %v479
        %v597 = vpack.c.b16 %v482, %v481
        %v598 = vpack.c.b16 %v484, %v483
        %v599 = vpack.c.b16 %v486, %v485
        %v600 = vpack.c.b16 %v488, %v487
        %v601 = vpack.c.b16 %v490, %v489
        %v602 = vpack.c.b16 %v492, %v491
        %v603 = vpack.c.b16 %v494, %v493
        %v604 = vpack.c.b16 %v496, %v495
        %v605 = vpack.c.b16 %v498, %v497
        %v606 = vpack.c.b16 %v500, %v499
        %v607 = vpack.c.b16 %v502, %v501
        %v608 = vpack.c.b16 %v504, %v503
        %v609 = vpack.c.b16 %v506, %v505
        %v610 = vpack.c.b16 %v508, %v507
        %v611 = vpack.c.b16 %v510, %v509
        %v612 = vpack.c.b16 %v512, %v511
        %v613 = vpack.c.b16 %v514, %v513
        %v614 = vpack.c.b16 %v516, %v515
        %v615 = vpack.c.b16 %v518, %v517
        %v616 = vpack.c.b16 %v520, %v519
        %v617 = vpack.c.b16 %v522, %v521
        %v618 = vpack.c.b16 %v524, %v523
        %v619 = vpack.c.b16 %v526, %v525
        %v620 = vpack.c.b16 %v528, %v527
        %v621 = vpack.c.b16 %v530, %v529
        %v622 = vpack.c.b16 %v532, %v531
        %v623 = vpack.c.b16 %v534, %v533
        %v624 = vpack.c.b16 %v536, %v535
        %v625 = vpack.c.b16 %v538, %v537
        %v626 = vpack.c.b16 %v540, %v539
        %v627 = vpack.c.b16 %v542, %v541
        %v628 = vpack.c.b16 %v544, %v543
        %v629 = vpack.c.b16 %v546, %v545
        %v630 = vpack.c.b16 %v548, %v547
        %v631 = vpack.c.b16 %v550, %v549
        %v632 = vpack.c.b16 %v552, %v551
        %v633 = vpack.c.b16 %v554, %v553
        %v634 = vpack.c.b16 %v556, %v555
        %v635 = vpack.c.b16 %v558, %v557
        %v636 = vpack.c.b16 %v560, %v559
        %v637 = vpack.c.b16 %v562, %v561
        %v638 = vpack.c.b16 %v564, %v563
        %v639 = vpack.c.b16 %v566, %v565
        %v640 = vpack.c.b16 %v568, %v567
        %v641 = vpack.c.b16 %v570, %v569
        %v642 = vpack.c.b16 %v572, %v571
        %v643 = vpack.c.b16 %v574, %v573
        %v644 = vpack.c.b16 %v576, %v575
        %v645 = vpack.c.b16 %v578, %v577
        %v646 = vpack.c.b16 %v580, %v579
        %v647 = vpack.c.b16 %v582, %v581
        %v648 = vpack.c.b16 %v584, %v583
        %v650 = vunpack.c.l.b16 %v328
        %v651 = vunpack.c.h.b16 %v328
        %v652 = vpack.c.b16 %v650, %v650
        %v653 = vpack.c.b16 %v651, %v651
        %vm654 = vcmask 64512
        %v656 = vsel %vm654, %v585, 0
        %v659 = vsel %vm654, %v586, 0
        %v662 = vsel %vm654, %v587, 0
        %v665 = vsel %vm654, %v588, 0
        %v668 = vsel %vm654, %v589, 0
        %v671 = vsel %vm654, %v590, 0
        %v674 = vsel %vm654, %v591, 0
        %v677 = vsel %vm654, %v592, 0
        %v680 = vsel %vm654, %v593, 0
        %v683 = vsel %vm654, %v594, 0
        %v686 = vsel %vm654, %v595, 0
        %v689 = vsel %vm654, %v596, 0
        %v692 = vsel %vm654, %v597, 0
        %v695 = vsel %vm654, %v598, 0
        %v698 = vsel %vm654, %v599, 0
        %v701 = vsel %vm654, %v600, 0
        %v704 = vsel %vm654, %v601, 0
        %v707 = vsel %vm654, %v602, 0
        %v710 = vsel %vm654, %v603, 0
        %v713 = vsel %vm654, %v604, 0
        %v716 = vsel %vm654, %v605, 0
        %v719 = vsel %vm654, %v606, 0
        %v722 = vsel %vm654, %v607, 0
        %v725 = vsel %vm654, %v608, 0
        %v728 = vsel %vm654, %v609, 0
        %v731 = vsel %vm654, %v610, 0
        %v734 = vsel %vm654, %v611, 0
        %v737 = vsel %vm654, %v612, 0
        %v740 = vsel %vm654, %v613, 0
        %v743 = vsel %vm654, %v614, 0
        %v746 = vsel %vm654, %v615, 0
        %v749 = vsel %vm654, %v616, 0
        %v752 = vsel %vm654, %v617, 0
        %v755 = vsel %vm654, %v618, 0
        %v758 = vsel %vm654, %v619, 0
        %v761 = vsel %vm654, %v620, 0
        %v764 = vsel %vm654, %v621, 0
        %v767 = vsel %vm654, %v622, 0
        %v770 = vsel %vm654, %v623, 0
        %v773 = vsel %vm654, %v624, 0
        %v776 = vsel %vm654, %v625, 0
        %v779 = vsel %vm654, %v626, 0
        %v782 = vsel %vm654, %v627, 0
        %v785 = vsel %vm654, %v628, 0
        %v788 = vsel %vm654, %v629, 0
        %v791 = vsel %vm654, %v630, 0
        %v794 = vsel %vm654, %v631, 0
        %v797 = vsel %vm654, %v632, 0
        %v800 = vsel %vm654, %v633, 0
        %v803 = vsel %vm654, %v634, 0
        %v806 = vsel %vm654, %v635, 0
        %v809 = vsel %vm654, %v636, 0
        %v812 = vsel %vm654, %v637, 0
        %v815 = vsel %vm654, %v638, 0
        %v818 = vsel %vm654, %v639, 0
        %v821 = vsel %vm654, %v640, 0
        %v824 = vsel %vm654, %v641, 0
        %v827 = vsel %vm654, %v642, 0
        %v830 = vsel %vm654, %v643, 0
        %v833 = vsel %vm654, %v644, 0
        %v836 = vsel %vm654, %v645, 0
        %v839 = vsel %vm654, %v646, 0
        %v842 = vsel %vm654, %v647, 0
        %v845 = vsel %vm654, %v648, 0
        %vm847 = vcmask 1043456
        %v849 = vsel %vm847, %v652, 0
        %v852 = vsel %vm847, %v653, 0
        %854 = vmatprep.subr.bf16.mxu0 %v852
        %855 = vmatpush1.bf16.msra.mxu0 %v849
        %856 = vmatprep.subr.bf16.mxu0 0
        %857 = vmatpush1.bf16.msra.mxu0 0
        %858 = vmatprep.subr.bf16.mxu0 0
        %859 = vmatpush1.bf16.msra.mxu0 0
        %860 = vmatprep.subr.bf16.mxu0 0
        %861 = vmatpush1.bf16.msra.mxu0 0
        %862 = vmatprep.subr.bf16.mxu0 0
        %863 = vmatpush1.bf16.msra.mxu0 0
        %864 = vmatprep.subr.bf16.mxu0 0
        %865 = vmatpush1.bf16.msra.mxu0 0
        %866 = vmatprep.subr.bf16.mxu0 0
        %867 = vmatpush1.bf16.msra.mxu0 0
        %868 = vmatprep.subr.bf16.mxu0 0
        %869 = vmatpush1.bf16.msra.mxu0 0
        %870 = vmatprep.subr.bf16.mxu0 0
        %871 = vmatpush1.bf16.msra.mxu0 0
        %872 = vmatprep.subr.bf16.mxu0 0
        %873 = vmatpush1.bf16.msra.mxu0 0
        %874 = vmatprep.subr.bf16.mxu0 0
        %875 = vmatpush1.bf16.msra.mxu0 0
        %876 = vmatprep.subr.bf16.mxu0 0
        %877 = vmatpush1.bf16.msra.mxu0 0
        %878 = vmatprep.subr.bf16.mxu0 0
        %879 = vmatpush1.bf16.msra.mxu0 0
        %880 = vmatprep.subr.bf16.mxu0 0
        %881 = vmatpush1.bf16.msra.mxu0 0
        %882 = vmatprep.subr.bf16.mxu0 0
        %883 = vmatpush1.bf16.msra.mxu0 0
        %884 = vmatprep.subr.bf16.mxu0 0
        %885 = vmatpush1.bf16.msra.mxu0 0
        %886 = vmatprep.mubr.bf16.mxu0 0
        %887 = vmatmul.mubr.bf16.gmra.mrb[0].mxu0 %v656
        %v888 = vpop.f32.mrb[0].mxu0
        %v889 = vadd.f32 0.0, %v888
        %v890 = vpop.f32.mrb[0].mxu0
        %v891 = vadd.f32 0.0, %v890
        %v892 = vpop.f32.mrb[0].mxu0
        %v893 = vadd.f32 0.0, %v892
        %v894 = vpop.f32.mrb[0].mxu0
        %v895 = vadd.f32 0.0, %v894
        %896 = vmatprep.mubr.bf16.mxu0 0
        %897 = vmatmul.mubr.bf16.gmra.mrb[0].mxu0 %v659
        %v898 = vpop.f32.mrb[0].mxu0
        %v899 = vadd.f32 0.0, %v898
        %v900 = vpop.f32.mrb[0].mxu0
        %v901 = vadd.f32 0.0, %v900
        %v902 = vpop.f32.mrb[0].mxu0
        %v903 = vadd.f32 0.0, %v902
        %v904 = vpop.f32.mrb[0].mxu0
        %v905 = vadd.f32 0.0, %v904
        %906 = vmatprep.mubr.bf16.mxu0 0
        %907 = vmatmul.mubr.bf16.gmra.mrb[0].mxu0 %v662
        %v908 = vpop.f32.mrb[0].mxu0
        %v909 = vadd.f32 0.0, %v908
        %v910 = vpop.f32.mrb[0].mxu0
        %v911 = vadd.f32 0.0, %v910
        %v912 = vpop.f32.mrb[0].mxu0
        %v913 = vadd.f32 0.0, %v912
        %v914 = vpop.f32.mrb[0].mxu0
        %v915 = vadd.f32 0.0, %v914
        %916 = vmatprep.mubr.bf16.mxu0 0
        %917 = vmatmul.mubr.bf16.gmra.mrb[0].mxu0 %v665
        %v918 = vpop.f32.mrb[0].mxu0
        %v919 = vadd.f32 0.0, %v918
        %v920 = vpop.f32.mrb[0].mxu0
        %v921 = vadd.f32 0.0, %v920
        %v922 = vpop.f32.mrb[0].mxu0
        %v923 = vadd.f32 0.0, %v922
        %v924 = vpop.f32.mrb[0].mxu0
        %v925 = vadd.f32 0.0, %v924
        %926 = vmatprep.mubr.bf16.mxu0 0
        %927 = vmatmul.mubr.bf16.gmra.mrb[0].mxu0 %v668
        %v928 = vpop.f32.mrb[0].mxu0
        %v929 = vadd.f32 0.0, %v928
        %v930 = vpop.f32.mrb[0].mxu0
        %v931 = vadd.f32 0.0, %v930
        %v932 = vpop.f32.mrb[0].mxu0
        %v933 = vadd.f32 0.0, %v932
        %v934 = vpop.f32.mrb[0].mxu0
        %v935 = vadd.f32 0.0, %v934
        %936 = vmatprep.mubr.bf16.mxu0 0
        %937 = vmatmul.mubr.bf16.gmra.mrb[0].mxu0 %v671
        %v938 = vpop.f32.mrb[0].mxu0
        %v939 = vadd.f32 0.0, %v938
        %v940 = vpop.f32.mrb[0].mxu0
        %v941 = vadd.f32 0.0, %v940
        %v942 = vpop.f32.mrb[0].mxu0
        %v943 = vadd.f32 0.0, %v942
        %v944 = vpop.f32.mrb[0].mxu0
        %v945 = vadd.f32 0.0, %v944
        %946 = vmatprep.mubr.bf16.mxu0 0
        %947 = vmatmul.mubr.bf16.gmra.mrb[0].mxu0 %v674
        %v948 = vpop.f32.mrb[0].mxu0
        %v949 = vadd.f32 0.0, %v948
        %v950 = vpop.f32.mrb[0].mxu0
        %v951 = vadd.f32 0.0, %v950
        %v952 = vpop.f32.mrb[0].mxu0
        %v953 = vadd.f32 0.0, %v952
        %v954 = vpop.f32.mrb[0].mxu0
        %v955 = vadd.f32 0.0, %v954
        %956 = vmatprep.mubr.bf16.mxu0 0
        %957 = vmatmul.mubr.bf16.gmra.mrb[0].mxu0 %v677
        %v958 = vpop.f32.mrb[0].mxu0
        %v959 = vadd.f32 0.0, %v958
        %v960 = vpop.f32.mrb[0].mxu0
        %v961 = vadd.f32 0.0, %v960
        %v962 = vpop.f32.mrb[0].mxu0
        %v963 = vadd.f32 0.0, %v962
        %v964 = vpop.f32.mrb[0].mxu0
        %v965 = vadd.f32 0.0, %v964
        %966 = vmatprep.mubr.bf16.mxu0 0
        %967 = vmatmul.mubr.bf16.gmra.mrb[0].mxu0 %v680
        %v968 = vpop.f32.mrb[0].mxu0
        %v969 = vadd.f32 0.0, %v968
        %v970 = vpop.f32.mrb[0].mxu0
        %v971 = vadd.f32 0.0, %v970
        %v972 = vpop.f32.mrb[0].mxu0
        %v973 = vadd.f32 0.0, %v972
        %v974 = vpop.f32.mrb[0].mxu0
        %v975 = vadd.f32 0.0, %v974
        %976 = vmatprep.mubr.bf16.mxu0 0
        %977 = vmatmul.mubr.bf16.gmra.mrb[0].mxu0 %v683
        %v978 = vpop.f32.mrb[0].mxu0
        %v979 = vadd.f32 0.0, %v978
        %v980 = vpop.f32.mrb[0].mxu0
        %v981 = vadd.f32 0.0, %v980
        %v982 = vpop.f32.mrb[0].mxu0
        %v983 = vadd.f32 0.0, %v982
        %v984 = vpop.f32.mrb[0].mxu0
        %v985 = vadd.f32 0.0, %v984
        %986 = vmatprep.mubr.bf16.mxu0 0
        %987 = vmatmul.mubr.bf16.gmra.mrb[0].mxu0 %v686
        %v988 = vpop.f32.mrb[0].mxu0
        %v989 = vadd.f32 0.0, %v988
        %v990 = vpop.f32.mrb[0].mxu0
        %v991 = vadd.f32 0.0, %v990
        %v992 = vpop.f32.mrb[0].mxu0
        %v993 = vadd.f32 0.0, %v992
        %v994 = vpop.f32.mrb[0].mxu0
        %v995 = vadd.f32 0.0, %v994
        %996 = vmatprep.mubr.bf16.mxu0 0
        %997 = vmatmul.mubr.bf16.gmra.mrb[0].mxu0 %v689
        %v998 = vpop.f32.mrb[0].mxu0
        %v999 = vadd.f32 0.0, %v998
        %v1000 = vpop.f32.mrb[0].mxu0
        %v1001 = vadd.f32 0.0, %v1000
        %v1002 = vpop.f32.mrb[0].mxu0
        %v1003 = vadd.f32 0.0, %v1002
        %v1004 = vpop.f32.mrb[0].mxu0
        %v1005 = vadd.f32 0.0, %v1004
        %1006 = vmatprep.mubr.bf16.mxu0 0
        %1007 = vmatmul.mubr.bf16.gmra.mrb[0].mxu0 %v692
        %v1008 = vpop.f32.mrb[0].mxu0
        %v1009 = vadd.f32 0.0, %v1008
        %v1010 = vpop.f32.mrb[0].mxu0
        %v1011 = vadd.f32 0.0, %v1010
        %v1012 = vpop.f32.mrb[0].mxu0
        %v1013 = vadd.f32 0.0, %v1012
        %v1014 = vpop.f32.mrb[0].mxu0
        %v1015 = vadd.f32 0.0, %v1014
        %1016 = vmatprep.mubr.bf16.mxu0 0
        %1017 = vmatmul.mubr.bf16.gmra.mrb[0].mxu0 %v695
        %v1018 = vpop.f32.mrb[0].mxu0
        %v1019 = vadd.f32 0.0, %v1018
        %v1020 = vpop.f32.mrb[0].mxu0
        %v1021 = vadd.f32 0.0, %v1020
        %v1022 = vpop.f32.mrb[0].mxu0
        %v1023 = vadd.f32 0.0, %v1022
        %v1024 = vpop.f32.mrb[0].mxu0
        %v1025 = vadd.f32 0.0, %v1024
        %1026 = vmatprep.mubr.bf16.mxu0 0
        %1027 = vmatmul.mubr.bf16.gmra.mrb[0].mxu0 %v698
        %v1028 = vpop.f32.mrb[0].mxu0
        %v1029 = vadd.f32 0.0, %v1028
        %v1030 = vpop.f32.mrb[0].mxu0
        %v1031 = vadd.f32 0.0, %v1030
        %v1032 = vpop.f32.mrb[0].mxu0
        %v1033 = vadd.f32 0.0, %v1032
        %v1034 = vpop.f32.mrb[0].mxu0
        %v1035 = vadd.f32 0.0, %v1034
        %1036 = vmatprep.mubr.bf16.mxu0 0
        %1037 = vmatmul.mubr.bf16.gmra.mrb[0].mxu0 %v701
        %v1038 = vpop.f32.mrb[0].mxu0
        %v1039 = vadd.f32 0.0, %v1038
        %v1040 = vpop.f32.mrb[0].mxu0
        %v1041 = vadd.f32 0.0, %v1040
        %v1042 = vpop.f32.mrb[0].mxu0
        %v1043 = vadd.f32 0.0, %v1042
        %v1044 = vpop.f32.mrb[0].mxu0
        %v1045 = vadd.f32 0.0, %v1044
        %1046 = vmatprep.mubr.bf16.mxu0 0
        %1047 = vmatmul.mubr.bf16.gmra.mrb[0].mxu0 %v704
        %v1048 = vpop.f32.mrb[0].mxu0
        %v1049 = vadd.f32 0.0, %v1048
        %v1050 = vpop.f32.mrb[0].mxu0
        %v1051 = vadd.f32 0.0, %v1050
        %v1052 = vpop.f32.mrb[0].mxu0
        %v1053 = vadd.f32 0.0, %v1052
        %v1054 = vpop.f32.mrb[0].mxu0
        %v1055 = vadd.f32 0.0, %v1054
        %1056 = vmatprep.mubr.bf16.mxu0 0
        %1057 = vmatmul.mubr.bf16.gmra.mrb[0].mxu0 %v707
        %v1058 = vpop.f32.mrb[0].mxu0
        %v1059 = vadd.f32 0.0, %v1058
        %v1060 = vpop.f32.mrb[0].mxu0
        %v1061 = vadd.f32 0.0, %v1060
        %v1062 = vpop.f32.mrb[0].mxu0
        %v1063 = vadd.f32 0.0, %v1062
        %v1064 = vpop.f32.mrb[0].mxu0
        %v1065 = vadd.f32 0.0, %v1064
        %1066 = vmatprep.mubr.bf16.mxu0 0
        %1067 = vmatmul.mubr.bf16.gmra.mrb[0].mxu0 %v710
        %v1068 = vpop.f32.mrb[0].mxu0
        %v1069 = vadd.f32 0.0, %v1068
        %v1070 = vpop.f32.mrb[0].mxu0
        %v1071 = vadd.f32 0.0, %v1070
        %v1072 = vpop.f32.mrb[0].mxu0
        %v1073 = vadd.f32 0.0, %v1072
        %v1074 = vpop.f32.mrb[0].mxu0
        %v1075 = vadd.f32 0.0, %v1074
        %1076 = vmatprep.mubr.bf16.mxu0 0
        %1077 = vmatmul.mubr.bf16.gmra.mrb[0].mxu0 %v713
        %v1078 = vpop.f32.mrb[0].mxu0
        %v1079 = vadd.f32 0.0, %v1078
        %v1080 = vpop.f32.mrb[0].mxu0
        %v1081 = vadd.f32 0.0, %v1080
        %v1082 = vpop.f32.mrb[0].mxu0
        %v1083 = vadd.f32 0.0, %v1082
        %v1084 = vpop.f32.mrb[0].mxu0
        %v1085 = vadd.f32 0.0, %v1084
        %1086 = vmatprep.mubr.bf16.mxu0 0
        %1087 = vmatmul.mubr.bf16.gmra.mrb[0].mxu0 %v716
        %v1088 = vpop.f32.mrb[0].mxu0
        %v1089 = vadd.f32 0.0, %v1088
        %v1090 = vpop.f32.mrb[0].mxu0
        %v1091 = vadd.f32 0.0, %v1090
        %v1092 = vpop.f32.mrb[0].mxu0
        %v1093 = vadd.f32 0.0, %v1092
        %v1094 = vpop.f32.mrb[0].mxu0
        %v1095 = vadd.f32 0.0, %v1094
        %1096 = vmatprep.mubr.bf16.mxu0 0
        %1097 = vmatmul.mubr.bf16.gmra.mrb[0].mxu0 %v719
        %v1098 = vpop.f32.mrb[0].mxu0
        %v1099 = vadd.f32 0.0, %v1098
        %v1100 = vpop.f32.mrb[0].mxu0
        %v1101 = vadd.f32 0.0, %v1100
        %v1102 = vpop.f32.mrb[0].mxu0
        %v1103 = vadd.f32 0.0, %v1102
        %v1104 = vpop.f32.mrb[0].mxu0
        %v1105 = vadd.f32 0.0, %v1104
        %1106 = vmatprep.mubr.bf16.mxu0 0
        %1107 = vmatmul.mubr.bf16.gmra.mrb[0].mxu0 %v722
        %v1108 = vpop.f32.mrb[0].mxu0
        %v1109 = vadd.f32 0.0, %v1108
        %v1110 = vpop.f32.mrb[0].mxu0
        %v1111 = vadd.f32 0.0, %v1110
        %v1112 = vpop.f32.mrb[0].mxu0
        %v1113 = vadd.f32 0.0, %v1112
        %v1114 = vpop.f32.mrb[0].mxu0
        %v1115 = vadd.f32 0.0, %v1114
        %1116 = vmatprep.mubr.bf16.mxu0 0
        %1117 = vmatmul.mubr.bf16.gmra.mrb[0].mxu0 %v725
        %v1118 = vpop.f32.mrb[0].mxu0
        %v1119 = vadd.f32 0.0, %v1118
        %v1120 = vpop.f32.mrb[0].mxu0
        %v1121 = vadd.f32 0.0, %v1120
        %v1122 = vpop.f32.mrb[0].mxu0
        %v1123 = vadd.f32 0.0, %v1122
        %v1124 = vpop.f32.mrb[0].mxu0
        %v1125 = vadd.f32 0.0, %v1124
        %1126 = vmatprep.mubr.bf16.mxu0 0
        %1127 = vmatmul.mubr.bf16.gmra.mrb[0].mxu0 %v728
        %v1128 = vpop.f32.mrb[0].mxu0
        %v1129 = vadd.f32 0.0, %v1128
        %v1130 = vpop.f32.mrb[0].mxu0
        %v1131 = vadd.f32 0.0, %v1130
        %v1132 = vpop.f32.mrb[0].mxu0
        %v1133 = vadd.f32 0.0, %v1132
        %v1134 = vpop.f32.mrb[0].mxu0
        %v1135 = vadd.f32 0.0, %v1134
        %1136 = vmatprep.mubr.bf16.mxu0 0
        %1137 = vmatmul.mubr.bf16.gmra.mrb[0].mxu0 %v731
        %v1138 = vpop.f32.mrb[0].mxu0
        %v1139 = vadd.f32 0.0, %v1138
        %v1140 = vpop.f32.mrb[0].mxu0
        %v1141 = vadd.f32 0.0, %v1140
        %v1142 = vpop.f32.mrb[0].mxu0
        %v1143 = vadd.f32 0.0, %v1142
        %v1144 = vpop.f32.mrb[0].mxu0
        %v1145 = vadd.f32 0.0, %v1144
        %1146 = vmatprep.mubr.bf16.mxu0 0
        %1147 = vmatmul.mubr.bf16.gmra.mrb[0].mxu0 %v734
        %v1148 = vpop.f32.mrb[0].mxu0
        %v1149 = vadd.f32 0.0, %v1148
        %v1150 = vpop.f32.mrb[0].mxu0
        %v1151 = vadd.f32 0.0, %v1150
        %v1152 = vpop.f32.mrb[0].mxu0
        %v1153 = vadd.f32 0.0, %v1152
        %v1154 = vpop.f32.mrb[0].mxu0
        %v1155 = vadd.f32 0.0, %v1154
        %1156 = vmatprep.mubr.bf16.mxu0 0
        %1157 = vmatmul.mubr.bf16.gmra.mrb[0].mxu0 %v737
        %v1158 = vpop.f32.mrb[0].mxu0
        %v1159 = vadd.f32 0.0, %v1158
        %v1160 = vpop.f32.mrb[0].mxu0
        %v1161 = vadd.f32 0.0, %v1160
        %v1162 = vpop.f32.mrb[0].mxu0
        %v1163 = vadd.f32 0.0, %v1162
        %v1164 = vpop.f32.mrb[0].mxu0
        %v1165 = vadd.f32 0.0, %v1164
        %1166 = vmatprep.mubr.bf16.mxu0 0
        %1167 = vmatmul.mubr.bf16.gmra.mrb[0].mxu0 %v740
        %v1168 = vpop.f32.mrb[0].mxu0
        %v1169 = vadd.f32 0.0, %v1168
        %v1170 = vpop.f32.mrb[0].mxu0
        %v1171 = vadd.f32 0.0, %v1170
        %v1172 = vpop.f32.mrb[0].mxu0
        %v1173 = vadd.f32 0.0, %v1172
        %v1174 = vpop.f32.mrb[0].mxu0
        %v1175 = vadd.f32 0.0, %v1174
        %1176 = vmatprep.mubr.bf16.mxu0 0
        %1177 = vmatmul.mubr.bf16.gmra.mrb[0].mxu0 %v743
        %v1178 = vpop.f32.mrb[0].mxu0
        %v1179 = vadd.f32 0.0, %v1178
        %v1180 = vpop.f32.mrb[0].mxu0
        %v1181 = vadd.f32 0.0, %v1180
        %v1182 = vpop.f32.mrb[0].mxu0
        %v1183 = vadd.f32 0.0, %v1182
        %v1184 = vpop.f32.mrb[0].mxu0
        %v1185 = vadd.f32 0.0, %v1184
        %1186 = vmatprep.mubr.bf16.mxu0 0
        %1187 = vmatmul.mubr.bf16.gmra.mrb[0].mxu0 %v746
        %v1188 = vpop.f32.mrb[0].mxu0
        %v1189 = vadd.f32 0.0, %v1188
        %v1190 = vpop.f32.mrb[0].mxu0
        %v1191 = vadd.f32 0.0, %v1190
        %v1192 = vpop.f32.mrb[0].mxu0
        %v1193 = vadd.f32 0.0, %v1192
        %v1194 = vpop.f32.mrb[0].mxu0
        %v1195 = vadd.f32 0.0, %v1194
        %1196 = vmatprep.mubr.bf16.mxu0 0
        %1197 = vmatmul.mubr.bf16.gmra.mrb[0].mxu0 %v749
        %v1198 = vpop.f32.mrb[0].mxu0
        %v1199 = vadd.f32 0.0, %v1198
        %v1200 = vpop.f32.mrb[0].mxu0
        %v1201 = vadd.f32 0.0, %v1200
        %v1202 = vpop.f32.mrb[0].mxu0
        %v1203 = vadd.f32 0.0, %v1202
        %v1204 = vpop.f32.mrb[0].mxu0
        %v1205 = vadd.f32 0.0, %v1204
        %1206 = vmatprep.mubr.bf16.mxu0 0
        %1207 = vmatmul.mubr.bf16.gmra.mrb[0].mxu0 %v752
        %v1208 = vpop.f32.mrb[0].mxu0
        %v1209 = vadd.f32 0.0, %v1208
        %v1210 = vpop.f32.mrb[0].mxu0
        %v1211 = vadd.f32 0.0, %v1210
        %v1212 = vpop.f32.mrb[0].mxu0
        %v1213 = vadd.f32 0.0, %v1212
        %v1214 = vpop.f32.mrb[0].mxu0
        %v1215 = vadd.f32 0.0, %v1214
        %1216 = vmatprep.mubr.bf16.mxu0 0
        %1217 = vmatmul.mubr.bf16.gmra.mrb[0].mxu0 %v755
        %v1218 = vpop.f32.mrb[0].mxu0
        %v1219 = vadd.f32 0.0, %v1218
        %v1220 = vpop.f32.mrb[0].mxu0
        %v1221 = vadd.f32 0.0, %v1220
        %v1222 = vpop.f32.mrb[0].mxu0
        %v1223 = vadd.f32 0.0, %v1222
        %v1224 = vpop.f32.mrb[0].mxu0
        %v1225 = vadd.f32 0.0, %v1224
        %1226 = vmatprep.mubr.bf16.mxu0 0
        %1227 = vmatmul.mubr.bf16.gmra.mrb[0].mxu0 %v758
        %v1228 = vpop.f32.mrb[0].mxu0
        %v1229 = vadd.f32 0.0, %v1228
        %v1230 = vpop.f32.mrb[0].mxu0
        %v1231 = vadd.f32 0.0, %v1230
        %v1232 = vpop.f32.mrb[0].mxu0
        %v1233 = vadd.f32 0.0, %v1232
        %v1234 = vpop.f32.mrb[0].mxu0
        %v1235 = vadd.f32 0.0, %v1234
        %1236 = vmatprep.mubr.bf16.mxu0 0
        %1237 = vmatmul.mubr.bf16.gmra.mrb[0].mxu0 %v761
        %v1238 = vpop.f32.mrb[0].mxu0
        %v1239 = vadd.f32 0.0, %v1238
        %v1240 = vpop.f32.mrb[0].mxu0
        %v1241 = vadd.f32 0.0, %v1240
        %v1242 = vpop.f32.mrb[0].mxu0
        %v1243 = vadd.f32 0.0, %v1242
        %v1244 = vpop.f32.mrb[0].mxu0
        %v1245 = vadd.f32 0.0, %v1244
        %1246 = vmatprep.mubr.bf16.mxu0 0
        %1247 = vmatmul.mubr.bf16.gmra.mrb[0].mxu0 %v764
        %v1248 = vpop.f32.mrb[0].mxu0
        %v1249 = vadd.f32 0.0, %v1248
        %v1250 = vpop.f32.mrb[0].mxu0
        %v1251 = vadd.f32 0.0, %v1250
        %v1252 = vpop.f32.mrb[0].mxu0
        %v1253 = vadd.f32 0.0, %v1252
        %v1254 = vpop.f32.mrb[0].mxu0
        %v1255 = vadd.f32 0.0, %v1254
        %1256 = vmatprep.mubr.bf16.mxu0 0
        %1257 = vmatmul.mubr.bf16.gmra.mrb[0].mxu0 %v767
        %v1258 = vpop.f32.mrb[0].mxu0
        %v1259 = vadd.f32 0.0, %v1258
        %v1260 = vpop.f32.mrb[0].mxu0
        %v1261 = vadd.f32 0.0, %v1260
        %v1262 = vpop.f32.mrb[0].mxu0
        %v1263 = vadd.f32 0.0, %v1262
        %v1264 = vpop.f32.mrb[0].mxu0
        %v1265 = vadd.f32 0.0, %v1264
        %1266 = vmatprep.mubr.bf16.mxu0 0
        %1267 = vmatmul.mubr.bf16.gmra.mrb[0].mxu0 %v770
        %v1268 = vpop.f32.mrb[0].mxu0
        %v1269 = vadd.f32 0.0, %v1268
        %v1270 = vpop.f32.mrb[0].mxu0
        %v1271 = vadd.f32 0.0, %v1270
        %v1272 = vpop.f32.mrb[0].mxu0
        %v1273 = vadd.f32 0.0, %v1272
        %v1274 = vpop.f32.mrb[0].mxu0
        %v1275 = vadd.f32 0.0, %v1274
        %1276 = vmatprep.mubr.bf16.mxu0 0
        %1277 = vmatmul.mubr.bf16.gmra.mrb[0].mxu0 %v773
        %v1278 = vpop.f32.mrb[0].mxu0
        %v1279 = vadd.f32 0.0, %v1278
        %v1280 = vpop.f32.mrb[0].mxu0
        %v1281 = vadd.f32 0.0, %v1280
        %v1282 = vpop.f32.mrb[0].mxu0
        %v1283 = vadd.f32 0.0, %v1282
        %v1284 = vpop.f32.mrb[0].mxu0
        %v1285 = vadd.f32 0.0, %v1284
        %1286 = vmatprep.mubr.bf16.mxu0 0
        %1287 = vmatmul.mubr.bf16.gmra.mrb[0].mxu0 %v776
        %v1288 = vpop.f32.mrb[0].mxu0
        %v1289 = vadd.f32 0.0, %v1288
        %v1290 = vpop.f32.mrb[0].mxu0
        %v1291 = vadd.f32 0.0, %v1290
        %v1292 = vpop.f32.mrb[0].mxu0
        %v1293 = vadd.f32 0.0, %v1292
        %v1294 = vpop.f32.mrb[0].mxu0
        %v1295 = vadd.f32 0.0, %v1294
        %1296 = vmatprep.mubr.bf16.mxu0 0
        %1297 = vmatmul.mubr.bf16.gmra.mrb[0].mxu0 %v779
        %v1298 = vpop.f32.mrb[0].mxu0
        %v1299 = vadd.f32 0.0, %v1298
        %v1300 = vpop.f32.mrb[0].mxu0
        %v1301 = vadd.f32 0.0, %v1300
        %v1302 = vpop.f32.mrb[0].mxu0
        %v1303 = vadd.f32 0.0, %v1302
        %v1304 = vpop.f32.mrb[0].mxu0
        %v1305 = vadd.f32 0.0, %v1304
        %1306 = vmatprep.mubr.bf16.mxu0 0
        %1307 = vmatmul.mubr.bf16.gmra.mrb[0].mxu0 %v782
        %v1308 = vpop.f32.mrb[0].mxu0
        %v1309 = vadd.f32 0.0, %v1308
        %v1310 = vpop.f32.mrb[0].mxu0
        %v1311 = vadd.f32 0.0, %v1310
        %v1312 = vpop.f32.mrb[0].mxu0
        %v1313 = vadd.f32 0.0, %v1312
        %v1314 = vpop.f32.mrb[0].mxu0
        %v1315 = vadd.f32 0.0, %v1314
        %1316 = vmatprep.mubr.bf16.mxu0 0
        %1317 = vmatmul.mubr.bf16.gmra.mrb[0].mxu0 %v785
        %v1318 = vpop.f32.mrb[0].mxu0
        %v1319 = vadd.f32 0.0, %v1318
        %v1320 = vpop.f32.mrb[0].mxu0
        %v1321 = vadd.f32 0.0, %v1320
        %v1322 = vpop.f32.mrb[0].mxu0
        %v1323 = vadd.f32 0.0, %v1322
        %v1324 = vpop.f32.mrb[0].mxu0
        %v1325 = vadd.f32 0.0, %v1324
        %1326 = vmatprep.mubr.bf16.mxu0 0
        %1327 = vmatmul.mubr.bf16.gmra.mrb[0].mxu0 %v788
        %v1328 = vpop.f32.mrb[0].mxu0
        %v1329 = vadd.f32 0.0, %v1328
        %v1330 = vpop.f32.mrb[0].mxu0
        %v1331 = vadd.f32 0.0, %v1330
        %v1332 = vpop.f32.mrb[0].mxu0
        %v1333 = vadd.f32 0.0, %v1332
        %v1334 = vpop.f32.mrb[0].mxu0
        %v1335 = vadd.f32 0.0, %v1334
        %1336 = vmatprep.mubr.bf16.mxu0 0
        %1337 = vmatmul.mubr.bf16.gmra.mrb[0].mxu0 %v791
        %v1338 = vpop.f32.mrb[0].mxu0
        %v1339 = vadd.f32 0.0, %v1338
        %v1340 = vpop.f32.mrb[0].mxu0
        %v1341 = vadd.f32 0.0, %v1340
        %v1342 = vpop.f32.mrb[0].mxu0
        %v1343 = vadd.f32 0.0, %v1342
        %v1344 = vpop.f32.mrb[0].mxu0
        %v1345 = vadd.f32 0.0, %v1344
        %1346 = vmatprep.mubr.bf16.mxu0 0
        %1347 = vmatmul.mubr.bf16.gmra.mrb[0].mxu0 %v794
        %v1348 = vpop.f32.mrb[0].mxu0
        %v1349 = vadd.f32 0.0, %v1348
        %v1350 = vpop.f32.mrb[0].mxu0
        %v1351 = vadd.f32 0.0, %v1350
        %v1352 = vpop.f32.mrb[0].mxu0
        %v1353 = vadd.f32 0.0, %v1352
        %v1354 = vpop.f32.mrb[0].mxu0
        %v1355 = vadd.f32 0.0, %v1354
        %1356 = vmatprep.mubr.bf16.mxu0 0
        %1357 = vmatmul.mubr.bf16.gmra.mrb[0].mxu0 %v797
        %v1358 = vpop.f32.mrb[0].mxu0
        %v1359 = vadd.f32 0.0, %v1358
        %v1360 = vpop.f32.mrb[0].mxu0
        %v1361 = vadd.f32 0.0, %v1360
        %v1362 = vpop.f32.mrb[0].mxu0
        %v1363 = vadd.f32 0.0, %v1362
        %v1364 = vpop.f32.mrb[0].mxu0
        %v1365 = vadd.f32 0.0, %v1364
        %1366 = vmatprep.mubr.bf16.mxu0 0
        %1367 = vmatmul.mubr.bf16.gmra.mrb[0].mxu0 %v800
        %v1368 = vpop.f32.mrb[0].mxu0
        %v1369 = vadd.f32 0.0, %v1368
        %v1370 = vpop.f32.mrb[0].mxu0
        %v1371 = vadd.f32 0.0, %v1370
        %v1372 = vpop.f32.mrb[0].mxu0
        %v1373 = vadd.f32 0.0, %v1372
        %v1374 = vpop.f32.mrb[0].mxu0
        %v1375 = vadd.f32 0.0, %v1374
        %1376 = vmatprep.mubr.bf16.mxu0 0
        %1377 = vmatmul.mubr.bf16.gmra.mrb[0].mxu0 %v803
        %v1378 = vpop.f32.mrb[0].mxu0
        %v1379 = vadd.f32 0.0, %v1378
        %v1380 = vpop.f32.mrb[0].mxu0
        %v1381 = vadd.f32 0.0, %v1380
        %v1382 = vpop.f32.mrb[0].mxu0
        %v1383 = vadd.f32 0.0, %v1382
        %v1384 = vpop.f32.mrb[0].mxu0
        %v1385 = vadd.f32 0.0, %v1384
        %1386 = vmatprep.mubr.bf16.mxu0 0
        %1387 = vmatmul.mubr.bf16.gmra.mrb[0].mxu0 %v806
        %v1388 = vpop.f32.mrb[0].mxu0
        %v1389 = vadd.f32 0.0, %v1388
        %v1390 = vpop.f32.mrb[0].mxu0
        %v1391 = vadd.f32 0.0, %v1390
        %v1392 = vpop.f32.mrb[0].mxu0
        %v1393 = vadd.f32 0.0, %v1392
        %v1394 = vpop.f32.mrb[0].mxu0
        %v1395 = vadd.f32 0.0, %v1394
        %1396 = vmatprep.mubr.bf16.mxu0 0
        %1397 = vmatmul.mubr.bf16.gmra.mrb[0].mxu0 %v809
        %v1398 = vpop.f32.mrb[0].mxu0
        %v1399 = vadd.f32 0.0, %v1398
        %v1400 = vpop.f32.mrb[0].mxu0
        %v1401 = vadd.f32 0.0, %v1400
        %v1402 = vpop.f32.mrb[0].mxu0
        %v1403 = vadd.f32 0.0, %v1402
        %v1404 = vpop.f32.mrb[0].mxu0
        %v1405 = vadd.f32 0.0, %v1404
        %1406 = vmatprep.mubr.bf16.mxu0 0
        %1407 = vmatmul.mubr.bf16.gmra.mrb[0].mxu0 %v812
        %v1408 = vpop.f32.mrb[0].mxu0
        %v1409 = vadd.f32 0.0, %v1408
        %v1410 = vpop.f32.mrb[0].mxu0
        %v1411 = vadd.f32 0.0, %v1410
        %v1412 = vpop.f32.mrb[0].mxu0
        %v1413 = vadd.f32 0.0, %v1412
        %v1414 = vpop.f32.mrb[0].mxu0
        %v1415 = vadd.f32 0.0, %v1414
        %1416 = vmatprep.mubr.bf16.mxu0 0
        %1417 = vmatmul.mubr.bf16.gmra.mrb[0].mxu0 %v815
        %v1418 = vpop.f32.mrb[0].mxu0
        %v1419 = vadd.f32 0.0, %v1418
        %v1420 = vpop.f32.mrb[0].mxu0
        %v1421 = vadd.f32 0.0, %v1420
        %v1422 = vpop.f32.mrb[0].mxu0
        %v1423 = vadd.f32 0.0, %v1422
        %v1424 = vpop.f32.mrb[0].mxu0
        %v1425 = vadd.f32 0.0, %v1424
        %1426 = vmatprep.mubr.bf16.mxu0 0
        %1427 = vmatmul.mubr.bf16.gmra.mrb[0].mxu0 %v818
        %v1428 = vpop.f32.mrb[0].mxu0
        %v1429 = vadd.f32 0.0, %v1428
        %v1430 = vpop.f32.mrb[0].mxu0
        %v1431 = vadd.f32 0.0, %v1430
        %v1432 = vpop.f32.mrb[0].mxu0
        %v1433 = vadd.f32 0.0, %v1432
        %v1434 = vpop.f32.mrb[0].mxu0
        %v1435 = vadd.f32 0.0, %v1434
        %1436 = vmatprep.mubr.bf16.mxu0 0
        %1437 = vmatmul.mubr.bf16.gmra.mrb[0].mxu0 %v821
        %v1438 = vpop.f32.mrb[0].mxu0
        %v1439 = vadd.f32 0.0, %v1438
        %v1440 = vpop.f32.mrb[0].mxu0
        %v1441 = vadd.f32 0.0, %v1440
        %v1442 = vpop.f32.mrb[0].mxu0
        %v1443 = vadd.f32 0.0, %v1442
        %v1444 = vpop.f32.mrb[0].mxu0
        %v1445 = vadd.f32 0.0, %v1444
        %1446 = vmatprep.mubr.bf16.mxu0 0
        %1447 = vmatmul.mubr.bf16.gmra.mrb[0].mxu0 %v824
        %v1448 = vpop.f32.mrb[0].mxu0
        %v1449 = vadd.f32 0.0, %v1448
        %v1450 = vpop.f32.mrb[0].mxu0
        %v1451 = vadd.f32 0.0, %v1450
        %v1452 = vpop.f32.mrb[0].mxu0
        %v1453 = vadd.f32 0.0, %v1452
        %v1454 = vpop.f32.mrb[0].mxu0
        %v1455 = vadd.f32 0.0, %v1454
        %1456 = vmatprep.mubr.bf16.mxu0 0
        %1457 = vmatmul.mubr.bf16.gmra.mrb[0].mxu0 %v827
        %v1458 = vpop.f32.mrb[0].mxu0
        %v1459 = vadd.f32 0.0, %v1458
        %v1460 = vpop.f32.mrb[0].mxu0
        %v1461 = vadd.f32 0.0, %v1460
        %v1462 = vpop.f32.mrb[0].mxu0
        %v1463 = vadd.f32 0.0, %v1462
        %v1464 = vpop.f32.mrb[0].mxu0
        %v1465 = vadd.f32 0.0, %v1464
        %1466 = vmatprep.mubr.bf16.mxu0 0
        %1467 = vmatmul.mubr.bf16.gmra.mrb[0].mxu0 %v830
        %v1468 = vpop.f32.mrb[0].mxu0
        %v1469 = vadd.f32 0.0, %v1468
        %v1470 = vpop.f32.mrb[0].mxu0
        %v1471 = vadd.f32 0.0, %v1470
        %v1472 = vpop.f32.mrb[0].mxu0
        %v1473 = vadd.f32 0.0, %v1472
        %v1474 = vpop.f32.mrb[0].mxu0
        %v1475 = vadd.f32 0.0, %v1474
        %1476 = vmatprep.mubr.bf16.mxu0 0
        %1477 = vmatmul.mubr.bf16.gmra.mrb[0].mxu0 %v833
        %v1478 = vpop.f32.mrb[0].mxu0
        %v1479 = vadd.f32 0.0, %v1478
        %v1480 = vpop.f32.mrb[0].mxu0
        %v1481 = vadd.f32 0.0, %v1480
        %v1482 = vpop.f32.mrb[0].mxu0
        %v1483 = vadd.f32 0.0, %v1482
        %v1484 = vpop.f32.mrb[0].mxu0
        %v1485 = vadd.f32 0.0, %v1484
        %1486 = vmatprep.mubr.bf16.mxu0 0
        %1487 = vmatmul.mubr.bf16.gmra.mrb[0].mxu0 %v836
        %v1488 = vpop.f32.mrb[0].mxu0
        %v1489 = vadd.f32 0.0, %v1488
        %v1490 = vpop.f32.mrb[0].mxu0
        %v1491 = vadd.f32 0.0, %v1490
        %v1492 = vpop.f32.mrb[0].mxu0
        %v1493 = vadd.f32 0.0, %v1492
        %v1494 = vpop.f32.mrb[0].mxu0
        %v1495 = vadd.f32 0.0, %v1494
        %1496 = vmatprep.mubr.bf16.mxu0 0
        %1497 = vmatmul.mubr.bf16.gmra.mrb[0].mxu0 %v839
        %v1498 = vpop.f32.mrb[0].mxu0
        %v1499 = vadd.f32 0.0, %v1498
        %v1500 = vpop.f32.mrb[0].mxu0
        %v1501 = vadd.f32 0.0, %v1500
        %v1502 = vpop.f32.mrb[0].mxu0
        %v1503 = vadd.f32 0.0, %v1502
        %v1504 = vpop.f32.mrb[0].mxu0
        %v1505 = vadd.f32 0.0, %v1504
        %1506 = vmatprep.mubr.bf16.mxu0 0
        %1507 = vmatmul.mubr.bf16.gmra.mrb[0].mxu0 %v842
        %v1508 = vpop.f32.mrb[0].mxu0
        %v1509 = vadd.f32 0.0, %v1508
        %v1510 = vpop.f32.mrb[0].mxu0
        %v1511 = vadd.f32 0.0, %v1510
        %v1512 = vpop.f32.mrb[0].mxu0
        %v1513 = vadd.f32 0.0, %v1512
        %v1514 = vpop.f32.mrb[0].mxu0
        %v1515 = vadd.f32 0.0, %v1514
        %1516 = vmatprep.mubr.bf16.mxu0 0
        %1517 = vmatmul.mubr.bf16.gmra.mrb[0].mxu0 %v845
        %v1518 = vpop.f32.mrb[0].mxu0
        %v1519 = vadd.f32 0.0, %v1518
        %v1520 = vpop.f32.mrb[0].mxu0
        %v1521 = vadd.f32 0.0, %v1520
        %v1522 = vpop.f32.mrb[0].mxu0
        %v1523 = vadd.f32 0.0, %v1522
        %v1524 = vpop.f32.mrb[0].mxu0
        %v1525 = vadd.f32 0.0, %v1524
        %1526 = vdwg.mxu0
        %v1527 = vld [vmem:[%s3] sm:$0x1]
        %v1528 = vlaneseq
        %v1529 = vshrl.u32 %v1528, 7
        %v1530 = vsub.s32 0, %v1529
        %v1531 = vrot.slane %v1527, %v1530
        %v1532 = vadd.f32 %v889, %v1531
        %v1533 = vadd.f32 %v893, %v1531
        %v1534 = vadd.f32 %v899, %v1531
        %v1535 = vadd.f32 %v903, %v1531
        %v1536 = vadd.f32 %v909, %v1531
        %v1537 = vadd.f32 %v913, %v1531
        %v1538 = vadd.f32 %v919, %v1531
        %v1539 = vadd.f32 %v923, %v1531
        %v1540 = vadd.f32 %v929, %v1531
        %v1541 = vadd.f32 %v933, %v1531
        %v1542 = vadd.f32 %v939, %v1531
        %v1543 = vadd.f32 %v943, %v1531
        %v1544 = vadd.f32 %v949, %v1531
        %v1545 = vadd.f32 %v953, %v1531
        %v1546 = vadd.f32 %v959, %v1531
        %v1547 = vadd.f32 %v963, %v1531
        %v1548 = vadd.f32 %v969, %v1531
        %v1549 = vadd.f32 %v973, %v1531
        %v1550 = vadd.f32 %v979, %v1531
        %v1551 = vadd.f32 %v983, %v1531
        %v1552 = vadd.f32 %v989, %v1531
        %v1553 = vadd.f32 %v993, %v1531
        %v1554 = vadd.f32 %v999, %v1531
        %v1555 = vadd.f32 %v1003, %v1531
        %v1556 = vadd.f32 %v1009, %v1531
        %v1557 = vadd.f32 %v1013, %v1531
        %v1558 = vadd.f32 %v1019, %v1531
        %v1559 = vadd.f32 %v1023, %v1531
        %v1560 = vadd.f32 %v1029, %v1531
        %v1561 = vadd.f32 %v1033, %v1531
        %v1562 = vadd.f32 %v1039, %v1531
        %v1563 = vadd.f32 %v1043, %v1531
        %v1564 = vadd.f32 %v1049, %v1531
        %v1565 = vadd.f32 %v1053, %v1531
        %v1566 = vadd.f32 %v1059, %v1531
        %v1567 = vadd.f32 %v1063, %v1531
        %v1568 = vadd.f32 %v1069, %v1531
        %v1569 = vadd.f32 %v1073, %v1531
        %v1570 = vadd.f32 %v1079, %v1531
        %v1571 = vadd.f32 %v1083, %v1531
        %v1572 = vadd.f32 %v1089, %v1531
        %v1573 = vadd.f32 %v1093, %v1531
        %v1574 = vadd.f32 %v1099, %v1531
        %v1575 = vadd.f32 %v1103, %v1531
        %v1576 = vadd.f32 %v1109, %v1531
        %v1577 = vadd.f32 %v1113, %v1531
        %v1578 = vadd.f32 %v1119, %v1531
        %v1579 = vadd.f32 %v1123, %v1531
        %v1580 = vadd.f32 %v1129, %v1531
        %v1581 = vadd.f32 %v1133, %v1531
        %v1582 = vadd.f32 %v1139, %v1531
        %v1583 = vadd.f32 %v1143, %v1531
        %v1584 = vadd.f32 %v1149, %v1531
        %v1585 = vadd.f32 %v1153, %v1531
        %v1586 = vadd.f32 %v1159, %v1531
        %v1587 = vadd.f32 %v1163, %v1531
        %v1588 = vadd.f32 %v1169, %v1531
        %v1589 = vadd.f32 %v1173, %v1531
        %v1590 = vadd.f32 %v1179, %v1531
        %v1591 = vadd.f32 %v1183, %v1531
        %v1592 = vadd.f32 %v1189, %v1531
        %v1593 = vadd.f32 %v1193, %v1531
        %v1594 = vadd.f32 %v1199, %v1531
        %v1595 = vadd.f32 %v1203, %v1531
        %v1596 = vadd.f32 %v1209, %v1531
        %v1597 = vadd.f32 %v1213, %v1531
        %v1598 = vadd.f32 %v1219, %v1531
        %v1599 = vadd.f32 %v1223, %v1531
        %v1600 = vadd.f32 %v1229, %v1531
        %v1601 = vadd.f32 %v1233, %v1531
        %v1602 = vadd.f32 %v1239, %v1531
        %v1603 = vadd.f32 %v1243, %v1531
        %v1604 = vadd.f32 %v1249, %v1531
        %v1605 = vadd.f32 %v1253, %v1531
        %v1606 = vadd.f32 %v1259, %v1531
        %v1607 = vadd.f32 %v1263, %v1531
        %v1608 = vadd.f32 %v1269, %v1531
        %v1609 = vadd.f32 %v1273, %v1531
        %v1610 = vadd.f32 %v1279, %v1531
        %v1611 = vadd.f32 %v1283, %v1531
        %v1612 = vadd.f32 %v1289, %v1531
        %v1613 = vadd.f32 %v1293, %v1531
        %v1614 = vadd.f32 %v1299, %v1531
        %v1615 = vadd.f32 %v1303, %v1531
        %v1616 = vadd.f32 %v1309, %v1531
        %v1617 = vadd.f32 %v1313, %v1531
        %v1618 = vadd.f32 %v1319, %v1531
        %v1619 = vadd.f32 %v1323, %v1531
        %v1620 = vadd.f32 %v1329, %v1531
        %v1621 = vadd.f32 %v1333, %v1531
        %v1622 = vadd.f32 %v1339, %v1531
        %v1623 = vadd.f32 %v1343, %v1531
        %v1624 = vadd.f32 %v1349, %v1531
        %v1625 = vadd.f32 %v1353, %v1531
        %v1626 = vadd.f32 %v1359, %v1531
        %v1627 = vadd.f32 %v1363, %v1531
        %v1628 = vadd.f32 %v1369, %v1531
        %v1629 = vadd.f32 %v1373, %v1531
        %v1630 = vadd.f32 %v1379, %v1531
        %v1631 = vadd.f32 %v1383, %v1531
        %v1632 = vadd.f32 %v1389, %v1531
        %v1633 = vadd.f32 %v1393, %v1531
        %v1634 = vadd.f32 %v1399, %v1531
        %v1635 = vadd.f32 %v1403, %v1531
        %v1636 = vadd.f32 %v1409, %v1531
        %v1637 = vadd.f32 %v1413, %v1531
        %v1638 = vadd.f32 %v1419, %v1531
        %v1639 = vadd.f32 %v1423, %v1531
        %v1640 = vadd.f32 %v1429, %v1531
        %v1641 = vadd.f32 %v1433, %v1531
        %v1642 = vadd.f32 %v1439, %v1531
        %v1643 = vadd.f32 %v1443, %v1531
        %v1644 = vadd.f32 %v1449, %v1531
        %v1645 = vadd.f32 %v1453, %v1531
        %v1646 = vadd.f32 %v1459, %v1531
        %v1647 = vadd.f32 %v1463, %v1531
        %v1648 = vadd.f32 %v1469, %v1531
        %v1649 = vadd.f32 %v1473, %v1531
        %v1650 = vadd.f32 %v1479, %v1531
        %v1651 = vadd.f32 %v1483, %v1531
        %v1652 = vadd.f32 %v1489, %v1531
        %v1653 = vadd.f32 %v1493, %v1531
        %v1654 = vadd.f32 %v1499, %v1531
        %v1655 = vadd.f32 %v1503, %v1531
        %v1656 = vadd.f32 %v1509, %v1531
        %v1657 = vadd.f32 %v1513, %v1531
        %v1658 = vadd.f32 %v1519, %v1531
        %v1659 = vadd.f32 %v1523, %v1531
        %v1660 = vmax.f32 %v1532, 0.0
        %v1661 = vmax.f32 %v1533, 0.0
        %v1662 = vmax.f32 %v1534, 0.0
        %v1663 = vmax.f32 %v1535, 0.0
        %v1664 = vmax.f32 %v1536, 0.0
        %v1665 = vmax.f32 %v1537, 0.0
        %v1666 = vmax.f32 %v1538, 0.0
        %v1667 = vmax.f32 %v1539, 0.0
        %v1668 = vmax.f32 %v1540, 0.0
        %v1669 = vmax.f32 %v1541, 0.0
        %v1670 = vmax.f32 %v1542, 0.0
        %v1671 = vmax.f32 %v1543, 0.0
        %v1672 = vmax.f32 %v1544, 0.0
        %v1673 = vmax.f32 %v1545, 0.0
        %v1674 = vmax.f32 %v1546, 0.0
        %v1675 = vmax.f32 %v1547, 0.0
        %v1676 = vmax.f32 %v1548, 0.0
        %v1677 = vmax.f32 %v1549, 0.0
        %v1678 = vmax.f32 %v1550, 0.0
        %v1679 = vmax.f32 %v1551, 0.0
        %v1680 = vmax.f32 %v1552, 0.0
        %v1681 = vmax.f32 %v1553, 0.0
        %v1682 = vmax.f32 %v1554, 0.0
        %v1683 = vmax.f32 %v1555, 0.0
        %v1684 = vmax.f32 %v1556, 0.0
        %v1685 = vmax.f32 %v1557, 0.0
        %v1686 = vmax.f32 %v1558, 0.0
        %v1687 = vmax.f32 %v1559, 0.0
        %v1688 = vmax.f32 %v1560, 0.0
        %v1689 = vmax.f32 %v1561, 0.0
        %v1690 = vmax.f32 %v1562, 0.0
        %v1691 = vmax.f32 %v1563, 0.0
        %v1692 = vmax.f32 %v1564, 0.0
        %v1693 = vmax.f32 %v1565, 0.0
        %v1694 = vmax.f32 %v1566, 0.0
        %v1695 = vmax.f32 %v1567, 0.0
        %v1696 = vmax.f32 %v1568, 0.0
        %v1697 = vmax.f32 %v1569, 0.0
        %v1698 = vmax.f32 %v1570, 0.0
        %v1699 = vmax.f32 %v1571, 0.0
        %v1700 = vmax.f32 %v1572, 0.0
        %v1701 = vmax.f32 %v1573, 0.0
        %v1702 = vmax.f32 %v1574, 0.0
        %v1703 = vmax.f32 %v1575, 0.0
        %v1704 = vmax.f32 %v1576, 0.0
        %v1705 = vmax.f32 %v1577, 0.0
        %v1706 = vmax.f32 %v1578, 0.0
        %v1707 = vmax.f32 %v1579, 0.0
        %v1708 = vmax.f32 %v1580, 0.0
        %v1709 = vmax.f32 %v1581, 0.0
        %v1710 = vmax.f32 %v1582, 0.0
        %v1711 = vmax.f32 %v1583, 0.0
        %v1712 = vmax.f32 %v1584, 0.0
        %v1713 = vmax.f32 %v1585, 0.0
        %v1714 = vmax.f32 %v1586, 0.0
        %v1715 = vmax.f32 %v1587, 0.0
        %v1716 = vmax.f32 %v1588, 0.0
        %v1717 = vmax.f32 %v1589, 0.0
        %v1718 = vmax.f32 %v1590, 0.0
        %v1719 = vmax.f32 %v1591, 0.0
        %v1720 = vmax.f32 %v1592, 0.0
        %v1721 = vmax.f32 %v1593, 0.0
        %v1722 = vmax.f32 %v1594, 0.0
        %v1723 = vmax.f32 %v1595, 0.0
        %v1724 = vmax.f32 %v1596, 0.0
        %v1725 = vmax.f32 %v1597, 0.0
        %v1726 = vmax.f32 %v1598, 0.0
        %v1727 = vmax.f32 %v1599, 0.0
        %v1728 = vmax.f32 %v1600, 0.0
        %v1729 = vmax.f32 %v1601, 0.0
        %v1730 = vmax.f32 %v1602, 0.0
        %v1731 = vmax.f32 %v1603, 0.0
        %v1732 = vmax.f32 %v1604, 0.0
        %v1733 = vmax.f32 %v1605, 0.0
        %v1734 = vmax.f32 %v1606, 0.0
        %v1735 = vmax.f32 %v1607, 0.0
        %v1736 = vmax.f32 %v1608, 0.0
        %v1737 = vmax.f32 %v1609, 0.0
        %v1738 = vmax.f32 %v1610, 0.0
        %v1739 = vmax.f32 %v1611, 0.0
        %v1740 = vmax.f32 %v1612, 0.0
        %v1741 = vmax.f32 %v1613, 0.0
        %v1742 = vmax.f32 %v1614, 0.0
        %v1743 = vmax.f32 %v1615, 0.0
        %v1744 = vmax.f32 %v1616, 0.0
        %v1745 = vmax.f32 %v1617, 0.0
        %v1746 = vmax.f32 %v1618, 0.0
        %v1747 = vmax.f32 %v1619, 0.0
        %v1748 = vmax.f32 %v1620, 0.0
        %v1749 = vmax.f32 %v1621, 0.0
        %v1750 = vmax.f32 %v1622, 0.0
        %v1751 = vmax.f32 %v1623, 0.0
        %v1752 = vmax.f32 %v1624, 0.0
        %v1753 = vmax.f32 %v1625, 0.0
        %v1754 = vmax.f32 %v1626, 0.0
        %v1755 = vmax.f32 %v1627, 0.0
        %v1756 = vmax.f32 %v1628, 0.0
        %v1757 = vmax.f32 %v1629, 0.0
        %v1758 = vmax.f32 %v1630, 0.0
        %v1759 = vmax.f32 %v1631, 0.0
        %v1760 = vmax.f32 %v1632, 0.0
        %v1761 = vmax.f32 %v1633, 0.0
        %v1762 = vmax.f32 %v1634, 0.0
        %v1763 = vmax.f32 %v1635, 0.0
        %v1764 = vmax.f32 %v1636, 0.0
        %v1765 = vmax.f32 %v1637, 0.0
        %v1766 = vmax.f32 %v1638, 0.0
        %v1767 = vmax.f32 %v1639, 0.0
        %v1768 = vmax.f32 %v1640, 0.0
        %v1769 = vmax.f32 %v1641, 0.0
        %v1770 = vmax.f32 %v1642, 0.0
        %v1771 = vmax.f32 %v1643, 0.0
        %v1772 = vmax.f32 %v1644, 0.0
        %v1773 = vmax.f32 %v1645, 0.0
        %v1774 = vmax.f32 %v1646, 0.0
        %v1775 = vmax.f32 %v1647, 0.0
        %v1776 = vmax.f32 %v1648, 0.0
        %v1777 = vmax.f32 %v1649, 0.0
        %v1778 = vmax.f32 %v1650, 0.0
        %v1779 = vmax.f32 %v1651, 0.0
        %v1780 = vmax.f32 %v1652, 0.0
        %v1781 = vmax.f32 %v1653, 0.0
        %v1782 = vmax.f32 %v1654, 0.0
        %v1783 = vmax.f32 %v1655, 0.0
        %v1784 = vmax.f32 %v1656, 0.0
        %v1785 = vmax.f32 %v1657, 0.0
        %v1786 = vmax.f32 %v1658, 0.0
        %v1787 = vmax.f32 %v1659, 0.0
        %v1788 = vmax.f32 %v1660, %v1661
        %v1789 = vrot.slane %v1788, 4
        %v1790 = vmax.f32 %v1788, %v1789
        %v1791 = vrot.slane %v1790, 2
        %v1792 = vmax.f32 %v1790, %v1791
        %v1793 = vrot.slane %v1792, 1
        %v1794 = vmax.f32 %v1792, %v1793
        %v1795 = vmax.f32 %v1662, %v1663
        %v1796 = vrot.slane %v1795, 4
        %v1797 = vmax.f32 %v1795, %v1796
        %v1798 = vrot.slane %v1797, 2
        %v1799 = vmax.f32 %v1797, %v1798
        %v1800 = vrot.slane %v1799, 1
        %v1801 = vmax.f32 %v1799, %v1800
        %v1802 = vmax.f32 %v1664, %v1665
        %v1803 = vrot.slane %v1802, 4
        %v1804 = vmax.f32 %v1802, %v1803
        %v1805 = vrot.slane %v1804, 2
        %v1806 = vmax.f32 %v1804, %v1805
        %v1807 = vrot.slane %v1806, 1
        %v1808 = vmax.f32 %v1806, %v1807
        %v1809 = vmax.f32 %v1666, %v1667
        %v1810 = vrot.slane %v1809, 4
        %v1811 = vmax.f32 %v1809, %v1810
        %v1812 = vrot.slane %v1811, 2
        %v1813 = vmax.f32 %v1811, %v1812
        %v1814 = vrot.slane %v1813, 1
        %v1815 = vmax.f32 %v1813, %v1814
        %v1816 = vmax.f32 %v1668, %v1669
        %v1817 = vrot.slane %v1816, 4
        %v1818 = vmax.f32 %v1816, %v1817
        %v1819 = vrot.slane %v1818, 2
        %v1820 = vmax.f32 %v1818, %v1819
        %v1821 = vrot.slane %v1820, 1
        %v1822 = vmax.f32 %v1820, %v1821
        %v1823 = vmax.f32 %v1670, %v1671
        %v1824 = vrot.slane %v1823, 4
        %v1825 = vmax.f32 %v1823, %v1824
        %v1826 = vrot.slane %v1825, 2
        %v1827 = vmax.f32 %v1825, %v1826
        %v1828 = vrot.slane %v1827, 1
        %v1829 = vmax.f32 %v1827, %v1828
        %v1830 = vmax.f32 %v1672, %v1673
        %v1831 = vrot.slane %v1830, 4
        %v1832 = vmax.f32 %v1830, %v1831
        %v1833 = vrot.slane %v1832, 2
        %v1834 = vmax.f32 %v1832, %v1833
        %v1835 = vrot.slane %v1834, 1
        %v1836 = vmax.f32 %v1834, %v1835
        %v1837 = vmax.f32 %v1674, %v1675
        %v1838 = vrot.slane %v1837, 4
        %v1839 = vmax.f32 %v1837, %v1838
        %v1840 = vrot.slane %v1839, 2
        %v1841 = vmax.f32 %v1839, %v1840
        %v1842 = vrot.slane %v1841, 1
        %v1843 = vmax.f32 %v1841, %v1842
        %v1844 = vmax.f32 %v1676, %v1677
        %v1845 = vrot.slane %v1844, 4
        %v1846 = vmax.f32 %v1844, %v1845
        %v1847 = vrot.slane %v1846, 2
        %v1848 = vmax.f32 %v1846, %v1847
        %v1849 = vrot.slane %v1848, 1
        %v1850 = vmax.f32 %v1848, %v1849
        %v1851 = vmax.f32 %v1678, %v1679
        %v1852 = vrot.slane %v1851, 4
        %v1853 = vmax.f32 %v1851, %v1852
        %v1854 = vrot.slane %v1853, 2
        %v1855 = vmax.f32 %v1853, %v1854
        %v1856 = vrot.slane %v1855, 1
        %v1857 = vmax.f32 %v1855, %v1856
        %v1858 = vmax.f32 %v1680, %v1681
        %v1859 = vrot.slane %v1858, 4
        %v1860 = vmax.f32 %v1858, %v1859
        %v1861 = vrot.slane %v1860, 2
        %v1862 = vmax.f32 %v1860, %v1861
        %v1863 = vrot.slane %v1862, 1
        %v1864 = vmax.f32 %v1862, %v1863
        %v1865 = vmax.f32 %v1682, %v1683
        %v1866 = vrot.slane %v1865, 4
        %v1867 = vmax.f32 %v1865, %v1866
        %v1868 = vrot.slane %v1867, 2
        %v1869 = vmax.f32 %v1867, %v1868
        %v1870 = vrot.slane %v1869, 1
        %v1871 = vmax.f32 %v1869, %v1870
        %v1872 = vmax.f32 %v1684, %v1685
        %v1873 = vrot.slane %v1872, 4
        %v1874 = vmax.f32 %v1872, %v1873
        %v1875 = vrot.slane %v1874, 2
        %v1876 = vmax.f32 %v1874, %v1875
        %v1877 = vrot.slane %v1876, 1
        %v1878 = vmax.f32 %v1876, %v1877
        %v1879 = vmax.f32 %v1686, %v1687
        %v1880 = vrot.slane %v1879, 4
        %v1881 = vmax.f32 %v1879, %v1880
        %v1882 = vrot.slane %v1881, 2
        %v1883 = vmax.f32 %v1881, %v1882
        %v1884 = vrot.slane %v1883, 1
        %v1885 = vmax.f32 %v1883, %v1884
        %v1886 = vmax.f32 %v1688, %v1689
        %v1887 = vrot.slane %v1886, 4
        %v1888 = vmax.f32 %v1886, %v1887
        %v1889 = vrot.slane %v1888, 2
        %v1890 = vmax.f32 %v1888, %v1889
        %v1891 = vrot.slane %v1890, 1
        %v1892 = vmax.f32 %v1890, %v1891
        %v1893 = vmax.f32 %v1690, %v1691
        %v1894 = vrot.slane %v1893, 4
        %v1895 = vmax.f32 %v1893, %v1894
        %v1896 = vrot.slane %v1895, 2
        %v1897 = vmax.f32 %v1895, %v1896
        %v1898 = vrot.slane %v1897, 1
        %v1899 = vmax.f32 %v1897, %v1898
        %v1900 = vmax.f32 %v1692, %v1693
        %v1901 = vrot.slane %v1900, 4
        %v1902 = vmax.f32 %v1900, %v1901
        %v1903 = vrot.slane %v1902, 2
        %v1904 = vmax.f32 %v1902, %v1903
        %v1905 = vrot.slane %v1904, 1
        %v1906 = vmax.f32 %v1904, %v1905
        %v1907 = vmax.f32 %v1694, %v1695
        %v1908 = vrot.slane %v1907, 4
        %v1909 = vmax.f32 %v1907, %v1908
        %v1910 = vrot.slane %v1909, 2
        %v1911 = vmax.f32 %v1909, %v1910
        %v1912 = vrot.slane %v1911, 1
        %v1913 = vmax.f32 %v1911, %v1912
        %v1914 = vmax.f32 %v1696, %v1697
        %v1915 = vrot.slane %v1914, 4
        %v1916 = vmax.f32 %v1914, %v1915
        %v1917 = vrot.slane %v1916, 2
        %v1918 = vmax.f32 %v1916, %v1917
        %v1919 = vrot.slane %v1918, 1
        %v1920 = vmax.f32 %v1918, %v1919
        %v1921 = vmax.f32 %v1698, %v1699
        %v1922 = vrot.slane %v1921, 4
        %v1923 = vmax.f32 %v1921, %v1922
        %v1924 = vrot.slane %v1923, 2
        %v1925 = vmax.f32 %v1923, %v1924
        %v1926 = vrot.slane %v1925, 1
        %v1927 = vmax.f32 %v1925, %v1926
        %v1928 = vmax.f32 %v1700, %v1701
        %v1929 = vrot.slane %v1928, 4
        %v1930 = vmax.f32 %v1928, %v1929
        %v1931 = vrot.slane %v1930, 2
        %v1932 = vmax.f32 %v1930, %v1931
        %v1933 = vrot.slane %v1932, 1
        %v1934 = vmax.f32 %v1932, %v1933
        %v1935 = vmax.f32 %v1702, %v1703
        %v1936 = vrot.slane %v1935, 4
        %v1937 = vmax.f32 %v1935, %v1936
        %v1938 = vrot.slane %v1937, 2
        %v1939 = vmax.f32 %v1937, %v1938
        %v1940 = vrot.slane %v1939, 1
        %v1941 = vmax.f32 %v1939, %v1940
        %v1942 = vmax.f32 %v1704, %v1705
        %v1943 = vrot.slane %v1942, 4
        %v1944 = vmax.f32 %v1942, %v1943
        %v1945 = vrot.slane %v1944, 2
        %v1946 = vmax.f32 %v1944, %v1945
        %v1947 = vrot.slane %v1946, 1
        %v1948 = vmax.f32 %v1946, %v1947
        %v1949 = vmax.f32 %v1706, %v1707
        %v1950 = vrot.slane %v1949, 4
        %v1951 = vmax.f32 %v1949, %v1950
        %v1952 = vrot.slane %v1951, 2
        %v1953 = vmax.f32 %v1951, %v1952
        %v1954 = vrot.slane %v1953, 1
        %v1955 = vmax.f32 %v1953, %v1954
        %v1956 = vmax.f32 %v1708, %v1709
        %v1957 = vrot.slane %v1956, 4
        %v1958 = vmax.f32 %v1956, %v1957
        %v1959 = vrot.slane %v1958, 2
        %v1960 = vmax.f32 %v1958, %v1959
        %v1961 = vrot.slane %v1960, 1
        %v1962 = vmax.f32 %v1960, %v1961
        %v1963 = vmax.f32 %v1710, %v1711
        %v1964 = vrot.slane %v1963, 4
        %v1965 = vmax.f32 %v1963, %v1964
        %v1966 = vrot.slane %v1965, 2
        %v1967 = vmax.f32 %v1965, %v1966
        %v1968 = vrot.slane %v1967, 1
        %v1969 = vmax.f32 %v1967, %v1968
        %v1970 = vmax.f32 %v1712, %v1713
        %v1971 = vrot.slane %v1970, 4
        %v1972 = vmax.f32 %v1970, %v1971
        %v1973 = vrot.slane %v1972, 2
        %v1974 = vmax.f32 %v1972, %v1973
        %v1975 = vrot.slane %v1974, 1
        %v1976 = vmax.f32 %v1974, %v1975
        %v1977 = vmax.f32 %v1714, %v1715
        %v1978 = vrot.slane %v1977, 4
        %v1979 = vmax.f32 %v1977, %v1978
        %v1980 = vrot.slane %v1979, 2
        %v1981 = vmax.f32 %v1979, %v1980
        %v1982 = vrot.slane %v1981, 1
        %v1983 = vmax.f32 %v1981, %v1982
        %v1984 = vmax.f32 %v1716, %v1717
        %v1985 = vrot.slane %v1984, 4
        %v1986 = vmax.f32 %v1984, %v1985
        %v1987 = vrot.slane %v1986, 2
        %v1988 = vmax.f32 %v1986, %v1987
        %v1989 = vrot.slane %v1988, 1
        %v1990 = vmax.f32 %v1988, %v1989
        %v1991 = vmax.f32 %v1718, %v1719
        %v1992 = vrot.slane %v1991, 4
        %v1993 = vmax.f32 %v1991, %v1992
        %v1994 = vrot.slane %v1993, 2
        %v1995 = vmax.f32 %v1993, %v1994
        %v1996 = vrot.slane %v1995, 1
        %v1997 = vmax.f32 %v1995, %v1996
        %v1998 = vmax.f32 %v1720, %v1721
        %v1999 = vrot.slane %v1998, 4
        %v2000 = vmax.f32 %v1998, %v1999
        %v2001 = vrot.slane %v2000, 2
        %v2002 = vmax.f32 %v2000, %v2001
        %v2003 = vrot.slane %v2002, 1
        %v2004 = vmax.f32 %v2002, %v2003
        %v2005 = vmax.f32 %v1722, %v1723
        %v2006 = vrot.slane %v2005, 4
        %v2007 = vmax.f32 %v2005, %v2006
        %v2008 = vrot.slane %v2007, 2
        %v2009 = vmax.f32 %v2007, %v2008
        %v2010 = vrot.slane %v2009, 1
        %v2011 = vmax.f32 %v2009, %v2010
        %v2012 = vmax.f32 %v1724, %v1725
        %v2013 = vrot.slane %v2012, 4
        %v2014 = vmax.f32 %v2012, %v2013
        %v2015 = vrot.slane %v2014, 2
        %v2016 = vmax.f32 %v2014, %v2015
        %v2017 = vrot.slane %v2016, 1
        %v2018 = vmax.f32 %v2016, %v2017
        %v2019 = vmax.f32 %v1726, %v1727
        %v2020 = vrot.slane %v2019, 4
        %v2021 = vmax.f32 %v2019, %v2020
        %v2022 = vrot.slane %v2021, 2
        %v2023 = vmax.f32 %v2021, %v2022
        %v2024 = vrot.slane %v2023, 1
        %v2025 = vmax.f32 %v2023, %v2024
        %v2026 = vmax.f32 %v1728, %v1729
        %v2027 = vrot.slane %v2026, 4
        %v2028 = vmax.f32 %v2026, %v2027
        %v2029 = vrot.slane %v2028, 2
        %v2030 = vmax.f32 %v2028, %v2029
        %v2031 = vrot.slane %v2030, 1
        %v2032 = vmax.f32 %v2030, %v2031
        %v2033 = vmax.f32 %v1730, %v1731
        %v2034 = vrot.slane %v2033, 4
        %v2035 = vmax.f32 %v2033, %v2034
        %v2036 = vrot.slane %v2035, 2
        %v2037 = vmax.f32 %v2035, %v2036
        %v2038 = vrot.slane %v2037, 1
        %v2039 = vmax.f32 %v2037, %v2038
        %v2040 = vmax.f32 %v1732, %v1733
        %v2041 = vrot.slane %v2040, 4
        %v2042 = vmax.f32 %v2040, %v2041
        %v2043 = vrot.slane %v2042, 2
        %v2044 = vmax.f32 %v2042, %v2043
        %v2045 = vrot.slane %v2044, 1
        %v2046 = vmax.f32 %v2044, %v2045
        %v2047 = vmax.f32 %v1734, %v1735
        %v2048 = vrot.slane %v2047, 4
        %v2049 = vmax.f32 %v2047, %v2048
        %v2050 = vrot.slane %v2049, 2
        %v2051 = vmax.f32 %v2049, %v2050
        %v2052 = vrot.slane %v2051, 1
        %v2053 = vmax.f32 %v2051, %v2052
        %v2054 = vmax.f32 %v1736, %v1737
        %v2055 = vrot.slane %v2054, 4
        %v2056 = vmax.f32 %v2054, %v2055
        %v2057 = vrot.slane %v2056, 2
        %v2058 = vmax.f32 %v2056, %v2057
        %v2059 = vrot.slane %v2058, 1
        %v2060 = vmax.f32 %v2058, %v2059
        %v2061 = vmax.f32 %v1738, %v1739
        %v2062 = vrot.slane %v2061, 4
        %v2063 = vmax.f32 %v2061, %v2062
        %v2064 = vrot.slane %v2063, 2
        %v2065 = vmax.f32 %v2063, %v2064
        %v2066 = vrot.slane %v2065, 1
        %v2067 = vmax.f32 %v2065, %v2066
        %v2068 = vmax.f32 %v1740, %v1741
        %v2069 = vrot.slane %v2068, 4
        %v2070 = vmax.f32 %v2068, %v2069
        %v2071 = vrot.slane %v2070, 2
        %v2072 = vmax.f32 %v2070, %v2071
        %v2073 = vrot.slane %v2072, 1
        %v2074 = vmax.f32 %v2072, %v2073
        %v2075 = vmax.f32 %v1742, %v1743
        %v2076 = vrot.slane %v2075, 4
        %v2077 = vmax.f32 %v2075, %v2076
        %v2078 = vrot.slane %v2077, 2
        %v2079 = vmax.f32 %v2077, %v2078
        %v2080 = vrot.slane %v2079, 1
        %v2081 = vmax.f32 %v2079, %v2080
        %v2082 = vmax.f32 %v1744, %v1745
        %v2083 = vrot.slane %v2082, 4
        %v2084 = vmax.f32 %v2082, %v2083
        %v2085 = vrot.slane %v2084, 2
        %v2086 = vmax.f32 %v2084, %v2085
        %v2087 = vrot.slane %v2086, 1
        %v2088 = vmax.f32 %v2086, %v2087
        %v2089 = vmax.f32 %v1746, %v1747
        %v2090 = vrot.slane %v2089, 4
        %v2091 = vmax.f32 %v2089, %v2090
        %v2092 = vrot.slane %v2091, 2
        %v2093 = vmax.f32 %v2091, %v2092
        %v2094 = vrot.slane %v2093, 1
        %v2095 = vmax.f32 %v2093, %v2094
        %v2096 = vmax.f32 %v1748, %v1749
        %v2097 = vrot.slane %v2096, 4
        %v2098 = vmax.f32 %v2096, %v2097
        %v2099 = vrot.slane %v2098, 2
        %v2100 = vmax.f32 %v2098, %v2099
        %v2101 = vrot.slane %v2100, 1
        %v2102 = vmax.f32 %v2100, %v2101
        %v2103 = vmax.f32 %v1750, %v1751
        %v2104 = vrot.slane %v2103, 4
        %v2105 = vmax.f32 %v2103, %v2104
        %v2106 = vrot.slane %v2105, 2
        %v2107 = vmax.f32 %v2105, %v2106
        %v2108 = vrot.slane %v2107, 1
        %v2109 = vmax.f32 %v2107, %v2108
        %v2110 = vmax.f32 %v1752, %v1753
        %v2111 = vrot.slane %v2110, 4
        %v2112 = vmax.f32 %v2110, %v2111
        %v2113 = vrot.slane %v2112, 2
        %v2114 = vmax.f32 %v2112, %v2113
        %v2115 = vrot.slane %v2114, 1
        %v2116 = vmax.f32 %v2114, %v2115
        %v2117 = vmax.f32 %v1754, %v1755
        %v2118 = vrot.slane %v2117, 4
        %v2119 = vmax.f32 %v2117, %v2118
        %v2120 = vrot.slane %v2119, 2
        %v2121 = vmax.f32 %v2119, %v2120
        %v2122 = vrot.slane %v2121, 1
        %v2123 = vmax.f32 %v2121, %v2122
        %v2124 = vmax.f32 %v1756, %v1757
        %v2125 = vrot.slane %v2124, 4
        %v2126 = vmax.f32 %v2124, %v2125
        %v2127 = vrot.slane %v2126, 2
        %v2128 = vmax.f32 %v2126, %v2127
        %v2129 = vrot.slane %v2128, 1
        %v2130 = vmax.f32 %v2128, %v2129
        %v2131 = vmax.f32 %v1758, %v1759
        %v2132 = vrot.slane %v2131, 4
        %v2133 = vmax.f32 %v2131, %v2132
        %v2134 = vrot.slane %v2133, 2
        %v2135 = vmax.f32 %v2133, %v2134
        %v2136 = vrot.slane %v2135, 1
        %v2137 = vmax.f32 %v2135, %v2136
        %v2138 = vmax.f32 %v1760, %v1761
        %v2139 = vrot.slane %v2138, 4
        %v2140 = vmax.f32 %v2138, %v2139
        %v2141 = vrot.slane %v2140, 2
        %v2142 = vmax.f32 %v2140, %v2141
        %v2143 = vrot.slane %v2142, 1
        %v2144 = vmax.f32 %v2142, %v2143
        %v2145 = vmax.f32 %v1762, %v1763
        %v2146 = vrot.slane %v2145, 4
        %v2147 = vmax.f32 %v2145, %v2146
        %v2148 = vrot.slane %v2147, 2
        %v2149 = vmax.f32 %v2147, %v2148
        %v2150 = vrot.slane %v2149, 1
        %v2151 = vmax.f32 %v2149, %v2150
        %v2152 = vmax.f32 %v1764, %v1765
        %v2153 = vrot.slane %v2152, 4
        %v2154 = vmax.f32 %v2152, %v2153
        %v2155 = vrot.slane %v2154, 2
        %v2156 = vmax.f32 %v2154, %v2155
        %v2157 = vrot.slane %v2156, 1
        %v2158 = vmax.f32 %v2156, %v2157
        %v2159 = vmax.f32 %v1766, %v1767
        %v2160 = vrot.slane %v2159, 4
        %v2161 = vmax.f32 %v2159, %v2160
        %v2162 = vrot.slane %v2161, 2
        %v2163 = vmax.f32 %v2161, %v2162
        %v2164 = vrot.slane %v2163, 1
        %v2165 = vmax.f32 %v2163, %v2164
        %v2166 = vmax.f32 %v1768, %v1769
        %v2167 = vrot.slane %v2166, 4
        %v2168 = vmax.f32 %v2166, %v2167
        %v2169 = vrot.slane %v2168, 2
        %v2170 = vmax.f32 %v2168, %v2169
        %v2171 = vrot.slane %v2170, 1
        %v2172 = vmax.f32 %v2170, %v2171
        %v2173 = vmax.f32 %v1770, %v1771
        %v2174 = vrot.slane %v2173, 4
        %v2175 = vmax.f32 %v2173, %v2174
        %v2176 = vrot.slane %v2175, 2
        %v2177 = vmax.f32 %v2175, %v2176
        %v2178 = vrot.slane %v2177, 1
        %v2179 = vmax.f32 %v2177, %v2178
        %v2180 = vmax.f32 %v1772, %v1773
        %v2181 = vrot.slane %v2180, 4
        %v2182 = vmax.f32 %v2180, %v2181
        %v2183 = vrot.slane %v2182, 2
        %v2184 = vmax.f32 %v2182, %v2183
        %v2185 = vrot.slane %v2184, 1
        %v2186 = vmax.f32 %v2184, %v2185
        %v2187 = vmax.f32 %v1774, %v1775
        %v2188 = vrot.slane %v2187, 4
        %v2189 = vmax.f32 %v2187, %v2188
        %v2190 = vrot.slane %v2189, 2
        %v2191 = vmax.f32 %v2189, %v2190
        %v2192 = vrot.slane %v2191, 1
        %v2193 = vmax.f32 %v2191, %v2192
        %v2194 = vmax.f32 %v1776, %v1777
        %v2195 = vrot.slane %v2194, 4
        %v2196 = vmax.f32 %v2194, %v2195
        %v2197 = vrot.slane %v2196, 2
        %v2198 = vmax.f32 %v2196, %v2197
        %v2199 = vrot.slane %v2198, 1
        %v2200 = vmax.f32 %v2198, %v2199
        %v2201 = vmax.f32 %v1778, %v1779
        %v2202 = vrot.slane %v2201, 4
        %v2203 = vmax.f32 %v2201, %v2202
        %v2204 = vrot.slane %v2203, 2
        %v2205 = vmax.f32 %v2203, %v2204
        %v2206 = vrot.slane %v2205, 1
        %v2207 = vmax.f32 %v2205, %v2206
        %v2208 = vmax.f32 %v1780, %v1781
        %v2209 = vrot.slane %v2208, 4
        %v2210 = vmax.f32 %v2208, %v2209
        %v2211 = vrot.slane %v2210, 2
        %v2212 = vmax.f32 %v2210, %v2211
        %v2213 = vrot.slane %v2212, 1
        %v2214 = vmax.f32 %v2212, %v2213
        %v2215 = vmax.f32 %v1782, %v1783
        %v2216 = vrot.slane %v2215, 4
        %v2217 = vmax.f32 %v2215, %v2216
        %v2218 = vrot.slane %v2217, 2
        %v2219 = vmax.f32 %v2217, %v2218
        %v2220 = vrot.slane %v2219, 1
        %v2221 = vmax.f32 %v2219, %v2220
        %v2222 = vmax.f32 %v1784, %v1785
        %v2223 = vrot.slane %v2222, 4
        %v2224 = vmax.f32 %v2222, %v2223
        %v2225 = vrot.slane %v2224, 2
        %v2226 = vmax.f32 %v2224, %v2225
        %v2227 = vrot.slane %v2226, 1
        %v2228 = vmax.f32 %v2226, %v2227
        %v2229 = vmax.f32 %v1786, %v1787
        %v2230 = vrot.slane %v2229, 4
        %v2231 = vmax.f32 %v2229, %v2230
        %v2232 = vrot.slane %v2231, 2
        %v2233 = vmax.f32 %v2231, %v2232
        %v2234 = vrot.slane %v2233, 1
        %v2235 = vmax.f32 %v2233, %v2234
        %v2236 = vpack.c.bf16 %v1794, %v1794
        %v2237 = vpack.c.bf16 %v1801, %v1801
        %v2238 = vpack.c.bf16 %v1808, %v1808
        %v2239 = vpack.c.bf16 %v1815, %v1815
        %v2240 = vpack.c.bf16 %v1822, %v1822
        %v2241 = vpack.c.bf16 %v1829, %v1829
        %v2242 = vpack.c.bf16 %v1836, %v1836
        %v2243 = vpack.c.bf16 %v1843, %v1843
        %v2244 = vpack.c.bf16 %v1850, %v1850
        %v2245 = vpack.c.bf16 %v1857, %v1857
        %v2246 = vpack.c.bf16 %v1864, %v1864
        %v2247 = vpack.c.bf16 %v1871, %v1871
        %v2248 = vpack.c.bf16 %v1878, %v1878
        %v2249 = vpack.c.bf16 %v1885, %v1885
        %v2250 = vpack.c.bf16 %v1892, %v1892
        %v2251 = vpack.c.bf16 %v1899, %v1899
        %v2252 = vpack.c.bf16 %v1906, %v1906
        %v2253 = vpack.c.bf16 %v1913, %v1913
        %v2254 = vpack.c.bf16 %v1920, %v1920
        %v2255 = vpack.c.bf16 %v1927, %v1927
        %v2256 = vpack.c.bf16 %v1934, %v1934
        %v2257 = vpack.c.bf16 %v1941, %v1941
        %v2258 = vpack.c.bf16 %v1948, %v1948
        %v2259 = vpack.c.bf16 %v1955, %v1955
        %v2260 = vpack.c.bf16 %v1962, %v1962
        %v2261 = vpack.c.bf16 %v1969, %v1969
        %v2262 = vpack.c.bf16 %v1976, %v1976
        %v2263 = vpack.c.bf16 %v1983, %v1983
        %v2264 = vpack.c.bf16 %v1990, %v1990
        %v2265 = vpack.c.bf16 %v1997, %v1997
        %v2266 = vpack.c.bf16 %v2004, %v2004
        %v2267 = vpack.c.bf16 %v2011, %v2011
        %v2268 = vpack.c.bf16 %v2018, %v2018
        %v2269 = vpack.c.bf16 %v2025, %v2025
        %v2270 = vpack.c.bf16 %v2032, %v2032
        %v2271 = vpack.c.bf16 %v2039, %v2039
        %v2272 = vpack.c.bf16 %v2046, %v2046
        %v2273 = vpack.c.bf16 %v2053, %v2053
        %v2274 = vpack.c.bf16 %v2060, %v2060
        %v2275 = vpack.c.bf16 %v2067, %v2067
        %v2276 = vpack.c.bf16 %v2074, %v2074
        %v2277 = vpack.c.bf16 %v2081, %v2081
        %v2278 = vpack.c.bf16 %v2088, %v2088
        %v2279 = vpack.c.bf16 %v2095, %v2095
        %v2280 = vpack.c.bf16 %v2102, %v2102
        %v2281 = vpack.c.bf16 %v2109, %v2109
        %v2282 = vpack.c.bf16 %v2116, %v2116
        %v2283 = vpack.c.bf16 %v2123, %v2123
        %v2284 = vpack.c.bf16 %v2130, %v2130
        %v2285 = vpack.c.bf16 %v2137, %v2137
        %v2286 = vpack.c.bf16 %v2144, %v2144
        %v2287 = vpack.c.bf16 %v2151, %v2151
        %v2288 = vpack.c.bf16 %v2158, %v2158
        %v2289 = vpack.c.bf16 %v2165, %v2165
        %v2290 = vpack.c.bf16 %v2172, %v2172
        %v2291 = vpack.c.bf16 %v2179, %v2179
        %v2292 = vpack.c.bf16 %v2186, %v2186
        %v2293 = vpack.c.bf16 %v2193, %v2193
        %v2294 = vpack.c.bf16 %v2200, %v2200
        %v2295 = vpack.c.bf16 %v2207, %v2207
        %v2296 = vpack.c.bf16 %v2214, %v2214
        %v2297 = vpack.c.bf16 %v2221, %v2221
        %v2298 = vpack.c.bf16 %v2228, %v2228
        %v2299 = vpack.c.bf16 %v2235, %v2235
        %v2300 = vld [vmem:[%s2] sm:$0xf]
        %v2301 = vld [vmem:[%s2 + $0x18] sm:$0xf]
        %v2302 = vld [vmem:[%s2 + $0x30] sm:$0xf]
        %v2303 = vld [vmem:[%s2 + $0x48] sm:$0xf]
        %v2304 = vld [vmem:[%s2 + $0x60] sm:$0xf]
        %v2305 = vld [vmem:[%s2 + $0x78] sm:$0xf]
        %v2306 = vld [vmem:[%s2 + $0x90] sm:$0xf]
        %v2307 = vld [vmem:[%s2 + $0xa8] sm:$0xf]
        %v2308 = vld [vmem:[%s2 + $0xc0] sm:$0xf]
        %v2309 = vld [vmem:[%s2 + $0xd8] sm:$0xf]
        %v2310 = vld [vmem:[%s2 + $0xf0] sm:$0xf]
        %v2311 = vld [vmem:[%s2 + $0x108] sm:$0xf]
        %v2312 = vld [vmem:[%s2 + $0x120] sm:$0xf]
        %v2313 = vld [vmem:[%s2 + $0x138] sm:$0xf]
        %v2314 = vld [vmem:[%s2 + $0x150] sm:$0xf]
        %v2315 = vld [vmem:[%s2 + $0x168] sm:$0xf]
        %v2380 = vunpack.c.l.b16 %v2236
        %v2381 = vunpack.c.l.b16 %v2237
        %v2382 = vunpack.c.l.b16 %v2238
        %v2383 = vunpack.c.l.b16 %v2239
        %v2384 = vunpack.c.l.b16 %v2240
        %v2385 = vunpack.c.l.b16 %v2241
        %v2386 = vunpack.c.l.b16 %v2242
        %v2387 = vunpack.c.l.b16 %v2243
        %v2388 = vunpack.c.l.b16 %v2244
        %v2389 = vunpack.c.l.b16 %v2245
        %v2390 = vunpack.c.l.b16 %v2246
        %v2391 = vunpack.c.l.b16 %v2247
        %v2392 = vunpack.c.l.b16 %v2248
        %v2393 = vunpack.c.l.b16 %v2249
        %v2394 = vunpack.c.l.b16 %v2250
        %v2395 = vunpack.c.l.b16 %v2251
        %v2396 = vunpack.c.l.b16 %v2252
        %v2397 = vunpack.c.l.b16 %v2253
        %v2398 = vunpack.c.l.b16 %v2254
        %v2399 = vunpack.c.l.b16 %v2255
        %v2400 = vunpack.c.l.b16 %v2256
        %v2401 = vunpack.c.l.b16 %v2257
        %v2402 = vunpack.c.l.b16 %v2258
        %v2403 = vunpack.c.l.b16 %v2259
        %v2404 = vunpack.c.l.b16 %v2260
        %v2405 = vunpack.c.l.b16 %v2261
        %v2406 = vunpack.c.l.b16 %v2262
        %v2407 = vunpack.c.l.b16 %v2263
        %v2408 = vunpack.c.l.b16 %v2264
        %v2409 = vunpack.c.l.b16 %v2265
        %v2410 = vunpack.c.l.b16 %v2266
        %v2411 = vunpack.c.l.b16 %v2267
        %v2412 = vunpack.c.l.b16 %v2268
        %v2413 = vunpack.c.l.b16 %v2269
        %v2414 = vunpack.c.l.b16 %v2270
        %v2415 = vunpack.c.l.b16 %v2271
        %v2416 = vunpack.c.l.b16 %v2272
        %v2417 = vunpack.c.l.b16 %v2273
        %v2418 = vunpack.c.l.b16 %v2274
        %v2419 = vunpack.c.l.b16 %v2275
        %v2420 = vunpack.c.l.b16 %v2276
        %v2421 = vunpack.c.l.b16 %v2277
        %v2422 = vunpack.c.l.b16 %v2278
        %v2423 = vunpack.c.l.b16 %v2279
        %v2424 = vunpack.c.l.b16 %v2280
        %v2425 = vunpack.c.l.b16 %v2281
        %v2426 = vunpack.c.l.b16 %v2282
        %v2427 = vunpack.c.l.b16 %v2283
        %v2428 = vunpack.c.l.b16 %v2284
        %v2429 = vunpack.c.l.b16 %v2285
        %v2430 = vunpack.c.l.b16 %v2286
        %v2431 = vunpack.c.l.b16 %v2287
        %v2432 = vunpack.c.l.b16 %v2288
        %v2433 = vunpack.c.l.b16 %v2289
        %v2434 = vunpack.c.l.b16 %v2290
        %v2435 = vunpack.c.l.b16 %v2291
        %v2436 = vunpack.c.l.b16 %v2292
        %v2437 = vunpack.c.l.b16 %v2293
        %v2438 = vunpack.c.l.b16 %v2294
        %v2439 = vunpack.c.l.b16 %v2295
        %v2440 = vunpack.c.l.b16 %v2296
        %v2441 = vunpack.c.l.b16 %v2297
        %v2442 = vunpack.c.l.b16 %v2298
        %v2443 = vunpack.c.l.b16 %v2299
        %vm2444 = vcmask 1041409
        %v2445 = vsel %vm2444, %v2381, %v2380
        %vm2446 = vcmask 1042434
        %v2447 = vsel %vm2446, %v2382, %v2445
        %vm2448 = vcmask 1043459
        %v2449 = vsel %vm2448, %v2383, %v2447
        %vm2450 = vcmask 1044484
        %v2451 = vsel %vm2450, %v2384, %v2449
        %vm2452 = vcmask 1045509
        %v2453 = vsel %vm2452, %v2385, %v2451
        %vm2454 = vcmask 1046534
        %v2455 = vsel %vm2454, %v2386, %v2453
        %vm2456 = vcmask 1047559
        %v2457 = vsel %vm2456, %v2387, %v2455
        %v2458 = vsel %vm2444, %v2389, %v2388
        %v2459 = vsel %vm2446, %v2390, %v2458
        %v2460 = vsel %vm2448, %v2391, %v2459
        %v2461 = vsel %vm2450, %v2392, %v2460
        %v2462 = vsel %vm2452, %v2393, %v2461
        %v2463 = vsel %vm2454, %v2394, %v2462
        %v2464 = vsel %vm2456, %v2395, %v2463
        %v2465 = vsel %vm2444, %v2397, %v2396
        %v2466 = vsel %vm2446, %v2398, %v2465
        %v2467 = vsel %vm2448, %v2399, %v2466
        %v2468 = vsel %vm2450, %v2400, %v2467
        %v2469 = vsel %vm2452, %v2401, %v2468
        %v2470 = vsel %vm2454, %v2402, %v2469
        %v2471 = vsel %vm2456, %v2403, %v2470
        %v2472 = vsel %vm2444, %v2405, %v2404
        %v2473 = vsel %vm2446, %v2406, %v2472
        %v2474 = vsel %vm2448, %v2407, %v2473
        %v2475 = vsel %vm2450, %v2408, %v2474
        %v2476 = vsel %vm2452, %v2409, %v2475
        %v2477 = vsel %vm2454, %v2410, %v2476
        %v2478 = vsel %vm2456, %v2411, %v2477
        %v2479 = vsel %vm2444, %v2413, %v2412
        %v2480 = vsel %vm2446, %v2414, %v2479
        %v2481 = vsel %vm2448, %v2415, %v2480
        %v2482 = vsel %vm2450, %v2416, %v2481
        %v2483 = vsel %vm2452, %v2417, %v2482
        %v2484 = vsel %vm2454, %v2418, %v2483
        %v2485 = vsel %vm2456, %v2419, %v2484
        %v2486 = vsel %vm2444, %v2421, %v2420
        %v2487 = vsel %vm2446, %v2422, %v2486
        %v2488 = vsel %vm2448, %v2423, %v2487
        %v2489 = vsel %vm2450, %v2424, %v2488
        %v2490 = vsel %vm2452, %v2425, %v2489
        %v2491 = vsel %vm2454, %v2426, %v2490
        %v2492 = vsel %vm2456, %v2427, %v2491
        %v2493 = vsel %vm2444, %v2429, %v2428
        %v2494 = vsel %vm2446, %v2430, %v2493
        %v2495 = vsel %vm2448, %v2431, %v2494
        %v2496 = vsel %vm2450, %v2432, %v2495
        %v2497 = vsel %vm2452, %v2433, %v2496
        %v2498 = vsel %vm2454, %v2434, %v2497
        %v2499 = vsel %vm2456, %v2435, %v2498
        %v2500 = vsel %vm2444, %v2437, %v2436
        %v2501 = vsel %vm2446, %v2438, %v2500
        %v2502 = vsel %vm2448, %v2439, %v2501
        %v2503 = vsel %vm2450, %v2440, %v2502
        %v2504 = vsel %vm2452, %v2441, %v2503
        %v2505 = vsel %vm2454, %v2442, %v2504
        %v2506 = vsel %vm2456, %v2443, %v2505
        %v2507 = vpack.c.b16 %v2464, %v2457
        %v2508 = vpack.c.b16 %v2478, %v2471
        %v2509 = vpack.c.b16 %v2492, %v2485
        %v2510 = vpack.c.b16 %v2506, %v2499
        %v2531 = vunpack.c.l.b16 %v2300
        %v2532 = vunpack.c.l.b16 %v2301
        %v2533 = vunpack.c.l.b16 %v2302
        %v2534 = vunpack.c.l.b16 %v2303
        %v2535 = vunpack.c.l.b16 %v2304
        %v2536 = vunpack.c.l.b16 %v2305
        %v2537 = vunpack.c.l.b16 %v2306
        %v2538 = vunpack.c.l.b16 %v2307
        %v2539 = vunpack.c.l.b16 %v2308
        %v2540 = vunpack.c.l.b16 %v2309
        %v2541 = vunpack.c.l.b16 %v2310
        %v2542 = vunpack.c.l.b16 %v2311
        %v2543 = vunpack.c.l.b16 %v2312
        %v2544 = vunpack.c.l.b16 %v2313
        %v2545 = vunpack.c.l.b16 %v2314
        %v2546 = vunpack.c.l.b16 %v2315
        %v2547 = vpack.c.b16 %v2532, %v2531
        %v2548 = vpack.c.b16 %v2534, %v2533
        %v2549 = vpack.c.b16 %v2536, %v2535
        %v2550 = vpack.c.b16 %v2538, %v2537
        %v2551 = vpack.c.b16 %v2540, %v2539
        %v2552 = vpack.c.b16 %v2542, %v2541
        %v2553 = vpack.c.b16 %v2544, %v2543
        %v2554 = vpack.c.b16 %v2546, %v2545
        %2563 = vmatprep.subr.bf16.mxu0 0
        %2564 = vmatpush1.bf16.msra.mxu0 %v2547
        %2565 = vmatprep.subr.bf16.mxu0 0
        %2566 = vmatpush1.bf16.msra.mxu0 %v2548
        %2567 = vmatprep.subr.bf16.mxu0 0
        %2568 = vmatpush1.bf16.msra.mxu0 %v2549
        %2569 = vmatprep.subr.bf16.mxu0 0
        %2570 = vmatpush1.bf16.msra.mxu0 %v2550
        %2571 = vmatprep.subr.bf16.mxu0 0
        %2572 = vmatpush1.bf16.msra.mxu0 %v2551
        %2573 = vmatprep.subr.bf16.mxu0 0
        %2574 = vmatpush1.bf16.msra.mxu0 %v2552
        %2575 = vmatprep.subr.bf16.mxu0 0
        %2576 = vmatpush1.bf16.msra.mxu0 %v2553
        %2577 = vmatprep.subr.bf16.mxu0 0
        %2578 = vmatpush1.bf16.msra.mxu0 %v2554
        %2579 = vmatprep.subr.bf16.mxu0 0
        %2580 = vmatpush1.bf16.msra.mxu0 0
        %2581 = vmatprep.subr.bf16.mxu0 0
        %2582 = vmatpush1.bf16.msra.mxu0 0
        %2583 = vmatprep.subr.bf16.mxu0 0
        %2584 = vmatpush1.bf16.msra.mxu0 0
        %2585 = vmatprep.subr.bf16.mxu0 0
        %2586 = vmatpush1.bf16.msra.mxu0 0
        %2587 = vmatprep.subr.bf16.mxu0 0
        %2588 = vmatpush1.bf16.msra.mxu0 0
        %2589 = vmatprep.subr.bf16.mxu0 0
        %2590 = vmatpush1.bf16.msra.mxu0 0
        %2591 = vmatprep.subr.bf16.mxu0 0
        %2592 = vmatpush1.bf16.msra.mxu0 0
        %2593 = vmatprep.subr.bf16.mxu0 0
        %2594 = vmatpush1.bf16.msra.mxu0 0
        %2595 = vmatprep.mubr.bf16.mxu0 0
        %2596 = vmatmul.mubr.bf16.gmra.mrb[0].mxu0 %v2507
        %v2597 = vpop.f32.mrb[0].mxu0
        %v2598 = vadd.f32 0.0, %v2597
        %v2599 = vpop.f32.mrb[0].mxu0
        %v2600 = vpop.f32.mrb[0].mxu0
        %v2601 = vadd.f32 0.0, %v2600
        %v2602 = vpop.f32.mrb[0].mxu0
        %2603 = vmatprep.mubr.bf16.mxu0 0
        %2604 = vmatmul.mubr.bf16.gmra.mrb[0].mxu0 %v2508
        %v2605 = vpop.f32.mrb[0].mxu0
        %v2606 = vadd.f32 0.0, %v2605
        %v2607 = vpop.f32.mrb[0].mxu0
        %v2608 = vpop.f32.mrb[0].mxu0
        %v2609 = vadd.f32 0.0, %v2608
        %v2610 = vpop.f32.mrb[0].mxu0
        %2611 = vmatprep.mubr.bf16.mxu0 0
        %2612 = vmatmul.mubr.bf16.gmra.mrb[0].mxu0 %v2509
        %v2613 = vpop.f32.mrb[0].mxu0
        %v2614 = vadd.f32 0.0, %v2613
        %v2615 = vpop.f32.mrb[0].mxu0
        %v2616 = vpop.f32.mrb[0].mxu0
        %v2617 = vadd.f32 0.0, %v2616
        %v2618 = vpop.f32.mrb[0].mxu0
        %2619 = vmatprep.mubr.bf16.mxu0 0
        %2620 = vmatmul.mubr.bf16.gmra.mrb[0].mxu0 %v2510
        %v2621 = vpop.f32.mrb[0].mxu0
        %v2622 = vadd.f32 0.0, %v2621
        %v2623 = vpop.f32.mrb[0].mxu0
        %v2624 = vpop.f32.mrb[0].mxu0
        %v2625 = vadd.f32 0.0, %v2624
        %v2626 = vpop.f32.mrb[0].mxu0
        %2627 = vdwg.mxu0
        %v2636 = vcombine.high %v2598, %v2598
        %v2638 = vunpack.c.l.s4 1966171168
        %v2639 = vunpack.c.0.s8 %v2638
        %v2640 = vlaneseq
        %v2641 = vshrl.u32 %v2640, 7
        %v2642 = vsub.s32 %v2639, %v2641
        %v2643 = vrot.slane %v2598, %v2642
        %v2645 = vunpack.c.l.s4 1966171168
        %v2646 = vunpack.c.0.s8 %v2645
        %v2647 = vlaneseq
        %v2648 = vshrl.u32 %v2647, 7
        %v2649 = vsub.s32 %v2646, %v2648
        %v2650 = vrot.slane %v2636, %v2649
        %v2651 = vcombine.high %v2643, %v2643
        %v2652 = vcombine.high %v2650, %v2650
        %v2654 = vunpack.c.l.s4 1966171168
        %v2655 = vunpack.c.0.s8 %v2654
        %v2656 = vlaneseq
        %v2657 = vshrl.u32 %v2656, 7
        %v2658 = vsub.s32 %v2655, %v2657
        %v2659 = vrot.slane %v2643, %v2658
        %v2661 = vunpack.c.l.s4 1966171168
        %v2662 = vunpack.c.0.s8 %v2661
        %v2663 = vlaneseq
        %v2664 = vshrl.u32 %v2663, 7
        %v2665 = vsub.s32 %v2662, %v2664
        %v2666 = vrot.slane %v2650, %v2665
        %v2668 = vunpack.c.l.s4 1966171168
        %v2669 = vunpack.c.0.s8 %v2668
        %v2670 = vlaneseq
        %v2671 = vshrl.u32 %v2670, 7
        %v2672 = vsub.s32 %v2669, %v2671
        %v2673 = vrot.slane %v2651, %v2672
        %v2675 = vunpack.c.l.s4 1966171168
        %v2676 = vunpack.c.0.s8 %v2675
        %v2677 = vlaneseq
        %v2678 = vshrl.u32 %v2677, 7
        %v2679 = vsub.s32 %v2676, %v2678
        %v2680 = vrot.slane %v2652, %v2679
        %v2681 = vcombine.high %v2659, %v2659
        %v2682 = vcombine.high %v2666, %v2666
        %v2683 = vcombine.high %v2673, %v2673
        %v2684 = vcombine.high %v2680, %v2680
        %v2685 = vcombine.high %v2601, %v2601
        %v2687 = vunpack.c.l.s4 1966171168
        %v2688 = vunpack.c.0.s8 %v2687
        %v2689 = vlaneseq
        %v2690 = vshrl.u32 %v2689, 7
        %v2691 = vsub.s32 %v2688, %v2690
        %v2692 = vrot.slane %v2601, %v2691
        %v2694 = vunpack.c.l.s4 1966171168
        %v2695 = vunpack.c.0.s8 %v2694
        %v2696 = vlaneseq
        %v2697 = vshrl.u32 %v2696, 7
        %v2698 = vsub.s32 %v2695, %v2697
        %v2699 = vrot.slane %v2685, %v2698
        %v2700 = vcombine.high %v2692, %v2692
        %v2701 = vcombine.high %v2699, %v2699
        %v2703 = vunpack.c.l.s4 1966171168
        %v2704 = vunpack.c.0.s8 %v2703
        %v2705 = vlaneseq
        %v2706 = vshrl.u32 %v2705, 7
        %v2707 = vsub.s32 %v2704, %v2706
        %v2708 = vrot.slane %v2692, %v2707
        %v2710 = vunpack.c.l.s4 1966171168
        %v2711 = vunpack.c.0.s8 %v2710
        %v2712 = vlaneseq
        %v2713 = vshrl.u32 %v2712, 7
        %v2714 = vsub.s32 %v2711, %v2713
        %v2715 = vrot.slane %v2699, %v2714
        %v2717 = vunpack.c.l.s4 1966171168
        %v2718 = vunpack.c.0.s8 %v2717
        %v2719 = vlaneseq
        %v2720 = vshrl.u32 %v2719, 7
        %v2721 = vsub.s32 %v2718, %v2720
        %v2722 = vrot.slane %v2700, %v2721
        %v2724 = vunpack.c.l.s4 1966171168
        %v2725 = vunpack.c.0.s8 %v2724
        %v2726 = vlaneseq
        %v2727 = vshrl.u32 %v2726, 7
        %v2728 = vsub.s32 %v2725, %v2727
        %v2729 = vrot.slane %v2701, %v2728
        %v2730 = vcombine.high %v2708, %v2708
        %v2731 = vcombine.high %v2715, %v2715
        %v2732 = vcombine.high %v2722, %v2722
        %v2733 = vcombine.high %v2729, %v2729
        %v2734 = vcombine.high %v2606, %v2606
        %v2736 = vunpack.c.l.s4 1966171168
        %v2737 = vunpack.c.0.s8 %v2736
        %v2738 = vlaneseq
        %v2739 = vshrl.u32 %v2738, 7
        %v2740 = vsub.s32 %v2737, %v2739
        %v2741 = vrot.slane %v2606, %v2740
        %v2743 = vunpack.c.l.s4 1966171168
        %v2744 = vunpack.c.0.s8 %v2743
        %v2745 = vlaneseq
        %v2746 = vshrl.u32 %v2745, 7
        %v2747 = vsub.s32 %v2744, %v2746
        %v2748 = vrot.slane %v2734, %v2747
        %v2749 = vcombine.high %v2741, %v2741
        %v2750 = vcombine.high %v2748, %v2748
        %v2752 = vunpack.c.l.s4 1966171168
        %v2753 = vunpack.c.0.s8 %v2752
        %v2754 = vlaneseq
        %v2755 = vshrl.u32 %v2754, 7
        %v2756 = vsub.s32 %v2753, %v2755
        %v2757 = vrot.slane %v2741, %v2756
        %v2759 = vunpack.c.l.s4 1966171168
        %v2760 = vunpack.c.0.s8 %v2759
        %v2761 = vlaneseq
        %v2762 = vshrl.u32 %v2761, 7
        %v2763 = vsub.s32 %v2760, %v2762
        %v2764 = vrot.slane %v2748, %v2763
        %v2766 = vunpack.c.l.s4 1966171168
        %v2767 = vunpack.c.0.s8 %v2766
        %v2768 = vlaneseq
        %v2769 = vshrl.u32 %v2768, 7
        %v2770 = vsub.s32 %v2767, %v2769
        %v2771 = vrot.slane %v2749, %v2770
        %v2773 = vunpack.c.l.s4 1966171168
        %v2774 = vunpack.c.0.s8 %v2773
        %v2775 = vlaneseq
        %v2776 = vshrl.u32 %v2775, 7
        %v2777 = vsub.s32 %v2774, %v2776
        %v2778 = vrot.slane %v2750, %v2777
        %v2779 = vcombine.high %v2757, %v2757
        %v2780 = vcombine.high %v2764, %v2764
        %v2781 = vcombine.high %v2771, %v2771
        %v2782 = vcombine.high %v2778, %v2778
        %v2783 = vcombine.high %v2609, %v2609
        %v2785 = vunpack.c.l.s4 1966171168
        %v2786 = vunpack.c.0.s8 %v2785
        %v2787 = vlaneseq
        %v2788 = vshrl.u32 %v2787, 7
        %v2789 = vsub.s32 %v2786, %v2788
        %v2790 = vrot.slane %v2609, %v2789
        %v2792 = vunpack.c.l.s4 1966171168
        %v2793 = vunpack.c.0.s8 %v2792
        %v2794 = vlaneseq
        %v2795 = vshrl.u32 %v2794, 7
        %v2796 = vsub.s32 %v2793, %v2795
        %v2797 = vrot.slane %v2783, %v2796
        %v2798 = vcombine.high %v2790, %v2790
        %v2799 = vcombine.high %v2797, %v2797
        %v2801 = vunpack.c.l.s4 1966171168
        %v2802 = vunpack.c.0.s8 %v2801
        %v2803 = vlaneseq
        %v2804 = vshrl.u32 %v2803, 7
        %v2805 = vsub.s32 %v2802, %v2804
        %v2806 = vrot.slane %v2790, %v2805
        %v2808 = vunpack.c.l.s4 1966171168
        %v2809 = vunpack.c.0.s8 %v2808
        %v2810 = vlaneseq
        %v2811 = vshrl.u32 %v2810, 7
        %v2812 = vsub.s32 %v2809, %v2811
        %v2813 = vrot.slane %v2797, %v2812
        %v2815 = vunpack.c.l.s4 1966171168
        %v2816 = vunpack.c.0.s8 %v2815
        %v2817 = vlaneseq
        %v2818 = vshrl.u32 %v2817, 7
        %v2819 = vsub.s32 %v2816, %v2818
        %v2820 = vrot.slane %v2798, %v2819
        %v2822 = vunpack.c.l.s4 1966171168
        %v2823 = vunpack.c.0.s8 %v2822
        %v2824 = vlaneseq
        %v2825 = vshrl.u32 %v2824, 7
        %v2826 = vsub.s32 %v2823, %v2825
        %v2827 = vrot.slane %v2799, %v2826
        %v2828 = vcombine.high %v2806, %v2806
        %v2829 = vcombine.high %v2813, %v2813
        %v2830 = vcombine.high %v2820, %v2820
        %v2831 = vcombine.high %v2827, %v2827
        %v2832 = vcombine.high %v2614, %v2614
        %v2834 = vunpack.c.l.s4 1966171168
        %v2835 = vunpack.c.0.s8 %v2834
        %v2836 = vlaneseq
        %v2837 = vshrl.u32 %v2836, 7
        %v2838 = vsub.s32 %v2835, %v2837
        %v2839 = vrot.slane %v2614, %v2838
        %v2841 = vunpack.c.l.s4 1966171168
        %v2842 = vunpack.c.0.s8 %v2841
        %v2843 = vlaneseq
        %v2844 = vshrl.u32 %v2843, 7
        %v2845 = vsub.s32 %v2842, %v2844
        %v2846 = vrot.slane %v2832, %v2845
        %v2847 = vcombine.high %v2839, %v2839
        %v2848 = vcombine.high %v2846, %v2846
        %v2850 = vunpack.c.l.s4 1966171168
        %v2851 = vunpack.c.0.s8 %v2850
        %v2852 = vlaneseq
        %v2853 = vshrl.u32 %v2852, 7
        %v2854 = vsub.s32 %v2851, %v2853
        %v2855 = vrot.slane %v2839, %v2854
        %v2857 = vunpack.c.l.s4 1966171168
        %v2858 = vunpack.c.0.s8 %v2857
        %v2859 = vlaneseq
        %v2860 = vshrl.u32 %v2859, 7
        %v2861 = vsub.s32 %v2858, %v2860
        %v2862 = vrot.slane %v2846, %v2861
        %v2864 = vunpack.c.l.s4 1966171168
        %v2865 = vunpack.c.0.s8 %v2864
        %v2866 = vlaneseq
        %v2867 = vshrl.u32 %v2866, 7
        %v2868 = vsub.s32 %v2865, %v2867
        %v2869 = vrot.slane %v2847, %v2868
        %v2871 = vunpack.c.l.s4 1966171168
        %v2872 = vunpack.c.0.s8 %v2871
        %v2873 = vlaneseq
        %v2874 = vshrl.u32 %v2873, 7
        %v2875 = vsub.s32 %v2872, %v2874
        %v2876 = vrot.slane %v2848, %v2875
        %v2877 = vcombine.high %v2855, %v2855
        %v2878 = vcombine.high %v2862, %v2862
        %v2879 = vcombine.high %v2869, %v2869
        %v2880 = vcombine.high %v2876, %v2876
        %v2881 = vcombine.high %v2617, %v2617
        %v2883 = vunpack.c.l.s4 1966171168
        %v2884 = vunpack.c.0.s8 %v2883
        %v2885 = vlaneseq
        %v2886 = vshrl.u32 %v2885, 7
        %v2887 = vsub.s32 %v2884, %v2886
        %v2888 = vrot.slane %v2617, %v2887
        %v2890 = vunpack.c.l.s4 1966171168
        %v2891 = vunpack.c.0.s8 %v2890
        %v2892 = vlaneseq
        %v2893 = vshrl.u32 %v2892, 7
        %v2894 = vsub.s32 %v2891, %v2893
        %v2895 = vrot.slane %v2881, %v2894
        %v2896 = vcombine.high %v2888, %v2888
        %v2897 = vcombine.high %v2895, %v2895
        %v2899 = vunpack.c.l.s4 1966171168
        %v2900 = vunpack.c.0.s8 %v2899
        %v2901 = vlaneseq
        %v2902 = vshrl.u32 %v2901, 7
        %v2903 = vsub.s32 %v2900, %v2902
        %v2904 = vrot.slane %v2888, %v2903
        %v2906 = vunpack.c.l.s4 1966171168
        %v2907 = vunpack.c.0.s8 %v2906
        %v2908 = vlaneseq
        %v2909 = vshrl.u32 %v2908, 7
        %v2910 = vsub.s32 %v2907, %v2909
        %v2911 = vrot.slane %v2895, %v2910
        %v2913 = vunpack.c.l.s4 1966171168
        %v2914 = vunpack.c.0.s8 %v2913
        %v2915 = vlaneseq
        %v2916 = vshrl.u32 %v2915, 7
        %v2917 = vsub.s32 %v2914, %v2916
        %v2918 = vrot.slane %v2896, %v2917
        %v2920 = vunpack.c.l.s4 1966171168
        %v2921 = vunpack.c.0.s8 %v2920
        %v2922 = vlaneseq
        %v2923 = vshrl.u32 %v2922, 7
        %v2924 = vsub.s32 %v2921, %v2923
        %v2925 = vrot.slane %v2897, %v2924
        %v2926 = vcombine.high %v2904, %v2904
        %v2927 = vcombine.high %v2911, %v2911
        %v2928 = vcombine.high %v2918, %v2918
        %v2929 = vcombine.high %v2925, %v2925
        %v2930 = vcombine.high %v2622, %v2622
        %v2932 = vunpack.c.l.s4 1966171168
        %v2933 = vunpack.c.0.s8 %v2932
        %v2934 = vlaneseq
        %v2935 = vshrl.u32 %v2934, 7
        %v2936 = vsub.s32 %v2933, %v2935
        %v2937 = vrot.slane %v2622, %v2936
        %v2939 = vunpack.c.l.s4 1966171168
        %v2940 = vunpack.c.0.s8 %v2939
        %v2941 = vlaneseq
        %v2942 = vshrl.u32 %v2941, 7
        %v2943 = vsub.s32 %v2940, %v2942
        %v2944 = vrot.slane %v2930, %v2943
        %v2945 = vcombine.high %v2937, %v2937
        %v2946 = vcombine.high %v2944, %v2944
        %v2948 = vunpack.c.l.s4 1966171168
        %v2949 = vunpack.c.0.s8 %v2948
        %v2950 = vlaneseq
        %v2951 = vshrl.u32 %v2950, 7
        %v2952 = vsub.s32 %v2949, %v2951
        %v2953 = vrot.slane %v2937, %v2952
        %v2955 = vunpack.c.l.s4 1966171168
        %v2956 = vunpack.c.0.s8 %v2955
        %v2957 = vlaneseq
        %v2958 = vshrl.u32 %v2957, 7
        %v2959 = vsub.s32 %v2956, %v2958
        %v2960 = vrot.slane %v2944, %v2959
        %v2962 = vunpack.c.l.s4 1966171168
        %v2963 = vunpack.c.0.s8 %v2962
        %v2964 = vlaneseq
        %v2965 = vshrl.u32 %v2964, 7
        %v2966 = vsub.s32 %v2963, %v2965
        %v2967 = vrot.slane %v2945, %v2966
        %v2969 = vunpack.c.l.s4 1966171168
        %v2970 = vunpack.c.0.s8 %v2969
        %v2971 = vlaneseq
        %v2972 = vshrl.u32 %v2971, 7
        %v2973 = vsub.s32 %v2970, %v2972
        %v2974 = vrot.slane %v2946, %v2973
        %v2975 = vcombine.high %v2953, %v2953
        %v2976 = vcombine.high %v2960, %v2960
        %v2977 = vcombine.high %v2967, %v2967
        %v2978 = vcombine.high %v2974, %v2974
        %v2979 = vcombine.high %v2625, %v2625
        %v2981 = vunpack.c.l.s4 1966171168
        %v2982 = vunpack.c.0.s8 %v2981
        %v2983 = vlaneseq
        %v2984 = vshrl.u32 %v2983, 7
        %v2985 = vsub.s32 %v2982, %v2984
        %v2986 = vrot.slane %v2625, %v2985
        %v2988 = vunpack.c.l.s4 1966171168
        %v2989 = vunpack.c.0.s8 %v2988
        %v2990 = vlaneseq
        %v2991 = vshrl.u32 %v2990, 7
        %v2992 = vsub.s32 %v2989, %v2991
        %v2993 = vrot.slane %v2979, %v2992
        %v2994 = vcombine.high %v2986, %v2986
        %v2995 = vcombine.high %v2993, %v2993
        %v2997 = vunpack.c.l.s4 1966171168
        %v2998 = vunpack.c.0.s8 %v2997
        %v2999 = vlaneseq
        %v3000 = vshrl.u32 %v2999, 7
        %v3001 = vsub.s32 %v2998, %v3000
        %v3002 = vrot.slane %v2986, %v3001
        %v3004 = vunpack.c.l.s4 1966171168
        %v3005 = vunpack.c.0.s8 %v3004
        %v3006 = vlaneseq
        %v3007 = vshrl.u32 %v3006, 7
        %v3008 = vsub.s32 %v3005, %v3007
        %v3009 = vrot.slane %v2993, %v3008
        %v3011 = vunpack.c.l.s4 1966171168
        %v3012 = vunpack.c.0.s8 %v3011
        %v3013 = vlaneseq
        %v3014 = vshrl.u32 %v3013, 7
        %v3015 = vsub.s32 %v3012, %v3014
        %v3016 = vrot.slane %v2994, %v3015
        %v3018 = vunpack.c.l.s4 1966171168
        %v3019 = vunpack.c.0.s8 %v3018
        %v3020 = vlaneseq
        %v3021 = vshrl.u32 %v3020, 7
        %v3022 = vsub.s32 %v3019, %v3021
        %v3023 = vrot.slane %v2995, %v3022
        %v3024 = vcombine.high %v3002, %v3002
        %v3025 = vcombine.high %v3009, %v3009
        %v3026 = vcombine.high %v3016, %v3016
        %v3027 = vcombine.high %v3023, %v3023
        %v3028 = vlaneseq
        %v3029 = vshrl.u32 %v3028, 7
        %v3030 = vsub.s32 0, %v3029
        %v3031 = vrot.slane %v2659, %v3030
        %v3032 = vlaneseq
        %v3033 = vshrl.u32 %v3032, 7
        %v3034 = vsub.s32 0, %v3033
        %v3035 = vrot.slane %v2673, %v3034
        %v3036 = vlaneseq
        %v3037 = vshrl.u32 %v3036, 7
        %v3038 = vsub.s32 0, %v3037
        %v3039 = vrot.slane %v2681, %v3038
        %v3040 = vlaneseq
        %v3041 = vshrl.u32 %v3040, 7
        %v3042 = vsub.s32 0, %v3041
        %v3043 = vrot.slane %v2683, %v3042
        %v3044 = vlaneseq
        %v3045 = vshrl.u32 %v3044, 7
        %v3046 = vsub.s32 0, %v3045
        %v3047 = vrot.slane %v2666, %v3046
        %v3048 = vlaneseq
        %v3049 = vshrl.u32 %v3048, 7
        %v3050 = vsub.s32 0, %v3049
        %v3051 = vrot.slane %v2680, %v3050
        %v3052 = vlaneseq
        %v3053 = vshrl.u32 %v3052, 7
        %v3054 = vsub.s32 0, %v3053
        %v3055 = vrot.slane %v2682, %v3054
        %v3056 = vlaneseq
        %v3057 = vshrl.u32 %v3056, 7
        %v3058 = vsub.s32 0, %v3057
        %v3059 = vrot.slane %v2684, %v3058
        %v3060 = vlaneseq
        %v3061 = vshrl.u32 %v3060, 7
        %v3062 = vsub.s32 0, %v3061
        %v3063 = vrot.slane %v2708, %v3062
        %v3064 = vlaneseq
        %v3065 = vshrl.u32 %v3064, 7
        %v3066 = vsub.s32 0, %v3065
        %v3067 = vrot.slane %v2722, %v3066
        %v3068 = vlaneseq
        %v3069 = vshrl.u32 %v3068, 7
        %v3070 = vsub.s32 0, %v3069
        %v3071 = vrot.slane %v2730, %v3070
        %v3072 = vlaneseq
        %v3073 = vshrl.u32 %v3072, 7
        %v3074 = vsub.s32 0, %v3073
        %v3075 = vrot.slane %v2732, %v3074
        %v3076 = vlaneseq
        %v3077 = vshrl.u32 %v3076, 7
        %v3078 = vsub.s32 0, %v3077
        %v3079 = vrot.slane %v2715, %v3078
        %v3080 = vlaneseq
        %v3081 = vshrl.u32 %v3080, 7
        %v3082 = vsub.s32 0, %v3081
        %v3083 = vrot.slane %v2729, %v3082
        %v3084 = vlaneseq
        %v3085 = vshrl.u32 %v3084, 7
        %v3086 = vsub.s32 0, %v3085
        %v3087 = vrot.slane %v2731, %v3086
        %v3088 = vlaneseq
        %v3089 = vshrl.u32 %v3088, 7
        %v3090 = vsub.s32 0, %v3089
        %v3091 = vrot.slane %v2733, %v3090
        %v3092 = vlaneseq
        %v3093 = vshrl.u32 %v3092, 7
        %v3094 = vsub.s32 0, %v3093
        %v3095 = vrot.slane %v2757, %v3094
        %v3096 = vlaneseq
        %v3097 = vshrl.u32 %v3096, 7
        %v3098 = vsub.s32 0, %v3097
        %v3099 = vrot.slane %v2771, %v3098
        %v3100 = vlaneseq
        %v3101 = vshrl.u32 %v3100, 7
        %v3102 = vsub.s32 0, %v3101
        %v3103 = vrot.slane %v2779, %v3102
        %v3104 = vlaneseq
        %v3105 = vshrl.u32 %v3104, 7
        %v3106 = vsub.s32 0, %v3105
        %v3107 = vrot.slane %v2781, %v3106
        %v3108 = vlaneseq
        %v3109 = vshrl.u32 %v3108, 7
        %v3110 = vsub.s32 0, %v3109
        %v3111 = vrot.slane %v2764, %v3110
        %v3112 = vlaneseq
        %v3113 = vshrl.u32 %v3112, 7
        %v3114 = vsub.s32 0, %v3113
        %v3115 = vrot.slane %v2778, %v3114
        %v3116 = vlaneseq
        %v3117 = vshrl.u32 %v3116, 7
        %v3118 = vsub.s32 0, %v3117
        %v3119 = vrot.slane %v2780, %v3118
        %v3120 = vlaneseq
        %v3121 = vshrl.u32 %v3120, 7
        %v3122 = vsub.s32 0, %v3121
        %v3123 = vrot.slane %v2782, %v3122
        %v3124 = vlaneseq
        %v3125 = vshrl.u32 %v3124, 7
        %v3126 = vsub.s32 0, %v3125
        %v3127 = vrot.slane %v2806, %v3126
        %v3128 = vlaneseq
        %v3129 = vshrl.u32 %v3128, 7
        %v3130 = vsub.s32 0, %v3129
        %v3131 = vrot.slane %v2820, %v3130
        %v3132 = vlaneseq
        %v3133 = vshrl.u32 %v3132, 7
        %v3134 = vsub.s32 0, %v3133
        %v3135 = vrot.slane %v2828, %v3134
        %v3136 = vlaneseq
        %v3137 = vshrl.u32 %v3136, 7
        %v3138 = vsub.s32 0, %v3137
        %v3139 = vrot.slane %v2830, %v3138
        %v3140 = vlaneseq
        %v3141 = vshrl.u32 %v3140, 7
        %v3142 = vsub.s32 0, %v3141
        %v3143 = vrot.slane %v2813, %v3142
        %v3144 = vlaneseq
        %v3145 = vshrl.u32 %v3144, 7
        %v3146 = vsub.s32 0, %v3145
        %v3147 = vrot.slane %v2827, %v3146
        %v3148 = vlaneseq
        %v3149 = vshrl.u32 %v3148, 7
        %v3150 = vsub.s32 0, %v3149
        %v3151 = vrot.slane %v2829, %v3150
        %v3152 = vlaneseq
        %v3153 = vshrl.u32 %v3152, 7
        %v3154 = vsub.s32 0, %v3153
        %v3155 = vrot.slane %v2831, %v3154
        %v3156 = vlaneseq
        %v3157 = vshrl.u32 %v3156, 7
        %v3158 = vsub.s32 0, %v3157
        %v3159 = vrot.slane %v2855, %v3158
        %v3160 = vlaneseq
        %v3161 = vshrl.u32 %v3160, 7
        %v3162 = vsub.s32 0, %v3161
        %v3163 = vrot.slane %v2869, %v3162
        %v3164 = vlaneseq
        %v3165 = vshrl.u32 %v3164, 7
        %v3166 = vsub.s32 0, %v3165
        %v3167 = vrot.slane %v2877, %v3166
        %v3168 = vlaneseq
        %v3169 = vshrl.u32 %v3168, 7
        %v3170 = vsub.s32 0, %v3169
        %v3171 = vrot.slane %v2879, %v3170
        %v3172 = vlaneseq
        %v3173 = vshrl.u32 %v3172, 7
        %v3174 = vsub.s32 0, %v3173
        %v3175 = vrot.slane %v2862, %v3174
        %v3176 = vlaneseq
        %v3177 = vshrl.u32 %v3176, 7
        %v3178 = vsub.s32 0, %v3177
        %v3179 = vrot.slane %v2876, %v3178
        %v3180 = vlaneseq
        %v3181 = vshrl.u32 %v3180, 7
        %v3182 = vsub.s32 0, %v3181
        %v3183 = vrot.slane %v2878, %v3182
        %v3184 = vlaneseq
        %v3185 = vshrl.u32 %v3184, 7
        %v3186 = vsub.s32 0, %v3185
        %v3187 = vrot.slane %v2880, %v3186
        %v3188 = vlaneseq
        %v3189 = vshrl.u32 %v3188, 7
        %v3190 = vsub.s32 0, %v3189
        %v3191 = vrot.slane %v2904, %v3190
        %v3192 = vlaneseq
        %v3193 = vshrl.u32 %v3192, 7
        %v3194 = vsub.s32 0, %v3193
        %v3195 = vrot.slane %v2918, %v3194
        %v3196 = vlaneseq
        %v3197 = vshrl.u32 %v3196, 7
        %v3198 = vsub.s32 0, %v3197
        %v3199 = vrot.slane %v2926, %v3198
        %v3200 = vlaneseq
        %v3201 = vshrl.u32 %v3200, 7
        %v3202 = vsub.s32 0, %v3201
        %v3203 = vrot.slane %v2928, %v3202
        %v3204 = vlaneseq
        %v3205 = vshrl.u32 %v3204, 7
        %v3206 = vsub.s32 0, %v3205
        %v3207 = vrot.slane %v2911, %v3206
        %v3208 = vlaneseq
        %v3209 = vshrl.u32 %v3208, 7
        %v3210 = vsub.s32 0, %v3209
        %v3211 = vrot.slane %v2925, %v3210
        %v3212 = vlaneseq
        %v3213 = vshrl.u32 %v3212, 7
        %v3214 = vsub.s32 0, %v3213
        %v3215 = vrot.slane %v2927, %v3214
        %v3216 = vlaneseq
        %v3217 = vshrl.u32 %v3216, 7
        %v3218 = vsub.s32 0, %v3217
        %v3219 = vrot.slane %v2929, %v3218
        %v3220 = vlaneseq
        %v3221 = vshrl.u32 %v3220, 7
        %v3222 = vsub.s32 0, %v3221
        %v3223 = vrot.slane %v2953, %v3222
        %v3224 = vlaneseq
        %v3225 = vshrl.u32 %v3224, 7
        %v3226 = vsub.s32 0, %v3225
        %v3227 = vrot.slane %v2967, %v3226
        %v3228 = vlaneseq
        %v3229 = vshrl.u32 %v3228, 7
        %v3230 = vsub.s32 0, %v3229
        %v3231 = vrot.slane %v2975, %v3230
        %v3232 = vlaneseq
        %v3233 = vshrl.u32 %v3232, 7
        %v3234 = vsub.s32 0, %v3233
        %v3235 = vrot.slane %v2977, %v3234
        %v3236 = vlaneseq
        %v3237 = vshrl.u32 %v3236, 7
        %v3238 = vsub.s32 0, %v3237
        %v3239 = vrot.slane %v2960, %v3238
        %v3240 = vlaneseq
        %v3241 = vshrl.u32 %v3240, 7
        %v3242 = vsub.s32 0, %v3241
        %v3243 = vrot.slane %v2974, %v3242
        %v3244 = vlaneseq
        %v3245 = vshrl.u32 %v3244, 7
        %v3246 = vsub.s32 0, %v3245
        %v3247 = vrot.slane %v2976, %v3246
        %v3248 = vlaneseq
        %v3249 = vshrl.u32 %v3248, 7
        %v3250 = vsub.s32 0, %v3249
        %v3251 = vrot.slane %v2978, %v3250
        %v3252 = vlaneseq
        %v3253 = vshrl.u32 %v3252, 7
        %v3254 = vsub.s32 0, %v3253
        %v3255 = vrot.slane %v3002, %v3254
        %v3256 = vlaneseq
        %v3257 = vshrl.u32 %v3256, 7
        %v3258 = vsub.s32 0, %v3257
        %v3259 = vrot.slane %v3016, %v3258
        %v3260 = vlaneseq
        %v3261 = vshrl.u32 %v3260, 7
        %v3262 = vsub.s32 0, %v3261
        %v3263 = vrot.slane %v3024, %v3262
        %v3264 = vlaneseq
        %v3265 = vshrl.u32 %v3264, 7
        %v3266 = vsub.s32 0, %v3265
        %v3267 = vrot.slane %v3026, %v3266
        %v3268 = vlaneseq
        %v3269 = vshrl.u32 %v3268, 7
        %v3270 = vsub.s32 0, %v3269
        %v3271 = vrot.slane %v3009, %v3270
        %v3272 = vlaneseq
        %v3273 = vshrl.u32 %v3272, 7
        %v3274 = vsub.s32 0, %v3273
        %v3275 = vrot.slane %v3023, %v3274
        %v3276 = vlaneseq
        %v3277 = vshrl.u32 %v3276, 7
        %v3278 = vsub.s32 0, %v3277
        %v3279 = vrot.slane %v3025, %v3278
        %v3280 = vlaneseq
        %v3281 = vshrl.u32 %v3280, 7
        %v3282 = vsub.s32 0, %v3281
        %v3283 = vrot.slane %v3027, %v3282
        %v3348 = vadd.f32 %v891, %v3031
        %v3349 = vadd.f32 %v895, %v3031
        %v3350 = vadd.f32 %v901, %v3035
        %v3351 = vadd.f32 %v905, %v3035
        %v3352 = vadd.f32 %v911, %v3039
        %v3353 = vadd.f32 %v915, %v3039
        %v3354 = vadd.f32 %v921, %v3043
        %v3355 = vadd.f32 %v925, %v3043
        %v3356 = vadd.f32 %v931, %v3047
        %v3357 = vadd.f32 %v935, %v3047
        %v3358 = vadd.f32 %v941, %v3051
        %v3359 = vadd.f32 %v945, %v3051
        %v3360 = vadd.f32 %v951, %v3055
        %v3361 = vadd.f32 %v955, %v3055
        %v3362 = vadd.f32 %v961, %v3059
        %v3363 = vadd.f32 %v965, %v3059
        %v3364 = vadd.f32 %v971, %v3063
        %v3365 = vadd.f32 %v975, %v3063
        %v3366 = vadd.f32 %v981, %v3067
        %v3367 = vadd.f32 %v985, %v3067
        %v3368 = vadd.f32 %v991, %v3071
        %v3369 = vadd.f32 %v995, %v3071
        %v3370 = vadd.f32 %v1001, %v3075
        %v3371 = vadd.f32 %v1005, %v3075
        %v3372 = vadd.f32 %v1011, %v3079
        %v3373 = vadd.f32 %v1015, %v3079
        %v3374 = vadd.f32 %v1021, %v3083
        %v3375 = vadd.f32 %v1025, %v3083
        %v3376 = vadd.f32 %v1031, %v3087
        %v3377 = vadd.f32 %v1035, %v3087
        %v3378 = vadd.f32 %v1041, %v3091
        %v3379 = vadd.f32 %v1045, %v3091
        %v3380 = vadd.f32 %v1051, %v3095
        %v3381 = vadd.f32 %v1055, %v3095
        %v3382 = vadd.f32 %v1061, %v3099
        %v3383 = vadd.f32 %v1065, %v3099
        %v3384 = vadd.f32 %v1071, %v3103
        %v3385 = vadd.f32 %v1075, %v3103
        %v3386 = vadd.f32 %v1081, %v3107
        %v3387 = vadd.f32 %v1085, %v3107
        %v3388 = vadd.f32 %v1091, %v3111
        %v3389 = vadd.f32 %v1095, %v3111
        %v3390 = vadd.f32 %v1101, %v3115
        %v3391 = vadd.f32 %v1105, %v3115
        %v3392 = vadd.f32 %v1111, %v3119
        %v3393 = vadd.f32 %v1115, %v3119
        %v3394 = vadd.f32 %v1121, %v3123
        %v3395 = vadd.f32 %v1125, %v3123
        %v3396 = vadd.f32 %v1131, %v3127
        %v3397 = vadd.f32 %v1135, %v3127
        %v3398 = vadd.f32 %v1141, %v3131
        %v3399 = vadd.f32 %v1145, %v3131
        %v3400 = vadd.f32 %v1151, %v3135
        %v3401 = vadd.f32 %v1155, %v3135
        %v3402 = vadd.f32 %v1161, %v3139
        %v3403 = vadd.f32 %v1165, %v3139
        %v3404 = vadd.f32 %v1171, %v3143
        %v3405 = vadd.f32 %v1175, %v3143
        %v3406 = vadd.f32 %v1181, %v3147
        %v3407 = vadd.f32 %v1185, %v3147
        %v3408 = vadd.f32 %v1191, %v3151
        %v3409 = vadd.f32 %v1195, %v3151
        %v3410 = vadd.f32 %v1201, %v3155
        %v3411 = vadd.f32 %v1205, %v3155
        %v3412 = vadd.f32 %v1211, %v3159
        %v3413 = vadd.f32 %v1215, %v3159
        %v3414 = vadd.f32 %v1221, %v3163
        %v3415 = vadd.f32 %v1225, %v3163
        %v3416 = vadd.f32 %v1231, %v3167
        %v3417 = vadd.f32 %v1235, %v3167
        %v3418 = vadd.f32 %v1241, %v3171
        %v3419 = vadd.f32 %v1245, %v3171
        %v3420 = vadd.f32 %v1251, %v3175
        %v3421 = vadd.f32 %v1255, %v3175
        %v3422 = vadd.f32 %v1261, %v3179
        %v3423 = vadd.f32 %v1265, %v3179
        %v3424 = vadd.f32 %v1271, %v3183
        %v3425 = vadd.f32 %v1275, %v3183
        %v3426 = vadd.f32 %v1281, %v3187
        %v3427 = vadd.f32 %v1285, %v3187
        %v3428 = vadd.f32 %v1291, %v3191
        %v3429 = vadd.f32 %v1295, %v3191
        %v3430 = vadd.f32 %v1301, %v3195
        %v3431 = vadd.f32 %v1305, %v3195
        %v3432 = vadd.f32 %v1311, %v3199
        %v3433 = vadd.f32 %v1315, %v3199
        %v3434 = vadd.f32 %v1321, %v3203
        %v3435 = vadd.f32 %v1325, %v3203
        %v3436 = vadd.f32 %v1331, %v3207
        %v3437 = vadd.f32 %v1335, %v3207
        %v3438 = vadd.f32 %v1341, %v3211
        %v3439 = vadd.f32 %v1345, %v3211
        %v3440 = vadd.f32 %v1351, %v3215
        %v3441 = vadd.f32 %v1355, %v3215
        %v3442 = vadd.f32 %v1361, %v3219
        %v3443 = vadd.f32 %v1365, %v3219
        %v3444 = vadd.f32 %v1371, %v3223
        %v3445 = vadd.f32 %v1375, %v3223
        %v3446 = vadd.f32 %v1381, %v3227
        %v3447 = vadd.f32 %v1385, %v3227
        %v3448 = vadd.f32 %v1391, %v3231
        %v3449 = vadd.f32 %v1395, %v3231
        %v3450 = vadd.f32 %v1401, %v3235
        %v3451 = vadd.f32 %v1405, %v3235
        %v3452 = vadd.f32 %v1411, %v3239
        %v3453 = vadd.f32 %v1415, %v3239
        %v3454 = vadd.f32 %v1421, %v3243
        %v3455 = vadd.f32 %v1425, %v3243
        %v3456 = vadd.f32 %v1431, %v3247
        %v3457 = vadd.f32 %v1435, %v3247
        %v3458 = vadd.f32 %v1441, %v3251
        %v3459 = vadd.f32 %v1445, %v3251
        %v3460 = vadd.f32 %v1451, %v3255
        %v3461 = vadd.f32 %v1455, %v3255
        %v3462 = vadd.f32 %v1461, %v3259
        %v3463 = vadd.f32 %v1465, %v3259
        %v3464 = vadd.f32 %v1471, %v3263
        %v3465 = vadd.f32 %v1475, %v3263
        %v3466 = vadd.f32 %v1481, %v3267
        %v3467 = vadd.f32 %v1485, %v3267
        %v3468 = vadd.f32 %v1491, %v3271
        %v3469 = vadd.f32 %v1495, %v3271
        %v3470 = vadd.f32 %v1501, %v3275
        %v3471 = vadd.f32 %v1505, %v3275
        %v3472 = vadd.f32 %v1511, %v3279
        %v3473 = vadd.f32 %v1515, %v3279
        %v3474 = vadd.f32 %v1521, %v3283
        %v3475 = vadd.f32 %v1525, %v3283
        %v3476 = vld [vmem:[%s3 + $0x1] sm:$0x1]
        %v3477 = vlaneseq
        %v3478 = vshrl.u32 %v3477, 7
        %v3479 = vsub.s32 0, %v3478
        %v3480 = vrot.slane %v3476, %v3479
        %v3481 = vadd.f32 %v3348, %v3480
        %v3482 = vadd.f32 %v3349, %v3480
        %v3483 = vadd.f32 %v3350, %v3480
        %v3484 = vadd.f32 %v3351, %v3480
        %v3485 = vadd.f32 %v3352, %v3480
        %v3486 = vadd.f32 %v3353, %v3480
        %v3487 = vadd.f32 %v3354, %v3480
        %v3488 = vadd.f32 %v3355, %v3480
        %v3489 = vadd.f32 %v3356, %v3480
        %v3490 = vadd.f32 %v3357, %v3480
        %v3491 = vadd.f32 %v3358, %v3480
        %v3492 = vadd.f32 %v3359, %v3480
        %v3493 = vadd.f32 %v3360, %v3480
        %v3494 = vadd.f32 %v3361, %v3480
        %v3495 = vadd.f32 %v3362, %v3480
        %v3496 = vadd.f32 %v3363, %v3480
        %v3497 = vadd.f32 %v3364, %v3480
        %v3498 = vadd.f32 %v3365, %v3480
        %v3499 = vadd.f32 %v3366, %v3480
        %v3500 = vadd.f32 %v3367, %v3480
        %v3501 = vadd.f32 %v3368, %v3480
        %v3502 = vadd.f32 %v3369, %v3480
        %v3503 = vadd.f32 %v3370, %v3480
        %v3504 = vadd.f32 %v3371, %v3480
        %v3505 = vadd.f32 %v3372, %v3480
        %v3506 = vadd.f32 %v3373, %v3480
        %v3507 = vadd.f32 %v3374, %v3480
        %v3508 = vadd.f32 %v3375, %v3480
        %v3509 = vadd.f32 %v3376, %v3480
        %v3510 = vadd.f32 %v3377, %v3480
        %v3511 = vadd.f32 %v3378, %v3480
        %v3512 = vadd.f32 %v3379, %v3480
        %v3513 = vadd.f32 %v3380, %v3480
        %v3514 = vadd.f32 %v3381, %v3480
        %v3515 = vadd.f32 %v3382, %v3480
        %v3516 = vadd.f32 %v3383, %v3480
        %v3517 = vadd.f32 %v3384, %v3480
        %v3518 = vadd.f32 %v3385, %v3480
        %v3519 = vadd.f32 %v3386, %v3480
        %v3520 = vadd.f32 %v3387, %v3480
        %v3521 = vadd.f32 %v3388, %v3480
        %v3522 = vadd.f32 %v3389, %v3480
        %v3523 = vadd.f32 %v3390, %v3480
        %v3524 = vadd.f32 %v3391, %v3480
        %v3525 = vadd.f32 %v3392, %v3480
        %v3526 = vadd.f32 %v3393, %v3480
        %v3527 = vadd.f32 %v3394, %v3480
        %v3528 = vadd.f32 %v3395, %v3480
        %v3529 = vadd.f32 %v3396, %v3480
        %v3530 = vadd.f32 %v3397, %v3480
        %v3531 = vadd.f32 %v3398, %v3480
        %v3532 = vadd.f32 %v3399, %v3480
        %v3533 = vadd.f32 %v3400, %v3480
        %v3534 = vadd.f32 %v3401, %v3480
        %v3535 = vadd.f32 %v3402, %v3480
        %v3536 = vadd.f32 %v3403, %v3480
        %v3537 = vadd.f32 %v3404, %v3480
        %v3538 = vadd.f32 %v3405, %v3480
        %v3539 = vadd.f32 %v3406, %v3480
        %v3540 = vadd.f32 %v3407, %v3480
        %v3541 = vadd.f32 %v3408, %v3480
        %v3542 = vadd.f32 %v3409, %v3480
        %v3543 = vadd.f32 %v3410, %v3480
        %v3544 = vadd.f32 %v3411, %v3480
        %v3545 = vadd.f32 %v3412, %v3480
        %v3546 = vadd.f32 %v3413, %v3480
        %v3547 = vadd.f32 %v3414, %v3480
        %v3548 = vadd.f32 %v3415, %v3480
        %v3549 = vadd.f32 %v3416, %v3480
        %v3550 = vadd.f32 %v3417, %v3480
        %v3551 = vadd.f32 %v3418, %v3480
        %v3552 = vadd.f32 %v3419, %v3480
        %v3553 = vadd.f32 %v3420, %v3480
        %v3554 = vadd.f32 %v3421, %v3480
        %v3555 = vadd.f32 %v3422, %v3480
        %v3556 = vadd.f32 %v3423, %v3480
        %v3557 = vadd.f32 %v3424, %v3480
        %v3558 = vadd.f32 %v3425, %v3480
        %v3559 = vadd.f32 %v3426, %v3480
        %v3560 = vadd.f32 %v3427, %v3480
        %v3561 = vadd.f32 %v3428, %v3480
        %v3562 = vadd.f32 %v3429, %v3480
        %v3563 = vadd.f32 %v3430, %v3480
        %v3564 = vadd.f32 %v3431, %v3480
        %v3565 = vadd.f32 %v3432, %v3480
        %v3566 = vadd.f32 %v3433, %v3480
        %v3567 = vadd.f32 %v3434, %v3480
        %v3568 = vadd.f32 %v3435, %v3480
        %v3569 = vadd.f32 %v3436, %v3480
        %v3570 = vadd.f32 %v3437, %v3480
        %v3571 = vadd.f32 %v3438, %v3480
        %v3572 = vadd.f32 %v3439, %v3480
        %v3573 = vadd.f32 %v3440, %v3480
        %v3574 = vadd.f32 %v3441, %v3480
        %v3575 = vadd.f32 %v3442, %v3480
        %v3576 = vadd.f32 %v3443, %v3480
        %v3577 = vadd.f32 %v3444, %v3480
        %v3578 = vadd.f32 %v3445, %v3480
        %v3579 = vadd.f32 %v3446, %v3480
        %v3580 = vadd.f32 %v3447, %v3480
        %v3581 = vadd.f32 %v3448, %v3480
        %v3582 = vadd.f32 %v3449, %v3480
        %v3583 = vadd.f32 %v3450, %v3480
        %v3584 = vadd.f32 %v3451, %v3480
        %v3585 = vadd.f32 %v3452, %v3480
        %v3586 = vadd.f32 %v3453, %v3480
        %v3587 = vadd.f32 %v3454, %v3480
        %v3588 = vadd.f32 %v3455, %v3480
        %v3589 = vadd.f32 %v3456, %v3480
        %v3590 = vadd.f32 %v3457, %v3480
        %v3591 = vadd.f32 %v3458, %v3480
        %v3592 = vadd.f32 %v3459, %v3480
        %v3593 = vadd.f32 %v3460, %v3480
        %v3594 = vadd.f32 %v3461, %v3480
        %v3595 = vadd.f32 %v3462, %v3480
        %v3596 = vadd.f32 %v3463, %v3480
        %v3597 = vadd.f32 %v3464, %v3480
        %v3598 = vadd.f32 %v3465, %v3480
        %v3599 = vadd.f32 %v3466, %v3480
        %v3600 = vadd.f32 %v3467, %v3480
        %v3601 = vadd.f32 %v3468, %v3480
        %v3602 = vadd.f32 %v3469, %v3480
        %v3603 = vadd.f32 %v3470, %v3480
        %v3604 = vadd.f32 %v3471, %v3480
        %v3605 = vadd.f32 %v3472, %v3480
        %v3606 = vadd.f32 %v3473, %v3480
        %v3607 = vadd.f32 %v3474, %v3480
        %v3608 = vadd.f32 %v3475, %v3480
        %v3609 = vmax.f32 %v3481, 0.0
        %v3610 = vmax.f32 %v3482, 0.0
        %v3611 = vmax.f32 %v3483, 0.0
        %v3612 = vmax.f32 %v3484, 0.0
        %v3613 = vmax.f32 %v3485, 0.0
        %v3614 = vmax.f32 %v3486, 0.0
        %v3615 = vmax.f32 %v3487, 0.0
        %v3616 = vmax.f32 %v3488, 0.0
        %v3617 = vmax.f32 %v3489, 0.0
        %v3618 = vmax.f32 %v3490, 0.0
        %v3619 = vmax.f32 %v3491, 0.0
        %v3620 = vmax.f32 %v3492, 0.0
        %v3621 = vmax.f32 %v3493, 0.0
        %v3622 = vmax.f32 %v3494, 0.0
        %v3623 = vmax.f32 %v3495, 0.0
        %v3624 = vmax.f32 %v3496, 0.0
        %v3625 = vmax.f32 %v3497, 0.0
        %v3626 = vmax.f32 %v3498, 0.0
        %v3627 = vmax.f32 %v3499, 0.0
        %v3628 = vmax.f32 %v3500, 0.0
        %v3629 = vmax.f32 %v3501, 0.0
        %v3630 = vmax.f32 %v3502, 0.0
        %v3631 = vmax.f32 %v3503, 0.0
        %v3632 = vmax.f32 %v3504, 0.0
        %v3633 = vmax.f32 %v3505, 0.0
        %v3634 = vmax.f32 %v3506, 0.0
        %v3635 = vmax.f32 %v3507, 0.0
        %v3636 = vmax.f32 %v3508, 0.0
        %v3637 = vmax.f32 %v3509, 0.0
        %v3638 = vmax.f32 %v3510, 0.0
        %v3639 = vmax.f32 %v3511, 0.0
        %v3640 = vmax.f32 %v3512, 0.0
        %v3641 = vmax.f32 %v3513, 0.0
        %v3642 = vmax.f32 %v3514, 0.0
        %v3643 = vmax.f32 %v3515, 0.0
        %v3644 = vmax.f32 %v3516, 0.0
        %v3645 = vmax.f32 %v3517, 0.0
        %v3646 = vmax.f32 %v3518, 0.0
        %v3647 = vmax.f32 %v3519, 0.0
        %v3648 = vmax.f32 %v3520, 0.0
        %v3649 = vmax.f32 %v3521, 0.0
        %v3650 = vmax.f32 %v3522, 0.0
        %v3651 = vmax.f32 %v3523, 0.0
        %v3652 = vmax.f32 %v3524, 0.0
        %v3653 = vmax.f32 %v3525, 0.0
        %v3654 = vmax.f32 %v3526, 0.0
        %v3655 = vmax.f32 %v3527, 0.0
        %v3656 = vmax.f32 %v3528, 0.0
        %v3657 = vmax.f32 %v3529, 0.0
        %v3658 = vmax.f32 %v3530, 0.0
        %v3659 = vmax.f32 %v3531, 0.0
        %v3660 = vmax.f32 %v3532, 0.0
        %v3661 = vmax.f32 %v3533, 0.0
        %v3662 = vmax.f32 %v3534, 0.0
        %v3663 = vmax.f32 %v3535, 0.0
        %v3664 = vmax.f32 %v3536, 0.0
        %v3665 = vmax.f32 %v3537, 0.0
        %v3666 = vmax.f32 %v3538, 0.0
        %v3667 = vmax.f32 %v3539, 0.0
        %v3668 = vmax.f32 %v3540, 0.0
        %v3669 = vmax.f32 %v3541, 0.0
        %v3670 = vmax.f32 %v3542, 0.0
        %v3671 = vmax.f32 %v3543, 0.0
        %v3672 = vmax.f32 %v3544, 0.0
        %v3673 = vmax.f32 %v3545, 0.0
        %v3674 = vmax.f32 %v3546, 0.0
        %v3675 = vmax.f32 %v3547, 0.0
        %v3676 = vmax.f32 %v3548, 0.0
        %v3677 = vmax.f32 %v3549, 0.0
        %v3678 = vmax.f32 %v3550, 0.0
        %v3679 = vmax.f32 %v3551, 0.0
        %v3680 = vmax.f32 %v3552, 0.0
        %v3681 = vmax.f32 %v3553, 0.0
        %v3682 = vmax.f32 %v3554, 0.0
        %v3683 = vmax.f32 %v3555, 0.0
        %v3684 = vmax.f32 %v3556, 0.0
        %v3685 = vmax.f32 %v3557, 0.0
        %v3686 = vmax.f32 %v3558, 0.0
        %v3687 = vmax.f32 %v3559, 0.0
        %v3688 = vmax.f32 %v3560, 0.0
        %v3689 = vmax.f32 %v3561, 0.0
        %v3690 = vmax.f32 %v3562, 0.0
        %v3691 = vmax.f32 %v3563, 0.0
        %v3692 = vmax.f32 %v3564, 0.0
        %v3693 = vmax.f32 %v3565, 0.0
        %v3694 = vmax.f32 %v3566, 0.0
        %v3695 = vmax.f32 %v3567, 0.0
        %v3696 = vmax.f32 %v3568, 0.0
        %v3697 = vmax.f32 %v3569, 0.0
        %v3698 = vmax.f32 %v3570, 0.0
        %v3699 = vmax.f32 %v3571, 0.0
        %v3700 = vmax.f32 %v3572, 0.0
        %v3701 = vmax.f32 %v3573, 0.0
        %v3702 = vmax.f32 %v3574, 0.0
        %v3703 = vmax.f32 %v3575, 0.0
        %v3704 = vmax.f32 %v3576, 0.0
        %v3705 = vmax.f32 %v3577, 0.0
        %v3706 = vmax.f32 %v3578, 0.0
        %v3707 = vmax.f32 %v3579, 0.0
        %v3708 = vmax.f32 %v3580, 0.0
        %v3709 = vmax.f32 %v3581, 0.0
        %v3710 = vmax.f32 %v3582, 0.0
        %v3711 = vmax.f32 %v3583, 0.0
        %v3712 = vmax.f32 %v3584, 0.0
        %v3713 = vmax.f32 %v3585, 0.0
        %v3714 = vmax.f32 %v3586, 0.0
        %v3715 = vmax.f32 %v3587, 0.0
        %v3716 = vmax.f32 %v3588, 0.0
        %v3717 = vmax.f32 %v3589, 0.0
        %v3718 = vmax.f32 %v3590, 0.0
        %v3719 = vmax.f32 %v3591, 0.0
        %v3720 = vmax.f32 %v3592, 0.0
        %v3721 = vmax.f32 %v3593, 0.0
        %v3722 = vmax.f32 %v3594, 0.0
        %v3723 = vmax.f32 %v3595, 0.0
        %v3724 = vmax.f32 %v3596, 0.0
        %v3725 = vmax.f32 %v3597, 0.0
        %v3726 = vmax.f32 %v3598, 0.0
        %v3727 = vmax.f32 %v3599, 0.0
        %v3728 = vmax.f32 %v3600, 0.0
        %v3729 = vmax.f32 %v3601, 0.0
        %v3730 = vmax.f32 %v3602, 0.0
        %v3731 = vmax.f32 %v3603, 0.0
        %v3732 = vmax.f32 %v3604, 0.0
        %v3733 = vmax.f32 %v3605, 0.0
        %v3734 = vmax.f32 %v3606, 0.0
        %v3735 = vmax.f32 %v3607, 0.0
        %v3736 = vmax.f32 %v3608, 0.0
        %v3737 = vpack.c.bf16 %v3610, %v3609
        %v3738 = vpack.c.bf16 %v3612, %v3611
        %v3739 = vpack.c.bf16 %v3614, %v3613
        %v3740 = vpack.c.bf16 %v3616, %v3615
        %v3741 = vpack.c.bf16 %v3618, %v3617
        %v3742 = vpack.c.bf16 %v3620, %v3619
        %v3743 = vpack.c.bf16 %v3622, %v3621
        %v3744 = vpack.c.bf16 %v3624, %v3623
        %v3745 = vpack.c.bf16 %v3626, %v3625
        %v3746 = vpack.c.bf16 %v3628, %v3627
        %v3747 = vpack.c.bf16 %v3630, %v3629
        %v3748 = vpack.c.bf16 %v3632, %v3631
        %v3749 = vpack.c.bf16 %v3634, %v3633
        %v3750 = vpack.c.bf16 %v3636, %v3635
        %v3751 = vpack.c.bf16 %v3638, %v3637
        %v3752 = vpack.c.bf16 %v3640, %v3639
        %v3753 = vpack.c.bf16 %v3642, %v3641
        %v3754 = vpack.c.bf16 %v3644, %v3643
        %v3755 = vpack.c.bf16 %v3646, %v3645
        %v3756 = vpack.c.bf16 %v3648, %v3647
        %v3757 = vpack.c.bf16 %v3650, %v3649
        %v3758 = vpack.c.bf16 %v3652, %v3651
        %v3759 = vpack.c.bf16 %v3654, %v3653
        %v3760 = vpack.c.bf16 %v3656, %v3655
        %v3761 = vpack.c.bf16 %v3658, %v3657
        %v3762 = vpack.c.bf16 %v3660, %v3659
        %v3763 = vpack.c.bf16 %v3662, %v3661
        %v3764 = vpack.c.bf16 %v3664, %v3663
        %v3765 = vpack.c.bf16 %v3666, %v3665
        %v3766 = vpack.c.bf16 %v3668, %v3667
        %v3767 = vpack.c.bf16 %v3670, %v3669
        %v3768 = vpack.c.bf16 %v3672, %v3671
        %v3769 = vpack.c.bf16 %v3674, %v3673
        %v3770 = vpack.c.bf16 %v3676, %v3675
        %v3771 = vpack.c.bf16 %v3678, %v3677
        %v3772 = vpack.c.bf16 %v3680, %v3679
        %v3773 = vpack.c.bf16 %v3682, %v3681
        %v3774 = vpack.c.bf16 %v3684, %v3683
        %v3775 = vpack.c.bf16 %v3686, %v3685
        %v3776 = vpack.c.bf16 %v3688, %v3687
        %v3777 = vpack.c.bf16 %v3690, %v3689
        %v3778 = vpack.c.bf16 %v3692, %v3691
        %v3779 = vpack.c.bf16 %v3694, %v3693
        %v3780 = vpack.c.bf16 %v3696, %v3695
        %v3781 = vpack.c.bf16 %v3698, %v3697
        %v3782 = vpack.c.bf16 %v3700, %v3699
        %v3783 = vpack.c.bf16 %v3702, %v3701
        %v3784 = vpack.c.bf16 %v3704, %v3703
        %v3785 = vpack.c.bf16 %v3706, %v3705
        %v3786 = vpack.c.bf16 %v3708, %v3707
        %v3787 = vpack.c.bf16 %v3710, %v3709
        %v3788 = vpack.c.bf16 %v3712, %v3711
        %v3789 = vpack.c.bf16 %v3714, %v3713
        %v3790 = vpack.c.bf16 %v3716, %v3715
        %v3791 = vpack.c.bf16 %v3718, %v3717
        %v3792 = vpack.c.bf16 %v3720, %v3719
        %v3793 = vpack.c.bf16 %v3722, %v3721
        %v3794 = vpack.c.bf16 %v3724, %v3723
        %v3795 = vpack.c.bf16 %v3726, %v3725
        %v3796 = vpack.c.bf16 %v3728, %v3727
        %v3797 = vpack.c.bf16 %v3730, %v3729
        %v3798 = vpack.c.bf16 %v3732, %v3731
        %v3799 = vpack.c.bf16 %v3734, %v3733
        %v3800 = vpack.c.bf16 %v3736, %v3735
        %v3801 = vld [vmem:[%s2 + $0x4] sm:$0xf]
        %v3802 = vld [vmem:[%s2 + $0x1c] sm:$0xf]
        %v3803 = vld [vmem:[%s2 + $0x34] sm:$0xf]
        %v3804 = vld [vmem:[%s2 + $0x4c] sm:$0xf]
        %v3805 = vld [vmem:[%s2 + $0x64] sm:$0xf]
        %v3806 = vld [vmem:[%s2 + $0x7c] sm:$0xf]
        %v3807 = vld [vmem:[%s2 + $0x94] sm:$0xf]
        %v3808 = vld [vmem:[%s2 + $0xac] sm:$0xf]
        %v3809 = vld [vmem:[%s2 + $0xc4] sm:$0xf]
        %v3810 = vld [vmem:[%s2 + $0xdc] sm:$0xf]
        %v3811 = vld [vmem:[%s2 + $0xf4] sm:$0xf]
        %v3812 = vld [vmem:[%s2 + $0x10c] sm:$0xf]
        %v3813 = vld [vmem:[%s2 + $0x124] sm:$0xf]
        %v3814 = vld [vmem:[%s2 + $0x13c] sm:$0xf]
        %v3815 = vld [vmem:[%s2 + $0x154] sm:$0xf]
        %v3816 = vld [vmem:[%s2 + $0x16c] sm:$0xf]
        %v3817 = vld [vmem:[%s3 + $0x2] sm:$0x1]
        %v3818 = vlaneseq
        %v3819 = vshrl.u32 %v3818, 7
        %v3820 = vsub.s32 0, %v3819
        %v3821 = vrot.slane %v3817, %v3820
        %v3838 = vunpack.c.l.b16 %v3801
        %v3839 = vunpack.c.l.b16 %v3802
        %v3840 = vunpack.c.l.b16 %v3803
        %v3841 = vunpack.c.l.b16 %v3804
        %v3842 = vunpack.c.l.b16 %v3805
        %v3843 = vunpack.c.l.b16 %v3806
        %v3844 = vunpack.c.l.b16 %v3807
        %v3845 = vunpack.c.l.b16 %v3808
        %v3846 = vunpack.c.l.b16 %v3809
        %v3847 = vunpack.c.l.b16 %v3810
        %v3848 = vunpack.c.l.b16 %v3811
        %v3849 = vunpack.c.l.b16 %v3812
        %v3850 = vunpack.c.l.b16 %v3813
        %v3851 = vunpack.c.l.b16 %v3814
        %v3852 = vunpack.c.l.b16 %v3815
        %v3853 = vunpack.c.l.b16 %v3816
        %v3854 = vpack.c.b16 %v3839, %v3838
        %v3855 = vpack.c.b16 %v3841, %v3840
        %v3856 = vpack.c.b16 %v3843, %v3842
        %v3857 = vpack.c.b16 %v3845, %v3844
        %v3858 = vpack.c.b16 %v3847, %v3846
        %v3859 = vpack.c.b16 %v3849, %v3848
        %v3860 = vpack.c.b16 %v3851, %v3850
        %v3861 = vpack.c.b16 %v3853, %v3852
        %3870 = vmatprep.subr.bf16.mxu0 0
        %3871 = vmatpush1.bf16.msra.mxu0 %v3854
        %3872 = vmatprep.subr.bf16.mxu0 0
        %3873 = vmatpush1.bf16.msra.mxu0 %v3855
        %3874 = vmatprep.subr.bf16.mxu0 0
        %3875 = vmatpush1.bf16.msra.mxu0 %v3856
        %3876 = vmatprep.subr.bf16.mxu0 0
        %3877 = vmatpush1.bf16.msra.mxu0 %v3857
        %3878 = vmatprep.subr.bf16.mxu0 0
        %3879 = vmatpush1.bf16.msra.mxu0 %v3858
        %3880 = vmatprep.subr.bf16.mxu0 0
        %3881 = vmatpush1.bf16.msra.mxu0 %v3859
        %3882 = vmatprep.subr.bf16.mxu0 0
        %3883 = vmatpush1.bf16.msra.mxu0 %v3860
        %3884 = vmatprep.subr.bf16.mxu0 0
        %3885 = vmatpush1.bf16.msra.mxu0 %v3861
        %3886 = vmatprep.subr.bf16.mxu0 0
        %3887 = vmatpush1.bf16.msra.mxu0 0
        %3888 = vmatprep.subr.bf16.mxu0 0
        %3889 = vmatpush1.bf16.msra.mxu0 0
        %3890 = vmatprep.subr.bf16.mxu0 0
        %3891 = vmatpush1.bf16.msra.mxu0 0
        %3892 = vmatprep.subr.bf16.mxu0 0
        %3893 = vmatpush1.bf16.msra.mxu0 0
        %3894 = vmatprep.subr.bf16.mxu0 0
        %3895 = vmatpush1.bf16.msra.mxu0 0
        %3896 = vmatprep.subr.bf16.mxu0 0
        %3897 = vmatpush1.bf16.msra.mxu0 0
        %3898 = vmatprep.subr.bf16.mxu0 0
        %3899 = vmatpush1.bf16.msra.mxu0 0
        %3900 = vmatprep.subr.bf16.mxu0 0
        %3901 = vmatpush1.bf16.msra.mxu0 0
        %3902 = vmatprep.mubr.bf16.mxu0 0
        %3903 = vmatmul.mubr.bf16.gmra.mrb[0].mxu0 %v3737
        %v3904 = vpop.f32.mrb[0].mxu0
        %v3905 = vadd.f32 %v3821, %v3904
        %v3906 = vpop.f32.mrb[0].mxu0
        %v3907 = vpop.f32.mrb[0].mxu0
        %v3908 = vadd.f32 %v3821, %v3907
        %v3909 = vpop.f32.mrb[0].mxu0
        %3910 = vmatprep.mubr.bf16.mxu0 0
        %3911 = vmatmul.mubr.bf16.gmra.mrb[0].mxu0 %v3738
        %v3912 = vpop.f32.mrb[0].mxu0
        %v3913 = vadd.f32 %v3821, %v3912
        %v3914 = vpop.f32.mrb[0].mxu0
        %v3915 = vpop.f32.mrb[0].mxu0
        %v3916 = vadd.f32 %v3821, %v3915
        %v3917 = vpop.f32.mrb[0].mxu0
        %3918 = vmatprep.mubr.bf16.mxu0 0
        %3919 = vmatmul.mubr.bf16.gmra.mrb[0].mxu0 %v3739
        %v3920 = vpop.f32.mrb[0].mxu0
        %v3921 = vadd.f32 %v3821, %v3920
        %v3922 = vpop.f32.mrb[0].mxu0
        %v3923 = vpop.f32.mrb[0].mxu0
        %v3924 = vadd.f32 %v3821, %v3923
        %v3925 = vpop.f32.mrb[0].mxu0
        %3926 = vmatprep.mubr.bf16.mxu0 0
        %3927 = vmatmul.mubr.bf16.gmra.mrb[0].mxu0 %v3740
        %v3928 = vpop.f32.mrb[0].mxu0
        %v3929 = vadd.f32 %v3821, %v3928
        %v3930 = vpop.f32.mrb[0].mxu0
        %v3931 = vpop.f32.mrb[0].mxu0
        %v3932 = vadd.f32 %v3821, %v3931
        %v3933 = vpop.f32.mrb[0].mxu0
        %3934 = vmatprep.mubr.bf16.mxu0 0
        %3935 = vmatmul.mubr.bf16.gmra.mrb[0].mxu0 %v3741
        %v3936 = vpop.f32.mrb[0].mxu0
        %v3937 = vadd.f32 %v3821, %v3936
        %v3938 = vpop.f32.mrb[0].mxu0
        %v3939 = vpop.f32.mrb[0].mxu0
        %v3940 = vadd.f32 %v3821, %v3939
        %v3941 = vpop.f32.mrb[0].mxu0
        %3942 = vmatprep.mubr.bf16.mxu0 0
        %3943 = vmatmul.mubr.bf16.gmra.mrb[0].mxu0 %v3742
        %v3944 = vpop.f32.mrb[0].mxu0
        %v3945 = vadd.f32 %v3821, %v3944
        %v3946 = vpop.f32.mrb[0].mxu0
        %v3947 = vpop.f32.mrb[0].mxu0
        %v3948 = vadd.f32 %v3821, %v3947
        %v3949 = vpop.f32.mrb[0].mxu0
        %3950 = vmatprep.mubr.bf16.mxu0 0
        %3951 = vmatmul.mubr.bf16.gmra.mrb[0].mxu0 %v3743
        %v3952 = vpop.f32.mrb[0].mxu0
        %v3953 = vadd.f32 %v3821, %v3952
        %v3954 = vpop.f32.mrb[0].mxu0
        %v3955 = vpop.f32.mrb[0].mxu0
        %v3956 = vadd.f32 %v3821, %v3955
        %v3957 = vpop.f32.mrb[0].mxu0
        %3958 = vmatprep.mubr.bf16.mxu0 0
        %3959 = vmatmul.mubr.bf16.gmra.mrb[0].mxu0 %v3744
        %v3960 = vpop.f32.mrb[0].mxu0
        %v3961 = vadd.f32 %v3821, %v3960
        %v3962 = vpop.f32.mrb[0].mxu0
        %v3963 = vpop.f32.mrb[0].mxu0
        %v3964 = vadd.f32 %v3821, %v3963
        %v3965 = vpop.f32.mrb[0].mxu0
        %3966 = vmatprep.mubr.bf16.mxu0 0
        %3967 = vmatmul.mubr.bf16.gmra.mrb[0].mxu0 %v3745
        %v3968 = vpop.f32.mrb[0].mxu0
        %v3969 = vadd.f32 %v3821, %v3968
        %v3970 = vpop.f32.mrb[0].mxu0
        %v3971 = vpop.f32.mrb[0].mxu0
        %v3972 = vadd.f32 %v3821, %v3971
        %v3973 = vpop.f32.mrb[0].mxu0
        %3974 = vmatprep.mubr.bf16.mxu0 0
        %3975 = vmatmul.mubr.bf16.gmra.mrb[0].mxu0 %v3746
        %v3976 = vpop.f32.mrb[0].mxu0
        %v3977 = vadd.f32 %v3821, %v3976
        %v3978 = vpop.f32.mrb[0].mxu0
        %v3979 = vpop.f32.mrb[0].mxu0
        %v3980 = vadd.f32 %v3821, %v3979
        %v3981 = vpop.f32.mrb[0].mxu0
        %3982 = vmatprep.mubr.bf16.mxu0 0
        %3983 = vmatmul.mubr.bf16.gmra.mrb[0].mxu0 %v3747
        %v3984 = vpop.f32.mrb[0].mxu0
        %v3985 = vadd.f32 %v3821, %v3984
        %v3986 = vpop.f32.mrb[0].mxu0
        %v3987 = vpop.f32.mrb[0].mxu0
        %v3988 = vadd.f32 %v3821, %v3987
        %v3989 = vpop.f32.mrb[0].mxu0
        %3990 = vmatprep.mubr.bf16.mxu0 0
        %3991 = vmatmul.mubr.bf16.gmra.mrb[0].mxu0 %v3748
        %v3992 = vpop.f32.mrb[0].mxu0
        %v3993 = vadd.f32 %v3821, %v3992
        %v3994 = vpop.f32.mrb[0].mxu0
        %v3995 = vpop.f32.mrb[0].mxu0
        %v3996 = vadd.f32 %v3821, %v3995
        %v3997 = vpop.f32.mrb[0].mxu0
        %3998 = vmatprep.mubr.bf16.mxu0 0
        %3999 = vmatmul.mubr.bf16.gmra.mrb[0].mxu0 %v3749
        %v4000 = vpop.f32.mrb[0].mxu0
        %v4001 = vadd.f32 %v3821, %v4000
        %v4002 = vpop.f32.mrb[0].mxu0
        %v4003 = vpop.f32.mrb[0].mxu0
        %v4004 = vadd.f32 %v3821, %v4003
        %v4005 = vpop.f32.mrb[0].mxu0
        %4006 = vmatprep.mubr.bf16.mxu0 0
        %4007 = vmatmul.mubr.bf16.gmra.mrb[0].mxu0 %v3750
        %v4008 = vpop.f32.mrb[0].mxu0
        %v4009 = vadd.f32 %v3821, %v4008
        %v4010 = vpop.f32.mrb[0].mxu0
        %v4011 = vpop.f32.mrb[0].mxu0
        %v4012 = vadd.f32 %v3821, %v4011
        %v4013 = vpop.f32.mrb[0].mxu0
        %4014 = vmatprep.mubr.bf16.mxu0 0
        %4015 = vmatmul.mubr.bf16.gmra.mrb[0].mxu0 %v3751
        %v4016 = vpop.f32.mrb[0].mxu0
        %v4017 = vadd.f32 %v3821, %v4016
        %v4018 = vpop.f32.mrb[0].mxu0
        %v4019 = vpop.f32.mrb[0].mxu0
        %v4020 = vadd.f32 %v3821, %v4019
        %v4021 = vpop.f32.mrb[0].mxu0
        %4022 = vmatprep.mubr.bf16.mxu0 0
        %4023 = vmatmul.mubr.bf16.gmra.mrb[0].mxu0 %v3752
        %v4024 = vpop.f32.mrb[0].mxu0
        %v4025 = vadd.f32 %v3821, %v4024
        %v4026 = vpop.f32.mrb[0].mxu0
        %v4027 = vpop.f32.mrb[0].mxu0
        %v4028 = vadd.f32 %v3821, %v4027
        %v4029 = vpop.f32.mrb[0].mxu0
        %4030 = vmatprep.mubr.bf16.mxu0 0
        %4031 = vmatmul.mubr.bf16.gmra.mrb[0].mxu0 %v3753
        %v4032 = vpop.f32.mrb[0].mxu0
        %v4033 = vadd.f32 %v3821, %v4032
        %v4034 = vpop.f32.mrb[0].mxu0
        %v4035 = vpop.f32.mrb[0].mxu0
        %v4036 = vadd.f32 %v3821, %v4035
        %v4037 = vpop.f32.mrb[0].mxu0
        %4038 = vmatprep.mubr.bf16.mxu0 0
        %4039 = vmatmul.mubr.bf16.gmra.mrb[0].mxu0 %v3754
        %v4040 = vpop.f32.mrb[0].mxu0
        %v4041 = vadd.f32 %v3821, %v4040
        %v4042 = vpop.f32.mrb[0].mxu0
        %v4043 = vpop.f32.mrb[0].mxu0
        %v4044 = vadd.f32 %v3821, %v4043
        %v4045 = vpop.f32.mrb[0].mxu0
        %4046 = vmatprep.mubr.bf16.mxu0 0
        %4047 = vmatmul.mubr.bf16.gmra.mrb[0].mxu0 %v3755
        %v4048 = vpop.f32.mrb[0].mxu0
        %v4049 = vadd.f32 %v3821, %v4048
        %v4050 = vpop.f32.mrb[0].mxu0
        %v4051 = vpop.f32.mrb[0].mxu0
        %v4052 = vadd.f32 %v3821, %v4051
        %v4053 = vpop.f32.mrb[0].mxu0
        %4054 = vmatprep.mubr.bf16.mxu0 0
        %4055 = vmatmul.mubr.bf16.gmra.mrb[0].mxu0 %v3756
        %v4056 = vpop.f32.mrb[0].mxu0
        %v4057 = vadd.f32 %v3821, %v4056
        %v4058 = vpop.f32.mrb[0].mxu0
        %v4059 = vpop.f32.mrb[0].mxu0
        %v4060 = vadd.f32 %v3821, %v4059
        %v4061 = vpop.f32.mrb[0].mxu0
        %4062 = vmatprep.mubr.bf16.mxu0 0
        %4063 = vmatmul.mubr.bf16.gmra.mrb[0].mxu0 %v3757
        %v4064 = vpop.f32.mrb[0].mxu0
        %v4065 = vadd.f32 %v3821, %v4064
        %v4066 = vpop.f32.mrb[0].mxu0
        %v4067 = vpop.f32.mrb[0].mxu0
        %v4068 = vadd.f32 %v3821, %v4067
        %v4069 = vpop.f32.mrb[0].mxu0
        %4070 = vmatprep.mubr.bf16.mxu0 0
        %4071 = vmatmul.mubr.bf16.gmra.mrb[0].mxu0 %v3758
        %v4072 = vpop.f32.mrb[0].mxu0
        %v4073 = vadd.f32 %v3821, %v4072
        %v4074 = vpop.f32.mrb[0].mxu0
        %v4075 = vpop.f32.mrb[0].mxu0
        %v4076 = vadd.f32 %v3821, %v4075
        %v4077 = vpop.f32.mrb[0].mxu0
        %4078 = vmatprep.mubr.bf16.mxu0 0
        %4079 = vmatmul.mubr.bf16.gmra.mrb[0].mxu0 %v3759
        %v4080 = vpop.f32.mrb[0].mxu0
        %v4081 = vadd.f32 %v3821, %v4080
        %v4082 = vpop.f32.mrb[0].mxu0
        %v4083 = vpop.f32.mrb[0].mxu0
        %v4084 = vadd.f32 %v3821, %v4083
        %v4085 = vpop.f32.mrb[0].mxu0
        %4086 = vmatprep.mubr.bf16.mxu0 0
        %4087 = vmatmul.mubr.bf16.gmra.mrb[0].mxu0 %v3760
        %v4088 = vpop.f32.mrb[0].mxu0
        %v4089 = vadd.f32 %v3821, %v4088
        %v4090 = vpop.f32.mrb[0].mxu0
        %v4091 = vpop.f32.mrb[0].mxu0
        %v4092 = vadd.f32 %v3821, %v4091
        %v4093 = vpop.f32.mrb[0].mxu0
        %4094 = vmatprep.mubr.bf16.mxu0 0
        %4095 = vmatmul.mubr.bf16.gmra.mrb[0].mxu0 %v3761
        %v4096 = vpop.f32.mrb[0].mxu0
        %v4097 = vadd.f32 %v3821, %v4096
        %v4098 = vpop.f32.mrb[0].mxu0
        %v4099 = vpop.f32.mrb[0].mxu0
        %v4100 = vadd.f32 %v3821, %v4099
        %v4101 = vpop.f32.mrb[0].mxu0
        %4102 = vmatprep.mubr.bf16.mxu0 0
        %4103 = vmatmul.mubr.bf16.gmra.mrb[0].mxu0 %v3762
        %v4104 = vpop.f32.mrb[0].mxu0
        %v4105 = vadd.f32 %v3821, %v4104
        %v4106 = vpop.f32.mrb[0].mxu0
        %v4107 = vpop.f32.mrb[0].mxu0
        %v4108 = vadd.f32 %v3821, %v4107
        %v4109 = vpop.f32.mrb[0].mxu0
        %4110 = vmatprep.mubr.bf16.mxu0 0
        %4111 = vmatmul.mubr.bf16.gmra.mrb[0].mxu0 %v3763
        %v4112 = vpop.f32.mrb[0].mxu0
        %v4113 = vadd.f32 %v3821, %v4112
        %v4114 = vpop.f32.mrb[0].mxu0
        %v4115 = vpop.f32.mrb[0].mxu0
        %v4116 = vadd.f32 %v3821, %v4115
        %v4117 = vpop.f32.mrb[0].mxu0
        %4118 = vmatprep.mubr.bf16.mxu0 0
        %4119 = vmatmul.mubr.bf16.gmra.mrb[0].mxu0 %v3764
        %v4120 = vpop.f32.mrb[0].mxu0
        %v4121 = vadd.f32 %v3821, %v4120
        %v4122 = vpop.f32.mrb[0].mxu0
        %v4123 = vpop.f32.mrb[0].mxu0
        %v4124 = vadd.f32 %v3821, %v4123
        %v4125 = vpop.f32.mrb[0].mxu0
        %4126 = vmatprep.mubr.bf16.mxu0 0
        %4127 = vmatmul.mubr.bf16.gmra.mrb[0].mxu0 %v3765
        %v4128 = vpop.f32.mrb[0].mxu0
        %v4129 = vadd.f32 %v3821, %v4128
        %v4130 = vpop.f32.mrb[0].mxu0
        %v4131 = vpop.f32.mrb[0].mxu0
        %v4132 = vadd.f32 %v3821, %v4131
        %v4133 = vpop.f32.mrb[0].mxu0
        %4134 = vmatprep.mubr.bf16.mxu0 0
        %4135 = vmatmul.mubr.bf16.gmra.mrb[0].mxu0 %v3766
        %v4136 = vpop.f32.mrb[0].mxu0
        %v4137 = vadd.f32 %v3821, %v4136
        %v4138 = vpop.f32.mrb[0].mxu0
        %v4139 = vpop.f32.mrb[0].mxu0
        %v4140 = vadd.f32 %v3821, %v4139
        %v4141 = vpop.f32.mrb[0].mxu0
        %4142 = vmatprep.mubr.bf16.mxu0 0
        %4143 = vmatmul.mubr.bf16.gmra.mrb[0].mxu0 %v3767
        %v4144 = vpop.f32.mrb[0].mxu0
        %v4145 = vadd.f32 %v3821, %v4144
        %v4146 = vpop.f32.mrb[0].mxu0
        %v4147 = vpop.f32.mrb[0].mxu0
        %v4148 = vadd.f32 %v3821, %v4147
        %v4149 = vpop.f32.mrb[0].mxu0
        %4150 = vmatprep.mubr.bf16.mxu0 0
        %4151 = vmatmul.mubr.bf16.gmra.mrb[0].mxu0 %v3768
        %v4152 = vpop.f32.mrb[0].mxu0
        %v4153 = vadd.f32 %v3821, %v4152
        %v4154 = vpop.f32.mrb[0].mxu0
        %v4155 = vpop.f32.mrb[0].mxu0
        %v4156 = vadd.f32 %v3821, %v4155
        %v4157 = vpop.f32.mrb[0].mxu0
        %4158 = vmatprep.mubr.bf16.mxu0 0
        %4159 = vmatmul.mubr.bf16.gmra.mrb[0].mxu0 %v3769
        %v4160 = vpop.f32.mrb[0].mxu0
        %v4161 = vadd.f32 %v3821, %v4160
        %v4162 = vpop.f32.mrb[0].mxu0
        %v4163 = vpop.f32.mrb[0].mxu0
        %v4164 = vadd.f32 %v3821, %v4163
        %v4165 = vpop.f32.mrb[0].mxu0
        %4166 = vmatprep.mubr.bf16.mxu0 0
        %4167 = vmatmul.mubr.bf16.gmra.mrb[0].mxu0 %v3770
        %v4168 = vpop.f32.mrb[0].mxu0
        %v4169 = vadd.f32 %v3821, %v4168
        %v4170 = vpop.f32.mrb[0].mxu0
        %v4171 = vpop.f32.mrb[0].mxu0
        %v4172 = vadd.f32 %v3821, %v4171
        %v4173 = vpop.f32.mrb[0].mxu0
        %4174 = vmatprep.mubr.bf16.mxu0 0
        %4175 = vmatmul.mubr.bf16.gmra.mrb[0].mxu0 %v3771
        %v4176 = vpop.f32.mrb[0].mxu0
        %v4177 = vadd.f32 %v3821, %v4176
        %v4178 = vpop.f32.mrb[0].mxu0
        %v4179 = vpop.f32.mrb[0].mxu0
        %v4180 = vadd.f32 %v3821, %v4179
        %v4181 = vpop.f32.mrb[0].mxu0
        %4182 = vmatprep.mubr.bf16.mxu0 0
        %4183 = vmatmul.mubr.bf16.gmra.mrb[0].mxu0 %v3772
        %v4184 = vpop.f32.mrb[0].mxu0
        %v4185 = vadd.f32 %v3821, %v4184
        %v4186 = vpop.f32.mrb[0].mxu0
        %v4187 = vpop.f32.mrb[0].mxu0
        %v4188 = vadd.f32 %v3821, %v4187
        %v4189 = vpop.f32.mrb[0].mxu0
        %4190 = vmatprep.mubr.bf16.mxu0 0
        %4191 = vmatmul.mubr.bf16.gmra.mrb[0].mxu0 %v3773
        %v4192 = vpop.f32.mrb[0].mxu0
        %v4193 = vadd.f32 %v3821, %v4192
        %v4194 = vpop.f32.mrb[0].mxu0
        %v4195 = vpop.f32.mrb[0].mxu0
        %v4196 = vadd.f32 %v3821, %v4195
        %v4197 = vpop.f32.mrb[0].mxu0
        %4198 = vmatprep.mubr.bf16.mxu0 0
        %4199 = vmatmul.mubr.bf16.gmra.mrb[0].mxu0 %v3774
        %v4200 = vpop.f32.mrb[0].mxu0
        %v4201 = vadd.f32 %v3821, %v4200
        %v4202 = vpop.f32.mrb[0].mxu0
        %v4203 = vpop.f32.mrb[0].mxu0
        %v4204 = vadd.f32 %v3821, %v4203
        %v4205 = vpop.f32.mrb[0].mxu0
        %4206 = vmatprep.mubr.bf16.mxu0 0
        %4207 = vmatmul.mubr.bf16.gmra.mrb[0].mxu0 %v3775
        %v4208 = vpop.f32.mrb[0].mxu0
        %v4209 = vadd.f32 %v3821, %v4208
        %v4210 = vpop.f32.mrb[0].mxu0
        %v4211 = vpop.f32.mrb[0].mxu0
        %v4212 = vadd.f32 %v3821, %v4211
        %v4213 = vpop.f32.mrb[0].mxu0
        %4214 = vmatprep.mubr.bf16.mxu0 0
        %4215 = vmatmul.mubr.bf16.gmra.mrb[0].mxu0 %v3776
        %v4216 = vpop.f32.mrb[0].mxu0
        %v4217 = vadd.f32 %v3821, %v4216
        %v4218 = vpop.f32.mrb[0].mxu0
        %v4219 = vpop.f32.mrb[0].mxu0
        %v4220 = vadd.f32 %v3821, %v4219
        %v4221 = vpop.f32.mrb[0].mxu0
        %4222 = vmatprep.mubr.bf16.mxu0 0
        %4223 = vmatmul.mubr.bf16.gmra.mrb[0].mxu0 %v3777
        %v4224 = vpop.f32.mrb[0].mxu0
        %v4225 = vadd.f32 %v3821, %v4224
        %v4226 = vpop.f32.mrb[0].mxu0
        %v4227 = vpop.f32.mrb[0].mxu0
        %v4228 = vadd.f32 %v3821, %v4227
        %v4229 = vpop.f32.mrb[0].mxu0
        %4230 = vmatprep.mubr.bf16.mxu0 0
        %4231 = vmatmul.mubr.bf16.gmra.mrb[0].mxu0 %v3778
        %v4232 = vpop.f32.mrb[0].mxu0
        %v4233 = vadd.f32 %v3821, %v4232
        %v4234 = vpop.f32.mrb[0].mxu0
        %v4235 = vpop.f32.mrb[0].mxu0
        %v4236 = vadd.f32 %v3821, %v4235
        %v4237 = vpop.f32.mrb[0].mxu0
        %4238 = vmatprep.mubr.bf16.mxu0 0
        %4239 = vmatmul.mubr.bf16.gmra.mrb[0].mxu0 %v3779
        %v4240 = vpop.f32.mrb[0].mxu0
        %v4241 = vadd.f32 %v3821, %v4240
        %v4242 = vpop.f32.mrb[0].mxu0
        %v4243 = vpop.f32.mrb[0].mxu0
        %v4244 = vadd.f32 %v3821, %v4243
        %v4245 = vpop.f32.mrb[0].mxu0
        %4246 = vmatprep.mubr.bf16.mxu0 0
        %4247 = vmatmul.mubr.bf16.gmra.mrb[0].mxu0 %v3780
        %v4248 = vpop.f32.mrb[0].mxu0
        %v4249 = vadd.f32 %v3821, %v4248
        %v4250 = vpop.f32.mrb[0].mxu0
        %v4251 = vpop.f32.mrb[0].mxu0
        %v4252 = vadd.f32 %v3821, %v4251
        %v4253 = vpop.f32.mrb[0].mxu0
        %4254 = vmatprep.mubr.bf16.mxu0 0
        %4255 = vmatmul.mubr.bf16.gmra.mrb[0].mxu0 %v3781
        %v4256 = vpop.f32.mrb[0].mxu0
        %v4257 = vadd.f32 %v3821, %v4256
        %v4258 = vpop.f32.mrb[0].mxu0
        %v4259 = vpop.f32.mrb[0].mxu0
        %v4260 = vadd.f32 %v3821, %v4259
        %v4261 = vpop.f32.mrb[0].mxu0
        %4262 = vmatprep.mubr.bf16.mxu0 0
        %4263 = vmatmul.mubr.bf16.gmra.mrb[0].mxu0 %v3782
        %v4264 = vpop.f32.mrb[0].mxu0
        %v4265 = vadd.f32 %v3821, %v4264
        %v4266 = vpop.f32.mrb[0].mxu0
        %v4267 = vpop.f32.mrb[0].mxu0
        %v4268 = vadd.f32 %v3821, %v4267
        %v4269 = vpop.f32.mrb[0].mxu0
        %4270 = vmatprep.mubr.bf16.mxu0 0
        %4271 = vmatmul.mubr.bf16.gmra.mrb[0].mxu0 %v3783
        %v4272 = vpop.f32.mrb[0].mxu0
        %v4273 = vadd.f32 %v3821, %v4272
        %v4274 = vpop.f32.mrb[0].mxu0
        %v4275 = vpop.f32.mrb[0].mxu0
        %v4276 = vadd.f32 %v3821, %v4275
        %v4277 = vpop.f32.mrb[0].mxu0
        %4278 = vmatprep.mubr.bf16.mxu0 0
        %4279 = vmatmul.mubr.bf16.gmra.mrb[0].mxu0 %v3784
        %v4280 = vpop.f32.mrb[0].mxu0
        %v4281 = vadd.f32 %v3821, %v4280
        %v4282 = vpop.f32.mrb[0].mxu0
        %v4283 = vpop.f32.mrb[0].mxu0
        %v4284 = vadd.f32 %v3821, %v4283
        %v4285 = vpop.f32.mrb[0].mxu0
        %4286 = vmatprep.mubr.bf16.mxu0 0
        %4287 = vmatmul.mubr.bf16.gmra.mrb[0].mxu0 %v3785
        %v4288 = vpop.f32.mrb[0].mxu0
        %v4289 = vadd.f32 %v3821, %v4288
        %v4290 = vpop.f32.mrb[0].mxu0
        %v4291 = vpop.f32.mrb[0].mxu0
        %v4292 = vadd.f32 %v3821, %v4291
        %v4293 = vpop.f32.mrb[0].mxu0
        %4294 = vmatprep.mubr.bf16.mxu0 0
        %4295 = vmatmul.mubr.bf16.gmra.mrb[0].mxu0 %v3786
        %v4296 = vpop.f32.mrb[0].mxu0
        %v4297 = vadd.f32 %v3821, %v4296
        %v4298 = vpop.f32.mrb[0].mxu0
        %v4299 = vpop.f32.mrb[0].mxu0
        %v4300 = vadd.f32 %v3821, %v4299
        %v4301 = vpop.f32.mrb[0].mxu0
        %4302 = vmatprep.mubr.bf16.mxu0 0
        %4303 = vmatmul.mubr.bf16.gmra.mrb[0].mxu0 %v3787
        %v4304 = vpop.f32.mrb[0].mxu0
        %v4305 = vadd.f32 %v3821, %v4304
        %v4306 = vpop.f32.mrb[0].mxu0
        %v4307 = vpop.f32.mrb[0].mxu0
        %v4308 = vadd.f32 %v3821, %v4307
        %v4309 = vpop.f32.mrb[0].mxu0
        %4310 = vmatprep.mubr.bf16.mxu0 0
        %4311 = vmatmul.mubr.bf16.gmra.mrb[0].mxu0 %v3788
        %v4312 = vpop.f32.mrb[0].mxu0
        %v4313 = vadd.f32 %v3821, %v4312
        %v4314 = vpop.f32.mrb[0].mxu0
        %v4315 = vpop.f32.mrb[0].mxu0
        %v4316 = vadd.f32 %v3821, %v4315
        %v4317 = vpop.f32.mrb[0].mxu0
        %4318 = vmatprep.mubr.bf16.mxu0 0
        %4319 = vmatmul.mubr.bf16.gmra.mrb[0].mxu0 %v3789
        %v4320 = vpop.f32.mrb[0].mxu0
        %v4321 = vadd.f32 %v3821, %v4320
        %v4322 = vpop.f32.mrb[0].mxu0
        %v4323 = vpop.f32.mrb[0].mxu0
        %v4324 = vadd.f32 %v3821, %v4323
        %v4325 = vpop.f32.mrb[0].mxu0
        %4326 = vmatprep.mubr.bf16.mxu0 0
        %4327 = vmatmul.mubr.bf16.gmra.mrb[0].mxu0 %v3790
        %v4328 = vpop.f32.mrb[0].mxu0
        %v4329 = vadd.f32 %v3821, %v4328
        %v4330 = vpop.f32.mrb[0].mxu0
        %v4331 = vpop.f32.mrb[0].mxu0
        %v4332 = vadd.f32 %v3821, %v4331
        %v4333 = vpop.f32.mrb[0].mxu0
        %4334 = vmatprep.mubr.bf16.mxu0 0
        %4335 = vmatmul.mubr.bf16.gmra.mrb[0].mxu0 %v3791
        %v4336 = vpop.f32.mrb[0].mxu0
        %v4337 = vadd.f32 %v3821, %v4336
        %v4338 = vpop.f32.mrb[0].mxu0
        %v4339 = vpop.f32.mrb[0].mxu0
        %v4340 = vadd.f32 %v3821, %v4339
        %v4341 = vpop.f32.mrb[0].mxu0
        %4342 = vmatprep.mubr.bf16.mxu0 0
        %4343 = vmatmul.mubr.bf16.gmra.mrb[0].mxu0 %v3792
        %v4344 = vpop.f32.mrb[0].mxu0
        %v4345 = vadd.f32 %v3821, %v4344
        %v4346 = vpop.f32.mrb[0].mxu0
        %v4347 = vpop.f32.mrb[0].mxu0
        %v4348 = vadd.f32 %v3821, %v4347
        %v4349 = vpop.f32.mrb[0].mxu0
        %4350 = vmatprep.mubr.bf16.mxu0 0
        %4351 = vmatmul.mubr.bf16.gmra.mrb[0].mxu0 %v3793
        %v4352 = vpop.f32.mrb[0].mxu0
        %v4353 = vadd.f32 %v3821, %v4352
        %v4354 = vpop.f32.mrb[0].mxu0
        %v4355 = vpop.f32.mrb[0].mxu0
        %v4356 = vadd.f32 %v3821, %v4355
        %v4357 = vpop.f32.mrb[0].mxu0
        %4358 = vmatprep.mubr.bf16.mxu0 0
        %4359 = vmatmul.mubr.bf16.gmra.mrb[0].mxu0 %v3794
        %v4360 = vpop.f32.mrb[0].mxu0
        %v4361 = vadd.f32 %v3821, %v4360
        %v4362 = vpop.f32.mrb[0].mxu0
        %v4363 = vpop.f32.mrb[0].mxu0
        %v4364 = vadd.f32 %v3821, %v4363
        %v4365 = vpop.f32.mrb[0].mxu0
        %4366 = vmatprep.mubr.bf16.mxu0 0
        %4367 = vmatmul.mubr.bf16.gmra.mrb[0].mxu0 %v3795
        %v4368 = vpop.f32.mrb[0].mxu0
        %v4369 = vadd.f32 %v3821, %v4368
        %v4370 = vpop.f32.mrb[0].mxu0
        %v4371 = vpop.f32.mrb[0].mxu0
        %v4372 = vadd.f32 %v3821, %v4371
        %v4373 = vpop.f32.mrb[0].mxu0
        %4374 = vmatprep.mubr.bf16.mxu0 0
        %4375 = vmatmul.mubr.bf16.gmra.mrb[0].mxu0 %v3796
        %v4376 = vpop.f32.mrb[0].mxu0
        %v4377 = vadd.f32 %v3821, %v4376
        %v4378 = vpop.f32.mrb[0].mxu0
        %v4379 = vpop.f32.mrb[0].mxu0
        %v4380 = vadd.f32 %v3821, %v4379
        %v4381 = vpop.f32.mrb[0].mxu0
        %4382 = vmatprep.mubr.bf16.mxu0 0
        %4383 = vmatmul.mubr.bf16.gmra.mrb[0].mxu0 %v3797
        %v4384 = vpop.f32.mrb[0].mxu0
        %v4385 = vadd.f32 %v3821, %v4384
        %v4386 = vpop.f32.mrb[0].mxu0
        %v4387 = vpop.f32.mrb[0].mxu0
        %v4388 = vadd.f32 %v3821, %v4387
        %v4389 = vpop.f32.mrb[0].mxu0
        %4390 = vmatprep.mubr.bf16.mxu0 0
        %4391 = vmatmul.mubr.bf16.gmra.mrb[0].mxu0 %v3798
        %v4392 = vpop.f32.mrb[0].mxu0
        %v4393 = vadd.f32 %v3821, %v4392
        %v4394 = vpop.f32.mrb[0].mxu0
        %v4395 = vpop.f32.mrb[0].mxu0
        %v4396 = vadd.f32 %v3821, %v4395
        %v4397 = vpop.f32.mrb[0].mxu0
        %4398 = vmatprep.mubr.bf16.mxu0 0
        %4399 = vmatmul.mubr.bf16.gmra.mrb[0].mxu0 %v3799
        %v4400 = vpop.f32.mrb[0].mxu0
        %v4401 = vadd.f32 %v3821, %v4400
        %v4402 = vpop.f32.mrb[0].mxu0
        %v4403 = vpop.f32.mrb[0].mxu0
        %v4404 = vadd.f32 %v3821, %v4403
        %v4405 = vpop.f32.mrb[0].mxu0
        %4406 = vmatprep.mubr.bf16.mxu0 0
        %4407 = vmatmul.mubr.bf16.gmra.mrb[0].mxu0 %v3800
        %v4408 = vpop.f32.mrb[0].mxu0
        %v4409 = vadd.f32 %v3821, %v4408
        %v4410 = vpop.f32.mrb[0].mxu0
        %v4411 = vpop.f32.mrb[0].mxu0
        %v4412 = vadd.f32 %v3821, %v4411
        %v4413 = vpop.f32.mrb[0].mxu0
        %4414 = vdwg.mxu0
        %v4415 = vmax.f32 %v3905, 0.0
        %v4416 = vmax.f32 %v3908, 0.0
        %v4417 = vmax.f32 %v3913, 0.0
        %v4418 = vmax.f32 %v3916, 0.0
        %v4419 = vmax.f32 %v3921, 0.0
        %v4420 = vmax.f32 %v3924, 0.0
        %v4421 = vmax.f32 %v3929, 0.0
        %v4422 = vmax.f32 %v3932, 0.0
        %v4423 = vmax.f32 %v3937, 0.0
        %v4424 = vmax.f32 %v3940, 0.0
        %v4425 = vmax.f32 %v3945, 0.0
        %v4426 = vmax.f32 %v3948, 0.0
        %v4427 = vmax.f32 %v3953, 0.0
        %v4428 = vmax.f32 %v3956, 0.0
        %v4429 = vmax.f32 %v3961, 0.0
        %v4430 = vmax.f32 %v3964, 0.0
        %v4431 = vmax.f32 %v3969, 0.0
        %v4432 = vmax.f32 %v3972, 0.0
        %v4433 = vmax.f32 %v3977, 0.0
        %v4434 = vmax.f32 %v3980, 0.0
        %v4435 = vmax.f32 %v3985, 0.0
        %v4436 = vmax.f32 %v3988, 0.0
        %v4437 = vmax.f32 %v3993, 0.0
        %v4438 = vmax.f32 %v3996, 0.0
        %v4439 = vmax.f32 %v4001, 0.0
        %v4440 = vmax.f32 %v4004, 0.0
        %v4441 = vmax.f32 %v4009, 0.0
        %v4442 = vmax.f32 %v4012, 0.0
        %v4443 = vmax.f32 %v4017, 0.0
        %v4444 = vmax.f32 %v4020, 0.0
        %v4445 = vmax.f32 %v4025, 0.0
        %v4446 = vmax.f32 %v4028, 0.0
        %v4447 = vmax.f32 %v4033, 0.0
        %v4448 = vmax.f32 %v4036, 0.0
        %v4449 = vmax.f32 %v4041, 0.0
        %v4450 = vmax.f32 %v4044, 0.0
        %v4451 = vmax.f32 %v4049, 0.0
        %v4452 = vmax.f32 %v4052, 0.0
        %v4453 = vmax.f32 %v4057, 0.0
        %v4454 = vmax.f32 %v4060, 0.0
        %v4455 = vmax.f32 %v4065, 0.0
        %v4456 = vmax.f32 %v4068, 0.0
        %v4457 = vmax.f32 %v4073, 0.0
        %v4458 = vmax.f32 %v4076, 0.0
        %v4459 = vmax.f32 %v4081, 0.0
        %v4460 = vmax.f32 %v4084, 0.0
        %v4461 = vmax.f32 %v4089, 0.0
        %v4462 = vmax.f32 %v4092, 0.0
        %v4463 = vmax.f32 %v4097, 0.0
        %v4464 = vmax.f32 %v4100, 0.0
        %v4465 = vmax.f32 %v4105, 0.0
        %v4466 = vmax.f32 %v4108, 0.0
        %v4467 = vmax.f32 %v4113, 0.0
        %v4468 = vmax.f32 %v4116, 0.0
        %v4469 = vmax.f32 %v4121, 0.0
        %v4470 = vmax.f32 %v4124, 0.0
        %v4471 = vmax.f32 %v4129, 0.0
        %v4472 = vmax.f32 %v4132, 0.0
        %v4473 = vmax.f32 %v4137, 0.0
        %v4474 = vmax.f32 %v4140, 0.0
        %v4475 = vmax.f32 %v4145, 0.0
        %v4476 = vmax.f32 %v4148, 0.0
        %v4477 = vmax.f32 %v4153, 0.0
        %v4478 = vmax.f32 %v4156, 0.0
        %v4479 = vmax.f32 %v4161, 0.0
        %v4480 = vmax.f32 %v4164, 0.0
        %v4481 = vmax.f32 %v4169, 0.0
        %v4482 = vmax.f32 %v4172, 0.0
        %v4483 = vmax.f32 %v4177, 0.0
        %v4484 = vmax.f32 %v4180, 0.0
        %v4485 = vmax.f32 %v4185, 0.0
        %v4486 = vmax.f32 %v4188, 0.0
        %v4487 = vmax.f32 %v4193, 0.0
        %v4488 = vmax.f32 %v4196, 0.0
        %v4489 = vmax.f32 %v4201, 0.0
        %v4490 = vmax.f32 %v4204, 0.0
        %v4491 = vmax.f32 %v4209, 0.0
        %v4492 = vmax.f32 %v4212, 0.0
        %v4493 = vmax.f32 %v4217, 0.0
        %v4494 = vmax.f32 %v4220, 0.0
        %v4495 = vmax.f32 %v4225, 0.0
        %v4496 = vmax.f32 %v4228, 0.0
        %v4497 = vmax.f32 %v4233, 0.0
        %v4498 = vmax.f32 %v4236, 0.0
        %v4499 = vmax.f32 %v4241, 0.0
        %v4500 = vmax.f32 %v4244, 0.0
        %v4501 = vmax.f32 %v4249, 0.0
        %v4502 = vmax.f32 %v4252, 0.0
        %v4503 = vmax.f32 %v4257, 0.0
        %v4504 = vmax.f32 %v4260, 0.0
        %v4505 = vmax.f32 %v4265, 0.0
        %v4506 = vmax.f32 %v4268, 0.0
        %v4507 = vmax.f32 %v4273, 0.0
        %v4508 = vmax.f32 %v4276, 0.0
        %v4509 = vmax.f32 %v4281, 0.0
        %v4510 = vmax.f32 %v4284, 0.0
        %v4511 = vmax.f32 %v4289, 0.0
        %v4512 = vmax.f32 %v4292, 0.0
        %v4513 = vmax.f32 %v4297, 0.0
        %v4514 = vmax.f32 %v4300, 0.0
        %v4515 = vmax.f32 %v4305, 0.0
        %v4516 = vmax.f32 %v4308, 0.0
        %v4517 = vmax.f32 %v4313, 0.0
        %v4518 = vmax.f32 %v4316, 0.0
        %v4519 = vmax.f32 %v4321, 0.0
        %v4520 = vmax.f32 %v4324, 0.0
        %v4521 = vmax.f32 %v4329, 0.0
        %v4522 = vmax.f32 %v4332, 0.0
        %v4523 = vmax.f32 %v4337, 0.0
        %v4524 = vmax.f32 %v4340, 0.0
        %v4525 = vmax.f32 %v4345, 0.0
        %v4526 = vmax.f32 %v4348, 0.0
        %v4527 = vmax.f32 %v4353, 0.0
        %v4528 = vmax.f32 %v4356, 0.0
        %v4529 = vmax.f32 %v4361, 0.0
        %v4530 = vmax.f32 %v4364, 0.0
        %v4531 = vmax.f32 %v4369, 0.0
        %v4532 = vmax.f32 %v4372, 0.0
        %v4533 = vmax.f32 %v4377, 0.0
        %v4534 = vmax.f32 %v4380, 0.0
        %v4535 = vmax.f32 %v4385, 0.0
        %v4536 = vmax.f32 %v4388, 0.0
        %v4537 = vmax.f32 %v4393, 0.0
        %v4538 = vmax.f32 %v4396, 0.0
        %v4539 = vmax.f32 %v4401, 0.0
        %v4540 = vmax.f32 %v4404, 0.0
        %v4541 = vmax.f32 %v4409, 0.0
        %v4542 = vmax.f32 %v4412, 0.0
        %v4543 = vpack.c.bf16 %v4416, %v4415
        %v4544 = vpack.c.bf16 %v4418, %v4417
        %v4545 = vpack.c.bf16 %v4420, %v4419
        %v4546 = vpack.c.bf16 %v4422, %v4421
        %v4547 = vpack.c.bf16 %v4424, %v4423
        %v4548 = vpack.c.bf16 %v4426, %v4425
        %v4549 = vpack.c.bf16 %v4428, %v4427
        %v4550 = vpack.c.bf16 %v4430, %v4429
        %v4551 = vpack.c.bf16 %v4432, %v4431
        %v4552 = vpack.c.bf16 %v4434, %v4433
        %v4553 = vpack.c.bf16 %v4436, %v4435
        %v4554 = vpack.c.bf16 %v4438, %v4437
        %v4555 = vpack.c.bf16 %v4440, %v4439
        %v4556 = vpack.c.bf16 %v4442, %v4441
        %v4557 = vpack.c.bf16 %v4444, %v4443
        %v4558 = vpack.c.bf16 %v4446, %v4445
        %v4559 = vpack.c.bf16 %v4448, %v4447
        %v4560 = vpack.c.bf16 %v4450, %v4449
        %v4561 = vpack.c.bf16 %v4452, %v4451
        %v4562 = vpack.c.bf16 %v4454, %v4453
        %v4563 = vpack.c.bf16 %v4456, %v4455
        %v4564 = vpack.c.bf16 %v4458, %v4457
        %v4565 = vpack.c.bf16 %v4460, %v4459
        %v4566 = vpack.c.bf16 %v4462, %v4461
        %v4567 = vpack.c.bf16 %v4464, %v4463
        %v4568 = vpack.c.bf16 %v4466, %v4465
        %v4569 = vpack.c.bf16 %v4468, %v4467
        %v4570 = vpack.c.bf16 %v4470, %v4469
        %v4571 = vpack.c.bf16 %v4472, %v4471
        %v4572 = vpack.c.bf16 %v4474, %v4473
        %v4573 = vpack.c.bf16 %v4476, %v4475
        %v4574 = vpack.c.bf16 %v4478, %v4477
        %v4575 = vpack.c.bf16 %v4480, %v4479
        %v4576 = vpack.c.bf16 %v4482, %v4481
        %v4577 = vpack.c.bf16 %v4484, %v4483
        %v4578 = vpack.c.bf16 %v4486, %v4485
        %v4579 = vpack.c.bf16 %v4488, %v4487
        %v4580 = vpack.c.bf16 %v4490, %v4489
        %v4581 = vpack.c.bf16 %v4492, %v4491
        %v4582 = vpack.c.bf16 %v4494, %v4493
        %v4583 = vpack.c.bf16 %v4496, %v4495
        %v4584 = vpack.c.bf16 %v4498, %v4497
        %v4585 = vpack.c.bf16 %v4500, %v4499
        %v4586 = vpack.c.bf16 %v4502, %v4501
        %v4587 = vpack.c.bf16 %v4504, %v4503
        %v4588 = vpack.c.bf16 %v4506, %v4505
        %v4589 = vpack.c.bf16 %v4508, %v4507
        %v4590 = vpack.c.bf16 %v4510, %v4509
        %v4591 = vpack.c.bf16 %v4512, %v4511
        %v4592 = vpack.c.bf16 %v4514, %v4513
        %v4593 = vpack.c.bf16 %v4516, %v4515
        %v4594 = vpack.c.bf16 %v4518, %v4517
        %v4595 = vpack.c.bf16 %v4520, %v4519
        %v4596 = vpack.c.bf16 %v4522, %v4521
        %v4597 = vpack.c.bf16 %v4524, %v4523
        %v4598 = vpack.c.bf16 %v4526, %v4525
        %v4599 = vpack.c.bf16 %v4528, %v4527
        %v4600 = vpack.c.bf16 %v4530, %v4529
        %v4601 = vpack.c.bf16 %v4532, %v4531
        %v4602 = vpack.c.bf16 %v4534, %v4533
        %v4603 = vpack.c.bf16 %v4536, %v4535
        %v4604 = vpack.c.bf16 %v4538, %v4537
        %v4605 = vpack.c.bf16 %v4540, %v4539
        %v4606 = vpack.c.bf16 %v4542, %v4541
        %v4607 = vld [vmem:[%s2 + $0x8] sm:$0xf]
        %v4608 = vld [vmem:[%s2 + $0x20] sm:$0xf]
        %v4609 = vld [vmem:[%s2 + $0x38] sm:$0xf]
        %v4610 = vld [vmem:[%s2 + $0x50] sm:$0xf]
        %v4611 = vld [vmem:[%s2 + $0x68] sm:$0xf]
        %v4612 = vld [vmem:[%s2 + $0x80] sm:$0xf]
        %v4613 = vld [vmem:[%s2 + $0x98] sm:$0xf]
        %v4614 = vld [vmem:[%s2 + $0xb0] sm:$0xf]
        %v4615 = vld [vmem:[%s2 + $0xc8] sm:$0xf]
        %v4616 = vld [vmem:[%s2 + $0xe0] sm:$0xf]
        %v4617 = vld [vmem:[%s2 + $0xf8] sm:$0xf]
        %v4618 = vld [vmem:[%s2 + $0x110] sm:$0xf]
        %v4619 = vld [vmem:[%s2 + $0x128] sm:$0xf]
        %v4620 = vld [vmem:[%s2 + $0x140] sm:$0xf]
        %v4621 = vld [vmem:[%s2 + $0x158] sm:$0xf]
        %v4622 = vld [vmem:[%s2 + $0x170] sm:$0xf]
        %v4623 = vld [vmem:[%s3 + $0x3] sm:$0x1]
        %v4624 = vlaneseq
        %v4625 = vshrl.u32 %v4624, 7
        %v4626 = vsub.s32 0, %v4625
        %v4627 = vrot.slane %v4623, %v4626
        %v4644 = vunpack.c.l.b16 %v4607
        %v4645 = vunpack.c.l.b16 %v4608
        %v4646 = vunpack.c.l.b16 %v4609
        %v4647 = vunpack.c.l.b16 %v4610
        %v4648 = vunpack.c.l.b16 %v4611
        %v4649 = vunpack.c.l.b16 %v4612
        %v4650 = vunpack.c.l.b16 %v4613
        %v4651 = vunpack.c.l.b16 %v4614
        %v4652 = vunpack.c.l.b16 %v4615
        %v4653 = vunpack.c.l.b16 %v4616
        %v4654 = vunpack.c.l.b16 %v4617
        %v4655 = vunpack.c.l.b16 %v4618
        %v4656 = vunpack.c.l.b16 %v4619
        %v4657 = vunpack.c.l.b16 %v4620
        %v4658 = vunpack.c.l.b16 %v4621
        %v4659 = vunpack.c.l.b16 %v4622
        %v4660 = vpack.c.b16 %v4645, %v4644
        %v4661 = vpack.c.b16 %v4647, %v4646
        %v4662 = vpack.c.b16 %v4649, %v4648
        %v4663 = vpack.c.b16 %v4651, %v4650
        %v4664 = vpack.c.b16 %v4653, %v4652
        %v4665 = vpack.c.b16 %v4655, %v4654
        %v4666 = vpack.c.b16 %v4657, %v4656
        %v4667 = vpack.c.b16 %v4659, %v4658
        %4676 = vmatprep.subr.bf16.mxu0 0
        %4677 = vmatpush1.bf16.msra.mxu0 %v4660
        %4678 = vmatprep.subr.bf16.mxu0 0
        %4679 = vmatpush1.bf16.msra.mxu0 %v4661
        %4680 = vmatprep.subr.bf16.mxu0 0
        %4681 = vmatpush1.bf16.msra.mxu0 %v4662
        %4682 = vmatprep.subr.bf16.mxu0 0
        %4683 = vmatpush1.bf16.msra.mxu0 %v4663
        %4684 = vmatprep.subr.bf16.mxu0 0
        %4685 = vmatpush1.bf16.msra.mxu0 %v4664
        %4686 = vmatprep.subr.bf16.mxu0 0
        %4687 = vmatpush1.bf16.msra.mxu0 %v4665
        %4688 = vmatprep.subr.bf16.mxu0 0
        %4689 = vmatpush1.bf16.msra.mxu0 %v4666
        %4690 = vmatprep.subr.bf16.mxu0 0
        %4691 = vmatpush1.bf16.msra.mxu0 %v4667
        %4692 = vmatprep.subr.bf16.mxu0 0
        %4693 = vmatpush1.bf16.msra.mxu0 0
        %4694 = vmatprep.subr.bf16.mxu0 0
        %4695 = vmatpush1.bf16.msra.mxu0 0
        %4696 = vmatprep.subr.bf16.mxu0 0
        %4697 = vmatpush1.bf16.msra.mxu0 0
        %4698 = vmatprep.subr.bf16.mxu0 0
        %4699 = vmatpush1.bf16.msra.mxu0 0
        %4700 = vmatprep.subr.bf16.mxu0 0
        %4701 = vmatpush1.bf16.msra.mxu0 0
        %4702 = vmatprep.subr.bf16.mxu0 0
        %4703 = vmatpush1.bf16.msra.mxu0 0
        %4704 = vmatprep.subr.bf16.mxu0 0
        %4705 = vmatpush1.bf16.msra.mxu0 0
        %4706 = vmatprep.subr.bf16.mxu0 0
        %4707 = vmatpush1.bf16.msra.mxu0 0
        %4708 = vmatprep.mubr.bf16.mxu0 0
        %4709 = vmatmul.mubr.bf16.gmra.mrb[0].mxu0 %v4543
        %v4710 = vpop.f32.mrb[0].mxu0
        %v4711 = vadd.f32 %v4627, %v4710
        %v4712 = vpop.f32.mrb[0].mxu0
        %v4713 = vpop.f32.mrb[0].mxu0
        %v4714 = vadd.f32 %v4627, %v4713
        %v4715 = vpop.f32.mrb[0].mxu0
        %4716 = vmatprep.mubr.bf16.mxu0 0
        %4717 = vmatmul.mubr.bf16.gmra.mrb[0].mxu0 %v4544
        %v4718 = vpop.f32.mrb[0].mxu0
        %v4719 = vadd.f32 %v4627, %v4718
        %v4720 = vpop.f32.mrb[0].mxu0
        %v4721 = vpop.f32.mrb[0].mxu0
        %v4722 = vadd.f32 %v4627, %v4721
        %v4723 = vpop.f32.mrb[0].mxu0
        %4724 = vmatprep.mubr.bf16.mxu0 0
        %4725 = vmatmul.mubr.bf16.gmra.mrb[0].mxu0 %v4545
        %v4726 = vpop.f32.mrb[0].mxu0
        %v4727 = vadd.f32 %v4627, %v4726
        %v4728 = vpop.f32.mrb[0].mxu0
        %v4729 = vpop.f32.mrb[0].mxu0
        %v4730 = vadd.f32 %v4627, %v4729
        %v4731 = vpop.f32.mrb[0].mxu0
        %4732 = vmatprep.mubr.bf16.mxu0 0
        %4733 = vmatmul.mubr.bf16.gmra.mrb[0].mxu0 %v4546
        %v4734 = vpop.f32.mrb[0].mxu0
        %v4735 = vadd.f32 %v4627, %v4734
        %v4736 = vpop.f32.mrb[0].mxu0
        %v4737 = vpop.f32.mrb[0].mxu0
        %v4738 = vadd.f32 %v4627, %v4737
        %v4739 = vpop.f32.mrb[0].mxu0
        %4740 = vmatprep.mubr.bf16.mxu0 0
        %4741 = vmatmul.mubr.bf16.gmra.mrb[0].mxu0 %v4547
        %v4742 = vpop.f32.mrb[0].mxu0
        %v4743 = vadd.f32 %v4627, %v4742
        %v4744 = vpop.f32.mrb[0].mxu0
        %v4745 = vpop.f32.mrb[0].mxu0
        %v4746 = vadd.f32 %v4627, %v4745
        %v4747 = vpop.f32.mrb[0].mxu0
        %4748 = vmatprep.mubr.bf16.mxu0 0
        %4749 = vmatmul.mubr.bf16.gmra.mrb[0].mxu0 %v4548
        %v4750 = vpop.f32.mrb[0].mxu0
        %v4751 = vadd.f32 %v4627, %v4750
        %v4752 = vpop.f32.mrb[0].mxu0
        %v4753 = vpop.f32.mrb[0].mxu0
        %v4754 = vadd.f32 %v4627, %v4753
        %v4755 = vpop.f32.mrb[0].mxu0
        %4756 = vmatprep.mubr.bf16.mxu0 0
        %4757 = vmatmul.mubr.bf16.gmra.mrb[0].mxu0 %v4549
        %v4758 = vpop.f32.mrb[0].mxu0
        %v4759 = vadd.f32 %v4627, %v4758
        %v4760 = vpop.f32.mrb[0].mxu0
        %v4761 = vpop.f32.mrb[0].mxu0
        %v4762 = vadd.f32 %v4627, %v4761
        %v4763 = vpop.f32.mrb[0].mxu0
        %4764 = vmatprep.mubr.bf16.mxu0 0
        %4765 = vmatmul.mubr.bf16.gmra.mrb[0].mxu0 %v4550
        %v4766 = vpop.f32.mrb[0].mxu0
        %v4767 = vadd.f32 %v4627, %v4766
        %v4768 = vpop.f32.mrb[0].mxu0
        %v4769 = vpop.f32.mrb[0].mxu0
        %v4770 = vadd.f32 %v4627, %v4769
        %v4771 = vpop.f32.mrb[0].mxu0
        %4772 = vmatprep.mubr.bf16.mxu0 0
        %4773 = vmatmul.mubr.bf16.gmra.mrb[0].mxu0 %v4551
        %v4774 = vpop.f32.mrb[0].mxu0
        %v4775 = vadd.f32 %v4627, %v4774
        %v4776 = vpop.f32.mrb[0].mxu0
        %v4777 = vpop.f32.mrb[0].mxu0
        %v4778 = vadd.f32 %v4627, %v4777
        %v4779 = vpop.f32.mrb[0].mxu0
        %4780 = vmatprep.mubr.bf16.mxu0 0
        %4781 = vmatmul.mubr.bf16.gmra.mrb[0].mxu0 %v4552
        %v4782 = vpop.f32.mrb[0].mxu0
        %v4783 = vadd.f32 %v4627, %v4782
        %v4784 = vpop.f32.mrb[0].mxu0
        %v4785 = vpop.f32.mrb[0].mxu0
        %v4786 = vadd.f32 %v4627, %v4785
        %v4787 = vpop.f32.mrb[0].mxu0
        %4788 = vmatprep.mubr.bf16.mxu0 0
        %4789 = vmatmul.mubr.bf16.gmra.mrb[0].mxu0 %v4553
        %v4790 = vpop.f32.mrb[0].mxu0
        %v4791 = vadd.f32 %v4627, %v4790
        %v4792 = vpop.f32.mrb[0].mxu0
        %v4793 = vpop.f32.mrb[0].mxu0
        %v4794 = vadd.f32 %v4627, %v4793
        %v4795 = vpop.f32.mrb[0].mxu0
        %4796 = vmatprep.mubr.bf16.mxu0 0
        %4797 = vmatmul.mubr.bf16.gmra.mrb[0].mxu0 %v4554
        %v4798 = vpop.f32.mrb[0].mxu0
        %v4799 = vadd.f32 %v4627, %v4798
        %v4800 = vpop.f32.mrb[0].mxu0
        %v4801 = vpop.f32.mrb[0].mxu0
        %v4802 = vadd.f32 %v4627, %v4801
        %v4803 = vpop.f32.mrb[0].mxu0
        %4804 = vmatprep.mubr.bf16.mxu0 0
        %4805 = vmatmul.mubr.bf16.gmra.mrb[0].mxu0 %v4555
        %v4806 = vpop.f32.mrb[0].mxu0
        %v4807 = vadd.f32 %v4627, %v4806
        %v4808 = vpop.f32.mrb[0].mxu0
        %v4809 = vpop.f32.mrb[0].mxu0
        %v4810 = vadd.f32 %v4627, %v4809
        %v4811 = vpop.f32.mrb[0].mxu0
        %4812 = vmatprep.mubr.bf16.mxu0 0
        %4813 = vmatmul.mubr.bf16.gmra.mrb[0].mxu0 %v4556
        %v4814 = vpop.f32.mrb[0].mxu0
        %v4815 = vadd.f32 %v4627, %v4814
        %v4816 = vpop.f32.mrb[0].mxu0
        %v4817 = vpop.f32.mrb[0].mxu0
        %v4818 = vadd.f32 %v4627, %v4817
        %v4819 = vpop.f32.mrb[0].mxu0
        %4820 = vmatprep.mubr.bf16.mxu0 0
        %4821 = vmatmul.mubr.bf16.gmra.mrb[0].mxu0 %v4557
        %v4822 = vpop.f32.mrb[0].mxu0
        %v4823 = vadd.f32 %v4627, %v4822
        %v4824 = vpop.f32.mrb[0].mxu0
        %v4825 = vpop.f32.mrb[0].mxu0
        %v4826 = vadd.f32 %v4627, %v4825
        %v4827 = vpop.f32.mrb[0].mxu0
        %4828 = vmatprep.mubr.bf16.mxu0 0
        %4829 = vmatmul.mubr.bf16.gmra.mrb[0].mxu0 %v4558
        %v4830 = vpop.f32.mrb[0].mxu0
        %v4831 = vadd.f32 %v4627, %v4830
        %v4832 = vpop.f32.mrb[0].mxu0
        %v4833 = vpop.f32.mrb[0].mxu0
        %v4834 = vadd.f32 %v4627, %v4833
        %v4835 = vpop.f32.mrb[0].mxu0
        %4836 = vmatprep.mubr.bf16.mxu0 0
        %4837 = vmatmul.mubr.bf16.gmra.mrb[0].mxu0 %v4559
        %v4838 = vpop.f32.mrb[0].mxu0
        %v4839 = vadd.f32 %v4627, %v4838
        %v4840 = vpop.f32.mrb[0].mxu0
        %v4841 = vpop.f32.mrb[0].mxu0
        %v4842 = vadd.f32 %v4627, %v4841
        %v4843 = vpop.f32.mrb[0].mxu0
        %4844 = vmatprep.mubr.bf16.mxu0 0
        %4845 = vmatmul.mubr.bf16.gmra.mrb[0].mxu0 %v4560
        %v4846 = vpop.f32.mrb[0].mxu0
        %v4847 = vadd.f32 %v4627, %v4846
        %v4848 = vpop.f32.mrb[0].mxu0
        %v4849 = vpop.f32.mrb[0].mxu0
        %v4850 = vadd.f32 %v4627, %v4849
        %v4851 = vpop.f32.mrb[0].mxu0
        %4852 = vmatprep.mubr.bf16.mxu0 0
        %4853 = vmatmul.mubr.bf16.gmra.mrb[0].mxu0 %v4561
        %v4854 = vpop.f32.mrb[0].mxu0
        %v4855 = vadd.f32 %v4627, %v4854
        %v4856 = vpop.f32.mrb[0].mxu0
        %v4857 = vpop.f32.mrb[0].mxu0
        %v4858 = vadd.f32 %v4627, %v4857
        %v4859 = vpop.f32.mrb[0].mxu0
        %4860 = vmatprep.mubr.bf16.mxu0 0
        %4861 = vmatmul.mubr.bf16.gmra.mrb[0].mxu0 %v4562
        %v4862 = vpop.f32.mrb[0].mxu0
        %v4863 = vadd.f32 %v4627, %v4862
        %v4864 = vpop.f32.mrb[0].mxu0
        %v4865 = vpop.f32.mrb[0].mxu0
        %v4866 = vadd.f32 %v4627, %v4865
        %v4867 = vpop.f32.mrb[0].mxu0
        %4868 = vmatprep.mubr.bf16.mxu0 0
        %4869 = vmatmul.mubr.bf16.gmra.mrb[0].mxu0 %v4563
        %v4870 = vpop.f32.mrb[0].mxu0
        %v4871 = vadd.f32 %v4627, %v4870
        %v4872 = vpop.f32.mrb[0].mxu0
        %v4873 = vpop.f32.mrb[0].mxu0
        %v4874 = vadd.f32 %v4627, %v4873
        %v4875 = vpop.f32.mrb[0].mxu0
        %4876 = vmatprep.mubr.bf16.mxu0 0
        %4877 = vmatmul.mubr.bf16.gmra.mrb[0].mxu0 %v4564
        %v4878 = vpop.f32.mrb[0].mxu0
        %v4879 = vadd.f32 %v4627, %v4878
        %v4880 = vpop.f32.mrb[0].mxu0
        %v4881 = vpop.f32.mrb[0].mxu0
        %v4882 = vadd.f32 %v4627, %v4881
        %v4883 = vpop.f32.mrb[0].mxu0
        %4884 = vmatprep.mubr.bf16.mxu0 0
        %4885 = vmatmul.mubr.bf16.gmra.mrb[0].mxu0 %v4565
        %v4886 = vpop.f32.mrb[0].mxu0
        %v4887 = vadd.f32 %v4627, %v4886
        %v4888 = vpop.f32.mrb[0].mxu0
        %v4889 = vpop.f32.mrb[0].mxu0
        %v4890 = vadd.f32 %v4627, %v4889
        %v4891 = vpop.f32.mrb[0].mxu0
        %4892 = vmatprep.mubr.bf16.mxu0 0
        %4893 = vmatmul.mubr.bf16.gmra.mrb[0].mxu0 %v4566
        %v4894 = vpop.f32.mrb[0].mxu0
        %v4895 = vadd.f32 %v4627, %v4894
        %v4896 = vpop.f32.mrb[0].mxu0
        %v4897 = vpop.f32.mrb[0].mxu0
        %v4898 = vadd.f32 %v4627, %v4897
        %v4899 = vpop.f32.mrb[0].mxu0
        %4900 = vmatprep.mubr.bf16.mxu0 0
        %4901 = vmatmul.mubr.bf16.gmra.mrb[0].mxu0 %v4567
        %v4902 = vpop.f32.mrb[0].mxu0
        %v4903 = vadd.f32 %v4627, %v4902
        %v4904 = vpop.f32.mrb[0].mxu0
        %v4905 = vpop.f32.mrb[0].mxu0
        %v4906 = vadd.f32 %v4627, %v4905
        %v4907 = vpop.f32.mrb[0].mxu0
        %4908 = vmatprep.mubr.bf16.mxu0 0
        %4909 = vmatmul.mubr.bf16.gmra.mrb[0].mxu0 %v4568
        %v4910 = vpop.f32.mrb[0].mxu0
        %v4911 = vadd.f32 %v4627, %v4910
        %v4912 = vpop.f32.mrb[0].mxu0
        %v4913 = vpop.f32.mrb[0].mxu0
        %v4914 = vadd.f32 %v4627, %v4913
        %v4915 = vpop.f32.mrb[0].mxu0
        %4916 = vmatprep.mubr.bf16.mxu0 0
        %4917 = vmatmul.mubr.bf16.gmra.mrb[0].mxu0 %v4569
        %v4918 = vpop.f32.mrb[0].mxu0
        %v4919 = vadd.f32 %v4627, %v4918
        %v4920 = vpop.f32.mrb[0].mxu0
        %v4921 = vpop.f32.mrb[0].mxu0
        %v4922 = vadd.f32 %v4627, %v4921
        %v4923 = vpop.f32.mrb[0].mxu0
        %4924 = vmatprep.mubr.bf16.mxu0 0
        %4925 = vmatmul.mubr.bf16.gmra.mrb[0].mxu0 %v4570
        %v4926 = vpop.f32.mrb[0].mxu0
        %v4927 = vadd.f32 %v4627, %v4926
        %v4928 = vpop.f32.mrb[0].mxu0
        %v4929 = vpop.f32.mrb[0].mxu0
        %v4930 = vadd.f32 %v4627, %v4929
        %v4931 = vpop.f32.mrb[0].mxu0
        %4932 = vmatprep.mubr.bf16.mxu0 0
        %4933 = vmatmul.mubr.bf16.gmra.mrb[0].mxu0 %v4571
        %v4934 = vpop.f32.mrb[0].mxu0
        %v4935 = vadd.f32 %v4627, %v4934
        %v4936 = vpop.f32.mrb[0].mxu0
        %v4937 = vpop.f32.mrb[0].mxu0
        %v4938 = vadd.f32 %v4627, %v4937
        %v4939 = vpop.f32.mrb[0].mxu0
        %4940 = vmatprep.mubr.bf16.mxu0 0
        %4941 = vmatmul.mubr.bf16.gmra.mrb[0].mxu0 %v4572
        %v4942 = vpop.f32.mrb[0].mxu0
        %v4943 = vadd.f32 %v4627, %v4942
        %v4944 = vpop.f32.mrb[0].mxu0
        %v4945 = vpop.f32.mrb[0].mxu0
        %v4946 = vadd.f32 %v4627, %v4945
        %v4947 = vpop.f32.mrb[0].mxu0
        %4948 = vmatprep.mubr.bf16.mxu0 0
        %4949 = vmatmul.mubr.bf16.gmra.mrb[0].mxu0 %v4573
        %v4950 = vpop.f32.mrb[0].mxu0
        %v4951 = vadd.f32 %v4627, %v4950
        %v4952 = vpop.f32.mrb[0].mxu0
        %v4953 = vpop.f32.mrb[0].mxu0
        %v4954 = vadd.f32 %v4627, %v4953
        %v4955 = vpop.f32.mrb[0].mxu0
        %4956 = vmatprep.mubr.bf16.mxu0 0
        %4957 = vmatmul.mubr.bf16.gmra.mrb[0].mxu0 %v4574
        %v4958 = vpop.f32.mrb[0].mxu0
        %v4959 = vadd.f32 %v4627, %v4958
        %v4960 = vpop.f32.mrb[0].mxu0
        %v4961 = vpop.f32.mrb[0].mxu0
        %v4962 = vadd.f32 %v4627, %v4961
        %v4963 = vpop.f32.mrb[0].mxu0
        %4964 = vmatprep.mubr.bf16.mxu0 0
        %4965 = vmatmul.mubr.bf16.gmra.mrb[0].mxu0 %v4575
        %v4966 = vpop.f32.mrb[0].mxu0
        %v4967 = vadd.f32 %v4627, %v4966
        %v4968 = vpop.f32.mrb[0].mxu0
        %v4969 = vpop.f32.mrb[0].mxu0
        %v4970 = vadd.f32 %v4627, %v4969
        %v4971 = vpop.f32.mrb[0].mxu0
        %4972 = vmatprep.mubr.bf16.mxu0 0
        %4973 = vmatmul.mubr.bf16.gmra.mrb[0].mxu0 %v4576
        %v4974 = vpop.f32.mrb[0].mxu0
        %v4975 = vadd.f32 %v4627, %v4974
        %v4976 = vpop.f32.mrb[0].mxu0
        %v4977 = vpop.f32.mrb[0].mxu0
        %v4978 = vadd.f32 %v4627, %v4977
        %v4979 = vpop.f32.mrb[0].mxu0
        %4980 = vmatprep.mubr.bf16.mxu0 0
        %4981 = vmatmul.mubr.bf16.gmra.mrb[0].mxu0 %v4577
        %v4982 = vpop.f32.mrb[0].mxu0
        %v4983 = vadd.f32 %v4627, %v4982
        %v4984 = vpop.f32.mrb[0].mxu0
        %v4985 = vpop.f32.mrb[0].mxu0
        %v4986 = vadd.f32 %v4627, %v4985
        %v4987 = vpop.f32.mrb[0].mxu0
        %4988 = vmatprep.mubr.bf16.mxu0 0
        %4989 = vmatmul.mubr.bf16.gmra.mrb[0].mxu0 %v4578
        %v4990 = vpop.f32.mrb[0].mxu0
        %v4991 = vadd.f32 %v4627, %v4990
        %v4992 = vpop.f32.mrb[0].mxu0
        %v4993 = vpop.f32.mrb[0].mxu0
        %v4994 = vadd.f32 %v4627, %v4993
        %v4995 = vpop.f32.mrb[0].mxu0
        %4996 = vmatprep.mubr.bf16.mxu0 0
        %4997 = vmatmul.mubr.bf16.gmra.mrb[0].mxu0 %v4579
        %v4998 = vpop.f32.mrb[0].mxu0
        %v4999 = vadd.f32 %v4627, %v4998
        %v5000 = vpop.f32.mrb[0].mxu0
        %v5001 = vpop.f32.mrb[0].mxu0
        %v5002 = vadd.f32 %v4627, %v5001
        %v5003 = vpop.f32.mrb[0].mxu0
        %5004 = vmatprep.mubr.bf16.mxu0 0
        %5005 = vmatmul.mubr.bf16.gmra.mrb[0].mxu0 %v4580
        %v5006 = vpop.f32.mrb[0].mxu0
        %v5007 = vadd.f32 %v4627, %v5006
        %v5008 = vpop.f32.mrb[0].mxu0
        %v5009 = vpop.f32.mrb[0].mxu0
        %v5010 = vadd.f32 %v4627, %v5009
        %v5011 = vpop.f32.mrb[0].mxu0
        %5012 = vmatprep.mubr.bf16.mxu0 0
        %5013 = vmatmul.mubr.bf16.gmra.mrb[0].mxu0 %v4581
        %v5014 = vpop.f32.mrb[0].mxu0
        %v5015 = vadd.f32 %v4627, %v5014
        %v5016 = vpop.f32.mrb[0].mxu0
        %v5017 = vpop.f32.mrb[0].mxu0
        %v5018 = vadd.f32 %v4627, %v5017
        %v5019 = vpop.f32.mrb[0].mxu0
        %5020 = vmatprep.mubr.bf16.mxu0 0
        %5021 = vmatmul.mubr.bf16.gmra.mrb[0].mxu0 %v4582
        %v5022 = vpop.f32.mrb[0].mxu0
        %v5023 = vadd.f32 %v4627, %v5022
        %v5024 = vpop.f32.mrb[0].mxu0
        %v5025 = vpop.f32.mrb[0].mxu0
        %v5026 = vadd.f32 %v4627, %v5025
        %v5027 = vpop.f32.mrb[0].mxu0
        %5028 = vmatprep.mubr.bf16.mxu0 0
        %5029 = vmatmul.mubr.bf16.gmra.mrb[0].mxu0 %v4583
        %v5030 = vpop.f32.mrb[0].mxu0
        %v5031 = vadd.f32 %v4627, %v5030
        %v5032 = vpop.f32.mrb[0].mxu0
        %v5033 = vpop.f32.mrb[0].mxu0
        %v5034 = vadd.f32 %v4627, %v5033
        %v5035 = vpop.f32.mrb[0].mxu0
        %5036 = vmatprep.mubr.bf16.mxu0 0
        %5037 = vmatmul.mubr.bf16.gmra.mrb[0].mxu0 %v4584
        %v5038 = vpop.f32.mrb[0].mxu0
        %v5039 = vadd.f32 %v4627, %v5038
        %v5040 = vpop.f32.mrb[0].mxu0
        %v5041 = vpop.f32.mrb[0].mxu0
        %v5042 = vadd.f32 %v4627, %v5041
        %v5043 = vpop.f32.mrb[0].mxu0
        %5044 = vmatprep.mubr.bf16.mxu0 0
        %5045 = vmatmul.mubr.bf16.gmra.mrb[0].mxu0 %v4585
        %v5046 = vpop.f32.mrb[0].mxu0
        %v5047 = vadd.f32 %v4627, %v5046
        %v5048 = vpop.f32.mrb[0].mxu0
        %v5049 = vpop.f32.mrb[0].mxu0
        %v5050 = vadd.f32 %v4627, %v5049
        %v5051 = vpop.f32.mrb[0].mxu0
        %5052 = vmatprep.mubr.bf16.mxu0 0
        %5053 = vmatmul.mubr.bf16.gmra.mrb[0].mxu0 %v4586
        %v5054 = vpop.f32.mrb[0].mxu0
        %v5055 = vadd.f32 %v4627, %v5054
        %v5056 = vpop.f32.mrb[0].mxu0
        %v5057 = vpop.f32.mrb[0].mxu0
        %v5058 = vadd.f32 %v4627, %v5057
        %v5059 = vpop.f32.mrb[0].mxu0
        %5060 = vmatprep.mubr.bf16.mxu0 0
        %5061 = vmatmul.mubr.bf16.gmra.mrb[0].mxu0 %v4587
        %v5062 = vpop.f32.mrb[0].mxu0
        %v5063 = vadd.f32 %v4627, %v5062
        %v5064 = vpop.f32.mrb[0].mxu0
        %v5065 = vpop.f32.mrb[0].mxu0
        %v5066 = vadd.f32 %v4627, %v5065
        %v5067 = vpop.f32.mrb[0].mxu0
        %5068 = vmatprep.mubr.bf16.mxu0 0
        %5069 = vmatmul.mubr.bf16.gmra.mrb[0].mxu0 %v4588
        %v5070 = vpop.f32.mrb[0].mxu0
        %v5071 = vadd.f32 %v4627, %v5070
        %v5072 = vpop.f32.mrb[0].mxu0
        %v5073 = vpop.f32.mrb[0].mxu0
        %v5074 = vadd.f32 %v4627, %v5073
        %v5075 = vpop.f32.mrb[0].mxu0
        %5076 = vmatprep.mubr.bf16.mxu0 0
        %5077 = vmatmul.mubr.bf16.gmra.mrb[0].mxu0 %v4589
        %v5078 = vpop.f32.mrb[0].mxu0
        %v5079 = vadd.f32 %v4627, %v5078
        %v5080 = vpop.f32.mrb[0].mxu0
        %v5081 = vpop.f32.mrb[0].mxu0
        %v5082 = vadd.f32 %v4627, %v5081
        %v5083 = vpop.f32.mrb[0].mxu0
        %5084 = vmatprep.mubr.bf16.mxu0 0
        %5085 = vmatmul.mubr.bf16.gmra.mrb[0].mxu0 %v4590
        %v5086 = vpop.f32.mrb[0].mxu0
        %v5087 = vadd.f32 %v4627, %v5086
        %v5088 = vpop.f32.mrb[0].mxu0
        %v5089 = vpop.f32.mrb[0].mxu0
        %v5090 = vadd.f32 %v4627, %v5089
        %v5091 = vpop.f32.mrb[0].mxu0
        %5092 = vmatprep.mubr.bf16.mxu0 0
        %5093 = vmatmul.mubr.bf16.gmra.mrb[0].mxu0 %v4591
        %v5094 = vpop.f32.mrb[0].mxu0
        %v5095 = vadd.f32 %v4627, %v5094
        %v5096 = vpop.f32.mrb[0].mxu0
        %v5097 = vpop.f32.mrb[0].mxu0
        %v5098 = vadd.f32 %v4627, %v5097
        %v5099 = vpop.f32.mrb[0].mxu0
        %5100 = vmatprep.mubr.bf16.mxu0 0
        %5101 = vmatmul.mubr.bf16.gmra.mrb[0].mxu0 %v4592
        %v5102 = vpop.f32.mrb[0].mxu0
        %v5103 = vadd.f32 %v4627, %v5102
        %v5104 = vpop.f32.mrb[0].mxu0
        %v5105 = vpop.f32.mrb[0].mxu0
        %v5106 = vadd.f32 %v4627, %v5105
        %v5107 = vpop.f32.mrb[0].mxu0
        %5108 = vmatprep.mubr.bf16.mxu0 0
        %5109 = vmatmul.mubr.bf16.gmra.mrb[0].mxu0 %v4593
        %v5110 = vpop.f32.mrb[0].mxu0
        %v5111 = vadd.f32 %v4627, %v5110
        %v5112 = vpop.f32.mrb[0].mxu0
        %v5113 = vpop.f32.mrb[0].mxu0
        %v5114 = vadd.f32 %v4627, %v5113
        %v5115 = vpop.f32.mrb[0].mxu0
        %5116 = vmatprep.mubr.bf16.mxu0 0
        %5117 = vmatmul.mubr.bf16.gmra.mrb[0].mxu0 %v4594
        %v5118 = vpop.f32.mrb[0].mxu0
        %v5119 = vadd.f32 %v4627, %v5118
        %v5120 = vpop.f32.mrb[0].mxu0
        %v5121 = vpop.f32.mrb[0].mxu0
        %v5122 = vadd.f32 %v4627, %v5121
        %v5123 = vpop.f32.mrb[0].mxu0
        %5124 = vmatprep.mubr.bf16.mxu0 0
        %5125 = vmatmul.mubr.bf16.gmra.mrb[0].mxu0 %v4595
        %v5126 = vpop.f32.mrb[0].mxu0
        %v5127 = vadd.f32 %v4627, %v5126
        %v5128 = vpop.f32.mrb[0].mxu0
        %v5129 = vpop.f32.mrb[0].mxu0
        %v5130 = vadd.f32 %v4627, %v5129
        %v5131 = vpop.f32.mrb[0].mxu0
        %5132 = vmatprep.mubr.bf16.mxu0 0
        %5133 = vmatmul.mubr.bf16.gmra.mrb[0].mxu0 %v4596
        %v5134 = vpop.f32.mrb[0].mxu0
        %v5135 = vadd.f32 %v4627, %v5134
        %v5136 = vpop.f32.mrb[0].mxu0
        %v5137 = vpop.f32.mrb[0].mxu0
        %v5138 = vadd.f32 %v4627, %v5137
        %v5139 = vpop.f32.mrb[0].mxu0
        %5140 = vmatprep.mubr.bf16.mxu0 0
        %5141 = vmatmul.mubr.bf16.gmra.mrb[0].mxu0 %v4597
        %v5142 = vpop.f32.mrb[0].mxu0
        %v5143 = vadd.f32 %v4627, %v5142
        %v5144 = vpop.f32.mrb[0].mxu0
        %v5145 = vpop.f32.mrb[0].mxu0
        %v5146 = vadd.f32 %v4627, %v5145
        %v5147 = vpop.f32.mrb[0].mxu0
        %5148 = vmatprep.mubr.bf16.mxu0 0
        %5149 = vmatmul.mubr.bf16.gmra.mrb[0].mxu0 %v4598
        %v5150 = vpop.f32.mrb[0].mxu0
        %v5151 = vadd.f32 %v4627, %v5150
        %v5152 = vpop.f32.mrb[0].mxu0
        %v5153 = vpop.f32.mrb[0].mxu0
        %v5154 = vadd.f32 %v4627, %v5153
        %v5155 = vpop.f32.mrb[0].mxu0
        %5156 = vmatprep.mubr.bf16.mxu0 0
        %5157 = vmatmul.mubr.bf16.gmra.mrb[0].mxu0 %v4599
        %v5158 = vpop.f32.mrb[0].mxu0
        %v5159 = vadd.f32 %v4627, %v5158
        %v5160 = vpop.f32.mrb[0].mxu0
        %v5161 = vpop.f32.mrb[0].mxu0
        %v5162 = vadd.f32 %v4627, %v5161
        %v5163 = vpop.f32.mrb[0].mxu0
        %5164 = vmatprep.mubr.bf16.mxu0 0
        %5165 = vmatmul.mubr.bf16.gmra.mrb[0].mxu0 %v4600
        %v5166 = vpop.f32.mrb[0].mxu0
        %v5167 = vadd.f32 %v4627, %v5166
        %v5168 = vpop.f32.mrb[0].mxu0
        %v5169 = vpop.f32.mrb[0].mxu0
        %v5170 = vadd.f32 %v4627, %v5169
        %v5171 = vpop.f32.mrb[0].mxu0
        %5172 = vmatprep.mubr.bf16.mxu0 0
        %5173 = vmatmul.mubr.bf16.gmra.mrb[0].mxu0 %v4601
        %v5174 = vpop.f32.mrb[0].mxu0
        %v5175 = vadd.f32 %v4627, %v5174
        %v5176 = vpop.f32.mrb[0].mxu0
        %v5177 = vpop.f32.mrb[0].mxu0
        %v5178 = vadd.f32 %v4627, %v5177
        %v5179 = vpop.f32.mrb[0].mxu0
        %5180 = vmatprep.mubr.bf16.mxu0 0
        %5181 = vmatmul.mubr.bf16.gmra.mrb[0].mxu0 %v4602
        %v5182 = vpop.f32.mrb[0].mxu0
        %v5183 = vadd.f32 %v4627, %v5182
        %v5184 = vpop.f32.mrb[0].mxu0
        %v5185 = vpop.f32.mrb[0].mxu0
        %v5186 = vadd.f32 %v4627, %v5185
        %v5187 = vpop.f32.mrb[0].mxu0
        %5188 = vmatprep.mubr.bf16.mxu0 0
        %5189 = vmatmul.mubr.bf16.gmra.mrb[0].mxu0 %v4603
        %v5190 = vpop.f32.mrb[0].mxu0
        %v5191 = vadd.f32 %v4627, %v5190
        %v5192 = vpop.f32.mrb[0].mxu0
        %v5193 = vpop.f32.mrb[0].mxu0
        %v5194 = vadd.f32 %v4627, %v5193
        %v5195 = vpop.f32.mrb[0].mxu0
        %5196 = vmatprep.mubr.bf16.mxu0 0
        %5197 = vmatmul.mubr.bf16.gmra.mrb[0].mxu0 %v4604
        %v5198 = vpop.f32.mrb[0].mxu0
        %v5199 = vadd.f32 %v4627, %v5198
        %v5200 = vpop.f32.mrb[0].mxu0
        %v5201 = vpop.f32.mrb[0].mxu0
        %v5202 = vadd.f32 %v4627, %v5201
        %v5203 = vpop.f32.mrb[0].mxu0
        %5204 = vmatprep.mubr.bf16.mxu0 0
        %5205 = vmatmul.mubr.bf16.gmra.mrb[0].mxu0 %v4605
        %v5206 = vpop.f32.mrb[0].mxu0
        %v5207 = vadd.f32 %v4627, %v5206
        %v5208 = vpop.f32.mrb[0].mxu0
        %v5209 = vpop.f32.mrb[0].mxu0
        %v5210 = vadd.f32 %v4627, %v5209
        %v5211 = vpop.f32.mrb[0].mxu0
        %5212 = vmatprep.mubr.bf16.mxu0 0
        %5213 = vmatmul.mubr.bf16.gmra.mrb[0].mxu0 %v4606
        %v5214 = vpop.f32.mrb[0].mxu0
        %v5215 = vadd.f32 %v4627, %v5214
        %v5216 = vpop.f32.mrb[0].mxu0
        %v5217 = vpop.f32.mrb[0].mxu0
        %v5218 = vadd.f32 %v4627, %v5217
        %v5219 = vpop.f32.mrb[0].mxu0
        %5220 = vdwg.mxu0
        %v5221 = vmax.f32 %v4711, 0.0
        %v5222 = vmax.f32 %v4714, 0.0
        %v5223 = vmax.f32 %v4719, 0.0
        %v5224 = vmax.f32 %v4722, 0.0
        %v5225 = vmax.f32 %v4727, 0.0
        %v5226 = vmax.f32 %v4730, 0.0
        %v5227 = vmax.f32 %v4735, 0.0
        %v5228 = vmax.f32 %v4738, 0.0
        %v5229 = vmax.f32 %v4743, 0.0
        %v5230 = vmax.f32 %v4746, 0.0
        %v5231 = vmax.f32 %v4751, 0.0
        %v5232 = vmax.f32 %v4754, 0.0
        %v5233 = vmax.f32 %v4759, 0.0
        %v5234 = vmax.f32 %v4762, 0.0
        %v5235 = vmax.f32 %v4767, 0.0
        %v5236 = vmax.f32 %v4770, 0.0
        %v5237 = vmax.f32 %v4775, 0.0
        %v5238 = vmax.f32 %v4778, 0.0
        %v5239 = vmax.f32 %v4783, 0.0
        %v5240 = vmax.f32 %v4786, 0.0
        %v5241 = vmax.f32 %v4791, 0.0
        %v5242 = vmax.f32 %v4794, 0.0
        %v5243 = vmax.f32 %v4799, 0.0
        %v5244 = vmax.f32 %v4802, 0.0
        %v5245 = vmax.f32 %v4807, 0.0
        %v5246 = vmax.f32 %v4810, 0.0
        %v5247 = vmax.f32 %v4815, 0.0
        %v5248 = vmax.f32 %v4818, 0.0
        %v5249 = vmax.f32 %v4823, 0.0
        %v5250 = vmax.f32 %v4826, 0.0
        %v5251 = vmax.f32 %v4831, 0.0
        %v5252 = vmax.f32 %v4834, 0.0
        %v5253 = vmax.f32 %v4839, 0.0
        %v5254 = vmax.f32 %v4842, 0.0
        %v5255 = vmax.f32 %v4847, 0.0
        %v5256 = vmax.f32 %v4850, 0.0
        %v5257 = vmax.f32 %v4855, 0.0
        %v5258 = vmax.f32 %v4858, 0.0
        %v5259 = vmax.f32 %v4863, 0.0
        %v5260 = vmax.f32 %v4866, 0.0
        %v5261 = vmax.f32 %v4871, 0.0
        %v5262 = vmax.f32 %v4874, 0.0
        %v5263 = vmax.f32 %v4879, 0.0
        %v5264 = vmax.f32 %v4882, 0.0
        %v5265 = vmax.f32 %v4887, 0.0
        %v5266 = vmax.f32 %v4890, 0.0
        %v5267 = vmax.f32 %v4895, 0.0
        %v5268 = vmax.f32 %v4898, 0.0
        %v5269 = vmax.f32 %v4903, 0.0
        %v5270 = vmax.f32 %v4906, 0.0
        %v5271 = vmax.f32 %v4911, 0.0
        %v5272 = vmax.f32 %v4914, 0.0
        %v5273 = vmax.f32 %v4919, 0.0
        %v5274 = vmax.f32 %v4922, 0.0
        %v5275 = vmax.f32 %v4927, 0.0
        %v5276 = vmax.f32 %v4930, 0.0
        %v5277 = vmax.f32 %v4935, 0.0
        %v5278 = vmax.f32 %v4938, 0.0
        %v5279 = vmax.f32 %v4943, 0.0
        %v5280 = vmax.f32 %v4946, 0.0
        %v5281 = vmax.f32 %v4951, 0.0
        %v5282 = vmax.f32 %v4954, 0.0
        %v5283 = vmax.f32 %v4959, 0.0
        %v5284 = vmax.f32 %v4962, 0.0
        %v5285 = vmax.f32 %v4967, 0.0
        %v5286 = vmax.f32 %v4970, 0.0
        %v5287 = vmax.f32 %v4975, 0.0
        %v5288 = vmax.f32 %v4978, 0.0
        %v5289 = vmax.f32 %v4983, 0.0
        %v5290 = vmax.f32 %v4986, 0.0
        %v5291 = vmax.f32 %v4991, 0.0
        %v5292 = vmax.f32 %v4994, 0.0
        %v5293 = vmax.f32 %v4999, 0.0
        %v5294 = vmax.f32 %v5002, 0.0
        %v5295 = vmax.f32 %v5007, 0.0
        %v5296 = vmax.f32 %v5010, 0.0
        %v5297 = vmax.f32 %v5015, 0.0
        %v5298 = vmax.f32 %v5018, 0.0
        %v5299 = vmax.f32 %v5023, 0.0
        %v5300 = vmax.f32 %v5026, 0.0
        %v5301 = vmax.f32 %v5031, 0.0
        %v5302 = vmax.f32 %v5034, 0.0
        %v5303 = vmax.f32 %v5039, 0.0
        %v5304 = vmax.f32 %v5042, 0.0
        %v5305 = vmax.f32 %v5047, 0.0
        %v5306 = vmax.f32 %v5050, 0.0
        %v5307 = vmax.f32 %v5055, 0.0
        %v5308 = vmax.f32 %v5058, 0.0
        %v5309 = vmax.f32 %v5063, 0.0
        %v5310 = vmax.f32 %v5066, 0.0
        %v5311 = vmax.f32 %v5071, 0.0
        %v5312 = vmax.f32 %v5074, 0.0
        %v5313 = vmax.f32 %v5079, 0.0
        %v5314 = vmax.f32 %v5082, 0.0
        %v5315 = vmax.f32 %v5087, 0.0
        %v5316 = vmax.f32 %v5090, 0.0
        %v5317 = vmax.f32 %v5095, 0.0
        %v5318 = vmax.f32 %v5098, 0.0
        %v5319 = vmax.f32 %v5103, 0.0
        %v5320 = vmax.f32 %v5106, 0.0
        %v5321 = vmax.f32 %v5111, 0.0
        %v5322 = vmax.f32 %v5114, 0.0
        %v5323 = vmax.f32 %v5119, 0.0
        %v5324 = vmax.f32 %v5122, 0.0
        %v5325 = vmax.f32 %v5127, 0.0
        %v5326 = vmax.f32 %v5130, 0.0
        %v5327 = vmax.f32 %v5135, 0.0
        %v5328 = vmax.f32 %v5138, 0.0
        %v5329 = vmax.f32 %v5143, 0.0
        %v5330 = vmax.f32 %v5146, 0.0
        %v5331 = vmax.f32 %v5151, 0.0
        %v5332 = vmax.f32 %v5154, 0.0
        %v5333 = vmax.f32 %v5159, 0.0
        %v5334 = vmax.f32 %v5162, 0.0
        %v5335 = vmax.f32 %v5167, 0.0
        %v5336 = vmax.f32 %v5170, 0.0
        %v5337 = vmax.f32 %v5175, 0.0
        %v5338 = vmax.f32 %v5178, 0.0
        %v5339 = vmax.f32 %v5183, 0.0
        %v5340 = vmax.f32 %v5186, 0.0
        %v5341 = vmax.f32 %v5191, 0.0
        %v5342 = vmax.f32 %v5194, 0.0
        %v5343 = vmax.f32 %v5199, 0.0
        %v5344 = vmax.f32 %v5202, 0.0
        %v5345 = vmax.f32 %v5207, 0.0
        %v5346 = vmax.f32 %v5210, 0.0
        %v5347 = vmax.f32 %v5215, 0.0
        %v5348 = vmax.f32 %v5218, 0.0
        %5350 = vset.pattern.permute.xlu0 127
        %5351 = vperm.xlu0 %5350, %v891
        %v5352 = vpop.permute.xlu0 %5351
        %5355 = vset.pattern.permute.xlu0 127
        %5356 = vperm.xlu0 %5355, %v895
        %v5357 = vpop.permute.xlu0 %5356
        %5360 = vset.pattern.permute.xlu0 127
        %5361 = vperm.xlu0 %5360, %v901
        %v5362 = vpop.permute.xlu0 %5361
        %5365 = vset.pattern.permute.xlu0 127
        %5366 = vperm.xlu0 %5365, %v905
        %v5367 = vpop.permute.xlu0 %5366
        %5370 = vset.pattern.permute.xlu0 127
        %5371 = vperm.xlu0 %5370, %v911
        %v5372 = vpop.permute.xlu0 %5371
        %5375 = vset.pattern.permute.xlu0 127
        %5376 = vperm.xlu0 %5375, %v915
        %v5377 = vpop.permute.xlu0 %5376
        %5380 = vset.pattern.permute.xlu0 127
        %5381 = vperm.xlu0 %5380, %v921
        %v5382 = vpop.permute.xlu0 %5381
        %5385 = vset.pattern.permute.xlu0 127
        %5386 = vperm.xlu0 %5385, %v925
        %v5387 = vpop.permute.xlu0 %5386
        %5390 = vset.pattern.permute.xlu0 127
        %5391 = vperm.xlu0 %5390, %v931
        %v5392 = vpop.permute.xlu0 %5391
        %5395 = vset.pattern.permute.xlu0 127
        %5396 = vperm.xlu0 %5395, %v935
        %v5397 = vpop.permute.xlu0 %5396
        %5400 = vset.pattern.permute.xlu0 127
        %5401 = vperm.xlu0 %5400, %v941
        %v5402 = vpop.permute.xlu0 %5401
        %5405 = vset.pattern.permute.xlu0 127
        %5406 = vperm.xlu0 %5405, %v945
        %v5407 = vpop.permute.xlu0 %5406
        %5410 = vset.pattern.permute.xlu0 127
        %5411 = vperm.xlu0 %5410, %v951
        %v5412 = vpop.permute.xlu0 %5411
        %5415 = vset.pattern.permute.xlu0 127
        %5416 = vperm.xlu0 %5415, %v955
        %v5417 = vpop.permute.xlu0 %5416
        %5420 = vset.pattern.permute.xlu0 127
        %5421 = vperm.xlu0 %5420, %v961
        %v5422 = vpop.permute.xlu0 %5421
        %5425 = vset.pattern.permute.xlu0 127
        %5426 = vperm.xlu0 %5425, %v965
        %v5427 = vpop.permute.xlu0 %5426
        %5430 = vset.pattern.permute.xlu0 127
        %5431 = vperm.xlu0 %5430, %v971
        %v5432 = vpop.permute.xlu0 %5431
        %5435 = vset.pattern.permute.xlu0 127
        %5436 = vperm.xlu0 %5435, %v975
        %v5437 = vpop.permute.xlu0 %5436
        %5440 = vset.pattern.permute.xlu0 127
        %5441 = vperm.xlu0 %5440, %v981
        %v5442 = vpop.permute.xlu0 %5441
        %5445 = vset.pattern.permute.xlu0 127
        %5446 = vperm.xlu0 %5445, %v985
        %v5447 = vpop.permute.xlu0 %5446
        %5450 = vset.pattern.permute.xlu0 127
        %5451 = vperm.xlu0 %5450, %v991
        %v5452 = vpop.permute.xlu0 %5451
        %5455 = vset.pattern.permute.xlu0 127
        %5456 = vperm.xlu0 %5455, %v995
        %v5457 = vpop.permute.xlu0 %5456
        %5460 = vset.pattern.permute.xlu0 127
        %5461 = vperm.xlu0 %5460, %v1001
        %v5462 = vpop.permute.xlu0 %5461
        %5465 = vset.pattern.permute.xlu0 127
        %5466 = vperm.xlu0 %5465, %v1005
        %v5467 = vpop.permute.xlu0 %5466
        %5470 = vset.pattern.permute.xlu0 127
        %5471 = vperm.xlu0 %5470, %v1011
        %v5472 = vpop.permute.xlu0 %5471
        %5475 = vset.pattern.permute.xlu0 127
        %5476 = vperm.xlu0 %5475, %v1015
        %v5477 = vpop.permute.xlu0 %5476
        %5480 = vset.pattern.permute.xlu0 127
        %5481 = vperm.xlu0 %5480, %v1021
        %v5482 = vpop.permute.xlu0 %5481
        %5485 = vset.pattern.permute.xlu0 127
        %5486 = vperm.xlu0 %5485, %v1025
        %v5487 = vpop.permute.xlu0 %5486
        %5490 = vset.pattern.permute.xlu0 127
        %5491 = vperm.xlu0 %5490, %v1031
        %v5492 = vpop.permute.xlu0 %5491
        %5495 = vset.pattern.permute.xlu0 127
        %5496 = vperm.xlu0 %5495, %v1035
        %v5497 = vpop.permute.xlu0 %5496
        %5500 = vset.pattern.permute.xlu0 127
        %5501 = vperm.xlu0 %5500, %v1041
        %v5502 = vpop.permute.xlu0 %5501
        %5505 = vset.pattern.permute.xlu0 127
        %5506 = vperm.xlu0 %5505, %v1045
        %v5507 = vpop.permute.xlu0 %5506
        %5510 = vset.pattern.permute.xlu0 127
        %5511 = vperm.xlu0 %5510, %v1051
        %v5512 = vpop.permute.xlu0 %5511
        %5515 = vset.pattern.permute.xlu0 127
        %5516 = vperm.xlu0 %5515, %v1055
        %v5517 = vpop.permute.xlu0 %5516
        %5520 = vset.pattern.permute.xlu0 127
        %5521 = vperm.xlu0 %5520, %v1061
        %v5522 = vpop.permute.xlu0 %5521
        %5525 = vset.pattern.permute.xlu0 127
        %5526 = vperm.xlu0 %5525, %v1065
        %v5527 = vpop.permute.xlu0 %5526
        %5530 = vset.pattern.permute.xlu0 127
        %5531 = vperm.xlu0 %5530, %v1071
        %v5532 = vpop.permute.xlu0 %5531
        %5535 = vset.pattern.permute.xlu0 127
        %5536 = vperm.xlu0 %5535, %v1075
        %v5537 = vpop.permute.xlu0 %5536
        %5540 = vset.pattern.permute.xlu0 127
        %5541 = vperm.xlu0 %5540, %v1081
        %v5542 = vpop.permute.xlu0 %5541
        %5545 = vset.pattern.permute.xlu0 127
        %5546 = vperm.xlu0 %5545, %v1085
        %v5547 = vpop.permute.xlu0 %5546
        %5550 = vset.pattern.permute.xlu0 127
        %5551 = vperm.xlu0 %5550, %v1091
        %v5552 = vpop.permute.xlu0 %5551
        %5555 = vset.pattern.permute.xlu0 127
        %5556 = vperm.xlu0 %5555, %v1095
        %v5557 = vpop.permute.xlu0 %5556
        %5560 = vset.pattern.permute.xlu0 127
        %5561 = vperm.xlu0 %5560, %v1101
        %v5562 = vpop.permute.xlu0 %5561
        %5565 = vset.pattern.permute.xlu0 127
        %5566 = vperm.xlu0 %5565, %v1105
        %v5567 = vpop.permute.xlu0 %5566
        %5570 = vset.pattern.permute.xlu0 127
        %5571 = vperm.xlu0 %5570, %v1111
        %v5572 = vpop.permute.xlu0 %5571
        %5575 = vset.pattern.permute.xlu0 127
        %5576 = vperm.xlu0 %5575, %v1115
        %v5577 = vpop.permute.xlu0 %5576
        %5580 = vset.pattern.permute.xlu0 127
        %5581 = vperm.xlu0 %5580, %v1121
        %v5582 = vpop.permute.xlu0 %5581
        %5585 = vset.pattern.permute.xlu0 127
        %5586 = vperm.xlu0 %5585, %v1125
        %v5587 = vpop.permute.xlu0 %5586
        %5590 = vset.pattern.permute.xlu0 127
        %5591 = vperm.xlu0 %5590, %v1131
        %v5592 = vpop.permute.xlu0 %5591
        %5595 = vset.pattern.permute.xlu0 127
        %5596 = vperm.xlu0 %5595, %v1135
        %v5597 = vpop.permute.xlu0 %5596
        %5600 = vset.pattern.permute.xlu0 127
        %5601 = vperm.xlu0 %5600, %v1141
        %v5602 = vpop.permute.xlu0 %5601
        %5605 = vset.pattern.permute.xlu0 127
        %5606 = vperm.xlu0 %5605, %v1145
        %v5607 = vpop.permute.xlu0 %5606
        %5610 = vset.pattern.permute.xlu0 127
        %5611 = vperm.xlu0 %5610, %v1151
        %v5612 = vpop.permute.xlu0 %5611
        %5615 = vset.pattern.permute.xlu0 127
        %5616 = vperm.xlu0 %5615, %v1155
        %v5617 = vpop.permute.xlu0 %5616
        %5620 = vset.pattern.permute.xlu0 127
        %5621 = vperm.xlu0 %5620, %v1161
        %v5622 = vpop.permute.xlu0 %5621
        %5625 = vset.pattern.permute.xlu0 127
        %5626 = vperm.xlu0 %5625, %v1165
        %v5627 = vpop.permute.xlu0 %5626
        %5630 = vset.pattern.permute.xlu0 127
        %5631 = vperm.xlu0 %5630, %v1171
        %v5632 = vpop.permute.xlu0 %5631
        %5635 = vset.pattern.permute.xlu0 127
        %5636 = vperm.xlu0 %5635, %v1175
        %v5637 = vpop.permute.xlu0 %5636
        %5640 = vset.pattern.permute.xlu0 127
        %5641 = vperm.xlu0 %5640, %v1181
        %v5642 = vpop.permute.xlu0 %5641
        %5645 = vset.pattern.permute.xlu0 127
        %5646 = vperm.xlu0 %5645, %v1185
        %v5647 = vpop.permute.xlu0 %5646
        %5650 = vset.pattern.permute.xlu0 127
        %5651 = vperm.xlu0 %5650, %v1191
        %v5652 = vpop.permute.xlu0 %5651
        %5655 = vset.pattern.permute.xlu0 127
        %5656 = vperm.xlu0 %5655, %v1195
        %v5657 = vpop.permute.xlu0 %5656
        %5660 = vset.pattern.permute.xlu0 127
        %5661 = vperm.xlu0 %5660, %v1201
        %v5662 = vpop.permute.xlu0 %5661
        %5665 = vset.pattern.permute.xlu0 127
        %5666 = vperm.xlu0 %5665, %v1205
        %v5667 = vpop.permute.xlu0 %5666
        %5670 = vset.pattern.permute.xlu0 127
        %5671 = vperm.xlu0 %5670, %v1211
        %v5672 = vpop.permute.xlu0 %5671
        %5675 = vset.pattern.permute.xlu0 127
        %5676 = vperm.xlu0 %5675, %v1215
        %v5677 = vpop.permute.xlu0 %5676
        %5680 = vset.pattern.permute.xlu0 127
        %5681 = vperm.xlu0 %5680, %v1221
        %v5682 = vpop.permute.xlu0 %5681
        %5685 = vset.pattern.permute.xlu0 127
        %5686 = vperm.xlu0 %5685, %v1225
        %v5687 = vpop.permute.xlu0 %5686
        %5690 = vset.pattern.permute.xlu0 127
        %5691 = vperm.xlu0 %5690, %v1231
        %v5692 = vpop.permute.xlu0 %5691
        %5695 = vset.pattern.permute.xlu0 127
        %5696 = vperm.xlu0 %5695, %v1235
        %v5697 = vpop.permute.xlu0 %5696
        %5700 = vset.pattern.permute.xlu0 127
        %5701 = vperm.xlu0 %5700, %v1241
        %v5702 = vpop.permute.xlu0 %5701
        %5705 = vset.pattern.permute.xlu0 127
        %5706 = vperm.xlu0 %5705, %v1245
        %v5707 = vpop.permute.xlu0 %5706
        %5710 = vset.pattern.permute.xlu0 127
        %5711 = vperm.xlu0 %5710, %v1251
        %v5712 = vpop.permute.xlu0 %5711
        %5715 = vset.pattern.permute.xlu0 127
        %5716 = vperm.xlu0 %5715, %v1255
        %v5717 = vpop.permute.xlu0 %5716
        %5720 = vset.pattern.permute.xlu0 127
        %5721 = vperm.xlu0 %5720, %v1261
        %v5722 = vpop.permute.xlu0 %5721
        %5725 = vset.pattern.permute.xlu0 127
        %5726 = vperm.xlu0 %5725, %v1265
        %v5727 = vpop.permute.xlu0 %5726
        %5730 = vset.pattern.permute.xlu0 127
        %5731 = vperm.xlu0 %5730, %v1271
        %v5732 = vpop.permute.xlu0 %5731
        %5735 = vset.pattern.permute.xlu0 127
        %5736 = vperm.xlu0 %5735, %v1275
        %v5737 = vpop.permute.xlu0 %5736
        %5740 = vset.pattern.permute.xlu0 127
        %5741 = vperm.xlu0 %5740, %v1281
        %v5742 = vpop.permute.xlu0 %5741
        %5745 = vset.pattern.permute.xlu0 127
        %5746 = vperm.xlu0 %5745, %v1285
        %v5747 = vpop.permute.xlu0 %5746
        %5750 = vset.pattern.permute.xlu0 127
        %5751 = vperm.xlu0 %5750, %v1291
        %v5752 = vpop.permute.xlu0 %5751
        %5755 = vset.pattern.permute.xlu0 127
        %5756 = vperm.xlu0 %5755, %v1295
        %v5757 = vpop.permute.xlu0 %5756
        %5760 = vset.pattern.permute.xlu0 127
        %5761 = vperm.xlu0 %5760, %v1301
        %v5762 = vpop.permute.xlu0 %5761
        %5765 = vset.pattern.permute.xlu0 127
        %5766 = vperm.xlu0 %5765, %v1305
        %v5767 = vpop.permute.xlu0 %5766
        %5770 = vset.pattern.permute.xlu0 127
        %5771 = vperm.xlu0 %5770, %v1311
        %v5772 = vpop.permute.xlu0 %5771
        %5775 = vset.pattern.permute.xlu0 127
        %5776 = vperm.xlu0 %5775, %v1315
        %v5777 = vpop.permute.xlu0 %5776
        %5780 = vset.pattern.permute.xlu0 127
        %5781 = vperm.xlu0 %5780, %v1321
        %v5782 = vpop.permute.xlu0 %5781
        %5785 = vset.pattern.permute.xlu0 127
        %5786 = vperm.xlu0 %5785, %v1325
        %v5787 = vpop.permute.xlu0 %5786
        %5790 = vset.pattern.permute.xlu0 127
        %5791 = vperm.xlu0 %5790, %v1331
        %v5792 = vpop.permute.xlu0 %5791
        %5795 = vset.pattern.permute.xlu0 127
        %5796 = vperm.xlu0 %5795, %v1335
        %v5797 = vpop.permute.xlu0 %5796
        %5800 = vset.pattern.permute.xlu0 127
        %5801 = vperm.xlu0 %5800, %v1341
        %v5802 = vpop.permute.xlu0 %5801
        %5805 = vset.pattern.permute.xlu0 127
        %5806 = vperm.xlu0 %5805, %v1345
        %v5807 = vpop.permute.xlu0 %5806
        %5810 = vset.pattern.permute.xlu0 127
        %5811 = vperm.xlu0 %5810, %v1351
        %v5812 = vpop.permute.xlu0 %5811
        %5815 = vset.pattern.permute.xlu0 127
        %5816 = vperm.xlu0 %5815, %v1355
        %v5817 = vpop.permute.xlu0 %5816
        %5820 = vset.pattern.permute.xlu0 127
        %5821 = vperm.xlu0 %5820, %v1361
        %v5822 = vpop.permute.xlu0 %5821
        %5825 = vset.pattern.permute.xlu0 127
        %5826 = vperm.xlu0 %5825, %v1365
        %v5827 = vpop.permute.xlu0 %5826
        %5830 = vset.pattern.permute.xlu0 127
        %5831 = vperm.xlu0 %5830, %v1371
        %v5832 = vpop.permute.xlu0 %5831
        %5835 = vset.pattern.permute.xlu0 127
        %5836 = vperm.xlu0 %5835, %v1375
        %v5837 = vpop.permute.xlu0 %5836
        %5840 = vset.pattern.permute.xlu0 127
        %5841 = vperm.xlu0 %5840, %v1381
        %v5842 = vpop.permute.xlu0 %5841
        %5845 = vset.pattern.permute.xlu0 127
        %5846 = vperm.xlu0 %5845, %v1385
        %v5847 = vpop.permute.xlu0 %5846
        %5850 = vset.pattern.permute.xlu0 127
        %5851 = vperm.xlu0 %5850, %v1391
        %v5852 = vpop.permute.xlu0 %5851
        %5855 = vset.pattern.permute.xlu0 127
        %5856 = vperm.xlu0 %5855, %v1395
        %v5857 = vpop.permute.xlu0 %5856
        %5860 = vset.pattern.permute.xlu0 127
        %5861 = vperm.xlu0 %5860, %v1401
        %v5862 = vpop.permute.xlu0 %5861
        %5865 = vset.pattern.permute.xlu0 127
        %5866 = vperm.xlu0 %5865, %v1405
        %v5867 = vpop.permute.xlu0 %5866
        %5870 = vset.pattern.permute.xlu0 127
        %5871 = vperm.xlu0 %5870, %v1411
        %v5872 = vpop.permute.xlu0 %5871
        %5875 = vset.pattern.permute.xlu0 127
        %5876 = vperm.xlu0 %5875, %v1415
        %v5877 = vpop.permute.xlu0 %5876
        %5880 = vset.pattern.permute.xlu0 127
        %5881 = vperm.xlu0 %5880, %v1421
        %v5882 = vpop.permute.xlu0 %5881
        %5885 = vset.pattern.permute.xlu0 127
        %5886 = vperm.xlu0 %5885, %v1425
        %v5887 = vpop.permute.xlu0 %5886
        %5890 = vset.pattern.permute.xlu0 127
        %5891 = vperm.xlu0 %5890, %v1431
        %v5892 = vpop.permute.xlu0 %5891
        %5895 = vset.pattern.permute.xlu0 127
        %5896 = vperm.xlu0 %5895, %v1435
        %v5897 = vpop.permute.xlu0 %5896
        %5900 = vset.pattern.permute.xlu0 127
        %5901 = vperm.xlu0 %5900, %v1441
        %v5902 = vpop.permute.xlu0 %5901
        %5905 = vset.pattern.permute.xlu0 127
        %5906 = vperm.xlu0 %5905, %v1445
        %v5907 = vpop.permute.xlu0 %5906
        %5910 = vset.pattern.permute.xlu0 127
        %5911 = vperm.xlu0 %5910, %v1451
        %v5912 = vpop.permute.xlu0 %5911
        %5915 = vset.pattern.permute.xlu0 127
        %5916 = vperm.xlu0 %5915, %v1455
        %v5917 = vpop.permute.xlu0 %5916
        %5920 = vset.pattern.permute.xlu0 127
        %5921 = vperm.xlu0 %5920, %v1461
        %v5922 = vpop.permute.xlu0 %5921
        %5925 = vset.pattern.permute.xlu0 127
        %5926 = vperm.xlu0 %5925, %v1465
        %v5927 = vpop.permute.xlu0 %5926
        %5930 = vset.pattern.permute.xlu0 127
        %5931 = vperm.xlu0 %5930, %v1471
        %v5932 = vpop.permute.xlu0 %5931
        %5935 = vset.pattern.permute.xlu0 127
        %5936 = vperm.xlu0 %5935, %v1475
        %v5937 = vpop.permute.xlu0 %5936
        %5940 = vset.pattern.permute.xlu0 127
        %5941 = vperm.xlu0 %5940, %v1481
        %v5942 = vpop.permute.xlu0 %5941
        %5945 = vset.pattern.permute.xlu0 127
        %5946 = vperm.xlu0 %5945, %v1485
        %v5947 = vpop.permute.xlu0 %5946
        %5950 = vset.pattern.permute.xlu0 127
        %5951 = vperm.xlu0 %5950, %v1491
        %v5952 = vpop.permute.xlu0 %5951
        %5955 = vset.pattern.permute.xlu0 127
        %5956 = vperm.xlu0 %5955, %v1495
        %v5957 = vpop.permute.xlu0 %5956
        %5960 = vset.pattern.permute.xlu0 127
        %5961 = vperm.xlu0 %5960, %v1501
        %v5962 = vpop.permute.xlu0 %5961
        %5965 = vset.pattern.permute.xlu0 127
        %5966 = vperm.xlu0 %5965, %v1505
        %v5967 = vpop.permute.xlu0 %5966
        %5970 = vset.pattern.permute.xlu0 127
        %5971 = vperm.xlu0 %5970, %v1511
        %v5972 = vpop.permute.xlu0 %5971
        %5975 = vset.pattern.permute.xlu0 127
        %5976 = vperm.xlu0 %5975, %v1515
        %v5977 = vpop.permute.xlu0 %5976
        %5980 = vset.pattern.permute.xlu0 127
        %5981 = vperm.xlu0 %5980, %v1521
        %v5982 = vpop.permute.xlu0 %5981
        %5985 = vset.pattern.permute.xlu0 127
        %5986 = vperm.xlu0 %5985, %v1525
        %v5987 = vpop.permute.xlu0 %5986
        %v5989 = vadd.f32 %v5221, %v5352
        %v5990 = vadd.f32 %v5222, %v5357
        %v5991 = vadd.f32 %v5223, %v5362
        %v5992 = vadd.f32 %v5224, %v5367
        %v5993 = vadd.f32 %v5225, %v5372
        %v5994 = vadd.f32 %v5226, %v5377
        %v5995 = vadd.f32 %v5227, %v5382
        %v5996 = vadd.f32 %v5228, %v5387
        %v5997 = vadd.f32 %v5229, %v5392
        %v5998 = vadd.f32 %v5230, %v5397
        %v5999 = vadd.f32 %v5231, %v5402
        %v6000 = vadd.f32 %v5232, %v5407
        %v6001 = vadd.f32 %v5233, %v5412
        %v6002 = vadd.f32 %v5234, %v5417
        %v6003 = vadd.f32 %v5235, %v5422
        %v6004 = vadd.f32 %v5236, %v5427
        %v6005 = vadd.f32 %v5237, %v5432
        %v6006 = vadd.f32 %v5238, %v5437
        %v6007 = vadd.f32 %v5239, %v5442
        %v6008 = vadd.f32 %v5240, %v5447
        %v6009 = vadd.f32 %v5241, %v5452
        %v6010 = vadd.f32 %v5242, %v5457
        %v6011 = vadd.f32 %v5243, %v5462
        %v6012 = vadd.f32 %v5244, %v5467
        %v6013 = vadd.f32 %v5245, %v5472
        %v6014 = vadd.f32 %v5246, %v5477
        %v6015 = vadd.f32 %v5247, %v5482
        %v6016 = vadd.f32 %v5248, %v5487
        %v6017 = vadd.f32 %v5249, %v5492
        %v6018 = vadd.f32 %v5250, %v5497
        %v6019 = vadd.f32 %v5251, %v5502
        %v6020 = vadd.f32 %v5252, %v5507
        %v6021 = vadd.f32 %v5253, %v5512
        %v6022 = vadd.f32 %v5254, %v5517
        %v6023 = vadd.f32 %v5255, %v5522
        %v6024 = vadd.f32 %v5256, %v5527
        %v6025 = vadd.f32 %v5257, %v5532
        %v6026 = vadd.f32 %v5258, %v5537
        %v6027 = vadd.f32 %v5259, %v5542
        %v6028 = vadd.f32 %v5260, %v5547
        %v6029 = vadd.f32 %v5261, %v5552
        %v6030 = vadd.f32 %v5262, %v5557
        %v6031 = vadd.f32 %v5263, %v5562
        %v6032 = vadd.f32 %v5264, %v5567
        %v6033 = vadd.f32 %v5265, %v5572
        %v6034 = vadd.f32 %v5266, %v5577
        %v6035 = vadd.f32 %v5267, %v5582
        %v6036 = vadd.f32 %v5268, %v5587
        %v6037 = vadd.f32 %v5269, %v5592
        %v6038 = vadd.f32 %v5270, %v5597
        %v6039 = vadd.f32 %v5271, %v5602
        %v6040 = vadd.f32 %v5272, %v5607
        %v6041 = vadd.f32 %v5273, %v5612
        %v6042 = vadd.f32 %v5274, %v5617
        %v6043 = vadd.f32 %v5275, %v5622
        %v6044 = vadd.f32 %v5276, %v5627
        %v6045 = vadd.f32 %v5277, %v5632
        %v6046 = vadd.f32 %v5278, %v5637
        %v6047 = vadd.f32 %v5279, %v5642
        %v6048 = vadd.f32 %v5280, %v5647
        %v6049 = vadd.f32 %v5281, %v5652
        %v6050 = vadd.f32 %v5282, %v5657
        %v6051 = vadd.f32 %v5283, %v5662
        %v6052 = vadd.f32 %v5284, %v5667
        %v6053 = vadd.f32 %v5285, %v5672
        %v6054 = vadd.f32 %v5286, %v5677
        %v6055 = vadd.f32 %v5287, %v5682
        %v6056 = vadd.f32 %v5288, %v5687
        %v6057 = vadd.f32 %v5289, %v5692
        %v6058 = vadd.f32 %v5290, %v5697
        %v6059 = vadd.f32 %v5291, %v5702
        %v6060 = vadd.f32 %v5292, %v5707
        %v6061 = vadd.f32 %v5293, %v5712
        %v6062 = vadd.f32 %v5294, %v5717
        %v6063 = vadd.f32 %v5295, %v5722
        %v6064 = vadd.f32 %v5296, %v5727
        %v6065 = vadd.f32 %v5297, %v5732
        %v6066 = vadd.f32 %v5298, %v5737
        %v6067 = vadd.f32 %v5299, %v5742
        %v6068 = vadd.f32 %v5300, %v5747
        %v6069 = vadd.f32 %v5301, %v5752
        %v6070 = vadd.f32 %v5302, %v5757
        %v6071 = vadd.f32 %v5303, %v5762
        %v6072 = vadd.f32 %v5304, %v5767
        %v6073 = vadd.f32 %v5305, %v5772
        %v6074 = vadd.f32 %v5306, %v5777
        %v6075 = vadd.f32 %v5307, %v5782
        %v6076 = vadd.f32 %v5308, %v5787
        %v6077 = vadd.f32 %v5309, %v5792
        %v6078 = vadd.f32 %v5310, %v5797
        %v6079 = vadd.f32 %v5311, %v5802
        %v6080 = vadd.f32 %v5312, %v5807
        %v6081 = vadd.f32 %v5313, %v5812
        %v6082 = vadd.f32 %v5314, %v5817
        %v6083 = vadd.f32 %v5315, %v5822
        %v6084 = vadd.f32 %v5316, %v5827
        %v6085 = vadd.f32 %v5317, %v5832
        %v6086 = vadd.f32 %v5318, %v5837
        %v6087 = vadd.f32 %v5319, %v5842
        %v6088 = vadd.f32 %v5320, %v5847
        %v6089 = vadd.f32 %v5321, %v5852
        %v6090 = vadd.f32 %v5322, %v5857
        %v6091 = vadd.f32 %v5323, %v5862
        %v6092 = vadd.f32 %v5324, %v5867
        %v6093 = vadd.f32 %v5325, %v5872
        %v6094 = vadd.f32 %v5326, %v5877
        %v6095 = vadd.f32 %v5327, %v5882
        %v6096 = vadd.f32 %v5328, %v5887
        %v6097 = vadd.f32 %v5329, %v5892
        %v6098 = vadd.f32 %v5330, %v5897
        %v6099 = vadd.f32 %v5331, %v5902
        %v6100 = vadd.f32 %v5332, %v5907
        %v6101 = vadd.f32 %v5333, %v5912
        %v6102 = vadd.f32 %v5334, %v5917
        %v6103 = vadd.f32 %v5335, %v5922
        %v6104 = vadd.f32 %v5336, %v5927
        %v6105 = vadd.f32 %v5337, %v5932
        %v6106 = vadd.f32 %v5338, %v5937
        %v6107 = vadd.f32 %v5339, %v5942
        %v6108 = vadd.f32 %v5340, %v5947
        %v6109 = vadd.f32 %v5341, %v5952
        %v6110 = vadd.f32 %v5342, %v5957
        %v6111 = vadd.f32 %v5343, %v5962
        %v6112 = vadd.f32 %v5344, %v5967
        %v6113 = vadd.f32 %v5345, %v5972
        %v6114 = vadd.f32 %v5346, %v5977
        %v6115 = vadd.f32 %v5347, %v5982
        %v6116 = vadd.f32 %v5348, %v5987
        %v6117 = vmax.f32 %v5989, %v5990
        %v6118 = vrot.slane %v6117, 4
        %v6119 = vmax.f32 %v6117, %v6118
        %v6120 = vrot.slane %v6119, 2
        %v6121 = vmax.f32 %v6119, %v6120
        %v6122 = vrot.slane %v6121, 1
        %v6123 = vmax.f32 %v6121, %v6122
        %v6124 = vmax.f32 %v5991, %v5992
        %v6125 = vrot.slane %v6124, 4
        %v6126 = vmax.f32 %v6124, %v6125
        %v6127 = vrot.slane %v6126, 2
        %v6128 = vmax.f32 %v6126, %v6127
        %v6129 = vrot.slane %v6128, 1
        %v6130 = vmax.f32 %v6128, %v6129
        %v6131 = vmax.f32 %v5993, %v5994
        %v6132 = vrot.slane %v6131, 4
        %v6133 = vmax.f32 %v6131, %v6132
        %v6134 = vrot.slane %v6133, 2
        %v6135 = vmax.f32 %v6133, %v6134
        %v6136 = vrot.slane %v6135, 1
        %v6137 = vmax.f32 %v6135, %v6136
        %v6138 = vmax.f32 %v5995, %v5996
        %v6139 = vrot.slane %v6138, 4
        %v6140 = vmax.f32 %v6138, %v6139
        %v6141 = vrot.slane %v6140, 2
        %v6142 = vmax.f32 %v6140, %v6141
        %v6143 = vrot.slane %v6142, 1
        %v6144 = vmax.f32 %v6142, %v6143
        %v6145 = vmax.f32 %v5997, %v5998
        %v6146 = vrot.slane %v6145, 4
        %v6147 = vmax.f32 %v6145, %v6146
        %v6148 = vrot.slane %v6147, 2
        %v6149 = vmax.f32 %v6147, %v6148
        %v6150 = vrot.slane %v6149, 1
        %v6151 = vmax.f32 %v6149, %v6150
        %v6152 = vmax.f32 %v5999, %v6000
        %v6153 = vrot.slane %v6152, 4
        %v6154 = vmax.f32 %v6152, %v6153
        %v6155 = vrot.slane %v6154, 2
        %v6156 = vmax.f32 %v6154, %v6155
        %v6157 = vrot.slane %v6156, 1
        %v6158 = vmax.f32 %v6156, %v6157
        %v6159 = vmax.f32 %v6001, %v6002
        %v6160 = vrot.slane %v6159, 4
        %v6161 = vmax.f32 %v6159, %v6160
        %v6162 = vrot.slane %v6161, 2
        %v6163 = vmax.f32 %v6161, %v6162
        %v6164 = vrot.slane %v6163, 1
        %v6165 = vmax.f32 %v6163, %v6164
        %v6166 = vmax.f32 %v6003, %v6004
        %v6167 = vrot.slane %v6166, 4
        %v6168 = vmax.f32 %v6166, %v6167
        %v6169 = vrot.slane %v6168, 2
        %v6170 = vmax.f32 %v6168, %v6169
        %v6171 = vrot.slane %v6170, 1
        %v6172 = vmax.f32 %v6170, %v6171
        %v6173 = vmax.f32 %v6005, %v6006
        %v6174 = vrot.slane %v6173, 4
        %v6175 = vmax.f32 %v6173, %v6174
        %v6176 = vrot.slane %v6175, 2
        %v6177 = vmax.f32 %v6175, %v6176
        %v6178 = vrot.slane %v6177, 1
        %v6179 = vmax.f32 %v6177, %v6178
        %v6180 = vmax.f32 %v6007, %v6008
        %v6181 = vrot.slane %v6180, 4
        %v6182 = vmax.f32 %v6180, %v6181
        %v6183 = vrot.slane %v6182, 2
        %v6184 = vmax.f32 %v6182, %v6183
        %v6185 = vrot.slane %v6184, 1
        %v6186 = vmax.f32 %v6184, %v6185
        %v6187 = vmax.f32 %v6009, %v6010
        %v6188 = vrot.slane %v6187, 4
        %v6189 = vmax.f32 %v6187, %v6188
        %v6190 = vrot.slane %v6189, 2
        %v6191 = vmax.f32 %v6189, %v6190
        %v6192 = vrot.slane %v6191, 1
        %v6193 = vmax.f32 %v6191, %v6192
        %v6194 = vmax.f32 %v6011, %v6012
        %v6195 = vrot.slane %v6194, 4
        %v6196 = vmax.f32 %v6194, %v6195
        %v6197 = vrot.slane %v6196, 2
        %v6198 = vmax.f32 %v6196, %v6197
        %v6199 = vrot.slane %v6198, 1
        %v6200 = vmax.f32 %v6198, %v6199
        %v6201 = vmax.f32 %v6013, %v6014
        %v6202 = vrot.slane %v6201, 4
        %v6203 = vmax.f32 %v6201, %v6202
        %v6204 = vrot.slane %v6203, 2
        %v6205 = vmax.f32 %v6203, %v6204
        %v6206 = vrot.slane %v6205, 1
        %v6207 = vmax.f32 %v6205, %v6206
        %v6208 = vmax.f32 %v6015, %v6016
        %v6209 = vrot.slane %v6208, 4
        %v6210 = vmax.f32 %v6208, %v6209
        %v6211 = vrot.slane %v6210, 2
        %v6212 = vmax.f32 %v6210, %v6211
        %v6213 = vrot.slane %v6212, 1
        %v6214 = vmax.f32 %v6212, %v6213
        %v6215 = vmax.f32 %v6017, %v6018
        %v6216 = vrot.slane %v6215, 4
        %v6217 = vmax.f32 %v6215, %v6216
        %v6218 = vrot.slane %v6217, 2
        %v6219 = vmax.f32 %v6217, %v6218
        %v6220 = vrot.slane %v6219, 1
        %v6221 = vmax.f32 %v6219, %v6220
        %v6222 = vmax.f32 %v6019, %v6020
        %v6223 = vrot.slane %v6222, 4
        %v6224 = vmax.f32 %v6222, %v6223
        %v6225 = vrot.slane %v6224, 2
        %v6226 = vmax.f32 %v6224, %v6225
        %v6227 = vrot.slane %v6226, 1
        %v6228 = vmax.f32 %v6226, %v6227
        %v6229 = vmax.f32 %v6021, %v6022
        %v6230 = vrot.slane %v6229, 4
        %v6231 = vmax.f32 %v6229, %v6230
        %v6232 = vrot.slane %v6231, 2
        %v6233 = vmax.f32 %v6231, %v6232
        %v6234 = vrot.slane %v6233, 1
        %v6235 = vmax.f32 %v6233, %v6234
        %v6236 = vmax.f32 %v6023, %v6024
        %v6237 = vrot.slane %v6236, 4
        %v6238 = vmax.f32 %v6236, %v6237
        %v6239 = vrot.slane %v6238, 2
        %v6240 = vmax.f32 %v6238, %v6239
        %v6241 = vrot.slane %v6240, 1
        %v6242 = vmax.f32 %v6240, %v6241
        %v6243 = vmax.f32 %v6025, %v6026
        %v6244 = vrot.slane %v6243, 4
        %v6245 = vmax.f32 %v6243, %v6244
        %v6246 = vrot.slane %v6245, 2
        %v6247 = vmax.f32 %v6245, %v6246
        %v6248 = vrot.slane %v6247, 1
        %v6249 = vmax.f32 %v6247, %v6248
        %v6250 = vmax.f32 %v6027, %v6028
        %v6251 = vrot.slane %v6250, 4
        %v6252 = vmax.f32 %v6250, %v6251
        %v6253 = vrot.slane %v6252, 2
        %v6254 = vmax.f32 %v6252, %v6253
        %v6255 = vrot.slane %v6254, 1
        %v6256 = vmax.f32 %v6254, %v6255
        %v6257 = vmax.f32 %v6029, %v6030
        %v6258 = vrot.slane %v6257, 4
        %v6259 = vmax.f32 %v6257, %v6258
        %v6260 = vrot.slane %v6259, 2
        %v6261 = vmax.f32 %v6259, %v6260
        %v6262 = vrot.slane %v6261, 1
        %v6263 = vmax.f32 %v6261, %v6262
        %v6264 = vmax.f32 %v6031, %v6032
        %v6265 = vrot.slane %v6264, 4
        %v6266 = vmax.f32 %v6264, %v6265
        %v6267 = vrot.slane %v6266, 2
        %v6268 = vmax.f32 %v6266, %v6267
        %v6269 = vrot.slane %v6268, 1
        %v6270 = vmax.f32 %v6268, %v6269
        %v6271 = vmax.f32 %v6033, %v6034
        %v6272 = vrot.slane %v6271, 4
        %v6273 = vmax.f32 %v6271, %v6272
        %v6274 = vrot.slane %v6273, 2
        %v6275 = vmax.f32 %v6273, %v6274
        %v6276 = vrot.slane %v6275, 1
        %v6277 = vmax.f32 %v6275, %v6276
        %v6278 = vmax.f32 %v6035, %v6036
        %v6279 = vrot.slane %v6278, 4
        %v6280 = vmax.f32 %v6278, %v6279
        %v6281 = vrot.slane %v6280, 2
        %v6282 = vmax.f32 %v6280, %v6281
        %v6283 = vrot.slane %v6282, 1
        %v6284 = vmax.f32 %v6282, %v6283
        %v6285 = vmax.f32 %v6037, %v6038
        %v6286 = vrot.slane %v6285, 4
        %v6287 = vmax.f32 %v6285, %v6286
        %v6288 = vrot.slane %v6287, 2
        %v6289 = vmax.f32 %v6287, %v6288
        %v6290 = vrot.slane %v6289, 1
        %v6291 = vmax.f32 %v6289, %v6290
        %v6292 = vmax.f32 %v6039, %v6040
        %v6293 = vrot.slane %v6292, 4
        %v6294 = vmax.f32 %v6292, %v6293
        %v6295 = vrot.slane %v6294, 2
        %v6296 = vmax.f32 %v6294, %v6295
        %v6297 = vrot.slane %v6296, 1
        %v6298 = vmax.f32 %v6296, %v6297
        %v6299 = vmax.f32 %v6041, %v6042
        %v6300 = vrot.slane %v6299, 4
        %v6301 = vmax.f32 %v6299, %v6300
        %v6302 = vrot.slane %v6301, 2
        %v6303 = vmax.f32 %v6301, %v6302
        %v6304 = vrot.slane %v6303, 1
        %v6305 = vmax.f32 %v6303, %v6304
        %v6306 = vmax.f32 %v6043, %v6044
        %v6307 = vrot.slane %v6306, 4
        %v6308 = vmax.f32 %v6306, %v6307
        %v6309 = vrot.slane %v6308, 2
        %v6310 = vmax.f32 %v6308, %v6309
        %v6311 = vrot.slane %v6310, 1
        %v6312 = vmax.f32 %v6310, %v6311
        %v6313 = vmax.f32 %v6045, %v6046
        %v6314 = vrot.slane %v6313, 4
        %v6315 = vmax.f32 %v6313, %v6314
        %v6316 = vrot.slane %v6315, 2
        %v6317 = vmax.f32 %v6315, %v6316
        %v6318 = vrot.slane %v6317, 1
        %v6319 = vmax.f32 %v6317, %v6318
        %v6320 = vmax.f32 %v6047, %v6048
        %v6321 = vrot.slane %v6320, 4
        %v6322 = vmax.f32 %v6320, %v6321
        %v6323 = vrot.slane %v6322, 2
        %v6324 = vmax.f32 %v6322, %v6323
        %v6325 = vrot.slane %v6324, 1
        %v6326 = vmax.f32 %v6324, %v6325
        %v6327 = vmax.f32 %v6049, %v6050
        %v6328 = vrot.slane %v6327, 4
        %v6329 = vmax.f32 %v6327, %v6328
        %v6330 = vrot.slane %v6329, 2
        %v6331 = vmax.f32 %v6329, %v6330
        %v6332 = vrot.slane %v6331, 1
        %v6333 = vmax.f32 %v6331, %v6332
        %v6334 = vmax.f32 %v6051, %v6052
        %v6335 = vrot.slane %v6334, 4
        %v6336 = vmax.f32 %v6334, %v6335
        %v6337 = vrot.slane %v6336, 2
        %v6338 = vmax.f32 %v6336, %v6337
        %v6339 = vrot.slane %v6338, 1
        %v6340 = vmax.f32 %v6338, %v6339
        %v6341 = vmax.f32 %v6053, %v6054
        %v6342 = vrot.slane %v6341, 4
        %v6343 = vmax.f32 %v6341, %v6342
        %v6344 = vrot.slane %v6343, 2
        %v6345 = vmax.f32 %v6343, %v6344
        %v6346 = vrot.slane %v6345, 1
        %v6347 = vmax.f32 %v6345, %v6346
        %v6348 = vmax.f32 %v6055, %v6056
        %v6349 = vrot.slane %v6348, 4
        %v6350 = vmax.f32 %v6348, %v6349
        %v6351 = vrot.slane %v6350, 2
        %v6352 = vmax.f32 %v6350, %v6351
        %v6353 = vrot.slane %v6352, 1
        %v6354 = vmax.f32 %v6352, %v6353
        %v6355 = vmax.f32 %v6057, %v6058
        %v6356 = vrot.slane %v6355, 4
        %v6357 = vmax.f32 %v6355, %v6356
        %v6358 = vrot.slane %v6357, 2
        %v6359 = vmax.f32 %v6357, %v6358
        %v6360 = vrot.slane %v6359, 1
        %v6361 = vmax.f32 %v6359, %v6360
        %v6362 = vmax.f32 %v6059, %v6060
        %v6363 = vrot.slane %v6362, 4
        %v6364 = vmax.f32 %v6362, %v6363
        %v6365 = vrot.slane %v6364, 2
        %v6366 = vmax.f32 %v6364, %v6365
        %v6367 = vrot.slane %v6366, 1
        %v6368 = vmax.f32 %v6366, %v6367
        %v6369 = vmax.f32 %v6061, %v6062
        %v6370 = vrot.slane %v6369, 4
        %v6371 = vmax.f32 %v6369, %v6370
        %v6372 = vrot.slane %v6371, 2
        %v6373 = vmax.f32 %v6371, %v6372
        %v6374 = vrot.slane %v6373, 1
        %v6375 = vmax.f32 %v6373, %v6374
        %v6376 = vmax.f32 %v6063, %v6064
        %v6377 = vrot.slane %v6376, 4
        %v6378 = vmax.f32 %v6376, %v6377
        %v6379 = vrot.slane %v6378, 2
        %v6380 = vmax.f32 %v6378, %v6379
        %v6381 = vrot.slane %v6380, 1
        %v6382 = vmax.f32 %v6380, %v6381
        %v6383 = vmax.f32 %v6065, %v6066
        %v6384 = vrot.slane %v6383, 4
        %v6385 = vmax.f32 %v6383, %v6384
        %v6386 = vrot.slane %v6385, 2
        %v6387 = vmax.f32 %v6385, %v6386
        %v6388 = vrot.slane %v6387, 1
        %v6389 = vmax.f32 %v6387, %v6388
        %v6390 = vmax.f32 %v6067, %v6068
        %v6391 = vrot.slane %v6390, 4
        %v6392 = vmax.f32 %v6390, %v6391
        %v6393 = vrot.slane %v6392, 2
        %v6394 = vmax.f32 %v6392, %v6393
        %v6395 = vrot.slane %v6394, 1
        %v6396 = vmax.f32 %v6394, %v6395
        %v6397 = vmax.f32 %v6069, %v6070
        %v6398 = vrot.slane %v6397, 4
        %v6399 = vmax.f32 %v6397, %v6398
        %v6400 = vrot.slane %v6399, 2
        %v6401 = vmax.f32 %v6399, %v6400
        %v6402 = vrot.slane %v6401, 1
        %v6403 = vmax.f32 %v6401, %v6402
        %v6404 = vmax.f32 %v6071, %v6072
        %v6405 = vrot.slane %v6404, 4
        %v6406 = vmax.f32 %v6404, %v6405
        %v6407 = vrot.slane %v6406, 2
        %v6408 = vmax.f32 %v6406, %v6407
        %v6409 = vrot.slane %v6408, 1
        %v6410 = vmax.f32 %v6408, %v6409
        %v6411 = vmax.f32 %v6073, %v6074
        %v6412 = vrot.slane %v6411, 4
        %v6413 = vmax.f32 %v6411, %v6412
        %v6414 = vrot.slane %v6413, 2
        %v6415 = vmax.f32 %v6413, %v6414
        %v6416 = vrot.slane %v6415, 1
        %v6417 = vmax.f32 %v6415, %v6416
        %v6418 = vmax.f32 %v6075, %v6076
        %v6419 = vrot.slane %v6418, 4
        %v6420 = vmax.f32 %v6418, %v6419
        %v6421 = vrot.slane %v6420, 2
        %v6422 = vmax.f32 %v6420, %v6421
        %v6423 = vrot.slane %v6422, 1
        %v6424 = vmax.f32 %v6422, %v6423
        %v6425 = vmax.f32 %v6077, %v6078
        %v6426 = vrot.slane %v6425, 4
        %v6427 = vmax.f32 %v6425, %v6426
        %v6428 = vrot.slane %v6427, 2
        %v6429 = vmax.f32 %v6427, %v6428
        %v6430 = vrot.slane %v6429, 1
        %v6431 = vmax.f32 %v6429, %v6430
        %v6432 = vmax.f32 %v6079, %v6080
        %v6433 = vrot.slane %v6432, 4
        %v6434 = vmax.f32 %v6432, %v6433
        %v6435 = vrot.slane %v6434, 2
        %v6436 = vmax.f32 %v6434, %v6435
        %v6437 = vrot.slane %v6436, 1
        %v6438 = vmax.f32 %v6436, %v6437
        %v6439 = vmax.f32 %v6081, %v6082
        %v6440 = vrot.slane %v6439, 4
        %v6441 = vmax.f32 %v6439, %v6440
        %v6442 = vrot.slane %v6441, 2
        %v6443 = vmax.f32 %v6441, %v6442
        %v6444 = vrot.slane %v6443, 1
        %v6445 = vmax.f32 %v6443, %v6444
        %v6446 = vmax.f32 %v6083, %v6084
        %v6447 = vrot.slane %v6446, 4
        %v6448 = vmax.f32 %v6446, %v6447
        %v6449 = vrot.slane %v6448, 2
        %v6450 = vmax.f32 %v6448, %v6449
        %v6451 = vrot.slane %v6450, 1
        %v6452 = vmax.f32 %v6450, %v6451
        %v6453 = vmax.f32 %v6085, %v6086
        %v6454 = vrot.slane %v6453, 4
        %v6455 = vmax.f32 %v6453, %v6454
        %v6456 = vrot.slane %v6455, 2
        %v6457 = vmax.f32 %v6455, %v6456
        %v6458 = vrot.slane %v6457, 1
        %v6459 = vmax.f32 %v6457, %v6458
        %v6460 = vmax.f32 %v6087, %v6088
        %v6461 = vrot.slane %v6460, 4
        %v6462 = vmax.f32 %v6460, %v6461
        %v6463 = vrot.slane %v6462, 2
        %v6464 = vmax.f32 %v6462, %v6463
        %v6465 = vrot.slane %v6464, 1
        %v6466 = vmax.f32 %v6464, %v6465
        %v6467 = vmax.f32 %v6089, %v6090
        %v6468 = vrot.slane %v6467, 4
        %v6469 = vmax.f32 %v6467, %v6468
        %v6470 = vrot.slane %v6469, 2
        %v6471 = vmax.f32 %v6469, %v6470
        %v6472 = vrot.slane %v6471, 1
        %v6473 = vmax.f32 %v6471, %v6472
        %v6474 = vmax.f32 %v6091, %v6092
        %v6475 = vrot.slane %v6474, 4
        %v6476 = vmax.f32 %v6474, %v6475
        %v6477 = vrot.slane %v6476, 2
        %v6478 = vmax.f32 %v6476, %v6477
        %v6479 = vrot.slane %v6478, 1
        %v6480 = vmax.f32 %v6478, %v6479
        %v6481 = vmax.f32 %v6093, %v6094
        %v6482 = vrot.slane %v6481, 4
        %v6483 = vmax.f32 %v6481, %v6482
        %v6484 = vrot.slane %v6483, 2
        %v6485 = vmax.f32 %v6483, %v6484
        %v6486 = vrot.slane %v6485, 1
        %v6487 = vmax.f32 %v6485, %v6486
        %v6488 = vmax.f32 %v6095, %v6096
        %v6489 = vrot.slane %v6488, 4
        %v6490 = vmax.f32 %v6488, %v6489
        %v6491 = vrot.slane %v6490, 2
        %v6492 = vmax.f32 %v6490, %v6491
        %v6493 = vrot.slane %v6492, 1
        %v6494 = vmax.f32 %v6492, %v6493
        %v6495 = vmax.f32 %v6097, %v6098
        %v6496 = vrot.slane %v6495, 4
        %v6497 = vmax.f32 %v6495, %v6496
        %v6498 = vrot.slane %v6497, 2
        %v6499 = vmax.f32 %v6497, %v6498
        %v6500 = vrot.slane %v6499, 1
        %v6501 = vmax.f32 %v6499, %v6500
        %v6502 = vmax.f32 %v6099, %v6100
        %v6503 = vrot.slane %v6502, 4
        %v6504 = vmax.f32 %v6502, %v6503
        %v6505 = vrot.slane %v6504, 2
        %v6506 = vmax.f32 %v6504, %v6505
        %v6507 = vrot.slane %v6506, 1
        %v6508 = vmax.f32 %v6506, %v6507
        %v6509 = vmax.f32 %v6101, %v6102
        %v6510 = vrot.slane %v6509, 4
        %v6511 = vmax.f32 %v6509, %v6510
        %v6512 = vrot.slane %v6511, 2
        %v6513 = vmax.f32 %v6511, %v6512
        %v6514 = vrot.slane %v6513, 1
        %v6515 = vmax.f32 %v6513, %v6514
        %v6516 = vmax.f32 %v6103, %v6104
        %v6517 = vrot.slane %v6516, 4
        %v6518 = vmax.f32 %v6516, %v6517
        %v6519 = vrot.slane %v6518, 2
        %v6520 = vmax.f32 %v6518, %v6519
        %v6521 = vrot.slane %v6520, 1
        %v6522 = vmax.f32 %v6520, %v6521
        %v6523 = vmax.f32 %v6105, %v6106
        %v6524 = vrot.slane %v6523, 4
        %v6525 = vmax.f32 %v6523, %v6524
        %v6526 = vrot.slane %v6525, 2
        %v6527 = vmax.f32 %v6525, %v6526
        %v6528 = vrot.slane %v6527, 1
        %v6529 = vmax.f32 %v6527, %v6528
        %v6530 = vmax.f32 %v6107, %v6108
        %v6531 = vrot.slane %v6530, 4
        %v6532 = vmax.f32 %v6530, %v6531
        %v6533 = vrot.slane %v6532, 2
        %v6534 = vmax.f32 %v6532, %v6533
        %v6535 = vrot.slane %v6534, 1
        %v6536 = vmax.f32 %v6534, %v6535
        %v6537 = vmax.f32 %v6109, %v6110
        %v6538 = vrot.slane %v6537, 4
        %v6539 = vmax.f32 %v6537, %v6538
        %v6540 = vrot.slane %v6539, 2
        %v6541 = vmax.f32 %v6539, %v6540
        %v6542 = vrot.slane %v6541, 1
        %v6543 = vmax.f32 %v6541, %v6542
        %v6544 = vmax.f32 %v6111, %v6112
        %v6545 = vrot.slane %v6544, 4
        %v6546 = vmax.f32 %v6544, %v6545
        %v6547 = vrot.slane %v6546, 2
        %v6548 = vmax.f32 %v6546, %v6547
        %v6549 = vrot.slane %v6548, 1
        %v6550 = vmax.f32 %v6548, %v6549
        %v6551 = vmax.f32 %v6113, %v6114
        %v6552 = vrot.slane %v6551, 4
        %v6553 = vmax.f32 %v6551, %v6552
        %v6554 = vrot.slane %v6553, 2
        %v6555 = vmax.f32 %v6553, %v6554
        %v6556 = vrot.slane %v6555, 1
        %v6557 = vmax.f32 %v6555, %v6556
        %v6558 = vmax.f32 %v6115, %v6116
        %v6559 = vrot.slane %v6558, 4
        %v6560 = vmax.f32 %v6558, %v6559
        %v6561 = vrot.slane %v6560, 2
        %v6562 = vmax.f32 %v6560, %v6561
        %v6563 = vrot.slane %v6562, 1
        %v6564 = vmax.f32 %v6562, %v6563
        %v6565 = vpack.c.bf16 %v6123, %v6123
        %v6566 = vpack.c.bf16 %v6130, %v6130
        %v6567 = vpack.c.bf16 %v6137, %v6137
        %v6568 = vpack.c.bf16 %v6144, %v6144
        %v6569 = vpack.c.bf16 %v6151, %v6151
        %v6570 = vpack.c.bf16 %v6158, %v6158
        %v6571 = vpack.c.bf16 %v6165, %v6165
        %v6572 = vpack.c.bf16 %v6172, %v6172
        %v6573 = vpack.c.bf16 %v6179, %v6179
        %v6574 = vpack.c.bf16 %v6186, %v6186
        %v6575 = vpack.c.bf16 %v6193, %v6193
        %v6576 = vpack.c.bf16 %v6200, %v6200
        %v6577 = vpack.c.bf16 %v6207, %v6207
        %v6578 = vpack.c.bf16 %v6214, %v6214
        %v6579 = vpack.c.bf16 %v6221, %v6221
        %v6580 = vpack.c.bf16 %v6228, %v6228
        %v6581 = vpack.c.bf16 %v6235, %v6235
        %v6582 = vpack.c.bf16 %v6242, %v6242
        %v6583 = vpack.c.bf16 %v6249, %v6249
        %v6584 = vpack.c.bf16 %v6256, %v6256
        %v6585 = vpack.c.bf16 %v6263, %v6263
        %v6586 = vpack.c.bf16 %v6270, %v6270
        %v6587 = vpack.c.bf16 %v6277, %v6277
        %v6588 = vpack.c.bf16 %v6284, %v6284
        %v6589 = vpack.c.bf16 %v6291, %v6291
        %v6590 = vpack.c.bf16 %v6298, %v6298
        %v6591 = vpack.c.bf16 %v6305, %v6305
        %v6592 = vpack.c.bf16 %v6312, %v6312
        %v6593 = vpack.c.bf16 %v6319, %v6319
        %v6594 = vpack.c.bf16 %v6326, %v6326
        %v6595 = vpack.c.bf16 %v6333, %v6333
        %v6596 = vpack.c.bf16 %v6340, %v6340
        %v6597 = vpack.c.bf16 %v6347, %v6347
        %v6598 = vpack.c.bf16 %v6354, %v6354
        %v6599 = vpack.c.bf16 %v6361, %v6361
        %v6600 = vpack.c.bf16 %v6368, %v6368
        %v6601 = vpack.c.bf16 %v6375, %v6375
        %v6602 = vpack.c.bf16 %v6382, %v6382
        %v6603 = vpack.c.bf16 %v6389, %v6389
        %v6604 = vpack.c.bf16 %v6396, %v6396
        %v6605 = vpack.c.bf16 %v6403, %v6403
        %v6606 = vpack.c.bf16 %v6410, %v6410
        %v6607 = vpack.c.bf16 %v6417, %v6417
        %v6608 = vpack.c.bf16 %v6424, %v6424
        %v6609 = vpack.c.bf16 %v6431, %v6431
        %v6610 = vpack.c.bf16 %v6438, %v6438
        %v6611 = vpack.c.bf16 %v6445, %v6445
        %v6612 = vpack.c.bf16 %v6452, %v6452
        %v6613 = vpack.c.bf16 %v6459, %v6459
        %v6614 = vpack.c.bf16 %v6466, %v6466
        %v6615 = vpack.c.bf16 %v6473, %v6473
        %v6616 = vpack.c.bf16 %v6480, %v6480
        %v6617 = vpack.c.bf16 %v6487, %v6487
        %v6618 = vpack.c.bf16 %v6494, %v6494
        %v6619 = vpack.c.bf16 %v6501, %v6501
        %v6620 = vpack.c.bf16 %v6508, %v6508
        %v6621 = vpack.c.bf16 %v6515, %v6515
        %v6622 = vpack.c.bf16 %v6522, %v6522
        %v6623 = vpack.c.bf16 %v6529, %v6529
        %v6624 = vpack.c.bf16 %v6536, %v6536
        %v6625 = vpack.c.bf16 %v6543, %v6543
        %v6626 = vpack.c.bf16 %v6550, %v6550
        %v6627 = vpack.c.bf16 %v6557, %v6557
        %v6628 = vpack.c.bf16 %v6564, %v6564
        %v6629 = vld [vmem:[%s2 + $0xc] sm:$0xf]
        %v6630 = vld [vmem:[%s2 + $0x24] sm:$0xf]
        %v6631 = vld [vmem:[%s2 + $0x3c] sm:$0xf]
        %v6632 = vld [vmem:[%s2 + $0x54] sm:$0xf]
        %v6633 = vld [vmem:[%s2 + $0x6c] sm:$0xf]
        %v6634 = vld [vmem:[%s2 + $0x84] sm:$0xf]
        %v6635 = vld [vmem:[%s2 + $0x9c] sm:$0xf]
        %v6636 = vld [vmem:[%s2 + $0xb4] sm:$0xf]
        %v6637 = vld [vmem:[%s2 + $0xcc] sm:$0xf]
        %v6638 = vld [vmem:[%s2 + $0xe4] sm:$0xf]
        %v6639 = vld [vmem:[%s2 + $0xfc] sm:$0xf]
        %v6640 = vld [vmem:[%s2 + $0x114] sm:$0xf]
        %v6641 = vld [vmem:[%s2 + $0x12c] sm:$0xf]
        %v6642 = vld [vmem:[%s2 + $0x144] sm:$0xf]
        %v6643 = vld [vmem:[%s2 + $0x15c] sm:$0xf]
        %v6644 = vld [vmem:[%s2 + $0x174] sm:$0xf]
        %v6645 = vld [vmem:[%s3 + $0x4] sm:$0x1]
        %v6646 = vlaneseq
        %v6647 = vshrl.u32 %v6646, 7
        %v6648 = vsub.s32 0, %v6647
        %v6649 = vrot.slane %v6645, %v6648
        %v6714 = vunpack.c.l.b16 %v6565
        %v6715 = vunpack.c.l.b16 %v6566
        %v6716 = vunpack.c.l.b16 %v6567
        %v6717 = vunpack.c.l.b16 %v6568
        %v6718 = vunpack.c.l.b16 %v6569
        %v6719 = vunpack.c.l.b16 %v6570
        %v6720 = vunpack.c.l.b16 %v6571
        %v6721 = vunpack.c.l.b16 %v6572
        %v6722 = vunpack.c.l.b16 %v6573
        %v6723 = vunpack.c.l.b16 %v6574
        %v6724 = vunpack.c.l.b16 %v6575
        %v6725 = vunpack.c.l.b16 %v6576
        %v6726 = vunpack.c.l.b16 %v6577
        %v6727 = vunpack.c.l.b16 %v6578
        %v6728 = vunpack.c.l.b16 %v6579
        %v6729 = vunpack.c.l.b16 %v6580
        %v6730 = vunpack.c.l.b16 %v6581
        %v6731 = vunpack.c.l.b16 %v6582
        %v6732 = vunpack.c.l.b16 %v6583
        %v6733 = vunpack.c.l.b16 %v6584
        %v6734 = vunpack.c.l.b16 %v6585
        %v6735 = vunpack.c.l.b16 %v6586
        %v6736 = vunpack.c.l.b16 %v6587
        %v6737 = vunpack.c.l.b16 %v6588
        %v6738 = vunpack.c.l.b16 %v6589
        %v6739 = vunpack.c.l.b16 %v6590
        %v6740 = vunpack.c.l.b16 %v6591
        %v6741 = vunpack.c.l.b16 %v6592
        %v6742 = vunpack.c.l.b16 %v6593
        %v6743 = vunpack.c.l.b16 %v6594
        %v6744 = vunpack.c.l.b16 %v6595
        %v6745 = vunpack.c.l.b16 %v6596
        %v6746 = vunpack.c.l.b16 %v6597
        %v6747 = vunpack.c.l.b16 %v6598
        %v6748 = vunpack.c.l.b16 %v6599
        %v6749 = vunpack.c.l.b16 %v6600
        %v6750 = vunpack.c.l.b16 %v6601
        %v6751 = vunpack.c.l.b16 %v6602
        %v6752 = vunpack.c.l.b16 %v6603
        %v6753 = vunpack.c.l.b16 %v6604
        %v6754 = vunpack.c.l.b16 %v6605
        %v6755 = vunpack.c.l.b16 %v6606
        %v6756 = vunpack.c.l.b16 %v6607
        %v6757 = vunpack.c.l.b16 %v6608
        %v6758 = vunpack.c.l.b16 %v6609
        %v6759 = vunpack.c.l.b16 %v6610
        %v6760 = vunpack.c.l.b16 %v6611
        %v6761 = vunpack.c.l.b16 %v6612
        %v6762 = vunpack.c.l.b16 %v6613
        %v6763 = vunpack.c.l.b16 %v6614
        %v6764 = vunpack.c.l.b16 %v6615
        %v6765 = vunpack.c.l.b16 %v6616
        %v6766 = vunpack.c.l.b16 %v6617
        %v6767 = vunpack.c.l.b16 %v6618
        %v6768 = vunpack.c.l.b16 %v6619
        %v6769 = vunpack.c.l.b16 %v6620
        %v6770 = vunpack.c.l.b16 %v6621
        %v6771 = vunpack.c.l.b16 %v6622
        %v6772 = vunpack.c.l.b16 %v6623
        %v6773 = vunpack.c.l.b16 %v6624
        %v6774 = vunpack.c.l.b16 %v6625
        %v6775 = vunpack.c.l.b16 %v6626
        %v6776 = vunpack.c.l.b16 %v6627
        %v6777 = vunpack.c.l.b16 %v6628
        %v6778 = vsel %vm2444, %v6715, %v6714
        %v6779 = vsel %vm2446, %v6716, %v6778
        %v6780 = vsel %vm2448, %v6717, %v6779
        %v6781 = vsel %vm2450, %v6718, %v6780
        %v6782 = vsel %vm2452, %v6719, %v6781
        %v6783 = vsel %vm2454, %v6720, %v6782
        %v6784 = vsel %vm2456, %v6721, %v6783
        %v6785 = vsel %vm2444, %v6723, %v6722
        %v6786 = vsel %vm2446, %v6724, %v6785
        %v6787 = vsel %vm2448, %v6725, %v6786
        %v6788 = vsel %vm2450, %v6726, %v6787
        %v6789 = vsel %vm2452, %v6727, %v6788
        %v6790 = vsel %vm2454, %v6728, %v6789
        %v6791 = vsel %vm2456, %v6729, %v6790
        %v6792 = vsel %vm2444, %v6731, %v6730
        %v6793 = vsel %vm2446, %v6732, %v6792
        %v6794 = vsel %vm2448, %v6733, %v6793
        %v6795 = vsel %vm2450, %v6734, %v6794
        %v6796 = vsel %vm2452, %v6735, %v6795
        %v6797 = vsel %vm2454, %v6736, %v6796
        %v6798 = vsel %vm2456, %v6737, %v6797
        %v6799 = vsel %vm2444, %v6739, %v6738
        %v6800 = vsel %vm2446, %v6740, %v6799
        %v6801 = vsel %vm2448, %v6741, %v6800
        %v6802 = vsel %vm2450, %v6742, %v6801
        %v6803 = vsel %vm2452, %v6743, %v6802
        %v6804 = vsel %vm2454, %v6744, %v6803
        %v6805 = vsel %vm2456, %v6745, %v6804
        %v6806 = vsel %vm2444, %v6747, %v6746
        %v6807 = vsel %vm2446, %v6748, %v6806
        %v6808 = vsel %vm2448, %v6749, %v6807
        %v6809 = vsel %vm2450, %v6750, %v6808
        %v6810 = vsel %vm2452, %v6751, %v6809
        %v6811 = vsel %vm2454, %v6752, %v6810
        %v6812 = vsel %vm2456, %v6753, %v6811
        %v6813 = vsel %vm2444, %v6755, %v6754
        %v6814 = vsel %vm2446, %v6756, %v6813
        %v6815 = vsel %vm2448, %v6757, %v6814
        %v6816 = vsel %vm2450, %v6758, %v6815
        %v6817 = vsel %vm2452, %v6759, %v6816
        %v6818 = vsel %vm2454, %v6760, %v6817
        %v6819 = vsel %vm2456, %v6761, %v6818
        %v6820 = vsel %vm2444, %v6763, %v6762
        %v6821 = vsel %vm2446, %v6764, %v6820
        %v6822 = vsel %vm2448, %v6765, %v6821
        %v6823 = vsel %vm2450, %v6766, %v6822
        %v6824 = vsel %vm2452, %v6767, %v6823
        %v6825 = vsel %vm2454, %v6768, %v6824
        %v6826 = vsel %vm2456, %v6769, %v6825
        %v6827 = vsel %vm2444, %v6771, %v6770
        %v6828 = vsel %vm2446, %v6772, %v6827
        %v6829 = vsel %vm2448, %v6773, %v6828
        %v6830 = vsel %vm2450, %v6774, %v6829
        %v6831 = vsel %vm2452, %v6775, %v6830
        %v6832 = vsel %vm2454, %v6776, %v6831
        %v6833 = vsel %vm2456, %v6777, %v6832
        %v6834 = vpack.c.b16 %v6791, %v6784
        %v6835 = vpack.c.b16 %v6805, %v6798
        %v6836 = vpack.c.b16 %v6819, %v6812
        %v6837 = vpack.c.b16 %v6833, %v6826
        %v6858 = vunpack.c.l.b16 %v6629
        %v6859 = vunpack.c.l.b16 %v6630
        %v6860 = vunpack.c.l.b16 %v6631
        %v6861 = vunpack.c.l.b16 %v6632
        %v6862 = vunpack.c.l.b16 %v6633
        %v6863 = vunpack.c.l.b16 %v6634
        %v6864 = vunpack.c.l.b16 %v6635
        %v6865 = vunpack.c.l.b16 %v6636
        %v6866 = vunpack.c.l.b16 %v6637
        %v6867 = vunpack.c.l.b16 %v6638
        %v6868 = vunpack.c.l.b16 %v6639
        %v6869 = vunpack.c.l.b16 %v6640
        %v6870 = vunpack.c.l.b16 %v6641
        %v6871 = vunpack.c.l.b16 %v6642
        %v6872 = vunpack.c.l.b16 %v6643
        %v6873 = vunpack.c.l.b16 %v6644
        %v6874 = vpack.c.b16 %v6859, %v6858
        %v6875 = vpack.c.b16 %v6861, %v6860
        %v6876 = vpack.c.b16 %v6863, %v6862
        %v6877 = vpack.c.b16 %v6865, %v6864
        %v6878 = vpack.c.b16 %v6867, %v6866
        %v6879 = vpack.c.b16 %v6869, %v6868
        %v6880 = vpack.c.b16 %v6871, %v6870
        %v6881 = vpack.c.b16 %v6873, %v6872
        %6890 = vmatprep.subr.bf16.mxu0 0
        %6891 = vmatpush1.bf16.msra.mxu0 %v6874
        %6892 = vmatprep.subr.bf16.mxu0 0
        %6893 = vmatpush1.bf16.msra.mxu0 %v6875
        %6894 = vmatprep.subr.bf16.mxu0 0
        %6895 = vmatpush1.bf16.msra.mxu0 %v6876
        %6896 = vmatprep.subr.bf16.mxu0 0
        %6897 = vmatpush1.bf16.msra.mxu0 %v6877
        %6898 = vmatprep.subr.bf16.mxu0 0
        %6899 = vmatpush1.bf16.msra.mxu0 %v6878
        %6900 = vmatprep.subr.bf16.mxu0 0
        %6901 = vmatpush1.bf16.msra.mxu0 %v6879
        %6902 = vmatprep.subr.bf16.mxu0 0
        %6903 = vmatpush1.bf16.msra.mxu0 %v6880
        %6904 = vmatprep.subr.bf16.mxu0 0
        %6905 = vmatpush1.bf16.msra.mxu0 %v6881
        %6906 = vmatprep.subr.bf16.mxu0 0
        %6907 = vmatpush1.bf16.msra.mxu0 0
        %6908 = vmatprep.subr.bf16.mxu0 0
        %6909 = vmatpush1.bf16.msra.mxu0 0
        %6910 = vmatprep.subr.bf16.mxu0 0
        %6911 = vmatpush1.bf16.msra.mxu0 0
        %6912 = vmatprep.subr.bf16.mxu0 0
        %6913 = vmatpush1.bf16.msra.mxu0 0
        %6914 = vmatprep.subr.bf16.mxu0 0
        %6915 = vmatpush1.bf16.msra.mxu0 0
        %6916 = vmatprep.subr.bf16.mxu0 0
        %6917 = vmatpush1.bf16.msra.mxu0 0
        %6918 = vmatprep.subr.bf16.mxu0 0
        %6919 = vmatpush1.bf16.msra.mxu0 0
        %6920 = vmatprep.subr.bf16.mxu0 0
        %6921 = vmatpush1.bf16.msra.mxu0 0
        %6922 = vmatprep.mubr.bf16.mxu0 0
        %6923 = vmatmul.mubr.bf16.gmra.mrb[0].mxu0 %v6834
        %v6924 = vpop.f32.mrb[0].mxu0
        %v6925 = vadd.f32 %v6649, %v6924
        %v6926 = vpop.f32.mrb[0].mxu0
        %v6927 = vpop.f32.mrb[0].mxu0
        %v6928 = vadd.f32 %v6649, %v6927
        %v6929 = vpop.f32.mrb[0].mxu0
        %6930 = vmatprep.mubr.bf16.mxu0 0
        %6931 = vmatmul.mubr.bf16.gmra.mrb[0].mxu0 %v6835
        %v6932 = vpop.f32.mrb[0].mxu0
        %v6933 = vadd.f32 %v6649, %v6932
        %v6934 = vpop.f32.mrb[0].mxu0
        %v6935 = vpop.f32.mrb[0].mxu0
        %v6936 = vadd.f32 %v6649, %v6935
        %v6937 = vpop.f32.mrb[0].mxu0
        %6938 = vmatprep.mubr.bf16.mxu0 0
        %6939 = vmatmul.mubr.bf16.gmra.mrb[0].mxu0 %v6836
        %v6940 = vpop.f32.mrb[0].mxu0
        %v6941 = vadd.f32 %v6649, %v6940
        %v6942 = vpop.f32.mrb[0].mxu0
        %v6943 = vpop.f32.mrb[0].mxu0
        %v6944 = vadd.f32 %v6649, %v6943
        %v6945 = vpop.f32.mrb[0].mxu0
        %6946 = vmatprep.mubr.bf16.mxu0 0
        %6947 = vmatmul.mubr.bf16.gmra.mrb[0].mxu0 %v6837
        %v6948 = vpop.f32.mrb[0].mxu0
        %v6949 = vadd.f32 %v6649, %v6948
        %v6950 = vpop.f32.mrb[0].mxu0
        %v6951 = vpop.f32.mrb[0].mxu0
        %v6952 = vadd.f32 %v6649, %v6951
        %v6953 = vpop.f32.mrb[0].mxu0
        %6954 = vdwg.mxu0
        %v6955 = vmax.f32 %v6925, 0.0
        %v6956 = vmax.f32 %v6928, 0.0
        %v6957 = vmax.f32 %v6933, 0.0
        %v6958 = vmax.f32 %v6936, 0.0
        %v6959 = vmax.f32 %v6941, 0.0
        %v6960 = vmax.f32 %v6944, 0.0
        %v6961 = vmax.f32 %v6949, 0.0
        %v6962 = vmax.f32 %v6952, 0.0
        %v6963 = vpack.c.bf16 %v6956, %v6955
        %v6964 = vpack.c.bf16 %v6958, %v6957
        %v6965 = vpack.c.bf16 %v6960, %v6959
        %v6966 = vpack.c.bf16 %v6962, %v6961
        %v6967 = vld [vmem:[%s2 + $0x10] sm:$0xf]
        %v6968 = vld [vmem:[%s2 + $0x28] sm:$0xf]
        %v6969 = vld [vmem:[%s2 + $0x40] sm:$0xf]
        %v6970 = vld [vmem:[%s2 + $0x58] sm:$0xf]
        %v6971 = vld [vmem:[%s2 + $0x70] sm:$0xf]
        %v6972 = vld [vmem:[%s2 + $0x88] sm:$0xf]
        %v6973 = vld [vmem:[%s2 + $0xa0] sm:$0xf]
        %v6974 = vld [vmem:[%s2 + $0xb8] sm:$0xf]
        %v6975 = vld [vmem:[%s2 + $0xd0] sm:$0xf]
        %v6976 = vld [vmem:[%s2 + $0xe8] sm:$0xf]
        %v6977 = vld [vmem:[%s2 + $0x100] sm:$0xf]
        %v6978 = vld [vmem:[%s2 + $0x118] sm:$0xf]
        %v6979 = vld [vmem:[%s2 + $0x130] sm:$0xf]
        %v6980 = vld [vmem:[%s2 + $0x148] sm:$0xf]
        %v6981 = vld [vmem:[%s2 + $0x160] sm:$0xf]
        %v6982 = vld [vmem:[%s2 + $0x178] sm:$0xf]
        %v6983 = vld [vmem:[%s3 + $0x5] sm:$0x1]
        %v6984 = vlaneseq
        %v6985 = vshrl.u32 %v6984, 7
        %v6986 = vsub.s32 0, %v6985
        %v6987 = vrot.slane %v6983, %v6986
        %v7004 = vunpack.c.l.b16 %v6967
        %v7005 = vunpack.c.l.b16 %v6968
        %v7006 = vunpack.c.l.b16 %v6969
        %v7007 = vunpack.c.l.b16 %v6970
        %v7008 = vunpack.c.l.b16 %v6971
        %v7009 = vunpack.c.l.b16 %v6972
        %v7010 = vunpack.c.l.b16 %v6973
        %v7011 = vunpack.c.l.b16 %v6974
        %v7012 = vunpack.c.l.b16 %v6975
        %v7013 = vunpack.c.l.b16 %v6976
        %v7014 = vunpack.c.l.b16 %v6977
        %v7015 = vunpack.c.l.b16 %v6978
        %v7016 = vunpack.c.l.b16 %v6979
        %v7017 = vunpack.c.l.b16 %v6980
        %v7018 = vunpack.c.l.b16 %v6981
        %v7019 = vunpack.c.l.b16 %v6982
        %v7020 = vpack.c.b16 %v7005, %v7004
        %v7021 = vpack.c.b16 %v7007, %v7006
        %v7022 = vpack.c.b16 %v7009, %v7008
        %v7023 = vpack.c.b16 %v7011, %v7010
        %v7024 = vpack.c.b16 %v7013, %v7012
        %v7025 = vpack.c.b16 %v7015, %v7014
        %v7026 = vpack.c.b16 %v7017, %v7016
        %v7027 = vpack.c.b16 %v7019, %v7018
        %7036 = vmatprep.subr.bf16.mxu0 0
        %7037 = vmatpush1.bf16.msra.mxu0 %v7020
        %7038 = vmatprep.subr.bf16.mxu0 0
        %7039 = vmatpush1.bf16.msra.mxu0 %v7021
        %7040 = vmatprep.subr.bf16.mxu0 0
        %7041 = vmatpush1.bf16.msra.mxu0 %v7022
        %7042 = vmatprep.subr.bf16.mxu0 0
        %7043 = vmatpush1.bf16.msra.mxu0 %v7023
        %7044 = vmatprep.subr.bf16.mxu0 0
        %7045 = vmatpush1.bf16.msra.mxu0 %v7024
        %7046 = vmatprep.subr.bf16.mxu0 0
        %7047 = vmatpush1.bf16.msra.mxu0 %v7025
        %7048 = vmatprep.subr.bf16.mxu0 0
        %7049 = vmatpush1.bf16.msra.mxu0 %v7026
        %7050 = vmatprep.subr.bf16.mxu0 0
        %7051 = vmatpush1.bf16.msra.mxu0 %v7027
        %7052 = vmatprep.subr.bf16.mxu0 0
        %7053 = vmatpush1.bf16.msra.mxu0 0
        %7054 = vmatprep.subr.bf16.mxu0 0
        %7055 = vmatpush1.bf16.msra.mxu0 0
        %7056 = vmatprep.subr.bf16.mxu0 0
        %7057 = vmatpush1.bf16.msra.mxu0 0
        %7058 = vmatprep.subr.bf16.mxu0 0
        %7059 = vmatpush1.bf16.msra.mxu0 0
        %7060 = vmatprep.subr.bf16.mxu0 0
        %7061 = vmatpush1.bf16.msra.mxu0 0
        %7062 = vmatprep.subr.bf16.mxu0 0
        %7063 = vmatpush1.bf16.msra.mxu0 0
        %7064 = vmatprep.subr.bf16.mxu0 0
        %7065 = vmatpush1.bf16.msra.mxu0 0
        %7066 = vmatprep.subr.bf16.mxu0 0
        %7067 = vmatpush1.bf16.msra.mxu0 0
        %7068 = vmatprep.mubr.bf16.mxu0 0
        %7069 = vmatmul.mubr.bf16.gmra.mrb[0].mxu0 %v6963
        %v7070 = vpop.f32.mrb[0].mxu0
        %v7071 = vadd.f32 %v6987, %v7070
        %v7072 = vpop.f32.mrb[0].mxu0
        %v7073 = vpop.f32.mrb[0].mxu0
        %v7074 = vadd.f32 %v6987, %v7073
        %v7075 = vpop.f32.mrb[0].mxu0
        %7076 = vmatprep.mubr.bf16.mxu0 0
        %7077 = vmatmul.mubr.bf16.gmra.mrb[0].mxu0 %v6964
        %v7078 = vpop.f32.mrb[0].mxu0
        %v7079 = vadd.f32 %v6987, %v7078
        %v7080 = vpop.f32.mrb[0].mxu0
        %v7081 = vpop.f32.mrb[0].mxu0
        %v7082 = vadd.f32 %v6987, %v7081
        %v7083 = vpop.f32.mrb[0].mxu0
        %7084 = vmatprep.mubr.bf16.mxu0 0
        %7085 = vmatmul.mubr.bf16.gmra.mrb[0].mxu0 %v6965
        %v7086 = vpop.f32.mrb[0].mxu0
        %v7087 = vadd.f32 %v6987, %v7086
        %v7088 = vpop.f32.mrb[0].mxu0
        %v7089 = vpop.f32.mrb[0].mxu0
        %v7090 = vadd.f32 %v6987, %v7089
        %v7091 = vpop.f32.mrb[0].mxu0
        %7092 = vmatprep.mubr.bf16.mxu0 0
        %7093 = vmatmul.mubr.bf16.gmra.mrb[0].mxu0 %v6966
        %v7094 = vpop.f32.mrb[0].mxu0
        %v7095 = vadd.f32 %v6987, %v7094
        %v7096 = vpop.f32.mrb[0].mxu0
        %v7097 = vpop.f32.mrb[0].mxu0
        %v7098 = vadd.f32 %v6987, %v7097
        %v7099 = vpop.f32.mrb[0].mxu0
        %7100 = vdwg.mxu0
        %v7101 = vmax.f32 %v7071, 0.0
        %v7102 = vmax.f32 %v7074, 0.0
        %v7103 = vmax.f32 %v7079, 0.0
        %v7104 = vmax.f32 %v7082, 0.0
        %v7105 = vmax.f32 %v7087, 0.0
        %v7106 = vmax.f32 %v7090, 0.0
        %v7107 = vmax.f32 %v7095, 0.0
        %v7108 = vmax.f32 %v7098, 0.0
        %v7109 = vpack.c.bf16 %v7102, %v7101
        %v7110 = vpack.c.bf16 %v7104, %v7103
        %v7111 = vpack.c.bf16 %v7106, %v7105
        %v7112 = vpack.c.bf16 %v7108, %v7107
        %v7113 = vld [vmem:[%s2 + $0x14] sm:$0xf]
        %v7114 = vld [vmem:[%s2 + $0x2c] sm:$0xf]
        %v7115 = vld [vmem:[%s2 + $0x44] sm:$0xf]
        %v7116 = vld [vmem:[%s2 + $0x5c] sm:$0xf]
        %v7117 = vld [vmem:[%s2 + $0x74] sm:$0xf]
        %v7118 = vld [vmem:[%s2 + $0x8c] sm:$0xf]
        %v7119 = vld [vmem:[%s2 + $0xa4] sm:$0xf]
        %v7120 = vld [vmem:[%s2 + $0xbc] sm:$0xf]
        %v7121 = vld [vmem:[%s2 + $0xd4] sm:$0xf]
        %v7122 = vld [vmem:[%s2 + $0xec] sm:$0xf]
        %v7123 = vld [vmem:[%s2 + $0x104] sm:$0xf]
        %v7124 = vld [vmem:[%s2 + $0x11c] sm:$0xf]
        %v7125 = vld [vmem:[%s2 + $0x134] sm:$0xf]
        %v7126 = vld [vmem:[%s2 + $0x14c] sm:$0xf]
        %v7127 = vld [vmem:[%s2 + $0x164] sm:$0xf]
        %v7128 = vld [vmem:[%s2 + $0x17c] sm:$0xf]
        %v7129 = vld [vmem:[%s3 + $0x6] sm:$0x1]
        %v7130 = vlaneseq
        %v7131 = vshrl.u32 %v7130, 7
        %v7132 = vsub.s32 0, %v7131
        %v7133 = vrot.slane %v7129, %v7132
        %v7150 = vunpack.c.l.b16 %v7113
        %v7151 = vunpack.c.l.b16 %v7114
        %v7152 = vunpack.c.l.b16 %v7115
        %v7153 = vunpack.c.l.b16 %v7116
        %v7154 = vunpack.c.l.b16 %v7117
        %v7155 = vunpack.c.l.b16 %v7118
        %v7156 = vunpack.c.l.b16 %v7119
        %v7157 = vunpack.c.l.b16 %v7120
        %v7158 = vunpack.c.l.b16 %v7121
        %v7159 = vunpack.c.l.b16 %v7122
        %v7160 = vunpack.c.l.b16 %v7123
        %v7161 = vunpack.c.l.b16 %v7124
        %v7162 = vunpack.c.l.b16 %v7125
        %v7163 = vunpack.c.l.b16 %v7126
        %v7164 = vunpack.c.l.b16 %v7127
        %v7165 = vunpack.c.l.b16 %v7128
        %v7166 = vpack.c.b16 %v7151, %v7150
        %v7167 = vpack.c.b16 %v7153, %v7152
        %v7168 = vpack.c.b16 %v7155, %v7154
        %v7169 = vpack.c.b16 %v7157, %v7156
        %v7170 = vpack.c.b16 %v7159, %v7158
        %v7171 = vpack.c.b16 %v7161, %v7160
        %v7172 = vpack.c.b16 %v7163, %v7162
        %v7173 = vpack.c.b16 %v7165, %v7164
        %7182 = vmatprep.subr.bf16.mxu0 0
        %7183 = vmatpush1.bf16.msra.mxu0 %v7166
        %7184 = vmatprep.subr.bf16.mxu0 0
        %7185 = vmatpush1.bf16.msra.mxu0 %v7167
        %7186 = vmatprep.subr.bf16.mxu0 0
        %7187 = vmatpush1.bf16.msra.mxu0 %v7168
        %7188 = vmatprep.subr.bf16.mxu0 0
        %7189 = vmatpush1.bf16.msra.mxu0 %v7169
        %7190 = vmatprep.subr.bf16.mxu0 0
        %7191 = vmatpush1.bf16.msra.mxu0 %v7170
        %7192 = vmatprep.subr.bf16.mxu0 0
        %7193 = vmatpush1.bf16.msra.mxu0 %v7171
        %7194 = vmatprep.subr.bf16.mxu0 0
        %7195 = vmatpush1.bf16.msra.mxu0 %v7172
        %7196 = vmatprep.subr.bf16.mxu0 0
        %7197 = vmatpush1.bf16.msra.mxu0 %v7173
        %7198 = vmatprep.subr.bf16.mxu0 0
        %7199 = vmatpush1.bf16.msra.mxu0 0
        %7200 = vmatprep.subr.bf16.mxu0 0
        %7201 = vmatpush1.bf16.msra.mxu0 0
        %7202 = vmatprep.subr.bf16.mxu0 0
        %7203 = vmatpush1.bf16.msra.mxu0 0
        %7204 = vmatprep.subr.bf16.mxu0 0
        %7205 = vmatpush1.bf16.msra.mxu0 0
        %7206 = vmatprep.subr.bf16.mxu0 0
        %7207 = vmatpush1.bf16.msra.mxu0 0
        %7208 = vmatprep.subr.bf16.mxu0 0
        %7209 = vmatpush1.bf16.msra.mxu0 0
        %7210 = vmatprep.subr.bf16.mxu0 0
        %7211 = vmatpush1.bf16.msra.mxu0 0
        %7212 = vmatprep.subr.bf16.mxu0 0
        %7213 = vmatpush1.bf16.msra.mxu0 0
        %7214 = vmatprep.mubr.bf16.mxu0 0
        %7215 = vmatmul.mubr.bf16.gmra.mrb[0].mxu0 %v7109
        %v7216 = vpop.f32.mrb[0].mxu0
        %v7217 = vadd.f32 %v7133, %v7216
        %v7218 = vpop.f32.mrb[0].mxu0
        %v7219 = vpop.f32.mrb[0].mxu0
        %v7220 = vadd.f32 %v7133, %v7219
        %v7221 = vpop.f32.mrb[0].mxu0
        %7222 = vmatprep.mubr.bf16.mxu0 0
        %7223 = vmatmul.mubr.bf16.gmra.mrb[0].mxu0 %v7110
        %v7224 = vpop.f32.mrb[0].mxu0
        %v7225 = vadd.f32 %v7133, %v7224
        %v7226 = vpop.f32.mrb[0].mxu0
        %v7227 = vpop.f32.mrb[0].mxu0
        %v7228 = vadd.f32 %v7133, %v7227
        %v7229 = vpop.f32.mrb[0].mxu0
        %7230 = vmatprep.mubr.bf16.mxu0 0
        %7231 = vmatmul.mubr.bf16.gmra.mrb[0].mxu0 %v7111
        %v7232 = vpop.f32.mrb[0].mxu0
        %v7233 = vadd.f32 %v7133, %v7232
        %v7234 = vpop.f32.mrb[0].mxu0
        %v7235 = vpop.f32.mrb[0].mxu0
        %v7236 = vadd.f32 %v7133, %v7235
        %v7237 = vpop.f32.mrb[0].mxu0
        %7238 = vmatprep.mubr.bf16.mxu0 0
        %7239 = vmatmul.mubr.bf16.gmra.mrb[0].mxu0 %v7112
        %v7240 = vpop.f32.mrb[0].mxu0
        %v7241 = vadd.f32 %v7133, %v7240
        %v7242 = vpop.f32.mrb[0].mxu0
        %v7243 = vpop.f32.mrb[0].mxu0
        %v7244 = vadd.f32 %v7133, %v7243
        %v7245 = vpop.f32.mrb[0].mxu0
        %7246 = vdwg.mxu0
        %v7247 = vmax.f32 %v7217, 0.0
        %v7248 = vmax.f32 %v7220, 0.0
        %v7249 = vmax.f32 %v7225, 0.0
        %v7250 = vmax.f32 %v7228, 0.0
        %v7251 = vmax.f32 %v7233, 0.0
        %v7252 = vmax.f32 %v7236, 0.0
        %v7253 = vmax.f32 %v7241, 0.0
        %v7254 = vmax.f32 %v7244, 0.0
        %v7263 = vrot.slane %v7247, 1
        %v7264 = vrot.slane %v7247, 2
        %v7265 = vrot.slane %v7247, 3
        %v7266 = vrot.slane %v7247, 4
        %v7267 = vrot.slane %v7247, 5
        %v7268 = vrot.slane %v7247, 6
        %v7269 = vrot.slane %v7247, 7
        %v7270 = vrot.slane %v7248, 1
        %v7271 = vrot.slane %v7248, 2
        %v7272 = vrot.slane %v7248, 3
        %v7273 = vrot.slane %v7248, 4
        %v7274 = vrot.slane %v7248, 5
        %v7275 = vrot.slane %v7248, 6
        %v7276 = vrot.slane %v7248, 7
        %v7277 = vrot.slane %v7249, 1
        %v7278 = vrot.slane %v7249, 2
        %v7279 = vrot.slane %v7249, 3
        %v7280 = vrot.slane %v7249, 4
        %v7281 = vrot.slane %v7249, 5
        %v7282 = vrot.slane %v7249, 6
        %v7283 = vrot.slane %v7249, 7
        %v7284 = vrot.slane %v7250, 1
        %v7285 = vrot.slane %v7250, 2
        %v7286 = vrot.slane %v7250, 3
        %v7287 = vrot.slane %v7250, 4
        %v7288 = vrot.slane %v7250, 5
        %v7289 = vrot.slane %v7250, 6
        %v7290 = vrot.slane %v7250, 7
        %v7291 = vrot.slane %v7251, 1
        %v7292 = vrot.slane %v7251, 2
        %v7293 = vrot.slane %v7251, 3
        %v7294 = vrot.slane %v7251, 4
        %v7295 = vrot.slane %v7251, 5
        %v7296 = vrot.slane %v7251, 6
        %v7297 = vrot.slane %v7251, 7
        %v7298 = vrot.slane %v7252, 1
        %v7299 = vrot.slane %v7252, 2
        %v7300 = vrot.slane %v7252, 3
        %v7301 = vrot.slane %v7252, 4
        %v7302 = vrot.slane %v7252, 5
        %v7303 = vrot.slane %v7252, 6
        %v7304 = vrot.slane %v7252, 7
        %v7305 = vrot.slane %v7253, 1
        %v7306 = vrot.slane %v7253, 2
        %v7307 = vrot.slane %v7253, 3
        %v7308 = vrot.slane %v7253, 4
        %v7309 = vrot.slane %v7253, 5
        %v7310 = vrot.slane %v7253, 6
        %v7311 = vrot.slane %v7253, 7
        %v7312 = vrot.slane %v7254, 1
        %v7313 = vrot.slane %v7254, 2
        %v7314 = vrot.slane %v7254, 3
        %v7315 = vrot.slane %v7254, 4
        %v7316 = vrot.slane %v7254, 5
        %v7317 = vrot.slane %v7254, 6
        %v7318 = vrot.slane %v7254, 7
        %v7383 = vadd.f32 %v1794, %v7247
        %v7384 = vadd.f32 %v1801, %v7263
        %v7385 = vadd.f32 %v1808, %v7264
        %v7386 = vadd.f32 %v1815, %v7265
        %v7387 = vadd.f32 %v1822, %v7266
        %v7388 = vadd.f32 %v1829, %v7267
        %v7389 = vadd.f32 %v1836, %v7268
        %v7390 = vadd.f32 %v1843, %v7269
        %v7391 = vadd.f32 %v1850, %v7248
        %v7392 = vadd.f32 %v1857, %v7270
        %v7393 = vadd.f32 %v1864, %v7271
        %v7394 = vadd.f32 %v1871, %v7272
        %v7395 = vadd.f32 %v1878, %v7273
        %v7396 = vadd.f32 %v1885, %v7274
        %v7397 = vadd.f32 %v1892, %v7275
        %v7398 = vadd.f32 %v1899, %v7276
        %v7399 = vadd.f32 %v1906, %v7249
        %v7400 = vadd.f32 %v1913, %v7277
        %v7401 = vadd.f32 %v1920, %v7278
        %v7402 = vadd.f32 %v1927, %v7279
        %v7403 = vadd.f32 %v1934, %v7280
        %v7404 = vadd.f32 %v1941, %v7281
        %v7405 = vadd.f32 %v1948, %v7282
        %v7406 = vadd.f32 %v1955, %v7283
        %v7407 = vadd.f32 %v1962, %v7250
        %v7408 = vadd.f32 %v1969, %v7284
        %v7409 = vadd.f32 %v1976, %v7285
        %v7410 = vadd.f32 %v1983, %v7286
        %v7411 = vadd.f32 %v1990, %v7287
        %v7412 = vadd.f32 %v1997, %v7288
        %v7413 = vadd.f32 %v2004, %v7289
        %v7414 = vadd.f32 %v2011, %v7290
        %v7415 = vadd.f32 %v2018, %v7251
        %v7416 = vadd.f32 %v2025, %v7291
        %v7417 = vadd.f32 %v2032, %v7292
        %v7418 = vadd.f32 %v2039, %v7293
        %v7419 = vadd.f32 %v2046, %v7294
        %v7420 = vadd.f32 %v2053, %v7295
        %v7421 = vadd.f32 %v2060, %v7296
        %v7422 = vadd.f32 %v2067, %v7297
        %v7423 = vadd.f32 %v2074, %v7252
        %v7424 = vadd.f32 %v2081, %v7298
        %v7425 = vadd.f32 %v2088, %v7299
        %v7426 = vadd.f32 %v2095, %v7300
        %v7427 = vadd.f32 %v2102, %v7301
        %v7428 = vadd.f32 %v2109, %v7302
        %v7429 = vadd.f32 %v2116, %v7303
        %v7430 = vadd.f32 %v2123, %v7304
        %v7431 = vadd.f32 %v2130, %v7253
        %v7432 = vadd.f32 %v2137, %v7305
        %v7433 = vadd.f32 %v2144, %v7306
        %v7434 = vadd.f32 %v2151, %v7307
        %v7435 = vadd.f32 %v2158, %v7308
        %v7436 = vadd.f32 %v2165, %v7309
        %v7437 = vadd.f32 %v2172, %v7310
        %v7438 = vadd.f32 %v2179, %v7311
        %v7439 = vadd.f32 %v2186, %v7254
        %v7440 = vadd.f32 %v2193, %v7312
        %v7441 = vadd.f32 %v2200, %v7313
        %v7442 = vadd.f32 %v2207, %v7314
        %v7443 = vadd.f32 %v2214, %v7315
        %v7444 = vadd.f32 %v2221, %v7316
        %v7445 = vadd.f32 %v2228, %v7317
        %v7446 = vadd.f32 %v2235, %v7318
        %v7511 = vrot.slane %v7384, 7
        %v7512 = vsel %vm2444, %v7511, %v7383
        %v7513 = vrot.slane %v7385, 6
        %v7514 = vsel %vm2446, %v7513, %v7512
        %v7515 = vrot.slane %v7386, 5
        %v7516 = vsel %vm2448, %v7515, %v7514
        %v7517 = vrot.slane %v7387, 4
        %v7518 = vsel %vm2450, %v7517, %v7516
        %v7519 = vrot.slane %v7388, 3
        %v7520 = vsel %vm2452, %v7519, %v7518
        %v7521 = vrot.slane %v7389, 2
        %v7522 = vsel %vm2454, %v7521, %v7520
        %v7523 = vrot.slane %v7390, 1
        %v7524 = vsel %vm2456, %v7523, %v7522
        %v7525 = vrot.slane %v7392, 7
        %v7526 = vsel %vm2444, %v7525, %v7391
        %v7527 = vrot.slane %v7393, 6
        %v7528 = vsel %vm2446, %v7527, %v7526
        %v7529 = vrot.slane %v7394, 5
        %v7530 = vsel %vm2448, %v7529, %v7528
        %v7531 = vrot.slane %v7395, 4
        %v7532 = vsel %vm2450, %v7531, %v7530
        %v7533 = vrot.slane %v7396, 3
        %v7534 = vsel %vm2452, %v7533, %v7532
        %v7535 = vrot.slane %v7397, 2
        %v7536 = vsel %vm2454, %v7535, %v7534
        %v7537 = vrot.slane %v7398, 1
        %v7538 = vsel %vm2456, %v7537, %v7536
        %v7539 = vrot.slane %v7400, 7
        %v7540 = vsel %vm2444, %v7539, %v7399
        %v7541 = vrot.slane %v7401, 6
        %v7542 = vsel %vm2446, %v7541, %v7540
        %v7543 = vrot.slane %v7402, 5
        %v7544 = vsel %vm2448, %v7543, %v7542
        %v7545 = vrot.slane %v7403, 4
        %v7546 = vsel %vm2450, %v7545, %v7544
        %v7547 = vrot.slane %v7404, 3
        %v7548 = vsel %vm2452, %v7547, %v7546
        %v7549 = vrot.slane %v7405, 2
        %v7550 = vsel %vm2454, %v7549, %v7548
        %v7551 = vrot.slane %v7406, 1
        %v7552 = vsel %vm2456, %v7551, %v7550
        %v7553 = vrot.slane %v7408, 7
        %v7554 = vsel %vm2444, %v7553, %v7407
        %v7555 = vrot.slane %v7409, 6
        %v7556 = vsel %vm2446, %v7555, %v7554
        %v7557 = vrot.slane %v7410, 5
        %v7558 = vsel %vm2448, %v7557, %v7556
        %v7559 = vrot.slane %v7411, 4
        %v7560 = vsel %vm2450, %v7559, %v7558
        %v7561 = vrot.slane %v7412, 3
        %v7562 = vsel %vm2452, %v7561, %v7560
        %v7563 = vrot.slane %v7413, 2
        %v7564 = vsel %vm2454, %v7563, %v7562
        %v7565 = vrot.slane %v7414, 1
        %v7566 = vsel %vm2456, %v7565, %v7564
        %v7567 = vrot.slane %v7416, 7
        %v7568 = vsel %vm2444, %v7567, %v7415
        %v7569 = vrot.slane %v7417, 6
        %v7570 = vsel %vm2446, %v7569, %v7568
        %v7571 = vrot.slane %v7418, 5
        %v7572 = vsel %vm2448, %v7571, %v7570
        %v7573 = vrot.slane %v7419, 4
        %v7574 = vsel %vm2450, %v7573, %v7572
        %v7575 = vrot.slane %v7420, 3
        %v7576 = vsel %vm2452, %v7575, %v7574
        %v7577 = vrot.slane %v7421, 2
        %v7578 = vsel %vm2454, %v7577, %v7576
        %v7579 = vrot.slane %v7422, 1
        %v7580 = vsel %vm2456, %v7579, %v7578
        %v7581 = vrot.slane %v7424, 7
        %v7582 = vsel %vm2444, %v7581, %v7423
        %v7583 = vrot.slane %v7425, 6
        %v7584 = vsel %vm2446, %v7583, %v7582
        %v7585 = vrot.slane %v7426, 5
        %v7586 = vsel %vm2448, %v7585, %v7584
        %v7587 = vrot.slane %v7427, 4
        %v7588 = vsel %vm2450, %v7587, %v7586
        %v7589 = vrot.slane %v7428, 3
        %v7590 = vsel %vm2452, %v7589, %v7588
        %v7591 = vrot.slane %v7429, 2
        %v7592 = vsel %vm2454, %v7591, %v7590
        %v7593 = vrot.slane %v7430, 1
        %v7594 = vsel %vm2456, %v7593, %v7592
        %v7595 = vrot.slane %v7432, 7
        %v7596 = vsel %vm2444, %v7595, %v7431
        %v7597 = vrot.slane %v7433, 6
        %v7598 = vsel %vm2446, %v7597, %v7596
        %v7599 = vrot.slane %v7434, 5
        %v7600 = vsel %vm2448, %v7599, %v7598
        %v7601 = vrot.slane %v7435, 4
        %v7602 = vsel %vm2450, %v7601, %v7600
        %v7603 = vrot.slane %v7436, 3
        %v7604 = vsel %vm2452, %v7603, %v7602
        %v7605 = vrot.slane %v7437, 2
        %v7606 = vsel %vm2454, %v7605, %v7604
        %v7607 = vrot.slane %v7438, 1
        %v7608 = vsel %vm2456, %v7607, %v7606
        %v7609 = vrot.slane %v7440, 7
        %v7610 = vsel %vm2444, %v7609, %v7439
        %v7611 = vrot.slane %v7441, 6
        %v7612 = vsel %vm2446, %v7611, %v7610
        %v7613 = vrot.slane %v7442, 5
        %v7614 = vsel %vm2448, %v7613, %v7612
        %v7615 = vrot.slane %v7443, 4
        %v7616 = vsel %vm2450, %v7615, %v7614
        %v7617 = vrot.slane %v7444, 3
        %v7618 = vsel %vm2452, %v7617, %v7616
        %v7619 = vrot.slane %v7445, 2
        %v7620 = vsel %vm2454, %v7619, %v7618
        %v7621 = vrot.slane %v7446, 1
        %v7622 = vsel %vm2456, %v7621, %v7620
        %7631 = vst [vmem:[%s191] sm:$0xff] %v7524
        %7632 = vst [vmem:[%s191 + $0x8] sm:$0xff] %v7538
        %7633 = vst [vmem:[%s191 + $0x10] sm:$0xff] %v7552
        %7634 = vst [vmem:[%s191 + $0x18] sm:$0xff] %v7566
        %7635 = vst [vmem:[%s191 + $0x20] sm:$0xff] %v7580
        %7636 = vst [vmem:[%s191 + $0x28] sm:$0xff] %v7594
        %7637 = vst [vmem:[%s191 + $0x30] sm:$0xff] %v7608
        %7638 = vst [vmem:[%s191 + $0x38] sm:$0xff] %v7622
        %s7639 = sand.u32 %s115, 1
        %s7640 = scalar_lea.sflag [#allocation3], %s7639
        %s7641 = sand.u32 %s115, 1
        %s7642 = smul.addr %s7641, 64
        %s7643 = scalar_lea.vmem [#allocation2], %s7642
        // Predicated region
        $region37: #{tpu_custom_call.1} parent=35 // pred_check
          %p7644 = pneg %p125
        $region38: #{tpu_custom_call.1} parent=35 // pred_check_branch
          %7646 = sbr.rel (%p7644) target = $region40
        $region39: #{tpu_custom_call.1} parent=35 // pred_region
          %s7647 = smul.u32 8, %s18
          %s7649 = ssub.s32 1024, 1024
          %7650 = vsyncadd %s7640, %s7649
          %s7651 = smul.addr %s7647, 128
          %s7652 = scalar_lea.hbm %s4, %s7651
          %s7653 = sshll.u32 %s7643, 4
          %s7654 = int_to_ptr.vmem [resolvable:$true] %s7653
          %7659 = dma.vmem_to_hbm [thread:$0]  %s7654, 1024, %s7652, %s7640, 128, 128, 8
        $region40: #{tpu_custom_call.1} parent=35 // pred_fallthru
          _
      $region36: #{tpu_custom_call.1} parent=5 // pred_fallthru
        _
      %p7660 = scmp.le.s32.totalorder 2, %s13
      // Predicated region
      $region41: #{tpu_custom_call.1} parent=5 // pred_check
        %p7661 = pneg %p7660
      $region42: #{tpu_custom_call.1} parent=5 // pred_check_branch
        %7663 = sbr.rel (%p7661) target = $region44
      $region43: #{tpu_custom_call.1} parent=5 // pred_region
        %s7664 = ssub.s32 %s13, 2
        // Predicated region
        $region45: #{tpu_custom_call.1} parent=43 // pred_check
          %p7665 = pneg %p131
        $region46: #{tpu_custom_call.1} parent=43 // pred_check_branch
          %7667 = sbr.rel (%p7665) target = $region48
        $region47: #{tpu_custom_call.1} parent=43 // pred_region
          %s7668 = sand.u32 %s116, 1
          %s7669 = scalar_lea.sflag [#allocation3], %s7668
          %s7670 = sand.u32 %s116, 1
          %s7671 = smul.addr %s7670, 64
          %s7672 = scalar_lea.vmem [#allocation2], %s7671
          %7673 = dma.done %s7669, 1024
        $region48: #{tpu_custom_call.1} parent=43 // pred_fallthru
          _
      $region44: #{tpu_custom_call.1} parent=5 // pred_fallthru
        _
    $region6: #{tpu_custom_call.1} parent=1 // loop_footer
      %s17 = sadd.s32 1, %s13
    $region7: #{tpu_custom_call.1} parent=1 // loop_footer_branch
      %12 = sbr.rel target = $region3
    $region8: #{tpu_custom_call.1} parent=1 // loop_exit
      _
    %7674 = vsyncpa [#allocation3], 1
    %s7675 = scalar_lea.sflag [#allocation3], 1
    %7676 = vsyncpa %s7675, 1

</llo_original>
